<compile_context>
chip_gen: v7x
topology: tpu7x:2x2x1
jax: 0.10.0
libtpu: 0.0.40
codegen_flags: <defaults>
</compile_context>

<pallas_src>
import jax
import jax.numpy as jnp
from jax.experimental import pallas as pl
from jax.experimental.pallas import tpu as pltpu

HIDDEN = 16          # GRU input / hidden size
SEQ = 28             # linear1 expects 448 = 28 * 16 flattened GRU features
ENC = 64             # encoder width


def critic_kernel(x_ref, pos_ref, act_ref,
                  wih_ref, whh_ref, gb_ref,
                  w1_ref, b1_ref, wp_ref, bp_ref, wq_ref, bq_ref,
                  out_ref,
                  gi_r_s, gi_z_s, gi_n_s):
    B = out_ref.shape[0]
    T = x_ref.shape[1]

    # ---- gate-split weights / biases (lane offset 0 for every gate) ----------
    wih_r = wih_ref[0 * HIDDEN:1 * HIDDEN, :]       # (16,16) bf16
    wih_z = wih_ref[1 * HIDDEN:2 * HIDDEN, :]
    wih_n = wih_ref[2 * HIDDEN:3 * HIDDEN, :]
    whh_r = whh_ref[0 * HIDDEN:1 * HIDDEN, :]
    whh_z = whh_ref[1 * HIDDEN:2 * HIDDEN, :]
    whh_n = whh_ref[2 * HIDDEN:3 * HIDDEN, :]
    b_r = gb_ref[0:1, :]                            # b_ir + b_hr (folded)
    b_z = gb_ref[1:2, :]                            # b_iz + b_hz (folded)
    b_ni = gb_ref[2:3, :]                           # b_in (folded into gi_n)
    b_hn = gb_ref[3:4, :]                           # b_hn (stays under r-gate)

    # ---- hoisted input projection, OFF the recurrence (bf16 MXU, f32 acc) ----
    # Per-batch 2-D matmuls (B tiny & static); results land in VMEM scratch so
    # per-step reads are plain vector loads and vreg live ranges stay short.
    for b in range(B):
        xb = x_ref[b].astype(jnp.bfloat16)                          # (T, 16)
        gi_r_s[b] = jnp.dot(xb, wih_r, preferred_element_type=jnp.float32) + b_r
        gi_z_s[b] = jnp.dot(xb, wih_z, preferred_element_type=jnp.float32) + b_z
        gi_n_s[b] = jnp.dot(xb, wih_n, preferred_element_type=jnp.float32) + b_ni

    h = jnp.zeros((B, HIDDEN), jnp.float32)
    # accumulator starts at linear1's bias -> ends equal to linear1(code2)
    acc = jnp.broadcast_to(b1_ref[...], (B, ENC)).astype(jnp.float32)

    # ---- fully unrolled GRU recurrence (T static) -----------------------------
    # Serial chain per step: cast h -> 3 bf16 (16,16) matmuls -> sigmoid/tanh ->
    # h update.  The W1 dots below depend only on relu(h_t) and form a separate
    # chain the scheduler pipelines on the MXU behind the recurrence.
    for t in range(T):
        h_bf = h.astype(jnp.bfloat16)
        gh_r = jnp.dot(h_bf, whh_r, preferred_element_type=jnp.float32)
        gh_z = jnp.dot(h_bf, whh_z, preferred_element_type=jnp.float32)
        gh_n = jnp.dot(h_bf, whh_n, preferred_element_type=jnp.float32)
        # gi slices do not depend on h -> hoisted/pipelined by the scheduler
        r = jax.nn.sigmoid(gi_r_s[:, t, :] + gh_r)
        z = jax.nn.sigmoid(gi_z_s[:, t, :] + gh_z)
        n = jnp.tanh(gi_n_s[:, t, :] + r * (gh_n + b_hn))
        h = n + z * (h - n)                         # == (1-z)*n + z*h, one less VPU op
        relu_h = jnp.maximum(h, 0.0).astype(jnp.bfloat16)   # relu(code1)[:, t, :]
        # linear1(flatten(...)) contribution of timestep t (independent chain)
        acc = acc + jnp.dot(relu_h, w1_ref[t * HIDDEN:(t + 1) * HIDDEN, :],
                            preferred_element_type=jnp.float32)

    code3 = jnp.maximum(acc, 0.0)                   # relu(linear1(code2))

    # ---- pos / action encoders (forward() uses posEnc for BOTH) --------------
    wp = wp_ref[...]                                # (16,64) bf16
    bp = bp_ref[...]                                # (1,64)  f32
    poscode = jnp.maximum(
        jnp.dot(pos_ref[...].astype(jnp.bfloat16), wp,
                preferred_element_type=jnp.float32) + bp, 0.0)
    actcode = jnp.maximum(
        jnp.dot(act_ref[...].astype(jnp.bfloat16), wp,
                preferred_element_type=jnp.float32) + bp, 0.0)
    code5 = code3 + poscode + actcode

    # ---- QDec (64 -> 1): VPU multiply + lane reduction, no MXU pass -----------
    out_ref[...] = (jnp.sum(code5 * wq_ref[...], axis=-1, keepdims=True)
                    + bq_ref[...])


def critic_forward(params, state, action):
    x, _adj, pos = state                 # adj is unused (matches PyTorch forward)
    B, T, _ = x.shape

    vmem = pl.BlockSpec(memory_space=pltpu.MemorySpace.VMEM)
    return pl.pallas_call(
        critic_kernel,
        out_shape=jax.ShapeDtypeStruct((B, 1), jnp.float32),
        in_specs=[vmem] * 12,
        out_specs=vmem,
        scratch_shapes=[pltpu.VMEM((B, T, HIDDEN), jnp.float32)] * 3,
        compiler_params=pltpu.CompilerParams(vmem_limit_bytes=8 * 1024 * 1024),
    )(x.astype(jnp.float32), pos.astype(jnp.float32), action.astype(jnp.float32),
      params["wih_all"], params["whh_all"], params["gbias"],
      params["w1_t"], params["b1"], params["wp_t"], params["bp"],
      params["wq"], params["bq"])


def init_params(key):
    """Raw PyTorch-layout f32 weights (gate order r, z, n)."""
    ks = jax.random.split(key, 10)

    def u(k, shape, lim):
        return jax.random.uniform(k, shape, jnp.float32, -lim, lim)

    inv_h = 1.0 / (HIDDEN ** 0.5)
    inv_l1 = 1.0 / ((SEQ * HIDDEN) ** 0.5)
    inv_e = 1.0 / (ENC ** 0.5)

    return dict(
        w_ih=u(ks[0], (3 * HIDDEN, HIDDEN), inv_h),   # GRU weight_ih_l0
        w_hh=u(ks[1], (3 * HIDDEN, HIDDEN), inv_h),   # GRU weight_hh_l0
        b_ih=u(ks[2], (3 * HIDDEN,), inv_h),
        b_hh=u(ks[3], (3 * HIDDEN,), inv_h),
        w1=u(ks[4], (ENC, SEQ * HIDDEN), inv_l1),     # linear1: 448 -> 64
        b1=u(ks[5], (ENC,), inv_l1),
        wp=u(ks[6], (ENC, HIDDEN), inv_h),            # posEnc: 16 -> 64
        bp=u(ks[7], (ENC,), inv_h),
        wq=u(ks[8], (1, ENC), 0.003),                 # QDec: 64 -> 1
        bq=u(ks[9], (1,), inv_e),
        # TODO(synk): actEnc / linear2 are never used in forward(); not materialized.
    )


def prepare_kernel_params(raw):
    """Kernel-side layout: gate-split, transposed, bf16 matmul weights."""
    w_ih, w_hh = raw["w_ih"], raw["w_hh"]
    b_ih, b_hh = raw["b_ih"], raw["b_hh"]
    H = HIDDEN
    # (48,16): rows [0:16]=W_r^T, [16:32]=W_z^T, [32:48]=W_n^T (sublane-aligned)
    wih_all = jnp.concatenate(
        [w_ih[0:H].T, w_ih[H:2 * H].T, w_ih[2 * H:3 * H].T], axis=0).astype(jnp.bfloat16)
    whh_all = jnp.concatenate(
        [w_hh[0:H].T, w_hh[H:2 * H].T, w_hh[2 * H:3 * H].T], axis=0).astype(jnp.bfloat16)
    # (4,16) f32: [b_ir+b_hr, b_iz+b_hz, b_in, b_hn]
    gbias = jnp.stack([b_ih[0:H] + b_hh[0:H],
                       b_ih[H:2 * H] + b_hh[H:2 * H],
                       b_ih[2 * H:3 * H],
                       b_hh[2 * H:3 * H]], axis=0)
    return dict(
        wih_all=wih_all, whh_all=whh_all, gbias=gbias,
        w1_t=raw["w1"].T.astype(jnp.bfloat16), b1=raw["b1"].reshape(1, -1),
        wp_t=raw["wp"].T.astype(jnp.bfloat16), bp=raw["bp"].reshape(1, -1),
        wq=raw["wq"], bq=raw["bq"].reshape(1, 1),
    )


def critic_reference(raw, state, action):
    """Pure-JAX f32 reference mirroring the PyTorch forward, for verification."""
    x, _adj, pos = state
    B, T, _ = x.shape
    w_ih_t, w_hh_t = raw["w_ih"].T, raw["w_hh"].T
    b_ih, b_hh = raw["b_ih"], raw["b_hh"]
    h = jnp.zeros((B, HIDDEN), jnp.float32)
    outs = []
    for t in range(T):
        gi = x[:, t, :] @ w_ih_t + b_ih
        gh = h @ w_hh_t + b_hh
        r = jax.nn.sigmoid(gi[:, 0:16] + gh[:, 0:16])
        z = jax.nn.sigmoid(gi[:, 16:32] + gh[:, 16:32])
        n = jnp.tanh(gi[:, 32:48] + r * gh[:, 32:48])
        h = (1.0 - z) * n + z * h
        outs.append(h)
    code1 = jnp.stack(outs, axis=1)                       # (B, T, 16)
    code2 = jnp.maximum(code1, 0.0).reshape(B, -1)        # (B, 448)
    code3 = jnp.maximum(code2 @ raw["w1"].T + raw["b1"], 0.0)
    poscode = jnp.maximum(pos @ raw["wp"].T + raw["bp"], 0.0)
    actcode = jnp.maximum(action @ raw["wp"].T + raw["bp"], 0.0)   # posEnc on action, as in torch
    code5 = code3 + poscode + actcode
    return code5 @ raw["wq"].T + raw["bq"]


if __name__ == "__main__":
    key = jax.random.PRNGKey(0)
    kp, kx, kadj, kpos, ka = jax.random.split(key, 5)

    raw = init_params(kp)
    kernel_params = prepare_kernel_params(raw)

    B = 2
    x = jax.random.normal(kx, (B, SEQ, HIDDEN), jnp.float32)     # state[0]
    adj = jax.random.normal(kadj, (B, SEQ, SEQ), jnp.float32)    # state[1] (unused)
    pos = jax.random.normal(kpos, (B, HIDDEN), jnp.float32)      # state[2]
    action = jax.random.normal(ka, (B, HIDDEN), jnp.float32)
    state = (x, adj, pos)

    critic_jit = jax.jit(critic_forward)
    out = critic_jit(kernel_params, state, action)
    jax.block_until_ready(out)

    ref = critic_reference(raw, state, action)
    assert out.shape == (B, 1), out.shape
    # bf16 MXU operands (f32 accumulate) vs. pure-f32 reference -> loosened tolerance.
    assert jnp.allclose(out, ref, atol=1e-2, rtol=2e-2), (out, ref)

    print("KERNEL_OK")
</pallas_src>

<mosaic_0001>
module attributes {stable_mosaic.version = 11 : i64} {
  func.func @critic_kernel(%arg0: memref<2x28x16xf32, #tpu.memory_space<vmem>>, %arg1: memref<2x16xf32, #tpu.memory_space<vmem>>, %arg2: memref<2x16xf32, #tpu.memory_space<vmem>>, %arg3: memref<48x16xbf16, #tpu.memory_space<vmem>>, %arg4: memref<48x16xbf16, #tpu.memory_space<vmem>>, %arg5: memref<4x16xf32, #tpu.memory_space<vmem>>, %arg6: memref<448x64xbf16, #tpu.memory_space<vmem>>, %arg7: memref<1x64xf32, #tpu.memory_space<vmem>>, %arg8: memref<16x64xbf16, #tpu.memory_space<vmem>>, %arg9: memref<1x64xf32, #tpu.memory_space<vmem>>, %arg10: memref<1x64xf32, #tpu.memory_space<vmem>>, %arg11: memref<1x1xf32, #tpu.memory_space<vmem>>, %arg12: memref<2x1xf32, #tpu.memory_space<vmem>>, %arg13: memref<2x28x16xf32, #tpu.memory_space<vmem>>, %arg14: memref<2x28x16xf32, #tpu.memory_space<vmem>>, %arg15: memref<2x28x16xf32, #tpu.memory_space<vmem>>) attributes {dimension_semantics = [], scalar_prefetch = 0 : i64, scratch_operands = 3 : i64, tpu.core_type = #tpu.core_type<tc>} {
    %c0 = arith.constant 0 : index
    %c0_0 = arith.constant 0 : index
    %0 = vector.load %arg3[%c0, %c0_0] : memref<48x16xbf16, #tpu.memory_space<vmem>>, vector<16x16xbf16>
    %c16 = arith.constant 16 : index
    %c0_1 = arith.constant 0 : index
    %1 = vector.load %arg3[%c16, %c0_1] : memref<48x16xbf16, #tpu.memory_space<vmem>>, vector<16x16xbf16>
    %c32 = arith.constant 32 : index
    %c0_2 = arith.constant 0 : index
    %2 = vector.load %arg3[%c32, %c0_2] : memref<48x16xbf16, #tpu.memory_space<vmem>>, vector<16x16xbf16>
    %c0_3 = arith.constant 0 : index
    %c0_4 = arith.constant 0 : index
    %3 = vector.load %arg4[%c0_3, %c0_4] : memref<48x16xbf16, #tpu.memory_space<vmem>>, vector<16x16xbf16>
    %c16_5 = arith.constant 16 : index
    %c0_6 = arith.constant 0 : index
    %4 = vector.load %arg4[%c16_5, %c0_6] : memref<48x16xbf16, #tpu.memory_space<vmem>>, vector<16x16xbf16>
    %c32_7 = arith.constant 32 : index
    %c0_8 = arith.constant 0 : index
    %5 = vector.load %arg4[%c32_7, %c0_8] : memref<48x16xbf16, #tpu.memory_space<vmem>>, vector<16x16xbf16>
    %c0_9 = arith.constant 0 : index
    %c0_10 = arith.constant 0 : index
    %6 = vector.load %arg5[%c0_9, %c0_10] : memref<4x16xf32, #tpu.memory_space<vmem>>, vector<1x16xf32>
    %c1 = arith.constant 1 : index
    %c0_11 = arith.constant 0 : index
    %7 = vector.load %arg5[%c1, %c0_11] : memref<4x16xf32, #tpu.memory_space<vmem>>, vector<1x16xf32>
    %c2 = arith.constant 2 : index
    %c0_12 = arith.constant 0 : index
    %8 = vector.load %arg5[%c2, %c0_12] : memref<4x16xf32, #tpu.memory_space<vmem>>, vector<1x16xf32>
    %c3 = arith.constant 3 : index
    %c0_13 = arith.constant 0 : index
    %9 = vector.load %arg5[%c3, %c0_13] : memref<4x16xf32, #tpu.memory_space<vmem>>, vector<1x16xf32>
    %c0_14 = arith.constant 0 : index
    %c0_15 = arith.constant 0 : index
    %c0_16 = arith.constant 0 : index
    %10 = vector.load %arg0[%c0_14, %c0_15, %c0_16] : memref<2x28x16xf32, #tpu.memory_space<vmem>>, vector<1x28x16xf32>
    %11 = vector.shape_cast %10 : vector<1x28x16xf32> to vector<28x16xf32>
    %12 = arith.truncf %11 : vector<28x16xf32> to vector<28x16xbf16>
    %cst = arith.constant dense<0.000000e+00> : vector<28x16xf32>
    %13 = tpu.matmul %12, %0, %cst {dimension_numbers = #tpu.dot_dimension_numbers<[1], [0], [0], [1], [0, 0, 1, 1], [], []>} : vector<28x16xbf16>, vector<16x16xbf16>, vector<28x16xf32> -> vector<28x16xf32>
    %14 = vector.broadcast %6 : vector<1x16xf32> to vector<28x16xf32>
    %15 = arith.addf %13, %14 : vector<28x16xf32>
    %c0_17 = arith.constant 0 : index
    %c0_18 = arith.constant 0 : index
    %c0_19 = arith.constant 0 : index
    %16 = vector.load %arg13[%c0_17, %c0_18, %c0_19] : memref<2x28x16xf32, #tpu.memory_space<vmem>>, vector<1x28x16xf32>
    %17 = vector.shape_cast %16 : vector<1x28x16xf32> to vector<28x16xf32>
    %18 = vector.shape_cast %15 : vector<28x16xf32> to vector<1x28x16xf32>
    tpu.vector_store %arg13[%c0_17, %c0_18, %c0_19], %18 {strides = array<i32>} : memref<2x28x16xf32, #tpu.memory_space<vmem>>, vector<1x28x16xf32>,
    %cst_20 = arith.constant dense<0.000000e+00> : vector<28x16xf32>
    %19 = tpu.matmul %12, %1, %cst_20 {dimension_numbers = #tpu.dot_dimension_numbers<[1], [0], [0], [1], [0, 0, 1, 1], [], []>} : vector<28x16xbf16>, vector<16x16xbf16>, vector<28x16xf32> -> vector<28x16xf32>
    %20 = vector.broadcast %7 : vector<1x16xf32> to vector<28x16xf32>
    %21 = arith.addf %19, %20 : vector<28x16xf32>
    %c0_21 = arith.constant 0 : index
    %c0_22 = arith.constant 0 : index
    %c0_23 = arith.constant 0 : index
    %22 = vector.load %arg14[%c0_21, %c0_22, %c0_23] : memref<2x28x16xf32, #tpu.memory_space<vmem>>, vector<1x28x16xf32>
    %23 = vector.shape_cast %22 : vector<1x28x16xf32> to vector<28x16xf32>
    %24 = vector.shape_cast %21 : vector<28x16xf32> to vector<1x28x16xf32>
    tpu.vector_store %arg14[%c0_21, %c0_22, %c0_23], %24 {strides = array<i32>} : memref<2x28x16xf32, #tpu.memory_space<vmem>>, vector<1x28x16xf32>,
    %cst_24 = arith.constant dense<0.000000e+00> : vector<28x16xf32>
    %25 = tpu.matmul %12, %2, %cst_24 {dimension_numbers = #tpu.dot_dimension_numbers<[1], [0], [0], [1], [0, 0, 1, 1], [], []>} : vector<28x16xbf16>, vector<16x16xbf16>, vector<28x16xf32> -> vector<28x16xf32>
    %26 = vector.broadcast %8 : vector<1x16xf32> to vector<28x16xf32>
    %27 = arith.addf %25, %26 : vector<28x16xf32>
    %c0_25 = arith.constant 0 : index
    %c0_26 = arith.constant 0 : index
    %c0_27 = arith.constant 0 : index
    %28 = vector.load %arg15[%c0_25, %c0_26, %c0_27] : memref<2x28x16xf32, #tpu.memory_space<vmem>>, vector<1x28x16xf32>
    %29 = vector.shape_cast %28 : vector<1x28x16xf32> to vector<28x16xf32>
    %30 = vector.shape_cast %27 : vector<28x16xf32> to vector<1x28x16xf32>
    tpu.vector_store %arg15[%c0_25, %c0_26, %c0_27], %30 {strides = array<i32>} : memref<2x28x16xf32, #tpu.memory_space<vmem>>, vector<1x28x16xf32>,
    %c1_28 = arith.constant 1 : index
    %c0_29 = arith.constant 0 : index
    %c0_30 = arith.constant 0 : index
    %31 = vector.load %arg0[%c1_28, %c0_29, %c0_30] : memref<2x28x16xf32, #tpu.memory_space<vmem>>, vector<1x28x16xf32>
    %32 = vector.shape_cast %31 : vector<1x28x16xf32> to vector<28x16xf32>
    %33 = arith.truncf %32 : vector<28x16xf32> to vector<28x16xbf16>
    %cst_31 = arith.constant dense<0.000000e+00> : vector<28x16xf32>
    %34 = tpu.matmul %33, %0, %cst_31 {dimension_numbers = #tpu.dot_dimension_numbers<[1], [0], [0], [1], [0, 0, 1, 1], [], []>} : vector<28x16xbf16>, vector<16x16xbf16>, vector<28x16xf32> -> vector<28x16xf32>
    %35 = vector.broadcast %6 : vector<1x16xf32> to vector<28x16xf32>
    %36 = arith.addf %34, %35 : vector<28x16xf32>
    %c1_32 = arith.constant 1 : index
    %c0_33 = arith.constant 0 : index
    %c0_34 = arith.constant 0 : index
    %37 = vector.load %arg13[%c1_32, %c0_33, %c0_34] : memref<2x28x16xf32, #tpu.memory_space<vmem>>, vector<1x28x16xf32>
    %38 = vector.shape_cast %37 : vector<1x28x16xf32> to vector<28x16xf32>
    %39 = vector.shape_cast %36 : vector<28x16xf32> to vector<1x28x16xf32>
    tpu.vector_store %arg13[%c1_32, %c0_33, %c0_34], %39 {strides = array<i32>} : memref<2x28x16xf32, #tpu.memory_space<vmem>>, vector<1x28x16xf32>,
    %cst_35 = arith.constant dense<0.000000e+00> : vector<28x16xf32>
    %40 = tpu.matmul %33, %1, %cst_35 {dimension_numbers = #tpu.dot_dimension_numbers<[1], [0], [0], [1], [0, 0, 1, 1], [], []>} : vector<28x16xbf16>, vector<16x16xbf16>, vector<28x16xf32> -> vector<28x16xf32>
    %41 = vector.broadcast %7 : vector<1x16xf32> to vector<28x16xf32>
    %42 = arith.addf %40, %41 : vector<28x16xf32>
    %c1_36 = arith.constant 1 : index
    %c0_37 = arith.constant 0 : index
    %c0_38 = arith.constant 0 : index
    %43 = vector.load %arg14[%c1_36, %c0_37, %c0_38] : memref<2x28x16xf32, #tpu.memory_space<vmem>>, vector<1x28x16xf32>
    %44 = vector.shape_cast %43 : vector<1x28x16xf32> to vector<28x16xf32>
    %45 = vector.shape_cast %42 : vector<28x16xf32> to vector<1x28x16xf32>
    tpu.vector_store %arg14[%c1_36, %c0_37, %c0_38], %45 {strides = array<i32>} : memref<2x28x16xf32, #tpu.memory_space<vmem>>, vector<1x28x16xf32>,
    %cst_39 = arith.constant dense<0.000000e+00> : vector<28x16xf32>
    %46 = tpu.matmul %33, %2, %cst_39 {dimension_numbers = #tpu.dot_dimension_numbers<[1], [0], [0], [1], [0, 0, 1, 1], [], []>} : vector<28x16xbf16>, vector<16x16xbf16>, vector<28x16xf32> -> vector<28x16xf32>
    %47 = vector.broadcast %8 : vector<1x16xf32> to vector<28x16xf32>
    %48 = arith.addf %46, %47 : vector<28x16xf32>
    %c1_40 = arith.constant 1 : index
    %c0_41 = arith.constant 0 : index
    %c0_42 = arith.constant 0 : index
    %49 = vector.load %arg15[%c1_40, %c0_41, %c0_42] : memref<2x28x16xf32, #tpu.memory_space<vmem>>, vector<1x28x16xf32>
    %50 = vector.shape_cast %49 : vector<1x28x16xf32> to vector<28x16xf32>
    %51 = vector.shape_cast %48 : vector<28x16xf32> to vector<1x28x16xf32>
    tpu.vector_store %arg15[%c1_40, %c0_41, %c0_42], %51 {strides = array<i32>} : memref<2x28x16xf32, #tpu.memory_space<vmem>>, vector<1x28x16xf32>,
    %cst_43 = arith.constant 0.000000e+00 : f32
    %52 = vector.broadcast %cst_43 : f32 to vector<2x16xf32>
    %c0_44 = arith.constant 0 : index
    %c0_45 = arith.constant 0 : index
    %53 = vector.load %arg7[%c0_44, %c0_45] : memref<1x64xf32, #tpu.memory_space<vmem>>, vector<1x64xf32>
    %54 = vector.shape_cast %53 : vector<1x64xf32> to vector<1x64xf32>
    %55 = vector.broadcast %54 : vector<1x64xf32> to vector<2x64xf32>
    %56 = arith.truncf %52 : vector<2x16xf32> to vector<2x16xbf16>
    %cst_46 = arith.constant dense<0.000000e+00> : vector<2x16xf32>
    %57 = tpu.matmul %56, %3, %cst_46 {dimension_numbers = #tpu.dot_dimension_numbers<[1], [0], [0], [1], [0, 0, 1, 1], [], []>} : vector<2x16xbf16>, vector<16x16xbf16>, vector<2x16xf32> -> vector<2x16xf32>
    %cst_47 = arith.constant dense<0.000000e+00> : vector<2x16xf32>
    %58 = tpu.matmul %56, %4, %cst_47 {dimension_numbers = #tpu.dot_dimension_numbers<[1], [0], [0], [1], [0, 0, 1, 1], [], []>} : vector<2x16xbf16>, vector<16x16xbf16>, vector<2x16xf32> -> vector<2x16xf32>
    %cst_48 = arith.constant dense<0.000000e+00> : vector<2x16xf32>
    %59 = tpu.matmul %56, %5, %cst_48 {dimension_numbers = #tpu.dot_dimension_numbers<[1], [0], [0], [1], [0, 0, 1, 1], [], []>} : vector<2x16xbf16>, vector<16x16xbf16>, vector<2x16xf32> -> vector<2x16xf32>
    %c0_49 = arith.constant 0 : index
    %c0_50 = arith.constant 0 : index
    %c0_51 = arith.constant 0 : index
    %60 = vector.load %arg13[%c0_49, %c0_50, %c0_51] : memref<2x28x16xf32, #tpu.memory_space<vmem>>, vector<2x1x16xf32>
    %61 = vector.shape_cast %60 : vector<2x1x16xf32> to vector<2x16xf32>
    %62 = arith.addf %61, %57 : vector<2x16xf32>
    %63 = arith.negf %62 : vector<2x16xf32>
    %64 = math.exp %63 : vector<2x16xf32>
    %cst_52 = arith.constant 1.000000e+00 : f32
    %65 = vector.broadcast %cst_52 : f32 to vector<2x16xf32>
    %66 = arith.addf %65, %64 : vector<2x16xf32>
    %67 = arith.divf %65, %66 : vector<2x16xf32>
    %c0_53 = arith.constant 0 : index
    %c0_54 = arith.constant 0 : index
    %c0_55 = arith.constant 0 : index
    %68 = vector.load %arg14[%c0_53, %c0_54, %c0_55] : memref<2x28x16xf32, #tpu.memory_space<vmem>>, vector<2x1x16xf32>
    %69 = vector.shape_cast %68 : vector<2x1x16xf32> to vector<2x16xf32>
    %70 = arith.addf %69, %58 : vector<2x16xf32>
    %71 = arith.negf %70 : vector<2x16xf32>
    %72 = math.exp %71 : vector<2x16xf32>
    %cst_56 = arith.constant 1.000000e+00 : f32
    %73 = vector.broadcast %cst_56 : f32 to vector<2x16xf32>
    %74 = arith.addf %73, %72 : vector<2x16xf32>
    %75 = arith.divf %73, %74 : vector<2x16xf32>
    %c0_57 = arith.constant 0 : index
    %c0_58 = arith.constant 0 : index
    %c0_59 = arith.constant 0 : index
    %76 = vector.load %arg15[%c0_57, %c0_58, %c0_59] : memref<2x28x16xf32, #tpu.memory_space<vmem>>, vector<2x1x16xf32>
    %77 = vector.shape_cast %76 : vector<2x1x16xf32> to vector<2x16xf32>
    %78 = vector.broadcast %9 : vector<1x16xf32> to vector<2x16xf32>
    %79 = arith.addf %59, %78 : vector<2x16xf32>
    %80 = arith.mulf %67, %79 : vector<2x16xf32>
    %81 = arith.addf %77, %80 : vector<2x16xf32>
    %82 = math.tanh %81 : vector<2x16xf32>
    %83 = arith.subf %52, %82 : vector<2x16xf32>
    %84 = arith.mulf %75, %83 : vector<2x16xf32>
    %85 = arith.addf %82, %84 : vector<2x16xf32>
    %cst_60 = arith.constant 0.000000e+00 : f32
    %86 = vector.broadcast %cst_60 : f32 to vector<2x16xf32>
    %87 = arith.maximumf %85, %86 : vector<2x16xf32>
    %88 = arith.truncf %87 : vector<2x16xf32> to vector<2x16xbf16>
    %c0_61 = arith.constant 0 : index
    %c0_62 = arith.constant 0 : index
    %89 = vector.load %arg6[%c0_61, %c0_62] : memref<448x64xbf16, #tpu.memory_space<vmem>>, vector<16x64xbf16>
    %cst_63 = arith.constant dense<0.000000e+00> : vector<2x64xf32>
    %90 = tpu.matmul %88, %89, %cst_63 {dimension_numbers = #tpu.dot_dimension_numbers<[1], [0], [0], [1], [0, 0, 1, 1], [], []>} : vector<2x16xbf16>, vector<16x64xbf16>, vector<2x64xf32> -> vector<2x64xf32>
    %91 = arith.addf %55, %90 : vector<2x64xf32>
    %92 = arith.truncf %85 : vector<2x16xf32> to vector<2x16xbf16>
    %cst_64 = arith.constant dense<0.000000e+00> : vector<2x16xf32>
    %93 = tpu.matmul %92, %3, %cst_64 {dimension_numbers = #tpu.dot_dimension_numbers<[1], [0], [0], [1], [0, 0, 1, 1], [], []>} : vector<2x16xbf16>, vector<16x16xbf16>, vector<2x16xf32> -> vector<2x16xf32>
    %cst_65 = arith.constant dense<0.000000e+00> : vector<2x16xf32>
    %94 = tpu.matmul %92, %4, %cst_65 {dimension_numbers = #tpu.dot_dimension_numbers<[1], [0], [0], [1], [0, 0, 1, 1], [], []>} : vector<2x16xbf16>, vector<16x16xbf16>, vector<2x16xf32> -> vector<2x16xf32>
    %cst_66 = arith.constant dense<0.000000e+00> : vector<2x16xf32>
    %95 = tpu.matmul %92, %5, %cst_66 {dimension_numbers = #tpu.dot_dimension_numbers<[1], [0], [0], [1], [0, 0, 1, 1], [], []>} : vector<2x16xbf16>, vector<16x16xbf16>, vector<2x16xf32> -> vector<2x16xf32>
    %c0_67 = arith.constant 0 : index
    %c1_68 = arith.constant 1 : index
    %c0_69 = arith.constant 0 : index
    %96 = vector.load %arg13[%c0_67, %c1_68, %c0_69] : memref<2x28x16xf32, #tpu.memory_space<vmem>>, vector<2x1x16xf32>
    %97 = vector.shape_cast %96 : vector<2x1x16xf32> to vector<2x16xf32>
    %98 = arith.addf %97, %93 : vector<2x16xf32>
    %99 = arith.negf %98 : vector<2x16xf32>
    %100 = math.exp %99 : vector<2x16xf32>
    %cst_70 = arith.constant 1.000000e+00 : f32
    %101 = vector.broadcast %cst_70 : f32 to vector<2x16xf32>
    %102 = arith.addf %101, %100 : vector<2x16xf32>
    %103 = arith.divf %101, %102 : vector<2x16xf32>
    %c0_71 = arith.constant 0 : index
    %c1_72 = arith.constant 1 : index
    %c0_73 = arith.constant 0 : index
    %104 = vector.load %arg14[%c0_71, %c1_72, %c0_73] : memref<2x28x16xf32, #tpu.memory_space<vmem>>, vector<2x1x16xf32>
    %105 = vector.shape_cast %104 : vector<2x1x16xf32> to vector<2x16xf32>
    %106 = arith.addf %105, %94 : vector<2x16xf32>
    %107 = arith.negf %106 : vector<2x16xf32>
    %108 = math.exp %107 : vector<2x16xf32>
    %cst_74 = arith.constant 1.000000e+00 : f32
    %109 = vector.broadcast %cst_74 : f32 to vector<2x16xf32>
    %110 = arith.addf %109, %108 : vector<2x16xf32>
    %111 = arith.divf %109, %110 : vector<2x16xf32>
    %c0_75 = arith.constant 0 : index
    %c1_76 = arith.constant 1 : index
    %c0_77 = arith.constant 0 : index
    %112 = vector.load %arg15[%c0_75, %c1_76, %c0_77] : memref<2x28x16xf32, #tpu.memory_space<vmem>>, vector<2x1x16xf32>
    %113 = vector.shape_cast %112 : vector<2x1x16xf32> to vector<2x16xf32>
    %114 = vector.broadcast %9 : vector<1x16xf32> to vector<2x16xf32>
    %115 = arith.addf %95, %114 : vector<2x16xf32>
    %116 = arith.mulf %103, %115 : vector<2x16xf32>
    %117 = arith.addf %113, %116 : vector<2x16xf32>
    %118 = math.tanh %117 : vector<2x16xf32>
    %119 = arith.subf %85, %118 : vector<2x16xf32>
    %120 = arith.mulf %111, %119 : vector<2x16xf32>
    %121 = arith.addf %118, %120 : vector<2x16xf32>
    %cst_78 = arith.constant 0.000000e+00 : f32
    %122 = vector.broadcast %cst_78 : f32 to vector<2x16xf32>
    %123 = arith.maximumf %121, %122 : vector<2x16xf32>
    %124 = arith.truncf %123 : vector<2x16xf32> to vector<2x16xbf16>
    %c16_79 = arith.constant 16 : index
    %c0_80 = arith.constant 0 : index
    %125 = vector.load %arg6[%c16_79, %c0_80] : memref<448x64xbf16, #tpu.memory_space<vmem>>, vector<16x64xbf16>
    %cst_81 = arith.constant dense<0.000000e+00> : vector<2x64xf32>
    %126 = tpu.matmul %124, %125, %cst_81 {dimension_numbers = #tpu.dot_dimension_numbers<[1], [0], [0], [1], [0, 0, 1, 1], [], []>} : vector<2x16xbf16>, vector<16x64xbf16>, vector<2x64xf32> -> vector<2x64xf32>
    %127 = arith.addf %91, %126 : vector<2x64xf32>
    %128 = arith.truncf %121 : vector<2x16xf32> to vector<2x16xbf16>
    %cst_82 = arith.constant dense<0.000000e+00> : vector<2x16xf32>
    %129 = tpu.matmul %128, %3, %cst_82 {dimension_numbers = #tpu.dot_dimension_numbers<[1], [0], [0], [1], [0, 0, 1, 1], [], []>} : vector<2x16xbf16>, vector<16x16xbf16>, vector<2x16xf32> -> vector<2x16xf32>
    %cst_83 = arith.constant dense<0.000000e+00> : vector<2x16xf32>
    %130 = tpu.matmul %128, %4, %cst_83 {dimension_numbers = #tpu.dot_dimension_numbers<[1], [0], [0], [1], [0, 0, 1, 1], [], []>} : vector<2x16xbf16>, vector<16x16xbf16>, vector<2x16xf32> -> vector<2x16xf32>
    %cst_84 = arith.constant dense<0.000000e+00> : vector<2x16xf32>
    %131 = tpu.matmul %128, %5, %cst_84 {dimension_numbers = #tpu.dot_dimension_numbers<[1], [0], [0], [1], [0, 0, 1, 1], [], []>} : vector<2x16xbf16>, vector<16x16xbf16>, vector<2x16xf32> -> vector<2x16xf32>
    %c0_85 = arith.constant 0 : index
    %c2_86 = arith.constant 2 : index
    %c0_87 = arith.constant 0 : index
    %132 = vector.load %arg13[%c0_85, %c2_86, %c0_87] : memref<2x28x16xf32, #tpu.memory_space<vmem>>, vector<2x1x16xf32>
    %133 = vector.shape_cast %132 : vector<2x1x16xf32> to vector<2x16xf32>
    %134 = arith.addf %133, %129 : vector<2x16xf32>
    %135 = arith.negf %134 : vector<2x16xf32>
    %136 = math.exp %135 : vector<2x16xf32>
    %cst_88 = arith.constant 1.000000e+00 : f32
    %137 = vector.broadcast %cst_88 : f32 to vector<2x16xf32>
    %138 = arith.addf %137, %136 : vector<2x16xf32>
    %139 = arith.divf %137, %138 : vector<2x16xf32>
    %c0_89 = arith.constant 0 : index
    %c2_90 = arith.constant 2 : index
    %c0_91 = arith.constant 0 : index
    %140 = vector.load %arg14[%c0_89, %c2_90, %c0_91] : memref<2x28x16xf32, #tpu.memory_space<vmem>>, vector<2x1x16xf32>
    %141 = vector.shape_cast %140 : vector<2x1x16xf32> to vector<2x16xf32>
    %142 = arith.addf %141, %130 : vector<2x16xf32>
    %143 = arith.negf %142 : vector<2x16xf32>
    %144 = math.exp %143 : vector<2x16xf32>
    %cst_92 = arith.constant 1.000000e+00 : f32
    %145 = vector.broadcast %cst_92 : f32 to vector<2x16xf32>
    %146 = arith.addf %145, %144 : vector<2x16xf32>
    %147 = arith.divf %145, %146 : vector<2x16xf32>
    %c0_93 = arith.constant 0 : index
    %c2_94 = arith.constant 2 : index
    %c0_95 = arith.constant 0 : index
    %148 = vector.load %arg15[%c0_93, %c2_94, %c0_95] : memref<2x28x16xf32, #tpu.memory_space<vmem>>, vector<2x1x16xf32>
    %149 = vector.shape_cast %148 : vector<2x1x16xf32> to vector<2x16xf32>
    %150 = vector.broadcast %9 : vector<1x16xf32> to vector<2x16xf32>
    %151 = arith.addf %131, %150 : vector<2x16xf32>
    %152 = arith.mulf %139, %151 : vector<2x16xf32>
    %153 = arith.addf %149, %152 : vector<2x16xf32>
    %154 = math.tanh %153 : vector<2x16xf32>
    %155 = arith.subf %121, %154 : vector<2x16xf32>
    %156 = arith.mulf %147, %155 : vector<2x16xf32>
    %157 = arith.addf %154, %156 : vector<2x16xf32>
    %cst_96 = arith.constant 0.000000e+00 : f32
    %158 = vector.broadcast %cst_96 : f32 to vector<2x16xf32>
    %159 = arith.maximumf %157, %158 : vector<2x16xf32>
    %160 = arith.truncf %159 : vector<2x16xf32> to vector<2x16xbf16>
    %c32_97 = arith.constant 32 : index
    %c0_98 = arith.constant 0 : index
    %161 = vector.load %arg6[%c32_97, %c0_98] : memref<448x64xbf16, #tpu.memory_space<vmem>>, vector<16x64xbf16>
    %cst_99 = arith.constant dense<0.000000e+00> : vector<2x64xf32>
    %162 = tpu.matmul %160, %161, %cst_99 {dimension_numbers = #tpu.dot_dimension_numbers<[1], [0], [0], [1], [0, 0, 1, 1], [], []>} : vector<2x16xbf16>, vector<16x64xbf16>, vector<2x64xf32> -> vector<2x64xf32>
    %163 = arith.addf %127, %162 : vector<2x64xf32>
    %164 = arith.truncf %157 : vector<2x16xf32> to vector<2x16xbf16>
    %cst_100 = arith.constant dense<0.000000e+00> : vector<2x16xf32>
    %165 = tpu.matmul %164, %3, %cst_100 {dimension_numbers = #tpu.dot_dimension_numbers<[1], [0], [0], [1], [0, 0, 1, 1], [], []>} : vector<2x16xbf16>, vector<16x16xbf16>, vector<2x16xf32> -> vector<2x16xf32>
    %cst_101 = arith.constant dense<0.000000e+00> : vector<2x16xf32>
    %166 = tpu.matmul %164, %4, %cst_101 {dimension_numbers = #tpu.dot_dimension_numbers<[1], [0], [0], [1], [0, 0, 1, 1], [], []>} : vector<2x16xbf16>, vector<16x16xbf16>, vector<2x16xf32> -> vector<2x16xf32>
    %cst_102 = arith.constant dense<0.000000e+00> : vector<2x16xf32>
    %167 = tpu.matmul %164, %5, %cst_102 {dimension_numbers = #tpu.dot_dimension_numbers<[1], [0], [0], [1], [0, 0, 1, 1], [], []>} : vector<2x16xbf16>, vector<16x16xbf16>, vector<2x16xf32> -> vector<2x16xf32>
    %c0_103 = arith.constant 0 : index
    %c3_104 = arith.constant 3 : index
    %c0_105 = arith.constant 0 : index
    %168 = vector.load %arg13[%c0_103, %c3_104, %c0_105] : memref<2x28x16xf32, #tpu.memory_space<vmem>>, vector<2x1x16xf32>
    %169 = vector.shape_cast %168 : vector<2x1x16xf32> to vector<2x16xf32>
    %170 = arith.addf %169, %165 : vector<2x16xf32>
    %171 = arith.negf %170 : vector<2x16xf32>
    %172 = math.exp %171 : vector<2x16xf32>
    %cst_106 = arith.constant 1.000000e+00 : f32
    %173 = vector.broadcast %cst_106 : f32 to vector<2x16xf32>
    %174 = arith.addf %173, %172 : vector<2x16xf32>
    %175 = arith.divf %173, %174 : vector<2x16xf32>
    %c0_107 = arith.constant 0 : index
    %c3_108 = arith.constant 3 : index
    %c0_109 = arith.constant 0 : index
    %176 = vector.load %arg14[%c0_107, %c3_108, %c0_109] : memref<2x28x16xf32, #tpu.memory_space<vmem>>, vector<2x1x16xf32>
    %177 = vector.shape_cast %176 : vector<2x1x16xf32> to vector<2x16xf32>
    %178 = arith.addf %177, %166 : vector<2x16xf32>
    %179 = arith.negf %178 : vector<2x16xf32>
    %180 = math.exp %179 : vector<2x16xf32>
    %cst_110 = arith.constant 1.000000e+00 : f32
    %181 = vector.broadcast %cst_110 : f32 to vector<2x16xf32>
    %182 = arith.addf %181, %180 : vector<2x16xf32>
    %183 = arith.divf %181, %182 : vector<2x16xf32>
    %c0_111 = arith.constant 0 : index
    %c3_112 = arith.constant 3 : index
    %c0_113 = arith.constant 0 : index
    %184 = vector.load %arg15[%c0_111, %c3_112, %c0_113] : memref<2x28x16xf32, #tpu.memory_space<vmem>>, vector<2x1x16xf32>
    %185 = vector.shape_cast %184 : vector<2x1x16xf32> to vector<2x16xf32>
    %186 = vector.broadcast %9 : vector<1x16xf32> to vector<2x16xf32>
    %187 = arith.addf %167, %186 : vector<2x16xf32>
    %188 = arith.mulf %175, %187 : vector<2x16xf32>
    %189 = arith.addf %185, %188 : vector<2x16xf32>
    %190 = math.tanh %189 : vector<2x16xf32>
    %191 = arith.subf %157, %190 : vector<2x16xf32>
    %192 = arith.mulf %183, %191 : vector<2x16xf32>
    %193 = arith.addf %190, %192 : vector<2x16xf32>
    %cst_114 = arith.constant 0.000000e+00 : f32
    %194 = vector.broadcast %cst_114 : f32 to vector<2x16xf32>
    %195 = arith.maximumf %193, %194 : vector<2x16xf32>
    %196 = arith.truncf %195 : vector<2x16xf32> to vector<2x16xbf16>
    %c48 = arith.constant 48 : index
    %c0_115 = arith.constant 0 : index
    %197 = vector.load %arg6[%c48, %c0_115] : memref<448x64xbf16, #tpu.memory_space<vmem>>, vector<16x64xbf16>
    %cst_116 = arith.constant dense<0.000000e+00> : vector<2x64xf32>
    %198 = tpu.matmul %196, %197, %cst_116 {dimension_numbers = #tpu.dot_dimension_numbers<[1], [0], [0], [1], [0, 0, 1, 1], [], []>} : vector<2x16xbf16>, vector<16x64xbf16>, vector<2x64xf32> -> vector<2x64xf32>
    %199 = arith.addf %163, %198 : vector<2x64xf32>
    %200 = arith.truncf %193 : vector<2x16xf32> to vector<2x16xbf16>
    %cst_117 = arith.constant dense<0.000000e+00> : vector<2x16xf32>
    %201 = tpu.matmul %200, %3, %cst_117 {dimension_numbers = #tpu.dot_dimension_numbers<[1], [0], [0], [1], [0, 0, 1, 1], [], []>} : vector<2x16xbf16>, vector<16x16xbf16>, vector<2x16xf32> -> vector<2x16xf32>
    %cst_118 = arith.constant dense<0.000000e+00> : vector<2x16xf32>
    %202 = tpu.matmul %200, %4, %cst_118 {dimension_numbers = #tpu.dot_dimension_numbers<[1], [0], [0], [1], [0, 0, 1, 1], [], []>} : vector<2x16xbf16>, vector<16x16xbf16>, vector<2x16xf32> -> vector<2x16xf32>
    %cst_119 = arith.constant dense<0.000000e+00> : vector<2x16xf32>
    %203 = tpu.matmul %200, %5, %cst_119 {dimension_numbers = #tpu.dot_dimension_numbers<[1], [0], [0], [1], [0, 0, 1, 1], [], []>} : vector<2x16xbf16>, vector<16x16xbf16>, vector<2x16xf32> -> vector<2x16xf32>
    %c0_120 = arith.constant 0 : index
    %c4 = arith.constant 4 : index
    %c0_121 = arith.constant 0 : index
    %204 = vector.load %arg13[%c0_120, %c4, %c0_121] : memref<2x28x16xf32, #tpu.memory_space<vmem>>, vector<2x1x16xf32>
    %205 = vector.shape_cast %204 : vector<2x1x16xf32> to vector<2x16xf32>
    %206 = arith.addf %205, %201 : vector<2x16xf32>
    %207 = arith.negf %206 : vector<2x16xf32>
    %208 = math.exp %207 : vector<2x16xf32>
    %cst_122 = arith.constant 1.000000e+00 : f32
    %209 = vector.broadcast %cst_122 : f32 to vector<2x16xf32>
    %210 = arith.addf %209, %208 : vector<2x16xf32>
    %211 = arith.divf %209, %210 : vector<2x16xf32>
    %c0_123 = arith.constant 0 : index
    %c4_124 = arith.constant 4 : index
    %c0_125 = arith.constant 0 : index
    %212 = vector.load %arg14[%c0_123, %c4_124, %c0_125] : memref<2x28x16xf32, #tpu.memory_space<vmem>>, vector<2x1x16xf32>
    %213 = vector.shape_cast %212 : vector<2x1x16xf32> to vector<2x16xf32>
    %214 = arith.addf %213, %202 : vector<2x16xf32>
    %215 = arith.negf %214 : vector<2x16xf32>
    %216 = math.exp %215 : vector<2x16xf32>
    %cst_126 = arith.constant 1.000000e+00 : f32
    %217 = vector.broadcast %cst_126 : f32 to vector<2x16xf32>
    %218 = arith.addf %217, %216 : vector<2x16xf32>
    %219 = arith.divf %217, %218 : vector<2x16xf32>
    %c0_127 = arith.constant 0 : index
    %c4_128 = arith.constant 4 : index
    %c0_129 = arith.constant 0 : index
    %220 = vector.load %arg15[%c0_127, %c4_128, %c0_129] : memref<2x28x16xf32, #tpu.memory_space<vmem>>, vector<2x1x16xf32>
    %221 = vector.shape_cast %220 : vector<2x1x16xf32> to vector<2x16xf32>
    %222 = vector.broadcast %9 : vector<1x16xf32> to vector<2x16xf32>
    %223 = arith.addf %203, %222 : vector<2x16xf32>
    %224 = arith.mulf %211, %223 : vector<2x16xf32>
    %225 = arith.addf %221, %224 : vector<2x16xf32>
    %226 = math.tanh %225 : vector<2x16xf32>
    %227 = arith.subf %193, %226 : vector<2x16xf32>
    %228 = arith.mulf %219, %227 : vector<2x16xf32>
    %229 = arith.addf %226, %228 : vector<2x16xf32>
    %cst_130 = arith.constant 0.000000e+00 : f32
    %230 = vector.broadcast %cst_130 : f32 to vector<2x16xf32>
    %231 = arith.maximumf %229, %230 : vector<2x16xf32>
    %232 = arith.truncf %231 : vector<2x16xf32> to vector<2x16xbf16>
    %c64 = arith.constant 64 : index
    %c0_131 = arith.constant 0 : index
    %233 = vector.load %arg6[%c64, %c0_131] : memref<448x64xbf16, #tpu.memory_space<vmem>>, vector<16x64xbf16>
    %cst_132 = arith.constant dense<0.000000e+00> : vector<2x64xf32>
    %234 = tpu.matmul %232, %233, %cst_132 {dimension_numbers = #tpu.dot_dimension_numbers<[1], [0], [0], [1], [0, 0, 1, 1], [], []>} : vector<2x16xbf16>, vector<16x64xbf16>, vector<2x64xf32> -> vector<2x64xf32>
    %235 = arith.addf %199, %234 : vector<2x64xf32>
    %236 = arith.truncf %229 : vector<2x16xf32> to vector<2x16xbf16>
    %cst_133 = arith.constant dense<0.000000e+00> : vector<2x16xf32>
    %237 = tpu.matmul %236, %3, %cst_133 {dimension_numbers = #tpu.dot_dimension_numbers<[1], [0], [0], [1], [0, 0, 1, 1], [], []>} : vector<2x16xbf16>, vector<16x16xbf16>, vector<2x16xf32> -> vector<2x16xf32>
    %cst_134 = arith.constant dense<0.000000e+00> : vector<2x16xf32>
    %238 = tpu.matmul %236, %4, %cst_134 {dimension_numbers = #tpu.dot_dimension_numbers<[1], [0], [0], [1], [0, 0, 1, 1], [], []>} : vector<2x16xbf16>, vector<16x16xbf16>, vector<2x16xf32> -> vector<2x16xf32>
    %cst_135 = arith.constant dense<0.000000e+00> : vector<2x16xf32>
    %239 = tpu.matmul %236, %5, %cst_135 {dimension_numbers = #tpu.dot_dimension_numbers<[1], [0], [0], [1], [0, 0, 1, 1], [], []>} : vector<2x16xbf16>, vector<16x16xbf16>, vector<2x16xf32> -> vector<2x16xf32>
    %c0_136 = arith.constant 0 : index
    %c5 = arith.constant 5 : index
    %c0_137 = arith.constant 0 : index
    %240 = vector.load %arg13[%c0_136, %c5, %c0_137] : memref<2x28x16xf32, #tpu.memory_space<vmem>>, vector<2x1x16xf32>
    %241 = vector.shape_cast %240 : vector<2x1x16xf32> to vector<2x16xf32>
    %242 = arith.addf %241, %237 : vector<2x16xf32>
    %243 = arith.negf %242 : vector<2x16xf32>
    %244 = math.exp %243 : vector<2x16xf32>
    %cst_138 = arith.constant 1.000000e+00 : f32
    %245 = vector.broadcast %cst_138 : f32 to vector<2x16xf32>
    %246 = arith.addf %245, %244 : vector<2x16xf32>
    %247 = arith.divf %245, %246 : vector<2x16xf32>
    %c0_139 = arith.constant 0 : index
    %c5_140 = arith.constant 5 : index
    %c0_141 = arith.constant 0 : index
    %248 = vector.load %arg14[%c0_139, %c5_140, %c0_141] : memref<2x28x16xf32, #tpu.memory_space<vmem>>, vector<2x1x16xf32>
    %249 = vector.shape_cast %248 : vector<2x1x16xf32> to vector<2x16xf32>
    %250 = arith.addf %249, %238 : vector<2x16xf32>
    %251 = arith.negf %250 : vector<2x16xf32>
    %252 = math.exp %251 : vector<2x16xf32>
    %cst_142 = arith.constant 1.000000e+00 : f32
    %253 = vector.broadcast %cst_142 : f32 to vector<2x16xf32>
    %254 = arith.addf %253, %252 : vector<2x16xf32>
    %255 = arith.divf %253, %254 : vector<2x16xf32>
    %c0_143 = arith.constant 0 : index
    %c5_144 = arith.constant 5 : index
    %c0_145 = arith.constant 0 : index
    %256 = vector.load %arg15[%c0_143, %c5_144, %c0_145] : memref<2x28x16xf32, #tpu.memory_space<vmem>>, vector<2x1x16xf32>
    %257 = vector.shape_cast %256 : vector<2x1x16xf32> to vector<2x16xf32>
    %258 = vector.broadcast %9 : vector<1x16xf32> to vector<2x16xf32>
    %259 = arith.addf %239, %258 : vector<2x16xf32>
    %260 = arith.mulf %247, %259 : vector<2x16xf32>
    %261 = arith.addf %257, %260 : vector<2x16xf32>
    %262 = math.tanh %261 : vector<2x16xf32>
    %263 = arith.subf %229, %262 : vector<2x16xf32>
    %264 = arith.mulf %255, %263 : vector<2x16xf32>
    %265 = arith.addf %262, %264 : vector<2x16xf32>
    %cst_146 = arith.constant 0.000000e+00 : f32
    %266 = vector.broadcast %cst_146 : f32 to vector<2x16xf32>
    %267 = arith.maximumf %265, %266 : vector<2x16xf32>
    %268 = arith.truncf %267 : vector<2x16xf32> to vector<2x16xbf16>
    %c80 = arith.constant 80 : index
    %c0_147 = arith.constant 0 : index
    %269 = vector.load %arg6[%c80, %c0_147] : memref<448x64xbf16, #tpu.memory_space<vmem>>, vector<16x64xbf16>
    %cst_148 = arith.constant dense<0.000000e+00> : vector<2x64xf32>
    %270 = tpu.matmul %268, %269, %cst_148 {dimension_numbers = #tpu.dot_dimension_numbers<[1], [0], [0], [1], [0, 0, 1, 1], [], []>} : vector<2x16xbf16>, vector<16x64xbf16>, vector<2x64xf32> -> vector<2x64xf32>
    %271 = arith.addf %235, %270 : vector<2x64xf32>
    %272 = arith.truncf %265 : vector<2x16xf32> to vector<2x16xbf16>
    %cst_149 = arith.constant dense<0.000000e+00> : vector<2x16xf32>
    %273 = tpu.matmul %272, %3, %cst_149 {dimension_numbers = #tpu.dot_dimension_numbers<[1], [0], [0], [1], [0, 0, 1, 1], [], []>} : vector<2x16xbf16>, vector<16x16xbf16>, vector<2x16xf32> -> vector<2x16xf32>
    %cst_150 = arith.constant dense<0.000000e+00> : vector<2x16xf32>
    %274 = tpu.matmul %272, %4, %cst_150 {dimension_numbers = #tpu.dot_dimension_numbers<[1], [0], [0], [1], [0, 0, 1, 1], [], []>} : vector<2x16xbf16>, vector<16x16xbf16>, vector<2x16xf32> -> vector<2x16xf32>
    %cst_151 = arith.constant dense<0.000000e+00> : vector<2x16xf32>
    %275 = tpu.matmul %272, %5, %cst_151 {dimension_numbers = #tpu.dot_dimension_numbers<[1], [0], [0], [1], [0, 0, 1, 1], [], []>} : vector<2x16xbf16>, vector<16x16xbf16>, vector<2x16xf32> -> vector<2x16xf32>
    %c0_152 = arith.constant 0 : index
    %c6 = arith.constant 6 : index
    %c0_153 = arith.constant 0 : index
    %276 = vector.load %arg13[%c0_152, %c6, %c0_153] : memref<2x28x16xf32, #tpu.memory_space<vmem>>, vector<2x1x16xf32>
    %277 = vector.shape_cast %276 : vector<2x1x16xf32> to vector<2x16xf32>
    %278 = arith.addf %277, %273 : vector<2x16xf32>
    %279 = arith.negf %278 : vector<2x16xf32>
    %280 = math.exp %279 : vector<2x16xf32>
    %cst_154 = arith.constant 1.000000e+00 : f32
    %281 = vector.broadcast %cst_154 : f32 to vector<2x16xf32>
    %282 = arith.addf %281, %280 : vector<2x16xf32>
    %283 = arith.divf %281, %282 : vector<2x16xf32>
    %c0_155 = arith.constant 0 : index
    %c6_156 = arith.constant 6 : index
    %c0_157 = arith.constant 0 : index
    %284 = vector.load %arg14[%c0_155, %c6_156, %c0_157] : memref<2x28x16xf32, #tpu.memory_space<vmem>>, vector<2x1x16xf32>
    %285 = vector.shape_cast %284 : vector<2x1x16xf32> to vector<2x16xf32>
    %286 = arith.addf %285, %274 : vector<2x16xf32>
    %287 = arith.negf %286 : vector<2x16xf32>
    %288 = math.exp %287 : vector<2x16xf32>
    %cst_158 = arith.constant 1.000000e+00 : f32
    %289 = vector.broadcast %cst_158 : f32 to vector<2x16xf32>
    %290 = arith.addf %289, %288 : vector<2x16xf32>
    %291 = arith.divf %289, %290 : vector<2x16xf32>
    %c0_159 = arith.constant 0 : index
    %c6_160 = arith.constant 6 : index
    %c0_161 = arith.constant 0 : index
    %292 = vector.load %arg15[%c0_159, %c6_160, %c0_161] : memref<2x28x16xf32, #tpu.memory_space<vmem>>, vector<2x1x16xf32>
    %293 = vector.shape_cast %292 : vector<2x1x16xf32> to vector<2x16xf32>
    %294 = vector.broadcast %9 : vector<1x16xf32> to vector<2x16xf32>
    %295 = arith.addf %275, %294 : vector<2x16xf32>
    %296 = arith.mulf %283, %295 : vector<2x16xf32>
    %297 = arith.addf %293, %296 : vector<2x16xf32>
    %298 = math.tanh %297 : vector<2x16xf32>
    %299 = arith.subf %265, %298 : vector<2x16xf32>
    %300 = arith.mulf %291, %299 : vector<2x16xf32>
    %301 = arith.addf %298, %300 : vector<2x16xf32>
    %cst_162 = arith.constant 0.000000e+00 : f32
    %302 = vector.broadcast %cst_162 : f32 to vector<2x16xf32>
    %303 = arith.maximumf %301, %302 : vector<2x16xf32>
    %304 = arith.truncf %303 : vector<2x16xf32> to vector<2x16xbf16>
    %c96 = arith.constant 96 : index
    %c0_163 = arith.constant 0 : index
    %305 = vector.load %arg6[%c96, %c0_163] : memref<448x64xbf16, #tpu.memory_space<vmem>>, vector<16x64xbf16>
    %cst_164 = arith.constant dense<0.000000e+00> : vector<2x64xf32>
    %306 = tpu.matmul %304, %305, %cst_164 {dimension_numbers = #tpu.dot_dimension_numbers<[1], [0], [0], [1], [0, 0, 1, 1], [], []>} : vector<2x16xbf16>, vector<16x64xbf16>, vector<2x64xf32> -> vector<2x64xf32>
    %307 = arith.addf %271, %306 : vector<2x64xf32>
    %308 = arith.truncf %301 : vector<2x16xf32> to vector<2x16xbf16>
    %cst_165 = arith.constant dense<0.000000e+00> : vector<2x16xf32>
    %309 = tpu.matmul %308, %3, %cst_165 {dimension_numbers = #tpu.dot_dimension_numbers<[1], [0], [0], [1], [0, 0, 1, 1], [], []>} : vector<2x16xbf16>, vector<16x16xbf16>, vector<2x16xf32> -> vector<2x16xf32>
    %cst_166 = arith.constant dense<0.000000e+00> : vector<2x16xf32>
    %310 = tpu.matmul %308, %4, %cst_166 {dimension_numbers = #tpu.dot_dimension_numbers<[1], [0], [0], [1], [0, 0, 1, 1], [], []>} : vector<2x16xbf16>, vector<16x16xbf16>, vector<2x16xf32> -> vector<2x16xf32>
    %cst_167 = arith.constant dense<0.000000e+00> : vector<2x16xf32>
    %311 = tpu.matmul %308, %5, %cst_167 {dimension_numbers = #tpu.dot_dimension_numbers<[1], [0], [0], [1], [0, 0, 1, 1], [], []>} : vector<2x16xbf16>, vector<16x16xbf16>, vector<2x16xf32> -> vector<2x16xf32>
    %c0_168 = arith.constant 0 : index
    %c7 = arith.constant 7 : index
    %c0_169 = arith.constant 0 : index
    %312 = vector.load %arg13[%c0_168, %c7, %c0_169] : memref<2x28x16xf32, #tpu.memory_space<vmem>>, vector<2x1x16xf32>
    %313 = vector.shape_cast %312 : vector<2x1x16xf32> to vector<2x16xf32>
    %314 = arith.addf %313, %309 : vector<2x16xf32>
    %315 = arith.negf %314 : vector<2x16xf32>
    %316 = math.exp %315 : vector<2x16xf32>
    %cst_170 = arith.constant 1.000000e+00 : f32
    %317 = vector.broadcast %cst_170 : f32 to vector<2x16xf32>
    %318 = arith.addf %317, %316 : vector<2x16xf32>
    %319 = arith.divf %317, %318 : vector<2x16xf32>
    %c0_171 = arith.constant 0 : index
    %c7_172 = arith.constant 7 : index
    %c0_173 = arith.constant 0 : index
    %320 = vector.load %arg14[%c0_171, %c7_172, %c0_173] : memref<2x28x16xf32, #tpu.memory_space<vmem>>, vector<2x1x16xf32>
    %321 = vector.shape_cast %320 : vector<2x1x16xf32> to vector<2x16xf32>
    %322 = arith.addf %321, %310 : vector<2x16xf32>
    %323 = arith.negf %322 : vector<2x16xf32>
    %324 = math.exp %323 : vector<2x16xf32>
    %cst_174 = arith.constant 1.000000e+00 : f32
    %325 = vector.broadcast %cst_174 : f32 to vector<2x16xf32>
    %326 = arith.addf %325, %324 : vector<2x16xf32>
    %327 = arith.divf %325, %326 : vector<2x16xf32>
    %c0_175 = arith.constant 0 : index
    %c7_176 = arith.constant 7 : index
    %c0_177 = arith.constant 0 : index
    %328 = vector.load %arg15[%c0_175, %c7_176, %c0_177] : memref<2x28x16xf32, #tpu.memory_space<vmem>>, vector<2x1x16xf32>
    %329 = vector.shape_cast %328 : vector<2x1x16xf32> to vector<2x16xf32>
    %330 = vector.broadcast %9 : vector<1x16xf32> to vector<2x16xf32>
    %331 = arith.addf %311, %330 : vector<2x16xf32>
    %332 = arith.mulf %319, %331 : vector<2x16xf32>
    %333 = arith.addf %329, %332 : vector<2x16xf32>
    %334 = math.tanh %333 : vector<2x16xf32>
    %335 = arith.subf %301, %334 : vector<2x16xf32>
    %336 = arith.mulf %327, %335 : vector<2x16xf32>
    %337 = arith.addf %334, %336 : vector<2x16xf32>
    %cst_178 = arith.constant 0.000000e+00 : f32
    %338 = vector.broadcast %cst_178 : f32 to vector<2x16xf32>
    %339 = arith.maximumf %337, %338 : vector<2x16xf32>
    %340 = arith.truncf %339 : vector<2x16xf32> to vector<2x16xbf16>
    %c112 = arith.constant 112 : index
    %c0_179 = arith.constant 0 : index
    %341 = vector.load %arg6[%c112, %c0_179] : memref<448x64xbf16, #tpu.memory_space<vmem>>, vector<16x64xbf16>
    %cst_180 = arith.constant dense<0.000000e+00> : vector<2x64xf32>
    %342 = tpu.matmul %340, %341, %cst_180 {dimension_numbers = #tpu.dot_dimension_numbers<[1], [0], [0], [1], [0, 0, 1, 1], [], []>} : vector<2x16xbf16>, vector<16x64xbf16>, vector<2x64xf32> -> vector<2x64xf32>
    %343 = arith.addf %307, %342 : vector<2x64xf32>
    %344 = arith.truncf %337 : vector<2x16xf32> to vector<2x16xbf16>
    %cst_181 = arith.constant dense<0.000000e+00> : vector<2x16xf32>
    %345 = tpu.matmul %344, %3, %cst_181 {dimension_numbers = #tpu.dot_dimension_numbers<[1], [0], [0], [1], [0, 0, 1, 1], [], []>} : vector<2x16xbf16>, vector<16x16xbf16>, vector<2x16xf32> -> vector<2x16xf32>
    %cst_182 = arith.constant dense<0.000000e+00> : vector<2x16xf32>
    %346 = tpu.matmul %344, %4, %cst_182 {dimension_numbers = #tpu.dot_dimension_numbers<[1], [0], [0], [1], [0, 0, 1, 1], [], []>} : vector<2x16xbf16>, vector<16x16xbf16>, vector<2x16xf32> -> vector<2x16xf32>
    %cst_183 = arith.constant dense<0.000000e+00> : vector<2x16xf32>
    %347 = tpu.matmul %344, %5, %cst_183 {dimension_numbers = #tpu.dot_dimension_numbers<[1], [0], [0], [1], [0, 0, 1, 1], [], []>} : vector<2x16xbf16>, vector<16x16xbf16>, vector<2x16xf32> -> vector<2x16xf32>
    %c0_184 = arith.constant 0 : index
    %c8 = arith.constant 8 : index
    %c0_185 = arith.constant 0 : index
    %348 = vector.load %arg13[%c0_184, %c8, %c0_185] : memref<2x28x16xf32, #tpu.memory_space<vmem>>, vector<2x1x16xf32>
    %349 = vector.shape_cast %348 : vector<2x1x16xf32> to vector<2x16xf32>
    %350 = arith.addf %349, %345 : vector<2x16xf32>
    %351 = arith.negf %350 : vector<2x16xf32>
    %352 = math.exp %351 : vector<2x16xf32>
    %cst_186 = arith.constant 1.000000e+00 : f32
    %353 = vector.broadcast %cst_186 : f32 to vector<2x16xf32>
    %354 = arith.addf %353, %352 : vector<2x16xf32>
    %355 = arith.divf %353, %354 : vector<2x16xf32>
    %c0_187 = arith.constant 0 : index
    %c8_188 = arith.constant 8 : index
    %c0_189 = arith.constant 0 : index
    %356 = vector.load %arg14[%c0_187, %c8_188, %c0_189] : memref<2x28x16xf32, #tpu.memory_space<vmem>>, vector<2x1x16xf32>
    %357 = vector.shape_cast %356 : vector<2x1x16xf32> to vector<2x16xf32>
    %358 = arith.addf %357, %346 : vector<2x16xf32>
    %359 = arith.negf %358 : vector<2x16xf32>
    %360 = math.exp %359 : vector<2x16xf32>
    %cst_190 = arith.constant 1.000000e+00 : f32
    %361 = vector.broadcast %cst_190 : f32 to vector<2x16xf32>
    %362 = arith.addf %361, %360 : vector<2x16xf32>
    %363 = arith.divf %361, %362 : vector<2x16xf32>
    %c0_191 = arith.constant 0 : index
    %c8_192 = arith.constant 8 : index
    %c0_193 = arith.constant 0 : index
    %364 = vector.load %arg15[%c0_191, %c8_192, %c0_193] : memref<2x28x16xf32, #tpu.memory_space<vmem>>, vector<2x1x16xf32>
    %365 = vector.shape_cast %364 : vector<2x1x16xf32> to vector<2x16xf32>
    %366 = vector.broadcast %9 : vector<1x16xf32> to vector<2x16xf32>
    %367 = arith.addf %347, %366 : vector<2x16xf32>
    %368 = arith.mulf %355, %367 : vector<2x16xf32>
    %369 = arith.addf %365, %368 : vector<2x16xf32>
    %370 = math.tanh %369 : vector<2x16xf32>
    %371 = arith.subf %337, %370 : vector<2x16xf32>
    %372 = arith.mulf %363, %371 : vector<2x16xf32>
    %373 = arith.addf %370, %372 : vector<2x16xf32>
    %cst_194 = arith.constant 0.000000e+00 : f32
    %374 = vector.broadcast %cst_194 : f32 to vector<2x16xf32>
    %375 = arith.maximumf %373, %374 : vector<2x16xf32>
    %376 = arith.truncf %375 : vector<2x16xf32> to vector<2x16xbf16>
    %c128 = arith.constant 128 : index
    %c0_195 = arith.constant 0 : index
    %377 = vector.load %arg6[%c128, %c0_195] : memref<448x64xbf16, #tpu.memory_space<vmem>>, vector<16x64xbf16>
    %cst_196 = arith.constant dense<0.000000e+00> : vector<2x64xf32>
    %378 = tpu.matmul %376, %377, %cst_196 {dimension_numbers = #tpu.dot_dimension_numbers<[1], [0], [0], [1], [0, 0, 1, 1], [], []>} : vector<2x16xbf16>, vector<16x64xbf16>, vector<2x64xf32> -> vector<2x64xf32>
    %379 = arith.addf %343, %378 : vector<2x64xf32>
    %380 = arith.truncf %373 : vector<2x16xf32> to vector<2x16xbf16>
    %cst_197 = arith.constant dense<0.000000e+00> : vector<2x16xf32>
    %381 = tpu.matmul %380, %3, %cst_197 {dimension_numbers = #tpu.dot_dimension_numbers<[1], [0], [0], [1], [0, 0, 1, 1], [], []>} : vector<2x16xbf16>, vector<16x16xbf16>, vector<2x16xf32> -> vector<2x16xf32>
    %cst_198 = arith.constant dense<0.000000e+00> : vector<2x16xf32>
    %382 = tpu.matmul %380, %4, %cst_198 {dimension_numbers = #tpu.dot_dimension_numbers<[1], [0], [0], [1], [0, 0, 1, 1], [], []>} : vector<2x16xbf16>, vector<16x16xbf16>, vector<2x16xf32> -> vector<2x16xf32>
    %cst_199 = arith.constant dense<0.000000e+00> : vector<2x16xf32>
    %383 = tpu.matmul %380, %5, %cst_199 {dimension_numbers = #tpu.dot_dimension_numbers<[1], [0], [0], [1], [0, 0, 1, 1], [], []>} : vector<2x16xbf16>, vector<16x16xbf16>, vector<2x16xf32> -> vector<2x16xf32>
    %c0_200 = arith.constant 0 : index
    %c9 = arith.constant 9 : index
    %c0_201 = arith.constant 0 : index
    %384 = vector.load %arg13[%c0_200, %c9, %c0_201] : memref<2x28x16xf32, #tpu.memory_space<vmem>>, vector<2x1x16xf32>
    %385 = vector.shape_cast %384 : vector<2x1x16xf32> to vector<2x16xf32>
    %386 = arith.addf %385, %381 : vector<2x16xf32>
    %387 = arith.negf %386 : vector<2x16xf32>
    %388 = math.exp %387 : vector<2x16xf32>
    %cst_202 = arith.constant 1.000000e+00 : f32
    %389 = vector.broadcast %cst_202 : f32 to vector<2x16xf32>
    %390 = arith.addf %389, %388 : vector<2x16xf32>
    %391 = arith.divf %389, %390 : vector<2x16xf32>
    %c0_203 = arith.constant 0 : index
    %c9_204 = arith.constant 9 : index
    %c0_205 = arith.constant 0 : index
    %392 = vector.load %arg14[%c0_203, %c9_204, %c0_205] : memref<2x28x16xf32, #tpu.memory_space<vmem>>, vector<2x1x16xf32>
    %393 = vector.shape_cast %392 : vector<2x1x16xf32> to vector<2x16xf32>
    %394 = arith.addf %393, %382 : vector<2x16xf32>
    %395 = arith.negf %394 : vector<2x16xf32>
    %396 = math.exp %395 : vector<2x16xf32>
    %cst_206 = arith.constant 1.000000e+00 : f32
    %397 = vector.broadcast %cst_206 : f32 to vector<2x16xf32>
    %398 = arith.addf %397, %396 : vector<2x16xf32>
    %399 = arith.divf %397, %398 : vector<2x16xf32>
    %c0_207 = arith.constant 0 : index
    %c9_208 = arith.constant 9 : index
    %c0_209 = arith.constant 0 : index
    %400 = vector.load %arg15[%c0_207, %c9_208, %c0_209] : memref<2x28x16xf32, #tpu.memory_space<vmem>>, vector<2x1x16xf32>
    %401 = vector.shape_cast %400 : vector<2x1x16xf32> to vector<2x16xf32>
    %402 = vector.broadcast %9 : vector<1x16xf32> to vector<2x16xf32>
    %403 = arith.addf %383, %402 : vector<2x16xf32>
    %404 = arith.mulf %391, %403 : vector<2x16xf32>
    %405 = arith.addf %401, %404 : vector<2x16xf32>
    %406 = math.tanh %405 : vector<2x16xf32>
    %407 = arith.subf %373, %406 : vector<2x16xf32>
    %408 = arith.mulf %399, %407 : vector<2x16xf32>
    %409 = arith.addf %406, %408 : vector<2x16xf32>
    %cst_210 = arith.constant 0.000000e+00 : f32
    %410 = vector.broadcast %cst_210 : f32 to vector<2x16xf32>
    %411 = arith.maximumf %409, %410 : vector<2x16xf32>
    %412 = arith.truncf %411 : vector<2x16xf32> to vector<2x16xbf16>
    %c144 = arith.constant 144 : index
    %c0_211 = arith.constant 0 : index
    %413 = vector.load %arg6[%c144, %c0_211] : memref<448x64xbf16, #tpu.memory_space<vmem>>, vector<16x64xbf16>
    %cst_212 = arith.constant dense<0.000000e+00> : vector<2x64xf32>
    %414 = tpu.matmul %412, %413, %cst_212 {dimension_numbers = #tpu.dot_dimension_numbers<[1], [0], [0], [1], [0, 0, 1, 1], [], []>} : vector<2x16xbf16>, vector<16x64xbf16>, vector<2x64xf32> -> vector<2x64xf32>
    %415 = arith.addf %379, %414 : vector<2x64xf32>
    %416 = arith.truncf %409 : vector<2x16xf32> to vector<2x16xbf16>
    %cst_213 = arith.constant dense<0.000000e+00> : vector<2x16xf32>
    %417 = tpu.matmul %416, %3, %cst_213 {dimension_numbers = #tpu.dot_dimension_numbers<[1], [0], [0], [1], [0, 0, 1, 1], [], []>} : vector<2x16xbf16>, vector<16x16xbf16>, vector<2x16xf32> -> vector<2x16xf32>
    %cst_214 = arith.constant dense<0.000000e+00> : vector<2x16xf32>
    %418 = tpu.matmul %416, %4, %cst_214 {dimension_numbers = #tpu.dot_dimension_numbers<[1], [0], [0], [1], [0, 0, 1, 1], [], []>} : vector<2x16xbf16>, vector<16x16xbf16>, vector<2x16xf32> -> vector<2x16xf32>
    %cst_215 = arith.constant dense<0.000000e+00> : vector<2x16xf32>
    %419 = tpu.matmul %416, %5, %cst_215 {dimension_numbers = #tpu.dot_dimension_numbers<[1], [0], [0], [1], [0, 0, 1, 1], [], []>} : vector<2x16xbf16>, vector<16x16xbf16>, vector<2x16xf32> -> vector<2x16xf32>
    %c0_216 = arith.constant 0 : index
    %c10 = arith.constant 10 : index
    %c0_217 = arith.constant 0 : index
    %420 = vector.load %arg13[%c0_216, %c10, %c0_217] : memref<2x28x16xf32, #tpu.memory_space<vmem>>, vector<2x1x16xf32>
    %421 = vector.shape_cast %420 : vector<2x1x16xf32> to vector<2x16xf32>
    %422 = arith.addf %421, %417 : vector<2x16xf32>
    %423 = arith.negf %422 : vector<2x16xf32>
    %424 = math.exp %423 : vector<2x16xf32>
    %cst_218 = arith.constant 1.000000e+00 : f32
    %425 = vector.broadcast %cst_218 : f32 to vector<2x16xf32>
    %426 = arith.addf %425, %424 : vector<2x16xf32>
    %427 = arith.divf %425, %426 : vector<2x16xf32>
    %c0_219 = arith.constant 0 : index
    %c10_220 = arith.constant 10 : index
    %c0_221 = arith.constant 0 : index
    %428 = vector.load %arg14[%c0_219, %c10_220, %c0_221] : memref<2x28x16xf32, #tpu.memory_space<vmem>>, vector<2x1x16xf32>
    %429 = vector.shape_cast %428 : vector<2x1x16xf32> to vector<2x16xf32>
    %430 = arith.addf %429, %418 : vector<2x16xf32>
    %431 = arith.negf %430 : vector<2x16xf32>
    %432 = math.exp %431 : vector<2x16xf32>
    %cst_222 = arith.constant 1.000000e+00 : f32
    %433 = vector.broadcast %cst_222 : f32 to vector<2x16xf32>
    %434 = arith.addf %433, %432 : vector<2x16xf32>
    %435 = arith.divf %433, %434 : vector<2x16xf32>
    %c0_223 = arith.constant 0 : index
    %c10_224 = arith.constant 10 : index
    %c0_225 = arith.constant 0 : index
    %436 = vector.load %arg15[%c0_223, %c10_224, %c0_225] : memref<2x28x16xf32, #tpu.memory_space<vmem>>, vector<2x1x16xf32>
    %437 = vector.shape_cast %436 : vector<2x1x16xf32> to vector<2x16xf32>
    %438 = vector.broadcast %9 : vector<1x16xf32> to vector<2x16xf32>
    %439 = arith.addf %419, %438 : vector<2x16xf32>
    %440 = arith.mulf %427, %439 : vector<2x16xf32>
    %441 = arith.addf %437, %440 : vector<2x16xf32>
    %442 = math.tanh %441 : vector<2x16xf32>
    %443 = arith.subf %409, %442 : vector<2x16xf32>
    %444 = arith.mulf %435, %443 : vector<2x16xf32>
    %445 = arith.addf %442, %444 : vector<2x16xf32>
    %cst_226 = arith.constant 0.000000e+00 : f32
    %446 = vector.broadcast %cst_226 : f32 to vector<2x16xf32>
    %447 = arith.maximumf %445, %446 : vector<2x16xf32>
    %448 = arith.truncf %447 : vector<2x16xf32> to vector<2x16xbf16>
    %c160 = arith.constant 160 : index
    %c0_227 = arith.constant 0 : index
    %449 = vector.load %arg6[%c160, %c0_227] : memref<448x64xbf16, #tpu.memory_space<vmem>>, vector<16x64xbf16>
    %cst_228 = arith.constant dense<0.000000e+00> : vector<2x64xf32>
    %450 = tpu.matmul %448, %449, %cst_228 {dimension_numbers = #tpu.dot_dimension_numbers<[1], [0], [0], [1], [0, 0, 1, 1], [], []>} : vector<2x16xbf16>, vector<16x64xbf16>, vector<2x64xf32> -> vector<2x64xf32>
    %451 = arith.addf %415, %450 : vector<2x64xf32>
    %452 = arith.truncf %445 : vector<2x16xf32> to vector<2x16xbf16>
    %cst_229 = arith.constant dense<0.000000e+00> : vector<2x16xf32>
    %453 = tpu.matmul %452, %3, %cst_229 {dimension_numbers = #tpu.dot_dimension_numbers<[1], [0], [0], [1], [0, 0, 1, 1], [], []>} : vector<2x16xbf16>, vector<16x16xbf16>, vector<2x16xf32> -> vector<2x16xf32>
    %cst_230 = arith.constant dense<0.000000e+00> : vector<2x16xf32>
    %454 = tpu.matmul %452, %4, %cst_230 {dimension_numbers = #tpu.dot_dimension_numbers<[1], [0], [0], [1], [0, 0, 1, 1], [], []>} : vector<2x16xbf16>, vector<16x16xbf16>, vector<2x16xf32> -> vector<2x16xf32>
    %cst_231 = arith.constant dense<0.000000e+00> : vector<2x16xf32>
    %455 = tpu.matmul %452, %5, %cst_231 {dimension_numbers = #tpu.dot_dimension_numbers<[1], [0], [0], [1], [0, 0, 1, 1], [], []>} : vector<2x16xbf16>, vector<16x16xbf16>, vector<2x16xf32> -> vector<2x16xf32>
    %c0_232 = arith.constant 0 : index
    %c11 = arith.constant 11 : index
    %c0_233 = arith.constant 0 : index
    %456 = vector.load %arg13[%c0_232, %c11, %c0_233] : memref<2x28x16xf32, #tpu.memory_space<vmem>>, vector<2x1x16xf32>
    %457 = vector.shape_cast %456 : vector<2x1x16xf32> to vector<2x16xf32>
    %458 = arith.addf %457, %453 : vector<2x16xf32>
    %459 = arith.negf %458 : vector<2x16xf32>
    %460 = math.exp %459 : vector<2x16xf32>
    %cst_234 = arith.constant 1.000000e+00 : f32
    %461 = vector.broadcast %cst_234 : f32 to vector<2x16xf32>
    %462 = arith.addf %461, %460 : vector<2x16xf32>
    %463 = arith.divf %461, %462 : vector<2x16xf32>
    %c0_235 = arith.constant 0 : index
    %c11_236 = arith.constant 11 : index
    %c0_237 = arith.constant 0 : index
    %464 = vector.load %arg14[%c0_235, %c11_236, %c0_237] : memref<2x28x16xf32, #tpu.memory_space<vmem>>, vector<2x1x16xf32>
    %465 = vector.shape_cast %464 : vector<2x1x16xf32> to vector<2x16xf32>
    %466 = arith.addf %465, %454 : vector<2x16xf32>
    %467 = arith.negf %466 : vector<2x16xf32>
    %468 = math.exp %467 : vector<2x16xf32>
    %cst_238 = arith.constant 1.000000e+00 : f32
    %469 = vector.broadcast %cst_238 : f32 to vector<2x16xf32>
    %470 = arith.addf %469, %468 : vector<2x16xf32>
    %471 = arith.divf %469, %470 : vector<2x16xf32>
    %c0_239 = arith.constant 0 : index
    %c11_240 = arith.constant 11 : index
    %c0_241 = arith.constant 0 : index
    %472 = vector.load %arg15[%c0_239, %c11_240, %c0_241] : memref<2x28x16xf32, #tpu.memory_space<vmem>>, vector<2x1x16xf32>
    %473 = vector.shape_cast %472 : vector<2x1x16xf32> to vector<2x16xf32>
    %474 = vector.broadcast %9 : vector<1x16xf32> to vector<2x16xf32>
    %475 = arith.addf %455, %474 : vector<2x16xf32>
    %476 = arith.mulf %463, %475 : vector<2x16xf32>
    %477 = arith.addf %473, %476 : vector<2x16xf32>
    %478 = math.tanh %477 : vector<2x16xf32>
    %479 = arith.subf %445, %478 : vector<2x16xf32>
    %480 = arith.mulf %471, %479 : vector<2x16xf32>
    %481 = arith.addf %478, %480 : vector<2x16xf32>
    %cst_242 = arith.constant 0.000000e+00 : f32
    %482 = vector.broadcast %cst_242 : f32 to vector<2x16xf32>
    %483 = arith.maximumf %481, %482 : vector<2x16xf32>
    %484 = arith.truncf %483 : vector<2x16xf32> to vector<2x16xbf16>
    %c176 = arith.constant 176 : index
    %c0_243 = arith.constant 0 : index
    %485 = vector.load %arg6[%c176, %c0_243] : memref<448x64xbf16, #tpu.memory_space<vmem>>, vector<16x64xbf16>
    %cst_244 = arith.constant dense<0.000000e+00> : vector<2x64xf32>
    %486 = tpu.matmul %484, %485, %cst_244 {dimension_numbers = #tpu.dot_dimension_numbers<[1], [0], [0], [1], [0, 0, 1, 1], [], []>} : vector<2x16xbf16>, vector<16x64xbf16>, vector<2x64xf32> -> vector<2x64xf32>
    %487 = arith.addf %451, %486 : vector<2x64xf32>
    %488 = arith.truncf %481 : vector<2x16xf32> to vector<2x16xbf16>
    %cst_245 = arith.constant dense<0.000000e+00> : vector<2x16xf32>
    %489 = tpu.matmul %488, %3, %cst_245 {dimension_numbers = #tpu.dot_dimension_numbers<[1], [0], [0], [1], [0, 0, 1, 1], [], []>} : vector<2x16xbf16>, vector<16x16xbf16>, vector<2x16xf32> -> vector<2x16xf32>
    %cst_246 = arith.constant dense<0.000000e+00> : vector<2x16xf32>
    %490 = tpu.matmul %488, %4, %cst_246 {dimension_numbers = #tpu.dot_dimension_numbers<[1], [0], [0], [1], [0, 0, 1, 1], [], []>} : vector<2x16xbf16>, vector<16x16xbf16>, vector<2x16xf32> -> vector<2x16xf32>
    %cst_247 = arith.constant dense<0.000000e+00> : vector<2x16xf32>
    %491 = tpu.matmul %488, %5, %cst_247 {dimension_numbers = #tpu.dot_dimension_numbers<[1], [0], [0], [1], [0, 0, 1, 1], [], []>} : vector<2x16xbf16>, vector<16x16xbf16>, vector<2x16xf32> -> vector<2x16xf32>
    %c0_248 = arith.constant 0 : index
    %c12 = arith.constant 12 : index
    %c0_249 = arith.constant 0 : index
    %492 = vector.load %arg13[%c0_248, %c12, %c0_249] : memref<2x28x16xf32, #tpu.memory_space<vmem>>, vector<2x1x16xf32>
    %493 = vector.shape_cast %492 : vector<2x1x16xf32> to vector<2x16xf32>
    %494 = arith.addf %493, %489 : vector<2x16xf32>
    %495 = arith.negf %494 : vector<2x16xf32>
    %496 = math.exp %495 : vector<2x16xf32>
    %cst_250 = arith.constant 1.000000e+00 : f32
    %497 = vector.broadcast %cst_250 : f32 to vector<2x16xf32>
    %498 = arith.addf %497, %496 : vector<2x16xf32>
    %499 = arith.divf %497, %498 : vector<2x16xf32>
    %c0_251 = arith.constant 0 : index
    %c12_252 = arith.constant 12 : index
    %c0_253 = arith.constant 0 : index
    %500 = vector.load %arg14[%c0_251, %c12_252, %c0_253] : memref<2x28x16xf32, #tpu.memory_space<vmem>>, vector<2x1x16xf32>
    %501 = vector.shape_cast %500 : vector<2x1x16xf32> to vector<2x16xf32>
    %502 = arith.addf %501, %490 : vector<2x16xf32>
    %503 = arith.negf %502 : vector<2x16xf32>
    %504 = math.exp %503 : vector<2x16xf32>
    %cst_254 = arith.constant 1.000000e+00 : f32
    %505 = vector.broadcast %cst_254 : f32 to vector<2x16xf32>
    %506 = arith.addf %505, %504 : vector<2x16xf32>
    %507 = arith.divf %505, %506 : vector<2x16xf32>
    %c0_255 = arith.constant 0 : index
    %c12_256 = arith.constant 12 : index
    %c0_257 = arith.constant 0 : index
    %508 = vector.load %arg15[%c0_255, %c12_256, %c0_257] : memref<2x28x16xf32, #tpu.memory_space<vmem>>, vector<2x1x16xf32>
    %509 = vector.shape_cast %508 : vector<2x1x16xf32> to vector<2x16xf32>
    %510 = vector.broadcast %9 : vector<1x16xf32> to vector<2x16xf32>
    %511 = arith.addf %491, %510 : vector<2x16xf32>
    %512 = arith.mulf %499, %511 : vector<2x16xf32>
    %513 = arith.addf %509, %512 : vector<2x16xf32>
    %514 = math.tanh %513 : vector<2x16xf32>
    %515 = arith.subf %481, %514 : vector<2x16xf32>
    %516 = arith.mulf %507, %515 : vector<2x16xf32>
    %517 = arith.addf %514, %516 : vector<2x16xf32>
    %cst_258 = arith.constant 0.000000e+00 : f32
    %518 = vector.broadcast %cst_258 : f32 to vector<2x16xf32>
    %519 = arith.maximumf %517, %518 : vector<2x16xf32>
    %520 = arith.truncf %519 : vector<2x16xf32> to vector<2x16xbf16>
    %c192 = arith.constant 192 : index
    %c0_259 = arith.constant 0 : index
    %521 = vector.load %arg6[%c192, %c0_259] : memref<448x64xbf16, #tpu.memory_space<vmem>>, vector<16x64xbf16>
    %cst_260 = arith.constant dense<0.000000e+00> : vector<2x64xf32>
    %522 = tpu.matmul %520, %521, %cst_260 {dimension_numbers = #tpu.dot_dimension_numbers<[1], [0], [0], [1], [0, 0, 1, 1], [], []>} : vector<2x16xbf16>, vector<16x64xbf16>, vector<2x64xf32> -> vector<2x64xf32>
    %523 = arith.addf %487, %522 : vector<2x64xf32>
    %524 = arith.truncf %517 : vector<2x16xf32> to vector<2x16xbf16>
    %cst_261 = arith.constant dense<0.000000e+00> : vector<2x16xf32>
    %525 = tpu.matmul %524, %3, %cst_261 {dimension_numbers = #tpu.dot_dimension_numbers<[1], [0], [0], [1], [0, 0, 1, 1], [], []>} : vector<2x16xbf16>, vector<16x16xbf16>, vector<2x16xf32> -> vector<2x16xf32>
    %cst_262 = arith.constant dense<0.000000e+00> : vector<2x16xf32>
    %526 = tpu.matmul %524, %4, %cst_262 {dimension_numbers = #tpu.dot_dimension_numbers<[1], [0], [0], [1], [0, 0, 1, 1], [], []>} : vector<2x16xbf16>, vector<16x16xbf16>, vector<2x16xf32> -> vector<2x16xf32>
    %cst_263 = arith.constant dense<0.000000e+00> : vector<2x16xf32>
    %527 = tpu.matmul %524, %5, %cst_263 {dimension_numbers = #tpu.dot_dimension_numbers<[1], [0], [0], [1], [0, 0, 1, 1], [], []>} : vector<2x16xbf16>, vector<16x16xbf16>, vector<2x16xf32> -> vector<2x16xf32>
    %c0_264 = arith.constant 0 : index
    %c13 = arith.constant 13 : index
    %c0_265 = arith.constant 0 : index
    %528 = vector.load %arg13[%c0_264, %c13, %c0_265] : memref<2x28x16xf32, #tpu.memory_space<vmem>>, vector<2x1x16xf32>
    %529 = vector.shape_cast %528 : vector<2x1x16xf32> to vector<2x16xf32>
    %530 = arith.addf %529, %525 : vector<2x16xf32>
    %531 = arith.negf %530 : vector<2x16xf32>
    %532 = math.exp %531 : vector<2x16xf32>
    %cst_266 = arith.constant 1.000000e+00 : f32
    %533 = vector.broadcast %cst_266 : f32 to vector<2x16xf32>
    %534 = arith.addf %533, %532 : vector<2x16xf32>
    %535 = arith.divf %533, %534 : vector<2x16xf32>
    %c0_267 = arith.constant 0 : index
    %c13_268 = arith.constant 13 : index
    %c0_269 = arith.constant 0 : index
    %536 = vector.load %arg14[%c0_267, %c13_268, %c0_269] : memref<2x28x16xf32, #tpu.memory_space<vmem>>, vector<2x1x16xf32>
    %537 = vector.shape_cast %536 : vector<2x1x16xf32> to vector<2x16xf32>
    %538 = arith.addf %537, %526 : vector<2x16xf32>
    %539 = arith.negf %538 : vector<2x16xf32>
    %540 = math.exp %539 : vector<2x16xf32>
    %cst_270 = arith.constant 1.000000e+00 : f32
    %541 = vector.broadcast %cst_270 : f32 to vector<2x16xf32>
    %542 = arith.addf %541, %540 : vector<2x16xf32>
    %543 = arith.divf %541, %542 : vector<2x16xf32>
    %c0_271 = arith.constant 0 : index
    %c13_272 = arith.constant 13 : index
    %c0_273 = arith.constant 0 : index
    %544 = vector.load %arg15[%c0_271, %c13_272, %c0_273] : memref<2x28x16xf32, #tpu.memory_space<vmem>>, vector<2x1x16xf32>
    %545 = vector.shape_cast %544 : vector<2x1x16xf32> to vector<2x16xf32>
    %546 = vector.broadcast %9 : vector<1x16xf32> to vector<2x16xf32>
    %547 = arith.addf %527, %546 : vector<2x16xf32>
    %548 = arith.mulf %535, %547 : vector<2x16xf32>
    %549 = arith.addf %545, %548 : vector<2x16xf32>
    %550 = math.tanh %549 : vector<2x16xf32>
    %551 = arith.subf %517, %550 : vector<2x16xf32>
    %552 = arith.mulf %543, %551 : vector<2x16xf32>
    %553 = arith.addf %550, %552 : vector<2x16xf32>
    %cst_274 = arith.constant 0.000000e+00 : f32
    %554 = vector.broadcast %cst_274 : f32 to vector<2x16xf32>
    %555 = arith.maximumf %553, %554 : vector<2x16xf32>
    %556 = arith.truncf %555 : vector<2x16xf32> to vector<2x16xbf16>
    %c208 = arith.constant 208 : index
    %c0_275 = arith.constant 0 : index
    %557 = vector.load %arg6[%c208, %c0_275] : memref<448x64xbf16, #tpu.memory_space<vmem>>, vector<16x64xbf16>
    %cst_276 = arith.constant dense<0.000000e+00> : vector<2x64xf32>
    %558 = tpu.matmul %556, %557, %cst_276 {dimension_numbers = #tpu.dot_dimension_numbers<[1], [0], [0], [1], [0, 0, 1, 1], [], []>} : vector<2x16xbf16>, vector<16x64xbf16>, vector<2x64xf32> -> vector<2x64xf32>
    %559 = arith.addf %523, %558 : vector<2x64xf32>
    %560 = arith.truncf %553 : vector<2x16xf32> to vector<2x16xbf16>
    %cst_277 = arith.constant dense<0.000000e+00> : vector<2x16xf32>
    %561 = tpu.matmul %560, %3, %cst_277 {dimension_numbers = #tpu.dot_dimension_numbers<[1], [0], [0], [1], [0, 0, 1, 1], [], []>} : vector<2x16xbf16>, vector<16x16xbf16>, vector<2x16xf32> -> vector<2x16xf32>
    %cst_278 = arith.constant dense<0.000000e+00> : vector<2x16xf32>
    %562 = tpu.matmul %560, %4, %cst_278 {dimension_numbers = #tpu.dot_dimension_numbers<[1], [0], [0], [1], [0, 0, 1, 1], [], []>} : vector<2x16xbf16>, vector<16x16xbf16>, vector<2x16xf32> -> vector<2x16xf32>
    %cst_279 = arith.constant dense<0.000000e+00> : vector<2x16xf32>
    %563 = tpu.matmul %560, %5, %cst_279 {dimension_numbers = #tpu.dot_dimension_numbers<[1], [0], [0], [1], [0, 0, 1, 1], [], []>} : vector<2x16xbf16>, vector<16x16xbf16>, vector<2x16xf32> -> vector<2x16xf32>
    %c0_280 = arith.constant 0 : index
    %c14 = arith.constant 14 : index
    %c0_281 = arith.constant 0 : index
    %564 = vector.load %arg13[%c0_280, %c14, %c0_281] : memref<2x28x16xf32, #tpu.memory_space<vmem>>, vector<2x1x16xf32>
    %565 = vector.shape_cast %564 : vector<2x1x16xf32> to vector<2x16xf32>
    %566 = arith.addf %565, %561 : vector<2x16xf32>
    %567 = arith.negf %566 : vector<2x16xf32>
    %568 = math.exp %567 : vector<2x16xf32>
    %cst_282 = arith.constant 1.000000e+00 : f32
    %569 = vector.broadcast %cst_282 : f32 to vector<2x16xf32>
    %570 = arith.addf %569, %568 : vector<2x16xf32>
    %571 = arith.divf %569, %570 : vector<2x16xf32>
    %c0_283 = arith.constant 0 : index
    %c14_284 = arith.constant 14 : index
    %c0_285 = arith.constant 0 : index
    %572 = vector.load %arg14[%c0_283, %c14_284, %c0_285] : memref<2x28x16xf32, #tpu.memory_space<vmem>>, vector<2x1x16xf32>
    %573 = vector.shape_cast %572 : vector<2x1x16xf32> to vector<2x16xf32>
    %574 = arith.addf %573, %562 : vector<2x16xf32>
    %575 = arith.negf %574 : vector<2x16xf32>
    %576 = math.exp %575 : vector<2x16xf32>
    %cst_286 = arith.constant 1.000000e+00 : f32
    %577 = vector.broadcast %cst_286 : f32 to vector<2x16xf32>
    %578 = arith.addf %577, %576 : vector<2x16xf32>
    %579 = arith.divf %577, %578 : vector<2x16xf32>
    %c0_287 = arith.constant 0 : index
    %c14_288 = arith.constant 14 : index
    %c0_289 = arith.constant 0 : index
    %580 = vector.load %arg15[%c0_287, %c14_288, %c0_289] : memref<2x28x16xf32, #tpu.memory_space<vmem>>, vector<2x1x16xf32>
    %581 = vector.shape_cast %580 : vector<2x1x16xf32> to vector<2x16xf32>
    %582 = vector.broadcast %9 : vector<1x16xf32> to vector<2x16xf32>
    %583 = arith.addf %563, %582 : vector<2x16xf32>
    %584 = arith.mulf %571, %583 : vector<2x16xf32>
    %585 = arith.addf %581, %584 : vector<2x16xf32>
    %586 = math.tanh %585 : vector<2x16xf32>
    %587 = arith.subf %553, %586 : vector<2x16xf32>
    %588 = arith.mulf %579, %587 : vector<2x16xf32>
    %589 = arith.addf %586, %588 : vector<2x16xf32>
    %cst_290 = arith.constant 0.000000e+00 : f32
    %590 = vector.broadcast %cst_290 : f32 to vector<2x16xf32>
    %591 = arith.maximumf %589, %590 : vector<2x16xf32>
    %592 = arith.truncf %591 : vector<2x16xf32> to vector<2x16xbf16>
    %c224 = arith.constant 224 : index
    %c0_291 = arith.constant 0 : index
    %593 = vector.load %arg6[%c224, %c0_291] : memref<448x64xbf16, #tpu.memory_space<vmem>>, vector<16x64xbf16>
    %cst_292 = arith.constant dense<0.000000e+00> : vector<2x64xf32>
    %594 = tpu.matmul %592, %593, %cst_292 {dimension_numbers = #tpu.dot_dimension_numbers<[1], [0], [0], [1], [0, 0, 1, 1], [], []>} : vector<2x16xbf16>, vector<16x64xbf16>, vector<2x64xf32> -> vector<2x64xf32>
    %595 = arith.addf %559, %594 : vector<2x64xf32>
    %596 = arith.truncf %589 : vector<2x16xf32> to vector<2x16xbf16>
    %cst_293 = arith.constant dense<0.000000e+00> : vector<2x16xf32>
    %597 = tpu.matmul %596, %3, %cst_293 {dimension_numbers = #tpu.dot_dimension_numbers<[1], [0], [0], [1], [0, 0, 1, 1], [], []>} : vector<2x16xbf16>, vector<16x16xbf16>, vector<2x16xf32> -> vector<2x16xf32>
    %cst_294 = arith.constant dense<0.000000e+00> : vector<2x16xf32>
    %598 = tpu.matmul %596, %4, %cst_294 {dimension_numbers = #tpu.dot_dimension_numbers<[1], [0], [0], [1], [0, 0, 1, 1], [], []>} : vector<2x16xbf16>, vector<16x16xbf16>, vector<2x16xf32> -> vector<2x16xf32>
    %cst_295 = arith.constant dense<0.000000e+00> : vector<2x16xf32>
    %599 = tpu.matmul %596, %5, %cst_295 {dimension_numbers = #tpu.dot_dimension_numbers<[1], [0], [0], [1], [0, 0, 1, 1], [], []>} : vector<2x16xbf16>, vector<16x16xbf16>, vector<2x16xf32> -> vector<2x16xf32>
    %c0_296 = arith.constant 0 : index
    %c15 = arith.constant 15 : index
    %c0_297 = arith.constant 0 : index
    %600 = vector.load %arg13[%c0_296, %c15, %c0_297] : memref<2x28x16xf32, #tpu.memory_space<vmem>>, vector<2x1x16xf32>
    %601 = vector.shape_cast %600 : vector<2x1x16xf32> to vector<2x16xf32>
    %602 = arith.addf %601, %597 : vector<2x16xf32>
    %603 = arith.negf %602 : vector<2x16xf32>
    %604 = math.exp %603 : vector<2x16xf32>
    %cst_298 = arith.constant 1.000000e+00 : f32
    %605 = vector.broadcast %cst_298 : f32 to vector<2x16xf32>
    %606 = arith.addf %605, %604 : vector<2x16xf32>
    %607 = arith.divf %605, %606 : vector<2x16xf32>
    %c0_299 = arith.constant 0 : index
    %c15_300 = arith.constant 15 : index
    %c0_301 = arith.constant 0 : index
    %608 = vector.load %arg14[%c0_299, %c15_300, %c0_301] : memref<2x28x16xf32, #tpu.memory_space<vmem>>, vector<2x1x16xf32>
    %609 = vector.shape_cast %608 : vector<2x1x16xf32> to vector<2x16xf32>
    %610 = arith.addf %609, %598 : vector<2x16xf32>
    %611 = arith.negf %610 : vector<2x16xf32>
    %612 = math.exp %611 : vector<2x16xf32>
    %cst_302 = arith.constant 1.000000e+00 : f32
    %613 = vector.broadcast %cst_302 : f32 to vector<2x16xf32>
    %614 = arith.addf %613, %612 : vector<2x16xf32>
    %615 = arith.divf %613, %614 : vector<2x16xf32>
    %c0_303 = arith.constant 0 : index
    %c15_304 = arith.constant 15 : index
    %c0_305 = arith.constant 0 : index
    %616 = vector.load %arg15[%c0_303, %c15_304, %c0_305] : memref<2x28x16xf32, #tpu.memory_space<vmem>>, vector<2x1x16xf32>
    %617 = vector.shape_cast %616 : vector<2x1x16xf32> to vector<2x16xf32>
    %618 = vector.broadcast %9 : vector<1x16xf32> to vector<2x16xf32>
    %619 = arith.addf %599, %618 : vector<2x16xf32>
    %620 = arith.mulf %607, %619 : vector<2x16xf32>
    %621 = arith.addf %617, %620 : vector<2x16xf32>
    %622 = math.tanh %621 : vector<2x16xf32>
    %623 = arith.subf %589, %622 : vector<2x16xf32>
    %624 = arith.mulf %615, %623 : vector<2x16xf32>
    %625 = arith.addf %622, %624 : vector<2x16xf32>
    %cst_306 = arith.constant 0.000000e+00 : f32
    %626 = vector.broadcast %cst_306 : f32 to vector<2x16xf32>
    %627 = arith.maximumf %625, %626 : vector<2x16xf32>
    %628 = arith.truncf %627 : vector<2x16xf32> to vector<2x16xbf16>
    %c240 = arith.constant 240 : index
    %c0_307 = arith.constant 0 : index
    %629 = vector.load %arg6[%c240, %c0_307] : memref<448x64xbf16, #tpu.memory_space<vmem>>, vector<16x64xbf16>
    %cst_308 = arith.constant dense<0.000000e+00> : vector<2x64xf32>
    %630 = tpu.matmul %628, %629, %cst_308 {dimension_numbers = #tpu.dot_dimension_numbers<[1], [0], [0], [1], [0, 0, 1, 1], [], []>} : vector<2x16xbf16>, vector<16x64xbf16>, vector<2x64xf32> -> vector<2x64xf32>
    %631 = arith.addf %595, %630 : vector<2x64xf32>
    %632 = arith.truncf %625 : vector<2x16xf32> to vector<2x16xbf16>
    %cst_309 = arith.constant dense<0.000000e+00> : vector<2x16xf32>
    %633 = tpu.matmul %632, %3, %cst_309 {dimension_numbers = #tpu.dot_dimension_numbers<[1], [0], [0], [1], [0, 0, 1, 1], [], []>} : vector<2x16xbf16>, vector<16x16xbf16>, vector<2x16xf32> -> vector<2x16xf32>
    %cst_310 = arith.constant dense<0.000000e+00> : vector<2x16xf32>
    %634 = tpu.matmul %632, %4, %cst_310 {dimension_numbers = #tpu.dot_dimension_numbers<[1], [0], [0], [1], [0, 0, 1, 1], [], []>} : vector<2x16xbf16>, vector<16x16xbf16>, vector<2x16xf32> -> vector<2x16xf32>
    %cst_311 = arith.constant dense<0.000000e+00> : vector<2x16xf32>
    %635 = tpu.matmul %632, %5, %cst_311 {dimension_numbers = #tpu.dot_dimension_numbers<[1], [0], [0], [1], [0, 0, 1, 1], [], []>} : vector<2x16xbf16>, vector<16x16xbf16>, vector<2x16xf32> -> vector<2x16xf32>
    %c0_312 = arith.constant 0 : index
    %c16_313 = arith.constant 16 : index
    %c0_314 = arith.constant 0 : index
    %636 = vector.load %arg13[%c0_312, %c16_313, %c0_314] : memref<2x28x16xf32, #tpu.memory_space<vmem>>, vector<2x1x16xf32>
    %637 = vector.shape_cast %636 : vector<2x1x16xf32> to vector<2x16xf32>
    %638 = arith.addf %637, %633 : vector<2x16xf32>
    %639 = arith.negf %638 : vector<2x16xf32>
    %640 = math.exp %639 : vector<2x16xf32>
    %cst_315 = arith.constant 1.000000e+00 : f32
    %641 = vector.broadcast %cst_315 : f32 to vector<2x16xf32>
    %642 = arith.addf %641, %640 : vector<2x16xf32>
    %643 = arith.divf %641, %642 : vector<2x16xf32>
    %c0_316 = arith.constant 0 : index
    %c16_317 = arith.constant 16 : index
    %c0_318 = arith.constant 0 : index
    %644 = vector.load %arg14[%c0_316, %c16_317, %c0_318] : memref<2x28x16xf32, #tpu.memory_space<vmem>>, vector<2x1x16xf32>
    %645 = vector.shape_cast %644 : vector<2x1x16xf32> to vector<2x16xf32>
    %646 = arith.addf %645, %634 : vector<2x16xf32>
    %647 = arith.negf %646 : vector<2x16xf32>
    %648 = math.exp %647 : vector<2x16xf32>
    %cst_319 = arith.constant 1.000000e+00 : f32
    %649 = vector.broadcast %cst_319 : f32 to vector<2x16xf32>
    %650 = arith.addf %649, %648 : vector<2x16xf32>
    %651 = arith.divf %649, %650 : vector<2x16xf32>
    %c0_320 = arith.constant 0 : index
    %c16_321 = arith.constant 16 : index
    %c0_322 = arith.constant 0 : index
    %652 = vector.load %arg15[%c0_320, %c16_321, %c0_322] : memref<2x28x16xf32, #tpu.memory_space<vmem>>, vector<2x1x16xf32>
    %653 = vector.shape_cast %652 : vector<2x1x16xf32> to vector<2x16xf32>
    %654 = vector.broadcast %9 : vector<1x16xf32> to vector<2x16xf32>
    %655 = arith.addf %635, %654 : vector<2x16xf32>
    %656 = arith.mulf %643, %655 : vector<2x16xf32>
    %657 = arith.addf %653, %656 : vector<2x16xf32>
    %658 = math.tanh %657 : vector<2x16xf32>
    %659 = arith.subf %625, %658 : vector<2x16xf32>
    %660 = arith.mulf %651, %659 : vector<2x16xf32>
    %661 = arith.addf %658, %660 : vector<2x16xf32>
    %cst_323 = arith.constant 0.000000e+00 : f32
    %662 = vector.broadcast %cst_323 : f32 to vector<2x16xf32>
    %663 = arith.maximumf %661, %662 : vector<2x16xf32>
    %664 = arith.truncf %663 : vector<2x16xf32> to vector<2x16xbf16>
    %c256 = arith.constant 256 : index
    %c0_324 = arith.constant 0 : index
    %665 = vector.load %arg6[%c256, %c0_324] : memref<448x64xbf16, #tpu.memory_space<vmem>>, vector<16x64xbf16>
    %cst_325 = arith.constant dense<0.000000e+00> : vector<2x64xf32>
    %666 = tpu.matmul %664, %665, %cst_325 {dimension_numbers = #tpu.dot_dimension_numbers<[1], [0], [0], [1], [0, 0, 1, 1], [], []>} : vector<2x16xbf16>, vector<16x64xbf16>, vector<2x64xf32> -> vector<2x64xf32>
    %667 = arith.addf %631, %666 : vector<2x64xf32>
    %668 = arith.truncf %661 : vector<2x16xf32> to vector<2x16xbf16>
    %cst_326 = arith.constant dense<0.000000e+00> : vector<2x16xf32>
    %669 = tpu.matmul %668, %3, %cst_326 {dimension_numbers = #tpu.dot_dimension_numbers<[1], [0], [0], [1], [0, 0, 1, 1], [], []>} : vector<2x16xbf16>, vector<16x16xbf16>, vector<2x16xf32> -> vector<2x16xf32>
    %cst_327 = arith.constant dense<0.000000e+00> : vector<2x16xf32>
    %670 = tpu.matmul %668, %4, %cst_327 {dimension_numbers = #tpu.dot_dimension_numbers<[1], [0], [0], [1], [0, 0, 1, 1], [], []>} : vector<2x16xbf16>, vector<16x16xbf16>, vector<2x16xf32> -> vector<2x16xf32>
    %cst_328 = arith.constant dense<0.000000e+00> : vector<2x16xf32>
    %671 = tpu.matmul %668, %5, %cst_328 {dimension_numbers = #tpu.dot_dimension_numbers<[1], [0], [0], [1], [0, 0, 1, 1], [], []>} : vector<2x16xbf16>, vector<16x16xbf16>, vector<2x16xf32> -> vector<2x16xf32>
    %c0_329 = arith.constant 0 : index
    %c17 = arith.constant 17 : index
    %c0_330 = arith.constant 0 : index
    %672 = vector.load %arg13[%c0_329, %c17, %c0_330] : memref<2x28x16xf32, #tpu.memory_space<vmem>>, vector<2x1x16xf32>
    %673 = vector.shape_cast %672 : vector<2x1x16xf32> to vector<2x16xf32>
    %674 = arith.addf %673, %669 : vector<2x16xf32>
    %675 = arith.negf %674 : vector<2x16xf32>
    %676 = math.exp %675 : vector<2x16xf32>
    %cst_331 = arith.constant 1.000000e+00 : f32
    %677 = vector.broadcast %cst_331 : f32 to vector<2x16xf32>
    %678 = arith.addf %677, %676 : vector<2x16xf32>
    %679 = arith.divf %677, %678 : vector<2x16xf32>
    %c0_332 = arith.constant 0 : index
    %c17_333 = arith.constant 17 : index
    %c0_334 = arith.constant 0 : index
    %680 = vector.load %arg14[%c0_332, %c17_333, %c0_334] : memref<2x28x16xf32, #tpu.memory_space<vmem>>, vector<2x1x16xf32>
    %681 = vector.shape_cast %680 : vector<2x1x16xf32> to vector<2x16xf32>
    %682 = arith.addf %681, %670 : vector<2x16xf32>
    %683 = arith.negf %682 : vector<2x16xf32>
    %684 = math.exp %683 : vector<2x16xf32>
    %cst_335 = arith.constant 1.000000e+00 : f32
    %685 = vector.broadcast %cst_335 : f32 to vector<2x16xf32>
    %686 = arith.addf %685, %684 : vector<2x16xf32>
    %687 = arith.divf %685, %686 : vector<2x16xf32>
    %c0_336 = arith.constant 0 : index
    %c17_337 = arith.constant 17 : index
    %c0_338 = arith.constant 0 : index
    %688 = vector.load %arg15[%c0_336, %c17_337, %c0_338] : memref<2x28x16xf32, #tpu.memory_space<vmem>>, vector<2x1x16xf32>
    %689 = vector.shape_cast %688 : vector<2x1x16xf32> to vector<2x16xf32>
    %690 = vector.broadcast %9 : vector<1x16xf32> to vector<2x16xf32>
    %691 = arith.addf %671, %690 : vector<2x16xf32>
    %692 = arith.mulf %679, %691 : vector<2x16xf32>
    %693 = arith.addf %689, %692 : vector<2x16xf32>
    %694 = math.tanh %693 : vector<2x16xf32>
    %695 = arith.subf %661, %694 : vector<2x16xf32>
    %696 = arith.mulf %687, %695 : vector<2x16xf32>
    %697 = arith.addf %694, %696 : vector<2x16xf32>
    %cst_339 = arith.constant 0.000000e+00 : f32
    %698 = vector.broadcast %cst_339 : f32 to vector<2x16xf32>
    %699 = arith.maximumf %697, %698 : vector<2x16xf32>
    %700 = arith.truncf %699 : vector<2x16xf32> to vector<2x16xbf16>
    %c272 = arith.constant 272 : index
    %c0_340 = arith.constant 0 : index
    %701 = vector.load %arg6[%c272, %c0_340] : memref<448x64xbf16, #tpu.memory_space<vmem>>, vector<16x64xbf16>
    %cst_341 = arith.constant dense<0.000000e+00> : vector<2x64xf32>
    %702 = tpu.matmul %700, %701, %cst_341 {dimension_numbers = #tpu.dot_dimension_numbers<[1], [0], [0], [1], [0, 0, 1, 1], [], []>} : vector<2x16xbf16>, vector<16x64xbf16>, vector<2x64xf32> -> vector<2x64xf32>
    %703 = arith.addf %667, %702 : vector<2x64xf32>
    %704 = arith.truncf %697 : vector<2x16xf32> to vector<2x16xbf16>
    %cst_342 = arith.constant dense<0.000000e+00> : vector<2x16xf32>
    %705 = tpu.matmul %704, %3, %cst_342 {dimension_numbers = #tpu.dot_dimension_numbers<[1], [0], [0], [1], [0, 0, 1, 1], [], []>} : vector<2x16xbf16>, vector<16x16xbf16>, vector<2x16xf32> -> vector<2x16xf32>
    %cst_343 = arith.constant dense<0.000000e+00> : vector<2x16xf32>
    %706 = tpu.matmul %704, %4, %cst_343 {dimension_numbers = #tpu.dot_dimension_numbers<[1], [0], [0], [1], [0, 0, 1, 1], [], []>} : vector<2x16xbf16>, vector<16x16xbf16>, vector<2x16xf32> -> vector<2x16xf32>
    %cst_344 = arith.constant dense<0.000000e+00> : vector<2x16xf32>
    %707 = tpu.matmul %704, %5, %cst_344 {dimension_numbers = #tpu.dot_dimension_numbers<[1], [0], [0], [1], [0, 0, 1, 1], [], []>} : vector<2x16xbf16>, vector<16x16xbf16>, vector<2x16xf32> -> vector<2x16xf32>
    %c0_345 = arith.constant 0 : index
    %c18 = arith.constant 18 : index
    %c0_346 = arith.constant 0 : index
    %708 = vector.load %arg13[%c0_345, %c18, %c0_346] : memref<2x28x16xf32, #tpu.memory_space<vmem>>, vector<2x1x16xf32>
    %709 = vector.shape_cast %708 : vector<2x1x16xf32> to vector<2x16xf32>
    %710 = arith.addf %709, %705 : vector<2x16xf32>
    %711 = arith.negf %710 : vector<2x16xf32>
    %712 = math.exp %711 : vector<2x16xf32>
    %cst_347 = arith.constant 1.000000e+00 : f32
    %713 = vector.broadcast %cst_347 : f32 to vector<2x16xf32>
    %714 = arith.addf %713, %712 : vector<2x16xf32>
    %715 = arith.divf %713, %714 : vector<2x16xf32>
    %c0_348 = arith.constant 0 : index
    %c18_349 = arith.constant 18 : index
    %c0_350 = arith.constant 0 : index
    %716 = vector.load %arg14[%c0_348, %c18_349, %c0_350] : memref<2x28x16xf32, #tpu.memory_space<vmem>>, vector<2x1x16xf32>
    %717 = vector.shape_cast %716 : vector<2x1x16xf32> to vector<2x16xf32>
    %718 = arith.addf %717, %706 : vector<2x16xf32>
    %719 = arith.negf %718 : vector<2x16xf32>
    %720 = math.exp %719 : vector<2x16xf32>
    %cst_351 = arith.constant 1.000000e+00 : f32
    %721 = vector.broadcast %cst_351 : f32 to vector<2x16xf32>
    %722 = arith.addf %721, %720 : vector<2x16xf32>
    %723 = arith.divf %721, %722 : vector<2x16xf32>
    %c0_352 = arith.constant 0 : index
    %c18_353 = arith.constant 18 : index
    %c0_354 = arith.constant 0 : index
    %724 = vector.load %arg15[%c0_352, %c18_353, %c0_354] : memref<2x28x16xf32, #tpu.memory_space<vmem>>, vector<2x1x16xf32>
    %725 = vector.shape_cast %724 : vector<2x1x16xf32> to vector<2x16xf32>
    %726 = vector.broadcast %9 : vector<1x16xf32> to vector<2x16xf32>
    %727 = arith.addf %707, %726 : vector<2x16xf32>
    %728 = arith.mulf %715, %727 : vector<2x16xf32>
    %729 = arith.addf %725, %728 : vector<2x16xf32>
    %730 = math.tanh %729 : vector<2x16xf32>
    %731 = arith.subf %697, %730 : vector<2x16xf32>
    %732 = arith.mulf %723, %731 : vector<2x16xf32>
    %733 = arith.addf %730, %732 : vector<2x16xf32>
    %cst_355 = arith.constant 0.000000e+00 : f32
    %734 = vector.broadcast %cst_355 : f32 to vector<2x16xf32>
    %735 = arith.maximumf %733, %734 : vector<2x16xf32>
    %736 = arith.truncf %735 : vector<2x16xf32> to vector<2x16xbf16>
    %c288 = arith.constant 288 : index
    %c0_356 = arith.constant 0 : index
    %737 = vector.load %arg6[%c288, %c0_356] : memref<448x64xbf16, #tpu.memory_space<vmem>>, vector<16x64xbf16>
    %cst_357 = arith.constant dense<0.000000e+00> : vector<2x64xf32>
    %738 = tpu.matmul %736, %737, %cst_357 {dimension_numbers = #tpu.dot_dimension_numbers<[1], [0], [0], [1], [0, 0, 1, 1], [], []>} : vector<2x16xbf16>, vector<16x64xbf16>, vector<2x64xf32> -> vector<2x64xf32>
    %739 = arith.addf %703, %738 : vector<2x64xf32>
    %740 = arith.truncf %733 : vector<2x16xf32> to vector<2x16xbf16>
    %cst_358 = arith.constant dense<0.000000e+00> : vector<2x16xf32>
    %741 = tpu.matmul %740, %3, %cst_358 {dimension_numbers = #tpu.dot_dimension_numbers<[1], [0], [0], [1], [0, 0, 1, 1], [], []>} : vector<2x16xbf16>, vector<16x16xbf16>, vector<2x16xf32> -> vector<2x16xf32>
    %cst_359 = arith.constant dense<0.000000e+00> : vector<2x16xf32>
    %742 = tpu.matmul %740, %4, %cst_359 {dimension_numbers = #tpu.dot_dimension_numbers<[1], [0], [0], [1], [0, 0, 1, 1], [], []>} : vector<2x16xbf16>, vector<16x16xbf16>, vector<2x16xf32> -> vector<2x16xf32>
    %cst_360 = arith.constant dense<0.000000e+00> : vector<2x16xf32>
    %743 = tpu.matmul %740, %5, %cst_360 {dimension_numbers = #tpu.dot_dimension_numbers<[1], [0], [0], [1], [0, 0, 1, 1], [], []>} : vector<2x16xbf16>, vector<16x16xbf16>, vector<2x16xf32> -> vector<2x16xf32>
    %c0_361 = arith.constant 0 : index
    %c19 = arith.constant 19 : index
    %c0_362 = arith.constant 0 : index
    %744 = vector.load %arg13[%c0_361, %c19, %c0_362] : memref<2x28x16xf32, #tpu.memory_space<vmem>>, vector<2x1x16xf32>
    %745 = vector.shape_cast %744 : vector<2x1x16xf32> to vector<2x16xf32>
    %746 = arith.addf %745, %741 : vector<2x16xf32>
    %747 = arith.negf %746 : vector<2x16xf32>
    %748 = math.exp %747 : vector<2x16xf32>
    %cst_363 = arith.constant 1.000000e+00 : f32
    %749 = vector.broadcast %cst_363 : f32 to vector<2x16xf32>
    %750 = arith.addf %749, %748 : vector<2x16xf32>
    %751 = arith.divf %749, %750 : vector<2x16xf32>
    %c0_364 = arith.constant 0 : index
    %c19_365 = arith.constant 19 : index
    %c0_366 = arith.constant 0 : index
    %752 = vector.load %arg14[%c0_364, %c19_365, %c0_366] : memref<2x28x16xf32, #tpu.memory_space<vmem>>, vector<2x1x16xf32>
    %753 = vector.shape_cast %752 : vector<2x1x16xf32> to vector<2x16xf32>
    %754 = arith.addf %753, %742 : vector<2x16xf32>
    %755 = arith.negf %754 : vector<2x16xf32>
    %756 = math.exp %755 : vector<2x16xf32>
    %cst_367 = arith.constant 1.000000e+00 : f32
    %757 = vector.broadcast %cst_367 : f32 to vector<2x16xf32>
    %758 = arith.addf %757, %756 : vector<2x16xf32>
    %759 = arith.divf %757, %758 : vector<2x16xf32>
    %c0_368 = arith.constant 0 : index
    %c19_369 = arith.constant 19 : index
    %c0_370 = arith.constant 0 : index
    %760 = vector.load %arg15[%c0_368, %c19_369, %c0_370] : memref<2x28x16xf32, #tpu.memory_space<vmem>>, vector<2x1x16xf32>
    %761 = vector.shape_cast %760 : vector<2x1x16xf32> to vector<2x16xf32>
    %762 = vector.broadcast %9 : vector<1x16xf32> to vector<2x16xf32>
    %763 = arith.addf %743, %762 : vector<2x16xf32>
    %764 = arith.mulf %751, %763 : vector<2x16xf32>
    %765 = arith.addf %761, %764 : vector<2x16xf32>
    %766 = math.tanh %765 : vector<2x16xf32>
    %767 = arith.subf %733, %766 : vector<2x16xf32>
    %768 = arith.mulf %759, %767 : vector<2x16xf32>
    %769 = arith.addf %766, %768 : vector<2x16xf32>
    %cst_371 = arith.constant 0.000000e+00 : f32
    %770 = vector.broadcast %cst_371 : f32 to vector<2x16xf32>
    %771 = arith.maximumf %769, %770 : vector<2x16xf32>
    %772 = arith.truncf %771 : vector<2x16xf32> to vector<2x16xbf16>
    %c304 = arith.constant 304 : index
    %c0_372 = arith.constant 0 : index
    %773 = vector.load %arg6[%c304, %c0_372] : memref<448x64xbf16, #tpu.memory_space<vmem>>, vector<16x64xbf16>
    %cst_373 = arith.constant dense<0.000000e+00> : vector<2x64xf32>
    %774 = tpu.matmul %772, %773, %cst_373 {dimension_numbers = #tpu.dot_dimension_numbers<[1], [0], [0], [1], [0, 0, 1, 1], [], []>} : vector<2x16xbf16>, vector<16x64xbf16>, vector<2x64xf32> -> vector<2x64xf32>
    %775 = arith.addf %739, %774 : vector<2x64xf32>
    %776 = arith.truncf %769 : vector<2x16xf32> to vector<2x16xbf16>
    %cst_374 = arith.constant dense<0.000000e+00> : vector<2x16xf32>
    %777 = tpu.matmul %776, %3, %cst_374 {dimension_numbers = #tpu.dot_dimension_numbers<[1], [0], [0], [1], [0, 0, 1, 1], [], []>} : vector<2x16xbf16>, vector<16x16xbf16>, vector<2x16xf32> -> vector<2x16xf32>
    %cst_375 = arith.constant dense<0.000000e+00> : vector<2x16xf32>
    %778 = tpu.matmul %776, %4, %cst_375 {dimension_numbers = #tpu.dot_dimension_numbers<[1], [0], [0], [1], [0, 0, 1, 1], [], []>} : vector<2x16xbf16>, vector<16x16xbf16>, vector<2x16xf32> -> vector<2x16xf32>
    %cst_376 = arith.constant dense<0.000000e+00> : vector<2x16xf32>
    %779 = tpu.matmul %776, %5, %cst_376 {dimension_numbers = #tpu.dot_dimension_numbers<[1], [0], [0], [1], [0, 0, 1, 1], [], []>} : vector<2x16xbf16>, vector<16x16xbf16>, vector<2x16xf32> -> vector<2x16xf32>
    %c0_377 = arith.constant 0 : index
    %c20 = arith.constant 20 : index
    %c0_378 = arith.constant 0 : index
    %780 = vector.load %arg13[%c0_377, %c20, %c0_378] : memref<2x28x16xf32, #tpu.memory_space<vmem>>, vector<2x1x16xf32>
    %781 = vector.shape_cast %780 : vector<2x1x16xf32> to vector<2x16xf32>
    %782 = arith.addf %781, %777 : vector<2x16xf32>
    %783 = arith.negf %782 : vector<2x16xf32>
    %784 = math.exp %783 : vector<2x16xf32>
    %cst_379 = arith.constant 1.000000e+00 : f32
    %785 = vector.broadcast %cst_379 : f32 to vector<2x16xf32>
    %786 = arith.addf %785, %784 : vector<2x16xf32>
    %787 = arith.divf %785, %786 : vector<2x16xf32>
    %c0_380 = arith.constant 0 : index
    %c20_381 = arith.constant 20 : index
    %c0_382 = arith.constant 0 : index
    %788 = vector.load %arg14[%c0_380, %c20_381, %c0_382] : memref<2x28x16xf32, #tpu.memory_space<vmem>>, vector<2x1x16xf32>
    %789 = vector.shape_cast %788 : vector<2x1x16xf32> to vector<2x16xf32>
    %790 = arith.addf %789, %778 : vector<2x16xf32>
    %791 = arith.negf %790 : vector<2x16xf32>
    %792 = math.exp %791 : vector<2x16xf32>
    %cst_383 = arith.constant 1.000000e+00 : f32
    %793 = vector.broadcast %cst_383 : f32 to vector<2x16xf32>
    %794 = arith.addf %793, %792 : vector<2x16xf32>
    %795 = arith.divf %793, %794 : vector<2x16xf32>
    %c0_384 = arith.constant 0 : index
    %c20_385 = arith.constant 20 : index
    %c0_386 = arith.constant 0 : index
    %796 = vector.load %arg15[%c0_384, %c20_385, %c0_386] : memref<2x28x16xf32, #tpu.memory_space<vmem>>, vector<2x1x16xf32>
    %797 = vector.shape_cast %796 : vector<2x1x16xf32> to vector<2x16xf32>
    %798 = vector.broadcast %9 : vector<1x16xf32> to vector<2x16xf32>
    %799 = arith.addf %779, %798 : vector<2x16xf32>
    %800 = arith.mulf %787, %799 : vector<2x16xf32>
    %801 = arith.addf %797, %800 : vector<2x16xf32>
    %802 = math.tanh %801 : vector<2x16xf32>
    %803 = arith.subf %769, %802 : vector<2x16xf32>
    %804 = arith.mulf %795, %803 : vector<2x16xf32>
    %805 = arith.addf %802, %804 : vector<2x16xf32>
    %cst_387 = arith.constant 0.000000e+00 : f32
    %806 = vector.broadcast %cst_387 : f32 to vector<2x16xf32>
    %807 = arith.maximumf %805, %806 : vector<2x16xf32>
    %808 = arith.truncf %807 : vector<2x16xf32> to vector<2x16xbf16>
    %c320 = arith.constant 320 : index
    %c0_388 = arith.constant 0 : index
    %809 = vector.load %arg6[%c320, %c0_388] : memref<448x64xbf16, #tpu.memory_space<vmem>>, vector<16x64xbf16>
    %cst_389 = arith.constant dense<0.000000e+00> : vector<2x64xf32>
    %810 = tpu.matmul %808, %809, %cst_389 {dimension_numbers = #tpu.dot_dimension_numbers<[1], [0], [0], [1], [0, 0, 1, 1], [], []>} : vector<2x16xbf16>, vector<16x64xbf16>, vector<2x64xf32> -> vector<2x64xf32>
    %811 = arith.addf %775, %810 : vector<2x64xf32>
    %812 = arith.truncf %805 : vector<2x16xf32> to vector<2x16xbf16>
    %cst_390 = arith.constant dense<0.000000e+00> : vector<2x16xf32>
    %813 = tpu.matmul %812, %3, %cst_390 {dimension_numbers = #tpu.dot_dimension_numbers<[1], [0], [0], [1], [0, 0, 1, 1], [], []>} : vector<2x16xbf16>, vector<16x16xbf16>, vector<2x16xf32> -> vector<2x16xf32>
    %cst_391 = arith.constant dense<0.000000e+00> : vector<2x16xf32>
    %814 = tpu.matmul %812, %4, %cst_391 {dimension_numbers = #tpu.dot_dimension_numbers<[1], [0], [0], [1], [0, 0, 1, 1], [], []>} : vector<2x16xbf16>, vector<16x16xbf16>, vector<2x16xf32> -> vector<2x16xf32>
    %cst_392 = arith.constant dense<0.000000e+00> : vector<2x16xf32>
    %815 = tpu.matmul %812, %5, %cst_392 {dimension_numbers = #tpu.dot_dimension_numbers<[1], [0], [0], [1], [0, 0, 1, 1], [], []>} : vector<2x16xbf16>, vector<16x16xbf16>, vector<2x16xf32> -> vector<2x16xf32>
    %c0_393 = arith.constant 0 : index
    %c21 = arith.constant 21 : index
    %c0_394 = arith.constant 0 : index
    %816 = vector.load %arg13[%c0_393, %c21, %c0_394] : memref<2x28x16xf32, #tpu.memory_space<vmem>>, vector<2x1x16xf32>
    %817 = vector.shape_cast %816 : vector<2x1x16xf32> to vector<2x16xf32>
    %818 = arith.addf %817, %813 : vector<2x16xf32>
    %819 = arith.negf %818 : vector<2x16xf32>
    %820 = math.exp %819 : vector<2x16xf32>
    %cst_395 = arith.constant 1.000000e+00 : f32
    %821 = vector.broadcast %cst_395 : f32 to vector<2x16xf32>
    %822 = arith.addf %821, %820 : vector<2x16xf32>
    %823 = arith.divf %821, %822 : vector<2x16xf32>
    %c0_396 = arith.constant 0 : index
    %c21_397 = arith.constant 21 : index
    %c0_398 = arith.constant 0 : index
    %824 = vector.load %arg14[%c0_396, %c21_397, %c0_398] : memref<2x28x16xf32, #tpu.memory_space<vmem>>, vector<2x1x16xf32>
    %825 = vector.shape_cast %824 : vector<2x1x16xf32> to vector<2x16xf32>
    %826 = arith.addf %825, %814 : vector<2x16xf32>
    %827 = arith.negf %826 : vector<2x16xf32>
    %828 = math.exp %827 : vector<2x16xf32>
    %cst_399 = arith.constant 1.000000e+00 : f32
    %829 = vector.broadcast %cst_399 : f32 to vector<2x16xf32>
    %830 = arith.addf %829, %828 : vector<2x16xf32>
    %831 = arith.divf %829, %830 : vector<2x16xf32>
    %c0_400 = arith.constant 0 : index
    %c21_401 = arith.constant 21 : index
    %c0_402 = arith.constant 0 : index
    %832 = vector.load %arg15[%c0_400, %c21_401, %c0_402] : memref<2x28x16xf32, #tpu.memory_space<vmem>>, vector<2x1x16xf32>
    %833 = vector.shape_cast %832 : vector<2x1x16xf32> to vector<2x16xf32>
    %834 = vector.broadcast %9 : vector<1x16xf32> to vector<2x16xf32>
    %835 = arith.addf %815, %834 : vector<2x16xf32>
    %836 = arith.mulf %823, %835 : vector<2x16xf32>
    %837 = arith.addf %833, %836 : vector<2x16xf32>
    %838 = math.tanh %837 : vector<2x16xf32>
    %839 = arith.subf %805, %838 : vector<2x16xf32>
    %840 = arith.mulf %831, %839 : vector<2x16xf32>
    %841 = arith.addf %838, %840 : vector<2x16xf32>
    %cst_403 = arith.constant 0.000000e+00 : f32
    %842 = vector.broadcast %cst_403 : f32 to vector<2x16xf32>
    %843 = arith.maximumf %841, %842 : vector<2x16xf32>
    %844 = arith.truncf %843 : vector<2x16xf32> to vector<2x16xbf16>
    %c336 = arith.constant 336 : index
    %c0_404 = arith.constant 0 : index
    %845 = vector.load %arg6[%c336, %c0_404] : memref<448x64xbf16, #tpu.memory_space<vmem>>, vector<16x64xbf16>
    %cst_405 = arith.constant dense<0.000000e+00> : vector<2x64xf32>
    %846 = tpu.matmul %844, %845, %cst_405 {dimension_numbers = #tpu.dot_dimension_numbers<[1], [0], [0], [1], [0, 0, 1, 1], [], []>} : vector<2x16xbf16>, vector<16x64xbf16>, vector<2x64xf32> -> vector<2x64xf32>
    %847 = arith.addf %811, %846 : vector<2x64xf32>
    %848 = arith.truncf %841 : vector<2x16xf32> to vector<2x16xbf16>
    %cst_406 = arith.constant dense<0.000000e+00> : vector<2x16xf32>
    %849 = tpu.matmul %848, %3, %cst_406 {dimension_numbers = #tpu.dot_dimension_numbers<[1], [0], [0], [1], [0, 0, 1, 1], [], []>} : vector<2x16xbf16>, vector<16x16xbf16>, vector<2x16xf32> -> vector<2x16xf32>
    %cst_407 = arith.constant dense<0.000000e+00> : vector<2x16xf32>
    %850 = tpu.matmul %848, %4, %cst_407 {dimension_numbers = #tpu.dot_dimension_numbers<[1], [0], [0], [1], [0, 0, 1, 1], [], []>} : vector<2x16xbf16>, vector<16x16xbf16>, vector<2x16xf32> -> vector<2x16xf32>
    %cst_408 = arith.constant dense<0.000000e+00> : vector<2x16xf32>
    %851 = tpu.matmul %848, %5, %cst_408 {dimension_numbers = #tpu.dot_dimension_numbers<[1], [0], [0], [1], [0, 0, 1, 1], [], []>} : vector<2x16xbf16>, vector<16x16xbf16>, vector<2x16xf32> -> vector<2x16xf32>
    %c0_409 = arith.constant 0 : index
    %c22 = arith.constant 22 : index
    %c0_410 = arith.constant 0 : index
    %852 = vector.load %arg13[%c0_409, %c22, %c0_410] : memref<2x28x16xf32, #tpu.memory_space<vmem>>, vector<2x1x16xf32>
    %853 = vector.shape_cast %852 : vector<2x1x16xf32> to vector<2x16xf32>
    %854 = arith.addf %853, %849 : vector<2x16xf32>
    %855 = arith.negf %854 : vector<2x16xf32>
    %856 = math.exp %855 : vector<2x16xf32>
    %cst_411 = arith.constant 1.000000e+00 : f32
    %857 = vector.broadcast %cst_411 : f32 to vector<2x16xf32>
    %858 = arith.addf %857, %856 : vector<2x16xf32>
    %859 = arith.divf %857, %858 : vector<2x16xf32>
    %c0_412 = arith.constant 0 : index
    %c22_413 = arith.constant 22 : index
    %c0_414 = arith.constant 0 : index
    %860 = vector.load %arg14[%c0_412, %c22_413, %c0_414] : memref<2x28x16xf32, #tpu.memory_space<vmem>>, vector<2x1x16xf32>
    %861 = vector.shape_cast %860 : vector<2x1x16xf32> to vector<2x16xf32>
    %862 = arith.addf %861, %850 : vector<2x16xf32>
    %863 = arith.negf %862 : vector<2x16xf32>
    %864 = math.exp %863 : vector<2x16xf32>
    %cst_415 = arith.constant 1.000000e+00 : f32
    %865 = vector.broadcast %cst_415 : f32 to vector<2x16xf32>
    %866 = arith.addf %865, %864 : vector<2x16xf32>
    %867 = arith.divf %865, %866 : vector<2x16xf32>
    %c0_416 = arith.constant 0 : index
    %c22_417 = arith.constant 22 : index
    %c0_418 = arith.constant 0 : index
    %868 = vector.load %arg15[%c0_416, %c22_417, %c0_418] : memref<2x28x16xf32, #tpu.memory_space<vmem>>, vector<2x1x16xf32>
    %869 = vector.shape_cast %868 : vector<2x1x16xf32> to vector<2x16xf32>
    %870 = vector.broadcast %9 : vector<1x16xf32> to vector<2x16xf32>
    %871 = arith.addf %851, %870 : vector<2x16xf32>
    %872 = arith.mulf %859, %871 : vector<2x16xf32>
    %873 = arith.addf %869, %872 : vector<2x16xf32>
    %874 = math.tanh %873 : vector<2x16xf32>
    %875 = arith.subf %841, %874 : vector<2x16xf32>
    %876 = arith.mulf %867, %875 : vector<2x16xf32>
    %877 = arith.addf %874, %876 : vector<2x16xf32>
    %cst_419 = arith.constant 0.000000e+00 : f32
    %878 = vector.broadcast %cst_419 : f32 to vector<2x16xf32>
    %879 = arith.maximumf %877, %878 : vector<2x16xf32>
    %880 = arith.truncf %879 : vector<2x16xf32> to vector<2x16xbf16>
    %c352 = arith.constant 352 : index
    %c0_420 = arith.constant 0 : index
    %881 = vector.load %arg6[%c352, %c0_420] : memref<448x64xbf16, #tpu.memory_space<vmem>>, vector<16x64xbf16>
    %cst_421 = arith.constant dense<0.000000e+00> : vector<2x64xf32>
    %882 = tpu.matmul %880, %881, %cst_421 {dimension_numbers = #tpu.dot_dimension_numbers<[1], [0], [0], [1], [0, 0, 1, 1], [], []>} : vector<2x16xbf16>, vector<16x64xbf16>, vector<2x64xf32> -> vector<2x64xf32>
    %883 = arith.addf %847, %882 : vector<2x64xf32>
    %884 = arith.truncf %877 : vector<2x16xf32> to vector<2x16xbf16>
    %cst_422 = arith.constant dense<0.000000e+00> : vector<2x16xf32>
    %885 = tpu.matmul %884, %3, %cst_422 {dimension_numbers = #tpu.dot_dimension_numbers<[1], [0], [0], [1], [0, 0, 1, 1], [], []>} : vector<2x16xbf16>, vector<16x16xbf16>, vector<2x16xf32> -> vector<2x16xf32>
    %cst_423 = arith.constant dense<0.000000e+00> : vector<2x16xf32>
    %886 = tpu.matmul %884, %4, %cst_423 {dimension_numbers = #tpu.dot_dimension_numbers<[1], [0], [0], [1], [0, 0, 1, 1], [], []>} : vector<2x16xbf16>, vector<16x16xbf16>, vector<2x16xf32> -> vector<2x16xf32>
    %cst_424 = arith.constant dense<0.000000e+00> : vector<2x16xf32>
    %887 = tpu.matmul %884, %5, %cst_424 {dimension_numbers = #tpu.dot_dimension_numbers<[1], [0], [0], [1], [0, 0, 1, 1], [], []>} : vector<2x16xbf16>, vector<16x16xbf16>, vector<2x16xf32> -> vector<2x16xf32>
    %c0_425 = arith.constant 0 : index
    %c23 = arith.constant 23 : index
    %c0_426 = arith.constant 0 : index
    %888 = vector.load %arg13[%c0_425, %c23, %c0_426] : memref<2x28x16xf32, #tpu.memory_space<vmem>>, vector<2x1x16xf32>
    %889 = vector.shape_cast %888 : vector<2x1x16xf32> to vector<2x16xf32>
    %890 = arith.addf %889, %885 : vector<2x16xf32>
    %891 = arith.negf %890 : vector<2x16xf32>
    %892 = math.exp %891 : vector<2x16xf32>
    %cst_427 = arith.constant 1.000000e+00 : f32
    %893 = vector.broadcast %cst_427 : f32 to vector<2x16xf32>
    %894 = arith.addf %893, %892 : vector<2x16xf32>
    %895 = arith.divf %893, %894 : vector<2x16xf32>
    %c0_428 = arith.constant 0 : index
    %c23_429 = arith.constant 23 : index
    %c0_430 = arith.constant 0 : index
    %896 = vector.load %arg14[%c0_428, %c23_429, %c0_430] : memref<2x28x16xf32, #tpu.memory_space<vmem>>, vector<2x1x16xf32>
    %897 = vector.shape_cast %896 : vector<2x1x16xf32> to vector<2x16xf32>
    %898 = arith.addf %897, %886 : vector<2x16xf32>
    %899 = arith.negf %898 : vector<2x16xf32>
    %900 = math.exp %899 : vector<2x16xf32>
    %cst_431 = arith.constant 1.000000e+00 : f32
    %901 = vector.broadcast %cst_431 : f32 to vector<2x16xf32>
    %902 = arith.addf %901, %900 : vector<2x16xf32>
    %903 = arith.divf %901, %902 : vector<2x16xf32>
    %c0_432 = arith.constant 0 : index
    %c23_433 = arith.constant 23 : index
    %c0_434 = arith.constant 0 : index
    %904 = vector.load %arg15[%c0_432, %c23_433, %c0_434] : memref<2x28x16xf32, #tpu.memory_space<vmem>>, vector<2x1x16xf32>
    %905 = vector.shape_cast %904 : vector<2x1x16xf32> to vector<2x16xf32>
    %906 = vector.broadcast %9 : vector<1x16xf32> to vector<2x16xf32>
    %907 = arith.addf %887, %906 : vector<2x16xf32>
    %908 = arith.mulf %895, %907 : vector<2x16xf32>
    %909 = arith.addf %905, %908 : vector<2x16xf32>
    %910 = math.tanh %909 : vector<2x16xf32>
    %911 = arith.subf %877, %910 : vector<2x16xf32>
    %912 = arith.mulf %903, %911 : vector<2x16xf32>
    %913 = arith.addf %910, %912 : vector<2x16xf32>
    %cst_435 = arith.constant 0.000000e+00 : f32
    %914 = vector.broadcast %cst_435 : f32 to vector<2x16xf32>
    %915 = arith.maximumf %913, %914 : vector<2x16xf32>
    %916 = arith.truncf %915 : vector<2x16xf32> to vector<2x16xbf16>
    %c368 = arith.constant 368 : index
    %c0_436 = arith.constant 0 : index
    %917 = vector.load %arg6[%c368, %c0_436] : memref<448x64xbf16, #tpu.memory_space<vmem>>, vector<16x64xbf16>
    %cst_437 = arith.constant dense<0.000000e+00> : vector<2x64xf32>
    %918 = tpu.matmul %916, %917, %cst_437 {dimension_numbers = #tpu.dot_dimension_numbers<[1], [0], [0], [1], [0, 0, 1, 1], [], []>} : vector<2x16xbf16>, vector<16x64xbf16>, vector<2x64xf32> -> vector<2x64xf32>
    %919 = arith.addf %883, %918 : vector<2x64xf32>
    %920 = arith.truncf %913 : vector<2x16xf32> to vector<2x16xbf16>
    %cst_438 = arith.constant dense<0.000000e+00> : vector<2x16xf32>
    %921 = tpu.matmul %920, %3, %cst_438 {dimension_numbers = #tpu.dot_dimension_numbers<[1], [0], [0], [1], [0, 0, 1, 1], [], []>} : vector<2x16xbf16>, vector<16x16xbf16>, vector<2x16xf32> -> vector<2x16xf32>
    %cst_439 = arith.constant dense<0.000000e+00> : vector<2x16xf32>
    %922 = tpu.matmul %920, %4, %cst_439 {dimension_numbers = #tpu.dot_dimension_numbers<[1], [0], [0], [1], [0, 0, 1, 1], [], []>} : vector<2x16xbf16>, vector<16x16xbf16>, vector<2x16xf32> -> vector<2x16xf32>
    %cst_440 = arith.constant dense<0.000000e+00> : vector<2x16xf32>
    %923 = tpu.matmul %920, %5, %cst_440 {dimension_numbers = #tpu.dot_dimension_numbers<[1], [0], [0], [1], [0, 0, 1, 1], [], []>} : vector<2x16xbf16>, vector<16x16xbf16>, vector<2x16xf32> -> vector<2x16xf32>
    %c0_441 = arith.constant 0 : index
    %c24 = arith.constant 24 : index
    %c0_442 = arith.constant 0 : index
    %924 = vector.load %arg13[%c0_441, %c24, %c0_442] : memref<2x28x16xf32, #tpu.memory_space<vmem>>, vector<2x1x16xf32>
    %925 = vector.shape_cast %924 : vector<2x1x16xf32> to vector<2x16xf32>
    %926 = arith.addf %925, %921 : vector<2x16xf32>
    %927 = arith.negf %926 : vector<2x16xf32>
    %928 = math.exp %927 : vector<2x16xf32>
    %cst_443 = arith.constant 1.000000e+00 : f32
    %929 = vector.broadcast %cst_443 : f32 to vector<2x16xf32>
    %930 = arith.addf %929, %928 : vector<2x16xf32>
    %931 = arith.divf %929, %930 : vector<2x16xf32>
    %c0_444 = arith.constant 0 : index
    %c24_445 = arith.constant 24 : index
    %c0_446 = arith.constant 0 : index
    %932 = vector.load %arg14[%c0_444, %c24_445, %c0_446] : memref<2x28x16xf32, #tpu.memory_space<vmem>>, vector<2x1x16xf32>
    %933 = vector.shape_cast %932 : vector<2x1x16xf32> to vector<2x16xf32>
    %934 = arith.addf %933, %922 : vector<2x16xf32>
    %935 = arith.negf %934 : vector<2x16xf32>
    %936 = math.exp %935 : vector<2x16xf32>
    %cst_447 = arith.constant 1.000000e+00 : f32
    %937 = vector.broadcast %cst_447 : f32 to vector<2x16xf32>
    %938 = arith.addf %937, %936 : vector<2x16xf32>
    %939 = arith.divf %937, %938 : vector<2x16xf32>
    %c0_448 = arith.constant 0 : index
    %c24_449 = arith.constant 24 : index
    %c0_450 = arith.constant 0 : index
    %940 = vector.load %arg15[%c0_448, %c24_449, %c0_450] : memref<2x28x16xf32, #tpu.memory_space<vmem>>, vector<2x1x16xf32>
    %941 = vector.shape_cast %940 : vector<2x1x16xf32> to vector<2x16xf32>
    %942 = vector.broadcast %9 : vector<1x16xf32> to vector<2x16xf32>
    %943 = arith.addf %923, %942 : vector<2x16xf32>
    %944 = arith.mulf %931, %943 : vector<2x16xf32>
    %945 = arith.addf %941, %944 : vector<2x16xf32>
    %946 = math.tanh %945 : vector<2x16xf32>
    %947 = arith.subf %913, %946 : vector<2x16xf32>
    %948 = arith.mulf %939, %947 : vector<2x16xf32>
    %949 = arith.addf %946, %948 : vector<2x16xf32>
    %cst_451 = arith.constant 0.000000e+00 : f32
    %950 = vector.broadcast %cst_451 : f32 to vector<2x16xf32>
    %951 = arith.maximumf %949, %950 : vector<2x16xf32>
    %952 = arith.truncf %951 : vector<2x16xf32> to vector<2x16xbf16>
    %c384 = arith.constant 384 : index
    %c0_452 = arith.constant 0 : index
    %953 = vector.load %arg6[%c384, %c0_452] : memref<448x64xbf16, #tpu.memory_space<vmem>>, vector<16x64xbf16>
    %cst_453 = arith.constant dense<0.000000e+00> : vector<2x64xf32>
    %954 = tpu.matmul %952, %953, %cst_453 {dimension_numbers = #tpu.dot_dimension_numbers<[1], [0], [0], [1], [0, 0, 1, 1], [], []>} : vector<2x16xbf16>, vector<16x64xbf16>, vector<2x64xf32> -> vector<2x64xf32>
    %955 = arith.addf %919, %954 : vector<2x64xf32>
    %956 = arith.truncf %949 : vector<2x16xf32> to vector<2x16xbf16>
    %cst_454 = arith.constant dense<0.000000e+00> : vector<2x16xf32>
    %957 = tpu.matmul %956, %3, %cst_454 {dimension_numbers = #tpu.dot_dimension_numbers<[1], [0], [0], [1], [0, 0, 1, 1], [], []>} : vector<2x16xbf16>, vector<16x16xbf16>, vector<2x16xf32> -> vector<2x16xf32>
    %cst_455 = arith.constant dense<0.000000e+00> : vector<2x16xf32>
    %958 = tpu.matmul %956, %4, %cst_455 {dimension_numbers = #tpu.dot_dimension_numbers<[1], [0], [0], [1], [0, 0, 1, 1], [], []>} : vector<2x16xbf16>, vector<16x16xbf16>, vector<2x16xf32> -> vector<2x16xf32>
    %cst_456 = arith.constant dense<0.000000e+00> : vector<2x16xf32>
    %959 = tpu.matmul %956, %5, %cst_456 {dimension_numbers = #tpu.dot_dimension_numbers<[1], [0], [0], [1], [0, 0, 1, 1], [], []>} : vector<2x16xbf16>, vector<16x16xbf16>, vector<2x16xf32> -> vector<2x16xf32>
    %c0_457 = arith.constant 0 : index
    %c25 = arith.constant 25 : index
    %c0_458 = arith.constant 0 : index
    %960 = vector.load %arg13[%c0_457, %c25, %c0_458] : memref<2x28x16xf32, #tpu.memory_space<vmem>>, vector<2x1x16xf32>
    %961 = vector.shape_cast %960 : vector<2x1x16xf32> to vector<2x16xf32>
    %962 = arith.addf %961, %957 : vector<2x16xf32>
    %963 = arith.negf %962 : vector<2x16xf32>
    %964 = math.exp %963 : vector<2x16xf32>
    %cst_459 = arith.constant 1.000000e+00 : f32
    %965 = vector.broadcast %cst_459 : f32 to vector<2x16xf32>
    %966 = arith.addf %965, %964 : vector<2x16xf32>
    %967 = arith.divf %965, %966 : vector<2x16xf32>
    %c0_460 = arith.constant 0 : index
    %c25_461 = arith.constant 25 : index
    %c0_462 = arith.constant 0 : index
    %968 = vector.load %arg14[%c0_460, %c25_461, %c0_462] : memref<2x28x16xf32, #tpu.memory_space<vmem>>, vector<2x1x16xf32>
    %969 = vector.shape_cast %968 : vector<2x1x16xf32> to vector<2x16xf32>
    %970 = arith.addf %969, %958 : vector<2x16xf32>
    %971 = arith.negf %970 : vector<2x16xf32>
    %972 = math.exp %971 : vector<2x16xf32>
    %cst_463 = arith.constant 1.000000e+00 : f32
    %973 = vector.broadcast %cst_463 : f32 to vector<2x16xf32>
    %974 = arith.addf %973, %972 : vector<2x16xf32>
    %975 = arith.divf %973, %974 : vector<2x16xf32>
    %c0_464 = arith.constant 0 : index
    %c25_465 = arith.constant 25 : index
    %c0_466 = arith.constant 0 : index
    %976 = vector.load %arg15[%c0_464, %c25_465, %c0_466] : memref<2x28x16xf32, #tpu.memory_space<vmem>>, vector<2x1x16xf32>
    %977 = vector.shape_cast %976 : vector<2x1x16xf32> to vector<2x16xf32>
    %978 = vector.broadcast %9 : vector<1x16xf32> to vector<2x16xf32>
    %979 = arith.addf %959, %978 : vector<2x16xf32>
    %980 = arith.mulf %967, %979 : vector<2x16xf32>
    %981 = arith.addf %977, %980 : vector<2x16xf32>
    %982 = math.tanh %981 : vector<2x16xf32>
    %983 = arith.subf %949, %982 : vector<2x16xf32>
    %984 = arith.mulf %975, %983 : vector<2x16xf32>
    %985 = arith.addf %982, %984 : vector<2x16xf32>
    %cst_467 = arith.constant 0.000000e+00 : f32
    %986 = vector.broadcast %cst_467 : f32 to vector<2x16xf32>
    %987 = arith.maximumf %985, %986 : vector<2x16xf32>
    %988 = arith.truncf %987 : vector<2x16xf32> to vector<2x16xbf16>
    %c400 = arith.constant 400 : index
    %c0_468 = arith.constant 0 : index
    %989 = vector.load %arg6[%c400, %c0_468] : memref<448x64xbf16, #tpu.memory_space<vmem>>, vector<16x64xbf16>
    %cst_469 = arith.constant dense<0.000000e+00> : vector<2x64xf32>
    %990 = tpu.matmul %988, %989, %cst_469 {dimension_numbers = #tpu.dot_dimension_numbers<[1], [0], [0], [1], [0, 0, 1, 1], [], []>} : vector<2x16xbf16>, vector<16x64xbf16>, vector<2x64xf32> -> vector<2x64xf32>
    %991 = arith.addf %955, %990 : vector<2x64xf32>
    %992 = arith.truncf %985 : vector<2x16xf32> to vector<2x16xbf16>
    %cst_470 = arith.constant dense<0.000000e+00> : vector<2x16xf32>
    %993 = tpu.matmul %992, %3, %cst_470 {dimension_numbers = #tpu.dot_dimension_numbers<[1], [0], [0], [1], [0, 0, 1, 1], [], []>} : vector<2x16xbf16>, vector<16x16xbf16>, vector<2x16xf32> -> vector<2x16xf32>
    %cst_471 = arith.constant dense<0.000000e+00> : vector<2x16xf32>
    %994 = tpu.matmul %992, %4, %cst_471 {dimension_numbers = #tpu.dot_dimension_numbers<[1], [0], [0], [1], [0, 0, 1, 1], [], []>} : vector<2x16xbf16>, vector<16x16xbf16>, vector<2x16xf32> -> vector<2x16xf32>
    %cst_472 = arith.constant dense<0.000000e+00> : vector<2x16xf32>
    %995 = tpu.matmul %992, %5, %cst_472 {dimension_numbers = #tpu.dot_dimension_numbers<[1], [0], [0], [1], [0, 0, 1, 1], [], []>} : vector<2x16xbf16>, vector<16x16xbf16>, vector<2x16xf32> -> vector<2x16xf32>
    %c0_473 = arith.constant 0 : index
    %c26 = arith.constant 26 : index
    %c0_474 = arith.constant 0 : index
    %996 = vector.load %arg13[%c0_473, %c26, %c0_474] : memref<2x28x16xf32, #tpu.memory_space<vmem>>, vector<2x1x16xf32>
    %997 = vector.shape_cast %996 : vector<2x1x16xf32> to vector<2x16xf32>
    %998 = arith.addf %997, %993 : vector<2x16xf32>
    %999 = arith.negf %998 : vector<2x16xf32>
    %1000 = math.exp %999 : vector<2x16xf32>
    %cst_475 = arith.constant 1.000000e+00 : f32
    %1001 = vector.broadcast %cst_475 : f32 to vector<2x16xf32>
    %1002 = arith.addf %1001, %1000 : vector<2x16xf32>
    %1003 = arith.divf %1001, %1002 : vector<2x16xf32>
    %c0_476 = arith.constant 0 : index
    %c26_477 = arith.constant 26 : index
    %c0_478 = arith.constant 0 : index
    %1004 = vector.load %arg14[%c0_476, %c26_477, %c0_478] : memref<2x28x16xf32, #tpu.memory_space<vmem>>, vector<2x1x16xf32>
    %1005 = vector.shape_cast %1004 : vector<2x1x16xf32> to vector<2x16xf32>
    %1006 = arith.addf %1005, %994 : vector<2x16xf32>
    %1007 = arith.negf %1006 : vector<2x16xf32>
    %1008 = math.exp %1007 : vector<2x16xf32>
    %cst_479 = arith.constant 1.000000e+00 : f32
    %1009 = vector.broadcast %cst_479 : f32 to vector<2x16xf32>
    %1010 = arith.addf %1009, %1008 : vector<2x16xf32>
    %1011 = arith.divf %1009, %1010 : vector<2x16xf32>
    %c0_480 = arith.constant 0 : index
    %c26_481 = arith.constant 26 : index
    %c0_482 = arith.constant 0 : index
    %1012 = vector.load %arg15[%c0_480, %c26_481, %c0_482] : memref<2x28x16xf32, #tpu.memory_space<vmem>>, vector<2x1x16xf32>
    %1013 = vector.shape_cast %1012 : vector<2x1x16xf32> to vector<2x16xf32>
    %1014 = vector.broadcast %9 : vector<1x16xf32> to vector<2x16xf32>
    %1015 = arith.addf %995, %1014 : vector<2x16xf32>
    %1016 = arith.mulf %1003, %1015 : vector<2x16xf32>
    %1017 = arith.addf %1013, %1016 : vector<2x16xf32>
    %1018 = math.tanh %1017 : vector<2x16xf32>
    %1019 = arith.subf %985, %1018 : vector<2x16xf32>
    %1020 = arith.mulf %1011, %1019 : vector<2x16xf32>
    %1021 = arith.addf %1018, %1020 : vector<2x16xf32>
    %cst_483 = arith.constant 0.000000e+00 : f32
    %1022 = vector.broadcast %cst_483 : f32 to vector<2x16xf32>
    %1023 = arith.maximumf %1021, %1022 : vector<2x16xf32>
    %1024 = arith.truncf %1023 : vector<2x16xf32> to vector<2x16xbf16>
    %c416 = arith.constant 416 : index
    %c0_484 = arith.constant 0 : index
    %1025 = vector.load %arg6[%c416, %c0_484] : memref<448x64xbf16, #tpu.memory_space<vmem>>, vector<16x64xbf16>
    %cst_485 = arith.constant dense<0.000000e+00> : vector<2x64xf32>
    %1026 = tpu.matmul %1024, %1025, %cst_485 {dimension_numbers = #tpu.dot_dimension_numbers<[1], [0], [0], [1], [0, 0, 1, 1], [], []>} : vector<2x16xbf16>, vector<16x64xbf16>, vector<2x64xf32> -> vector<2x64xf32>
    %1027 = arith.addf %991, %1026 : vector<2x64xf32>
    %1028 = arith.truncf %1021 : vector<2x16xf32> to vector<2x16xbf16>
    %cst_486 = arith.constant dense<0.000000e+00> : vector<2x16xf32>
    %1029 = tpu.matmul %1028, %3, %cst_486 {dimension_numbers = #tpu.dot_dimension_numbers<[1], [0], [0], [1], [0, 0, 1, 1], [], []>} : vector<2x16xbf16>, vector<16x16xbf16>, vector<2x16xf32> -> vector<2x16xf32>
    %cst_487 = arith.constant dense<0.000000e+00> : vector<2x16xf32>
    %1030 = tpu.matmul %1028, %4, %cst_487 {dimension_numbers = #tpu.dot_dimension_numbers<[1], [0], [0], [1], [0, 0, 1, 1], [], []>} : vector<2x16xbf16>, vector<16x16xbf16>, vector<2x16xf32> -> vector<2x16xf32>
    %cst_488 = arith.constant dense<0.000000e+00> : vector<2x16xf32>
    %1031 = tpu.matmul %1028, %5, %cst_488 {dimension_numbers = #tpu.dot_dimension_numbers<[1], [0], [0], [1], [0, 0, 1, 1], [], []>} : vector<2x16xbf16>, vector<16x16xbf16>, vector<2x16xf32> -> vector<2x16xf32>
    %c0_489 = arith.constant 0 : index
    %c27 = arith.constant 27 : index
    %c0_490 = arith.constant 0 : index
    %1032 = vector.load %arg13[%c0_489, %c27, %c0_490] : memref<2x28x16xf32, #tpu.memory_space<vmem>>, vector<2x1x16xf32>
    %1033 = vector.shape_cast %1032 : vector<2x1x16xf32> to vector<2x16xf32>
    %1034 = arith.addf %1033, %1029 : vector<2x16xf32>
    %1035 = arith.negf %1034 : vector<2x16xf32>
    %1036 = math.exp %1035 : vector<2x16xf32>
    %cst_491 = arith.constant 1.000000e+00 : f32
    %1037 = vector.broadcast %cst_491 : f32 to vector<2x16xf32>
    %1038 = arith.addf %1037, %1036 : vector<2x16xf32>
    %1039 = arith.divf %1037, %1038 : vector<2x16xf32>
    %c0_492 = arith.constant 0 : index
    %c27_493 = arith.constant 27 : index
    %c0_494 = arith.constant 0 : index
    %1040 = vector.load %arg14[%c0_492, %c27_493, %c0_494] : memref<2x28x16xf32, #tpu.memory_space<vmem>>, vector<2x1x16xf32>
    %1041 = vector.shape_cast %1040 : vector<2x1x16xf32> to vector<2x16xf32>
    %1042 = arith.addf %1041, %1030 : vector<2x16xf32>
    %1043 = arith.negf %1042 : vector<2x16xf32>
    %1044 = math.exp %1043 : vector<2x16xf32>
    %cst_495 = arith.constant 1.000000e+00 : f32
    %1045 = vector.broadcast %cst_495 : f32 to vector<2x16xf32>
    %1046 = arith.addf %1045, %1044 : vector<2x16xf32>
    %1047 = arith.divf %1045, %1046 : vector<2x16xf32>
    %c0_496 = arith.constant 0 : index
    %c27_497 = arith.constant 27 : index
    %c0_498 = arith.constant 0 : index
    %1048 = vector.load %arg15[%c0_496, %c27_497, %c0_498] : memref<2x28x16xf32, #tpu.memory_space<vmem>>, vector<2x1x16xf32>
    %1049 = vector.shape_cast %1048 : vector<2x1x16xf32> to vector<2x16xf32>
    %1050 = vector.broadcast %9 : vector<1x16xf32> to vector<2x16xf32>
    %1051 = arith.addf %1031, %1050 : vector<2x16xf32>
    %1052 = arith.mulf %1039, %1051 : vector<2x16xf32>
    %1053 = arith.addf %1049, %1052 : vector<2x16xf32>
    %1054 = math.tanh %1053 : vector<2x16xf32>
    %1055 = arith.subf %1021, %1054 : vector<2x16xf32>
    %1056 = arith.mulf %1047, %1055 : vector<2x16xf32>
    %1057 = arith.addf %1054, %1056 : vector<2x16xf32>
    %cst_499 = arith.constant 0.000000e+00 : f32
    %1058 = vector.broadcast %cst_499 : f32 to vector<2x16xf32>
    %1059 = arith.maximumf %1057, %1058 : vector<2x16xf32>
    %1060 = arith.truncf %1059 : vector<2x16xf32> to vector<2x16xbf16>
    %c432 = arith.constant 432 : index
    %c0_500 = arith.constant 0 : index
    %1061 = vector.load %arg6[%c432, %c0_500] : memref<448x64xbf16, #tpu.memory_space<vmem>>, vector<16x64xbf16>
    %cst_501 = arith.constant dense<0.000000e+00> : vector<2x64xf32>
    %1062 = tpu.matmul %1060, %1061, %cst_501 {dimension_numbers = #tpu.dot_dimension_numbers<[1], [0], [0], [1], [0, 0, 1, 1], [], []>} : vector<2x16xbf16>, vector<16x64xbf16>, vector<2x64xf32> -> vector<2x64xf32>
    %1063 = arith.addf %1027, %1062 : vector<2x64xf32>
    %cst_502 = arith.constant 0.000000e+00 : f32
    %1064 = vector.broadcast %cst_502 : f32 to vector<2x64xf32>
    %1065 = arith.maximumf %1063, %1064 : vector<2x64xf32>
    %c0_503 = arith.constant 0 : index
    %c0_504 = arith.constant 0 : index
    %1066 = vector.load %arg8[%c0_503, %c0_504] : memref<16x64xbf16, #tpu.memory_space<vmem>>, vector<16x64xbf16>
    %c0_505 = arith.constant 0 : index
    %c0_506 = arith.constant 0 : index
    %1067 = vector.load %arg9[%c0_505, %c0_506] : memref<1x64xf32, #tpu.memory_space<vmem>>, vector<1x64xf32>
    %c0_507 = arith.constant 0 : index
    %c0_508 = arith.constant 0 : index
    %1068 = vector.load %arg1[%c0_507, %c0_508] : memref<2x16xf32, #tpu.memory_space<vmem>>, vector<2x16xf32>
    %1069 = arith.truncf %1068 : vector<2x16xf32> to vector<2x16xbf16>
    %cst_509 = arith.constant dense<0.000000e+00> : vector<2x64xf32>
    %1070 = tpu.matmul %1069, %1066, %cst_509 {dimension_numbers = #tpu.dot_dimension_numbers<[1], [0], [0], [1], [0, 0, 1, 1], [], []>} : vector<2x16xbf16>, vector<16x64xbf16>, vector<2x64xf32> -> vector<2x64xf32>
    %1071 = vector.broadcast %1067 : vector<1x64xf32> to vector<2x64xf32>
    %1072 = arith.addf %1070, %1071 : vector<2x64xf32>
    %cst_510 = arith.constant 0.000000e+00 : f32
    %1073 = vector.broadcast %cst_510 : f32 to vector<2x64xf32>
    %1074 = arith.maximumf %1072, %1073 : vector<2x64xf32>
    %c0_511 = arith.constant 0 : index
    %c0_512 = arith.constant 0 : index
    %1075 = vector.load %arg2[%c0_511, %c0_512] : memref<2x16xf32, #tpu.memory_space<vmem>>, vector<2x16xf32>
    %1076 = arith.truncf %1075 : vector<2x16xf32> to vector<2x16xbf16>
    %cst_513 = arith.constant dense<0.000000e+00> : vector<2x64xf32>
    %1077 = tpu.matmul %1076, %1066, %cst_513 {dimension_numbers = #tpu.dot_dimension_numbers<[1], [0], [0], [1], [0, 0, 1, 1], [], []>} : vector<2x16xbf16>, vector<16x64xbf16>, vector<2x64xf32> -> vector<2x64xf32>
    %1078 = vector.broadcast %1067 : vector<1x64xf32> to vector<2x64xf32>
    %1079 = arith.addf %1077, %1078 : vector<2x64xf32>
    %cst_514 = arith.constant 0.000000e+00 : f32
    %1080 = vector.broadcast %cst_514 : f32 to vector<2x64xf32>
    %1081 = arith.maximumf %1079, %1080 : vector<2x64xf32>
    %1082 = arith.addf %1065, %1074 : vector<2x64xf32>
    %1083 = arith.addf %1082, %1081 : vector<2x64xf32>
    %c0_515 = arith.constant 0 : index
    %c0_516 = arith.constant 0 : index
    %1084 = vector.load %arg10[%c0_515, %c0_516] : memref<1x64xf32, #tpu.memory_space<vmem>>, vector<1x64xf32>
    %1085 = vector.broadcast %1084 : vector<1x64xf32> to vector<2x64xf32>
    %1086 = arith.mulf %1083, %1085 : vector<2x64xf32>
    %cst_517 = arith.constant dense<0.000000e+00> : vector<2xf32>
    %1087 = vector.multi_reduction <add>, %1086, %cst_517 [1] : vector<2x64xf32> to vector<2xf32>
    %1088 = vector.shape_cast %1087 : vector<2xf32> to vector<2x1xf32>
    %c0_518 = arith.constant 0 : index
    %c0_519 = arith.constant 0 : index
    %1089 = vector.load %arg11[%c0_518, %c0_519] : memref<1x1xf32, #tpu.memory_space<vmem>>, vector<1x1xf32>
    %1090 = vector.broadcast %1089 : vector<1x1xf32> to vector<2x1xf32>
    %1091 = arith.addf %1088, %1090 : vector<2x1xf32>
    %c0_520 = arith.constant 0 : index
    %c0_521 = arith.constant 0 : index
    %1092 = vector.load %arg12[%c0_520, %c0_521] : memref<2x1xf32, #tpu.memory_space<vmem>>, vector<2x1xf32>
    tpu.vector_store %arg12[%c0_520, %c0_521], %1091 {strides = array<i32>} : memref<2x1xf32, #tpu.memory_space<vmem>>, vector<2x1xf32>,
    return
  }
}

</mosaic_0001>

<llo_original>
// kernel: critic_forward.1
$region0: #{critic_forward.1}
  #allocation0 [shape = 'u32[]', space=smem, size = 0x4, offset = 0x4, fixed_abs, tag = 'smem constant byte address 0x4 - core index']
  #allocation1 [shape = 'u32[144,128]{1,0:T(1,128)}', space=vmem, size = 0x12000, scoped, tag = 'internal scratch']
  #allocation2 [shape = 'f32[2,28,16]{2,1,0:T(8,128)}', space=vmem, size = 0x8000, scoped, tag = 'scratch operand']
  #allocation3 [shape = 'f32[2,28,16]{2,1,0:T(8,128)}', space=vmem, size = 0x8000, scoped, tag = 'scratch operand']
  #allocation4 [shape = 'f32[2,28,16]{2,1,0:T(8,128)}', space=vmem, size = 0x8000, scoped, tag = 'scratch operand']
  #allocation5 [shape = 'f32[1,1]{1,0:T(1,128)S(1)}', space=vmem, size = 0x200, scoped, tag = 'scoped memory for critic_forward.1']
  %s0 = inlined_call_operand.vmem [shape: f32[2,28,16], index: 0, kind: input, shape index: {}]
  %s1 = inlined_call_operand.vmem [shape: f32[2,16], index: 1, kind: input, shape index: {}]
  %s2 = inlined_call_operand.vmem [shape: f32[2,16], index: 2, kind: input, shape index: {}]
  %s3 = inlined_call_operand.vmem [shape: bf16[48,16], index: 3, kind: input, shape index: {}]
  %s4 = inlined_call_operand.vmem [shape: bf16[48,16], index: 4, kind: input, shape index: {}]
  %s5 = inlined_call_operand.vmem [shape: f32[4,16], index: 5, kind: input, shape index: {}]
  %s6 = inlined_call_operand.vmem [shape: bf16[448,64], index: 6, kind: input, shape index: {}]
  %s7 = inlined_call_operand.vmem [shape: f32[1,64], index: 7, kind: input, shape index: {}]
  %s8 = inlined_call_operand.vmem [shape: bf16[16,64], index: 8, kind: input, shape index: {}]
  %s9 = inlined_call_operand.vmem [shape: f32[1,64], index: 9, kind: input, shape index: {}]
  %s10 = inlined_call_operand.vmem [shape: f32[1,64], index: 10, kind: input, shape index: {}]
  %s11 = inlined_call_operand.<no memory space> [shape: f32[1,1], index: 11, kind: input, shape index: {}]
  %s12 = inlined_call_operand.vmem [shape: f32[2,1], index: 12, kind: output, shape index: {}]
  %s13 = sld [smem:[#allocation0]]
  $region58: #{critic_forward.1} parent=0
    _
  %s15 = ssub.s32 1, %s13
  %s16 = scalar_select 0, %s15, %s13
  %v17 = vstv %s11
  %18 = vst [vmem:[#allocation5] sm:$0x1] %v17
  // Predicated region
  $region2: #{critic_forward.1} parent=0 // pred_check
    _
  $region3: #{critic_forward.1} parent=0 // pred_check_branch
    %20 = sbr.rel (0) target = $region5
  $region4: #{critic_forward.1} parent=0 // pred_region
    _
  $region5: #{critic_forward.1} parent=0 // pred_fallthru
    _
  // Predicated region
  $region6: #{critic_forward.1} parent=0 // pred_check
    _
  $region7: #{critic_forward.1} parent=0 // pred_check_branch
    %22 = sbr.rel (0) target = $region9
  $region8: #{critic_forward.1} parent=0 // pred_region
    _
  $region9: #{critic_forward.1} parent=0 // pred_fallthru
    _
  // Predicated region
  $region10: #{critic_forward.1} parent=0 // pred_check
    _
  $region11: #{critic_forward.1} parent=0 // pred_check_branch
    %24 = sbr.rel (0) target = $region13
  $region12: #{critic_forward.1} parent=0 // pred_region
    _
  $region13: #{critic_forward.1} parent=0 // pred_fallthru
    _
  // Predicated region
  $region14: #{critic_forward.1} parent=0 // pred_check
    _
  $region15: #{critic_forward.1} parent=0 // pred_check_branch
    %26 = sbr.rel (0) target = $region17
  $region16: #{critic_forward.1} parent=0 // pred_region
    _
  $region17: #{critic_forward.1} parent=0 // pred_fallthru
    _
  // Predicated region
  $region18: #{critic_forward.1} parent=0 // pred_check
    _
  $region19: #{critic_forward.1} parent=0 // pred_check_branch
    %28 = sbr.rel (0) target = $region21
  $region20: #{critic_forward.1} parent=0 // pred_region
    _
  $region21: #{critic_forward.1} parent=0 // pred_fallthru
    _
  // Predicated region
  $region22: #{critic_forward.1} parent=0 // pred_check
    _
  $region23: #{critic_forward.1} parent=0 // pred_check_branch
    %30 = sbr.rel (0) target = $region25
  $region24: #{critic_forward.1} parent=0 // pred_region
    _
  $region25: #{critic_forward.1} parent=0 // pred_fallthru
    _
  // Predicated region
  $region26: #{critic_forward.1} parent=0 // pred_check
    _
  $region27: #{critic_forward.1} parent=0 // pred_check_branch
    %32 = sbr.rel (0) target = $region29
  $region28: #{critic_forward.1} parent=0 // pred_region
    _
  $region29: #{critic_forward.1} parent=0 // pred_fallthru
    _
  // Predicated region
  $region30: #{critic_forward.1} parent=0 // pred_check
    _
  $region31: #{critic_forward.1} parent=0 // pred_check_branch
    %34 = sbr.rel (0) target = $region33
  $region32: #{critic_forward.1} parent=0 // pred_region
    _
  $region33: #{critic_forward.1} parent=0 // pred_fallthru
    _
  // Predicated region
  $region34: #{critic_forward.1} parent=0 // pred_check
    _
  $region35: #{critic_forward.1} parent=0 // pred_check_branch
    %36 = sbr.rel (0) target = $region37
  $region36: #{critic_forward.1} parent=0 // pred_region
    _
  $region37: #{critic_forward.1} parent=0 // pred_fallthru
    _
  // Predicated region
  $region38: #{critic_forward.1} parent=0 // pred_check
    _
  $region39: #{critic_forward.1} parent=0 // pred_check_branch
    %38 = sbr.rel (0) target = $region41
  $region40: #{critic_forward.1} parent=0 // pred_region
    _
  $region41: #{critic_forward.1} parent=0 // pred_fallthru
    _
  // Predicated region
  $region42: #{critic_forward.1} parent=0 // pred_check
    _
  $region43: #{critic_forward.1} parent=0 // pred_check_branch
    %40 = sbr.rel (0) target = $region45
  $region44: #{critic_forward.1} parent=0 // pred_region
    _
  $region45: #{critic_forward.1} parent=0 // pred_fallthru
    _
  // Predicated region
  $region46: #{critic_forward.1} parent=0 // pred_check
    _
  $region47: #{critic_forward.1} parent=0 // pred_check_branch
    %42 = sbr.rel (0) target = $region49
  $region48: #{critic_forward.1} parent=0 // pred_region
    _
  $region49: #{critic_forward.1} parent=0 // pred_fallthru
    _
  %v44 = vld [vmem:[%s3] sm:$0xf]
  %v45 = vld [vmem:[%s3 + $0x4] sm:$0xf]
  %v46 = vld [vmem:[%s3 + $0x8] sm:$0xf]
  %v47 = vld [vmem:[%s3 + $0xc] sm:$0xf]
  %v48 = vld [vmem:[%s3 + $0x10] sm:$0xf]
  %v49 = vld [vmem:[%s3 + $0x14] sm:$0xf]
  %v50 = vld [vmem:[%s4] sm:$0xf]
  %v51 = vld [vmem:[%s4 + $0x4] sm:$0xf]
  %v52 = vld [vmem:[%s4 + $0x8] sm:$0xf]
  %v53 = vld [vmem:[%s4 + $0xc] sm:$0xf]
  %v54 = vld [vmem:[%s4 + $0x10] sm:$0xf]
  %v55 = vld [vmem:[%s4 + $0x14] sm:$0xf]
  %v56 = vld [vmem:[%s5] sm:$0x1]
  %v57 = vld [vmem:[%s5 + $0x1] sm:$0x1]
  %v58 = vld [vmem:[%s5 + $0x2] sm:$0x1]
  %v59 = vld [vmem:[%s5 + $0x3] sm:$0x1]
  %v60 = vld [vmem:[%s0] sm:$0xff]
  %v61 = vld [vmem:[%s0 + $0x8] sm:$0xff]
  %v62 = vld [vmem:[%s0 + $0x10] sm:$0xff]
  %v63 = vld [vmem:[%s0 + $0x18] sm:$0xf]
  %v64 = vpack.c.bf16 %v61, %v60
  %v65 = vpack.c.bf16 %v63, %v62
  %v66 = vlaneseq
  %v67 = vshrl.u32 %v66, 7
  %v68 = vsub.s32 0, %v67
  %v69 = vrot.slane %v56, %v68
  %v72 = vunpack.c.l.b16 %v44
  %v73 = vunpack.c.l.b16 %v45
  %v74 = vpack.c.b16 %v73, %v72
  %vm76 = vcmask 130048
  %v78 = vsel %vm76, %v64, 0
  %v81 = vsel %vm76, %v65, 0
  %83 = vmatprep.subr.bf16.mxu0 0
  %84 = vmatpush1.bf16.msra.mxu0 %v74
  %85 = vmatprep.subr.bf16.mxu0 0
  %86 = vmatpush1.bf16.msra.mxu0 0
  %87 = vmatprep.subr.bf16.mxu0 0
  %88 = vmatpush1.bf16.msra.mxu0 0
  %89 = vmatprep.subr.bf16.mxu0 0
  %90 = vmatpush1.bf16.msra.mxu0 0
  %91 = vmatprep.subr.bf16.mxu0 0
  %92 = vmatpush1.bf16.msra.mxu0 0
  %93 = vmatprep.subr.bf16.mxu0 0
  %94 = vmatpush1.bf16.msra.mxu0 0
  %95 = vmatprep.subr.bf16.mxu0 0
  %96 = vmatpush1.bf16.msra.mxu0 0
  %97 = vmatprep.subr.bf16.mxu0 0
  %98 = vmatpush1.bf16.msra.mxu0 0
  %99 = vmatprep.subr.bf16.mxu0 0
  %100 = vmatpush1.bf16.msra.mxu0 0
  %101 = vmatprep.subr.bf16.mxu0 0
  %102 = vmatpush1.bf16.msra.mxu0 0
  %103 = vmatprep.subr.bf16.mxu0 0
  %104 = vmatpush1.bf16.msra.mxu0 0
  %105 = vmatprep.subr.bf16.mxu0 0
  %106 = vmatpush1.bf16.msra.mxu0 0
  %107 = vmatprep.subr.bf16.mxu0 0
  %108 = vmatpush1.bf16.msra.mxu0 0
  %109 = vmatprep.subr.bf16.mxu0 0
  %110 = vmatpush1.bf16.msra.mxu0 0
  %111 = vmatprep.subr.bf16.mxu0 0
  %112 = vmatpush1.bf16.msra.mxu0 0
  %113 = vmatprep.subr.bf16.mxu0 0
  %114 = vmatpush1.bf16.msra.mxu0 0
  %115 = vmatprep.mubr.bf16.mxu0 0
  %116 = vmatmul.mubr.bf16.gmra.mrb[0].mxu0 %v78
  %v117 = vpop.f32.mrb[0].mxu0
  %v118 = vadd.f32 %v69, %v117
  %v119 = vpop.f32.mrb[0].mxu0
  %v120 = vpop.f32.mrb[0].mxu0
  %v121 = vadd.f32 %v69, %v120
  %v122 = vpop.f32.mrb[0].mxu0
  %123 = vmatprep.mubr.bf16.mxu0 0
  %124 = vmatmul.mubr.bf16.gmra.mrb[0].mxu0 %v81
  %v125 = vpop.f32.mrb[0].mxu0
  %v126 = vadd.f32 %v69, %v125
  %v127 = vpop.f32.mrb[0].mxu0
  %v128 = vpop.f32.mrb[0].mxu0
  %v129 = vadd.f32 %v69, %v128
  %v130 = vpop.f32.mrb[0].mxu0
  %131 = vdwg.mxu0
  %132 = vst.msk [vmem:[#allocation2] sm:$0xff] %vm76, %v118
  %133 = vst.msk [vmem:[#allocation2 + $0x8] sm:$0xff] %vm76, %v121
  %134 = vst.msk [vmem:[#allocation2 + $0x10] sm:$0xff] %vm76, %v126
  %vm135 = vcmask 125952
  %136 = vst.msk [vmem:[#allocation2 + $0x18] sm:$0xf] %vm135, %v129
  %v137 = vlaneseq
  %v138 = vshrl.u32 %v137, 7
  %v139 = vsub.s32 0, %v138
  %v140 = vrot.slane %v57, %v139
  %v143 = vunpack.c.l.b16 %v46
  %v144 = vunpack.c.l.b16 %v47
  %v145 = vpack.c.b16 %v144, %v143
  %147 = vmatprep.subr.bf16.mxu0 0
  %148 = vmatpush1.bf16.msra.mxu0 %v145
  %149 = vmatprep.subr.bf16.mxu0 0
  %150 = vmatpush1.bf16.msra.mxu0 0
  %151 = vmatprep.subr.bf16.mxu0 0
  %152 = vmatpush1.bf16.msra.mxu0 0
  %153 = vmatprep.subr.bf16.mxu0 0
  %154 = vmatpush1.bf16.msra.mxu0 0
  %155 = vmatprep.subr.bf16.mxu0 0
  %156 = vmatpush1.bf16.msra.mxu0 0
  %157 = vmatprep.subr.bf16.mxu0 0
  %158 = vmatpush1.bf16.msra.mxu0 0
  %159 = vmatprep.subr.bf16.mxu0 0
  %160 = vmatpush1.bf16.msra.mxu0 0
  %161 = vmatprep.subr.bf16.mxu0 0
  %162 = vmatpush1.bf16.msra.mxu0 0
  %163 = vmatprep.subr.bf16.mxu0 0
  %164 = vmatpush1.bf16.msra.mxu0 0
  %165 = vmatprep.subr.bf16.mxu0 0
  %166 = vmatpush1.bf16.msra.mxu0 0
  %167 = vmatprep.subr.bf16.mxu0 0
  %168 = vmatpush1.bf16.msra.mxu0 0
  %169 = vmatprep.subr.bf16.mxu0 0
  %170 = vmatpush1.bf16.msra.mxu0 0
  %171 = vmatprep.subr.bf16.mxu0 0
  %172 = vmatpush1.bf16.msra.mxu0 0
  %173 = vmatprep.subr.bf16.mxu0 0
  %174 = vmatpush1.bf16.msra.mxu0 0
  %175 = vmatprep.subr.bf16.mxu0 0
  %176 = vmatpush1.bf16.msra.mxu0 0
  %177 = vmatprep.subr.bf16.mxu0 0
  %178 = vmatpush1.bf16.msra.mxu0 0
  %179 = vmatprep.mubr.bf16.mxu0 0
  %180 = vmatmul.mubr.bf16.gmra.mrb[0].mxu0 %v78
  %v181 = vpop.f32.mrb[0].mxu0
  %v182 = vadd.f32 %v140, %v181
  %v183 = vpop.f32.mrb[0].mxu0
  %v184 = vpop.f32.mrb[0].mxu0
  %v185 = vadd.f32 %v140, %v184
  %v186 = vpop.f32.mrb[0].mxu0
  %187 = vmatprep.mubr.bf16.mxu0 0
  %188 = vmatmul.mubr.bf16.gmra.mrb[0].mxu0 %v81
  %v189 = vpop.f32.mrb[0].mxu0
  %v190 = vadd.f32 %v140, %v189
  %v191 = vpop.f32.mrb[0].mxu0
  %v192 = vpop.f32.mrb[0].mxu0
  %v193 = vadd.f32 %v140, %v192
  %v194 = vpop.f32.mrb[0].mxu0
  %195 = vdwg.mxu0
  %196 = vst.msk [vmem:[#allocation3] sm:$0xff] %vm76, %v182
  %197 = vst.msk [vmem:[#allocation3 + $0x8] sm:$0xff] %vm76, %v185
  %198 = vst.msk [vmem:[#allocation3 + $0x10] sm:$0xff] %vm76, %v190
  %199 = vst.msk [vmem:[#allocation3 + $0x18] sm:$0xf] %vm135, %v193
  %v200 = vlaneseq
  %v201 = vshrl.u32 %v200, 7
  %v202 = vsub.s32 0, %v201
  %v203 = vrot.slane %v58, %v202
  %v206 = vunpack.c.l.b16 %v48
  %v207 = vunpack.c.l.b16 %v49
  %v208 = vpack.c.b16 %v207, %v206
  %210 = vmatprep.subr.bf16.mxu0 0
  %211 = vmatpush1.bf16.msra.mxu0 %v208
  %212 = vmatprep.subr.bf16.mxu0 0
  %213 = vmatpush1.bf16.msra.mxu0 0
  %214 = vmatprep.subr.bf16.mxu0 0
  %215 = vmatpush1.bf16.msra.mxu0 0
  %216 = vmatprep.subr.bf16.mxu0 0
  %217 = vmatpush1.bf16.msra.mxu0 0
  %218 = vmatprep.subr.bf16.mxu0 0
  %219 = vmatpush1.bf16.msra.mxu0 0
  %220 = vmatprep.subr.bf16.mxu0 0
  %221 = vmatpush1.bf16.msra.mxu0 0
  %222 = vmatprep.subr.bf16.mxu0 0
  %223 = vmatpush1.bf16.msra.mxu0 0
  %224 = vmatprep.subr.bf16.mxu0 0
  %225 = vmatpush1.bf16.msra.mxu0 0
  %226 = vmatprep.subr.bf16.mxu0 0
  %227 = vmatpush1.bf16.msra.mxu0 0
  %228 = vmatprep.subr.bf16.mxu0 0
  %229 = vmatpush1.bf16.msra.mxu0 0
  %230 = vmatprep.subr.bf16.mxu0 0
  %231 = vmatpush1.bf16.msra.mxu0 0
  %232 = vmatprep.subr.bf16.mxu0 0
  %233 = vmatpush1.bf16.msra.mxu0 0
  %234 = vmatprep.subr.bf16.mxu0 0
  %235 = vmatpush1.bf16.msra.mxu0 0
  %236 = vmatprep.subr.bf16.mxu0 0
  %237 = vmatpush1.bf16.msra.mxu0 0
  %238 = vmatprep.subr.bf16.mxu0 0
  %239 = vmatpush1.bf16.msra.mxu0 0
  %240 = vmatprep.subr.bf16.mxu0 0
  %241 = vmatpush1.bf16.msra.mxu0 0
  %242 = vmatprep.mubr.bf16.mxu0 0
  %243 = vmatmul.mubr.bf16.gmra.mrb[0].mxu0 %v78
  %v244 = vpop.f32.mrb[0].mxu0
  %v245 = vadd.f32 %v203, %v244
  %v246 = vpop.f32.mrb[0].mxu0
  %v247 = vpop.f32.mrb[0].mxu0
  %v248 = vadd.f32 %v203, %v247
  %v249 = vpop.f32.mrb[0].mxu0
  %250 = vmatprep.mubr.bf16.mxu0 0
  %251 = vmatmul.mubr.bf16.gmra.mrb[0].mxu0 %v81
  %v252 = vpop.f32.mrb[0].mxu0
  %v253 = vadd.f32 %v203, %v252
  %v254 = vpop.f32.mrb[0].mxu0
  %v255 = vpop.f32.mrb[0].mxu0
  %v256 = vadd.f32 %v203, %v255
  %v257 = vpop.f32.mrb[0].mxu0
  %258 = vdwg.mxu0
  %259 = vst.msk [vmem:[#allocation4] sm:$0xff] %vm76, %v245
  %260 = vst.msk [vmem:[#allocation4 + $0x8] sm:$0xff] %vm76, %v248
  %261 = vst.msk [vmem:[#allocation4 + $0x10] sm:$0xff] %vm76, %v253
  %262 = vst.msk [vmem:[#allocation4 + $0x18] sm:$0xf] %vm135, %v256
  %s263 = scalar_lea.vmem %s0, 32
  %v264 = vld [vmem:[%s263] sm:$0xff]
  %v265 = vld [vmem:[%s263 + $0x8] sm:$0xff]
  %v266 = vld [vmem:[%s263 + $0x10] sm:$0xff]
  %v267 = vld [vmem:[%s263 + $0x18] sm:$0xf]
  %v268 = vpack.c.bf16 %v265, %v264
  %v269 = vpack.c.bf16 %v267, %v266
  %v271 = vsel %vm76, %v268, 0
  %v274 = vsel %vm76, %v269, 0
  %276 = vmatprep.subr.bf16.mxu0 0
  %277 = vmatpush1.bf16.msra.mxu0 %v74
  %278 = vmatprep.subr.bf16.mxu0 0
  %279 = vmatpush1.bf16.msra.mxu0 0
  %280 = vmatprep.subr.bf16.mxu0 0
  %281 = vmatpush1.bf16.msra.mxu0 0
  %282 = vmatprep.subr.bf16.mxu0 0
  %283 = vmatpush1.bf16.msra.mxu0 0
  %284 = vmatprep.subr.bf16.mxu0 0
  %285 = vmatpush1.bf16.msra.mxu0 0
  %286 = vmatprep.subr.bf16.mxu0 0
  %287 = vmatpush1.bf16.msra.mxu0 0
  %288 = vmatprep.subr.bf16.mxu0 0
  %289 = vmatpush1.bf16.msra.mxu0 0
  %290 = vmatprep.subr.bf16.mxu0 0
  %291 = vmatpush1.bf16.msra.mxu0 0
  %292 = vmatprep.subr.bf16.mxu0 0
  %293 = vmatpush1.bf16.msra.mxu0 0
  %294 = vmatprep.subr.bf16.mxu0 0
  %295 = vmatpush1.bf16.msra.mxu0 0
  %296 = vmatprep.subr.bf16.mxu0 0
  %297 = vmatpush1.bf16.msra.mxu0 0
  %298 = vmatprep.subr.bf16.mxu0 0
  %299 = vmatpush1.bf16.msra.mxu0 0
  %300 = vmatprep.subr.bf16.mxu0 0
  %301 = vmatpush1.bf16.msra.mxu0 0
  %302 = vmatprep.subr.bf16.mxu0 0
  %303 = vmatpush1.bf16.msra.mxu0 0
  %304 = vmatprep.subr.bf16.mxu0 0
  %305 = vmatpush1.bf16.msra.mxu0 0
  %306 = vmatprep.subr.bf16.mxu0 0
  %307 = vmatpush1.bf16.msra.mxu0 0
  %308 = vmatprep.mubr.bf16.mxu0 0
  %309 = vmatmul.mubr.bf16.gmra.mrb[0].mxu0 %v271
  %v310 = vpop.f32.mrb[0].mxu0
  %v311 = vadd.f32 %v69, %v310
  %v312 = vpop.f32.mrb[0].mxu0
  %v313 = vpop.f32.mrb[0].mxu0
  %v314 = vadd.f32 %v69, %v313
  %v315 = vpop.f32.mrb[0].mxu0
  %316 = vmatprep.mubr.bf16.mxu0 0
  %317 = vmatmul.mubr.bf16.gmra.mrb[0].mxu0 %v274
  %v318 = vpop.f32.mrb[0].mxu0
  %v319 = vadd.f32 %v69, %v318
  %v320 = vpop.f32.mrb[0].mxu0
  %v321 = vpop.f32.mrb[0].mxu0
  %v322 = vadd.f32 %v69, %v321
  %v323 = vpop.f32.mrb[0].mxu0
  %324 = vdwg.mxu0
  %s325 = scalar_lea.vmem [#allocation2], 32
  %326 = vst.msk [vmem:[%s325] sm:$0xff] %vm76, %v311
  %327 = vst.msk [vmem:[%s325 + $0x8] sm:$0xff] %vm76, %v314
  %328 = vst.msk [vmem:[%s325 + $0x10] sm:$0xff] %vm76, %v319
  %329 = vst.msk [vmem:[%s325 + $0x18] sm:$0xf] %vm135, %v322
  %330 = vmatprep.subr.bf16.mxu0 0
  %331 = vmatpush1.bf16.msra.mxu0 %v145
  %332 = vmatprep.subr.bf16.mxu0 0
  %333 = vmatpush1.bf16.msra.mxu0 0
  %334 = vmatprep.subr.bf16.mxu0 0
  %335 = vmatpush1.bf16.msra.mxu0 0
  %336 = vmatprep.subr.bf16.mxu0 0
  %337 = vmatpush1.bf16.msra.mxu0 0
  %338 = vmatprep.subr.bf16.mxu0 0
  %339 = vmatpush1.bf16.msra.mxu0 0
  %340 = vmatprep.subr.bf16.mxu0 0
  %341 = vmatpush1.bf16.msra.mxu0 0
  %342 = vmatprep.subr.bf16.mxu0 0
  %343 = vmatpush1.bf16.msra.mxu0 0
  %344 = vmatprep.subr.bf16.mxu0 0
  %345 = vmatpush1.bf16.msra.mxu0 0
  %346 = vmatprep.subr.bf16.mxu0 0
  %347 = vmatpush1.bf16.msra.mxu0 0
  %348 = vmatprep.subr.bf16.mxu0 0
  %349 = vmatpush1.bf16.msra.mxu0 0
  %350 = vmatprep.subr.bf16.mxu0 0
  %351 = vmatpush1.bf16.msra.mxu0 0
  %352 = vmatprep.subr.bf16.mxu0 0
  %353 = vmatpush1.bf16.msra.mxu0 0
  %354 = vmatprep.subr.bf16.mxu0 0
  %355 = vmatpush1.bf16.msra.mxu0 0
  %356 = vmatprep.subr.bf16.mxu0 0
  %357 = vmatpush1.bf16.msra.mxu0 0
  %358 = vmatprep.subr.bf16.mxu0 0
  %359 = vmatpush1.bf16.msra.mxu0 0
  %360 = vmatprep.subr.bf16.mxu0 0
  %361 = vmatpush1.bf16.msra.mxu0 0
  %362 = vmatprep.mubr.bf16.mxu0 0
  %363 = vmatmul.mubr.bf16.gmra.mrb[0].mxu0 %v271
  %v364 = vpop.f32.mrb[0].mxu0
  %v365 = vadd.f32 %v140, %v364
  %v366 = vpop.f32.mrb[0].mxu0
  %v367 = vpop.f32.mrb[0].mxu0
  %v368 = vadd.f32 %v140, %v367
  %v369 = vpop.f32.mrb[0].mxu0
  %370 = vmatprep.mubr.bf16.mxu0 0
  %371 = vmatmul.mubr.bf16.gmra.mrb[0].mxu0 %v274
  %v372 = vpop.f32.mrb[0].mxu0
  %v373 = vadd.f32 %v140, %v372
  %v374 = vpop.f32.mrb[0].mxu0
  %v375 = vpop.f32.mrb[0].mxu0
  %v376 = vadd.f32 %v140, %v375
  %v377 = vpop.f32.mrb[0].mxu0
  %378 = vdwg.mxu0
  %s379 = scalar_lea.vmem [#allocation3], 32
  %380 = vst.msk [vmem:[%s379] sm:$0xff] %vm76, %v365
  %381 = vst.msk [vmem:[%s379 + $0x8] sm:$0xff] %vm76, %v368
  %382 = vst.msk [vmem:[%s379 + $0x10] sm:$0xff] %vm76, %v373
  %383 = vst.msk [vmem:[%s379 + $0x18] sm:$0xf] %vm135, %v376
  %384 = vmatprep.subr.bf16.mxu0 0
  %385 = vmatpush1.bf16.msra.mxu0 %v208
  %386 = vmatprep.subr.bf16.mxu0 0
  %387 = vmatpush1.bf16.msra.mxu0 0
  %388 = vmatprep.subr.bf16.mxu0 0
  %389 = vmatpush1.bf16.msra.mxu0 0
  %390 = vmatprep.subr.bf16.mxu0 0
  %391 = vmatpush1.bf16.msra.mxu0 0
  %392 = vmatprep.subr.bf16.mxu0 0
  %393 = vmatpush1.bf16.msra.mxu0 0
  %394 = vmatprep.subr.bf16.mxu0 0
  %395 = vmatpush1.bf16.msra.mxu0 0
  %396 = vmatprep.subr.bf16.mxu0 0
  %397 = vmatpush1.bf16.msra.mxu0 0
  %398 = vmatprep.subr.bf16.mxu0 0
  %399 = vmatpush1.bf16.msra.mxu0 0
  %400 = vmatprep.subr.bf16.mxu0 0
  %401 = vmatpush1.bf16.msra.mxu0 0
  %402 = vmatprep.subr.bf16.mxu0 0
  %403 = vmatpush1.bf16.msra.mxu0 0
  %404 = vmatprep.subr.bf16.mxu0 0
  %405 = vmatpush1.bf16.msra.mxu0 0
  %406 = vmatprep.subr.bf16.mxu0 0
  %407 = vmatpush1.bf16.msra.mxu0 0
  %408 = vmatprep.subr.bf16.mxu0 0
  %409 = vmatpush1.bf16.msra.mxu0 0
  %410 = vmatprep.subr.bf16.mxu0 0
  %411 = vmatpush1.bf16.msra.mxu0 0
  %412 = vmatprep.subr.bf16.mxu0 0
  %413 = vmatpush1.bf16.msra.mxu0 0
  %414 = vmatprep.subr.bf16.mxu0 0
  %415 = vmatpush1.bf16.msra.mxu0 0
  %416 = vmatprep.mubr.bf16.mxu0 0
  %417 = vmatmul.mubr.bf16.gmra.mrb[0].mxu0 %v271
  %v418 = vpop.f32.mrb[0].mxu0
  %v419 = vadd.f32 %v203, %v418
  %v420 = vpop.f32.mrb[0].mxu0
  %v421 = vpop.f32.mrb[0].mxu0
  %v422 = vadd.f32 %v203, %v421
  %v423 = vpop.f32.mrb[0].mxu0
  %424 = vmatprep.mubr.bf16.mxu0 0
  %425 = vmatmul.mubr.bf16.gmra.mrb[0].mxu0 %v274
  %v426 = vpop.f32.mrb[0].mxu0
  %v427 = vadd.f32 %v203, %v426
  %v428 = vpop.f32.mrb[0].mxu0
  %v429 = vpop.f32.mrb[0].mxu0
  %v430 = vadd.f32 %v203, %v429
  %v431 = vpop.f32.mrb[0].mxu0
  %432 = vdwg.mxu0
  %s433 = scalar_lea.vmem [#allocation4], 32
  %434 = vst.msk [vmem:[%s433] sm:$0xff] %vm76, %v419
  %435 = vst.msk [vmem:[%s433 + $0x8] sm:$0xff] %vm76, %v422
  %436 = vst.msk [vmem:[%s433 + $0x10] sm:$0xff] %vm76, %v427
  %437 = vst.msk [vmem:[%s433 + $0x18] sm:$0xf] %vm135, %v430
  %v438 = vld [vmem:[%s7] sm:$0x1]
  %v440 = vlaneseq
  %v441 = vshrl.u32 %v440, 7
  %v442 = vsub.s32 0, %v441
  %v443 = vrot.slane %v438, %v442
  %v447 = vunpack.c.l.b16 %v50
  %v448 = vunpack.c.l.b16 %v51
  %v449 = vpack.c.b16 %v448, %v447
  %v452 = vsel %vm76, 0, 0
  %454 = vmatprep.subr.bf16.mxu0 0
  %455 = vmatpush1.bf16.msra.mxu0 %v449
  %456 = vmatprep.subr.bf16.mxu0 0
  %457 = vmatpush1.bf16.msra.mxu0 0
  %458 = vmatprep.subr.bf16.mxu0 0
  %459 = vmatpush1.bf16.msra.mxu0 0
  %460 = vmatprep.subr.bf16.mxu0 0
  %461 = vmatpush1.bf16.msra.mxu0 0
  %462 = vmatprep.subr.bf16.mxu0 0
  %463 = vmatpush1.bf16.msra.mxu0 0
  %464 = vmatprep.subr.bf16.mxu0 0
  %465 = vmatpush1.bf16.msra.mxu0 0
  %466 = vmatprep.subr.bf16.mxu0 0
  %467 = vmatpush1.bf16.msra.mxu0 0
  %468 = vmatprep.subr.bf16.mxu0 0
  %469 = vmatpush1.bf16.msra.mxu0 0
  %470 = vmatprep.subr.bf16.mxu0 0
  %471 = vmatpush1.bf16.msra.mxu0 0
  %472 = vmatprep.subr.bf16.mxu0 0
  %473 = vmatpush1.bf16.msra.mxu0 0
  %474 = vmatprep.subr.bf16.mxu0 0
  %475 = vmatpush1.bf16.msra.mxu0 0
  %476 = vmatprep.subr.bf16.mxu0 0
  %477 = vmatpush1.bf16.msra.mxu0 0
  %478 = vmatprep.subr.bf16.mxu0 0
  %479 = vmatpush1.bf16.msra.mxu0 0
  %480 = vmatprep.subr.bf16.mxu0 0
  %481 = vmatpush1.bf16.msra.mxu0 0
  %482 = vmatprep.subr.bf16.mxu0 0
  %483 = vmatpush1.bf16.msra.mxu0 0
  %484 = vmatprep.subr.bf16.mxu0 0
  %485 = vmatpush1.bf16.msra.mxu0 0
  %486 = vmatprep.mubr.bf16.mxu0 0
  %487 = vmatmul.mubr.bf16.gmra.mrb[0].mxu0 %v452
  %v488 = vpop.f32.mrb[0].mxu0
  %v489 = vadd.f32 0.0, %v488
  %v490 = vpop.f32.mrb[0].mxu0
  %v491 = vpop.f32.mrb[0].mxu0
  %v492 = vpop.f32.mrb[0].mxu0
  %493 = vdwg.mxu0
  %v496 = vunpack.c.l.b16 %v52
  %v497 = vunpack.c.l.b16 %v53
  %v498 = vpack.c.b16 %v497, %v496
  %500 = vmatprep.subr.bf16.mxu0 0
  %501 = vmatpush1.bf16.msra.mxu0 %v498
  %502 = vmatprep.subr.bf16.mxu0 0
  %503 = vmatpush1.bf16.msra.mxu0 0
  %504 = vmatprep.subr.bf16.mxu0 0
  %505 = vmatpush1.bf16.msra.mxu0 0
  %506 = vmatprep.subr.bf16.mxu0 0
  %507 = vmatpush1.bf16.msra.mxu0 0
  %508 = vmatprep.subr.bf16.mxu0 0
  %509 = vmatpush1.bf16.msra.mxu0 0
  %510 = vmatprep.subr.bf16.mxu0 0
  %511 = vmatpush1.bf16.msra.mxu0 0
  %512 = vmatprep.subr.bf16.mxu0 0
  %513 = vmatpush1.bf16.msra.mxu0 0
  %514 = vmatprep.subr.bf16.mxu0 0
  %515 = vmatpush1.bf16.msra.mxu0 0
  %516 = vmatprep.subr.bf16.mxu0 0
  %517 = vmatpush1.bf16.msra.mxu0 0
  %518 = vmatprep.subr.bf16.mxu0 0
  %519 = vmatpush1.bf16.msra.mxu0 0
  %520 = vmatprep.subr.bf16.mxu0 0
  %521 = vmatpush1.bf16.msra.mxu0 0
  %522 = vmatprep.subr.bf16.mxu0 0
  %523 = vmatpush1.bf16.msra.mxu0 0
  %524 = vmatprep.subr.bf16.mxu0 0
  %525 = vmatpush1.bf16.msra.mxu0 0
  %526 = vmatprep.subr.bf16.mxu0 0
  %527 = vmatpush1.bf16.msra.mxu0 0
  %528 = vmatprep.subr.bf16.mxu0 0
  %529 = vmatpush1.bf16.msra.mxu0 0
  %530 = vmatprep.subr.bf16.mxu0 0
  %531 = vmatpush1.bf16.msra.mxu0 0
  %532 = vmatprep.mubr.bf16.mxu0 0
  %533 = vmatmul.mubr.bf16.gmra.mrb[0].mxu0 %v452
  %v534 = vpop.f32.mrb[0].mxu0
  %v535 = vadd.f32 0.0, %v534
  %v536 = vpop.f32.mrb[0].mxu0
  %v537 = vpop.f32.mrb[0].mxu0
  %v538 = vpop.f32.mrb[0].mxu0
  %539 = vdwg.mxu0
  %v540 = vld [vmem:[#allocation2] sm:$0x1]
  %v541 = vld [vmem:[#allocation2 + $0x20] sm:$0x1]
  %v543 = vrot.slane %v489, 1
  %v546 = vadd.f32 %v540, %v489
  %v547 = vadd.f32 %v541, %v543
  %v548 = vxor.u32 %v546, 2147483648
  %v549 = vxor.u32 %v547, 2147483648
  %v550 = vmul.f32 %v548, 1.442695
  %v551 = vpow.pop %v550
  %v552 = vmul.f32 %v549, 1.442695
  %v553 = vpow.pop %v552
  %v554 = vadd.f32 %v551, 1.0
  %v555 = vadd.f32 %v553, 1.0
  %v556 = vrcp.pop %v554
  %v557 = vmul.f32 1.0, %v556
  %v558 = vrcp.pop %v555
  %v559 = vmul.f32 1.0, %v558
  %v560 = vld [vmem:[#allocation3] sm:$0x1]
  %v561 = vld [vmem:[#allocation3 + $0x20] sm:$0x1]
  %v563 = vrot.slane %v535, 1
  %v566 = vadd.f32 %v560, %v535
  %v567 = vadd.f32 %v561, %v563
  %v568 = vxor.u32 %v566, 2147483648
  %v569 = vxor.u32 %v567, 2147483648
  %v570 = vmul.f32 %v568, 1.442695
  %v571 = vpow.pop %v570
  %v572 = vmul.f32 %v569, 1.442695
  %v573 = vpow.pop %v572
  %v574 = vadd.f32 %v571, 1.0
  %v575 = vadd.f32 %v573, 1.0
  %v576 = vrcp.pop %v574
  %v577 = vmul.f32 1.0, %v576
  %v578 = vrcp.pop %v575
  %v579 = vmul.f32 1.0, %v578
  %v580 = vld [vmem:[#allocation4] sm:$0x1]
  %v581 = vld [vmem:[#allocation4 + $0x20] sm:$0x1]
  %v582 = vlaneseq
  %v583 = vshrl.u32 %v582, 7
  %v584 = vsub.s32 0, %v583
  %v585 = vrot.slane %v59, %v584
  %v588 = vunpack.c.l.b16 %v54
  %v589 = vunpack.c.l.b16 %v55
  %v590 = vpack.c.b16 %v589, %v588
  %592 = vmatprep.subr.bf16.mxu0 0
  %593 = vmatpush1.bf16.msra.mxu0 %v590
  %594 = vmatprep.subr.bf16.mxu0 0
  %595 = vmatpush1.bf16.msra.mxu0 0
  %596 = vmatprep.subr.bf16.mxu0 0
  %597 = vmatpush1.bf16.msra.mxu0 0
  %598 = vmatprep.subr.bf16.mxu0 0
  %599 = vmatpush1.bf16.msra.mxu0 0
  %600 = vmatprep.subr.bf16.mxu0 0
  %601 = vmatpush1.bf16.msra.mxu0 0
  %602 = vmatprep.subr.bf16.mxu0 0
  %603 = vmatpush1.bf16.msra.mxu0 0
  %604 = vmatprep.subr.bf16.mxu0 0
  %605 = vmatpush1.bf16.msra.mxu0 0
  %606 = vmatprep.subr.bf16.mxu0 0
  %607 = vmatpush1.bf16.msra.mxu0 0
  %608 = vmatprep.subr.bf16.mxu0 0
  %609 = vmatpush1.bf16.msra.mxu0 0
  %610 = vmatprep.subr.bf16.mxu0 0
  %611 = vmatpush1.bf16.msra.mxu0 0
  %612 = vmatprep.subr.bf16.mxu0 0
  %613 = vmatpush1.bf16.msra.mxu0 0
  %614 = vmatprep.subr.bf16.mxu0 0
  %615 = vmatpush1.bf16.msra.mxu0 0
  %616 = vmatprep.subr.bf16.mxu0 0
  %617 = vmatpush1.bf16.msra.mxu0 0
  %618 = vmatprep.subr.bf16.mxu0 0
  %619 = vmatpush1.bf16.msra.mxu0 0
  %620 = vmatprep.subr.bf16.mxu0 0
  %621 = vmatpush1.bf16.msra.mxu0 0
  %622 = vmatprep.subr.bf16.mxu0 0
  %623 = vmatpush1.bf16.msra.mxu0 0
  %624 = vmatprep.mubr.bf16.mxu0 0
  %625 = vmatmul.mubr.bf16.gmra.mrb[0].mxu0 %v452
  %v626 = vpop.f32.mrb[0].mxu0
  %v627 = vadd.f32 %v585, %v626
  %v628 = vpop.f32.mrb[0].mxu0
  %v629 = vpop.f32.mrb[0].mxu0
  %v630 = vpop.f32.mrb[0].mxu0
  %631 = vdwg.mxu0
  %v633 = vrot.slane %v627, 1
  %v636 = vmul.f32 %v557, %v627
  %v637 = vmul.f32 %v559, %v633
  %v638 = vadd.f32 %v580, %v636
  %v639 = vadd.f32 %v581, %v637
  %v640 = vtanh.pop %v638
  %v641 = vtanh.pop %v639
  %v642 = vsub.f32 0.0, %v640
  %v643 = vsub.f32 0.0, %v641
  %v644 = vmul.f32 %v577, %v642
  %v645 = vmul.f32 %v579, %v643
  %v646 = vadd.f32 %v640, %v644
  %v647 = vadd.f32 %v641, %v645
  %v648 = vmax.f32 %v646, 0.0
  %v649 = vmax.f32 %v647, 0.0
  %v650 = vpack.c.bf16 %v648, %v648
  %v651 = vpack.c.bf16 %v649, %v649
  %v652 = vld [vmem:[%s6] sm:$0xf]
  %v653 = vld [vmem:[%s6 + $0x4] sm:$0xf]
  %v656 = vunpack.c.l.b16 %v650
  %v657 = vunpack.c.l.b16 %v651
  %v658 = vrot.slane %v657, 7
  %vm659 = vcmask 1041409
  %v660 = vsel %vm659, %v658, %v656
  %v661 = vpack.c.b16 %v660, %v660
  %v664 = vunpack.c.l.b16 %v652
  %v665 = vunpack.c.l.b16 %v653
  %v666 = vpack.c.b16 %v665, %v664
  %v669 = vsel %vm76, %v661, 0
  %671 = vmatprep.subr.bf16.mxu0 0
  %672 = vmatpush1.bf16.msra.mxu0 %v666
  %673 = vmatprep.subr.bf16.mxu0 0
  %674 = vmatpush1.bf16.msra.mxu0 0
  %675 = vmatprep.subr.bf16.mxu0 0
  %676 = vmatpush1.bf16.msra.mxu0 0
  %677 = vmatprep.subr.bf16.mxu0 0
  %678 = vmatpush1.bf16.msra.mxu0 0
  %679 = vmatprep.subr.bf16.mxu0 0
  %680 = vmatpush1.bf16.msra.mxu0 0
  %681 = vmatprep.subr.bf16.mxu0 0
  %682 = vmatpush1.bf16.msra.mxu0 0
  %683 = vmatprep.subr.bf16.mxu0 0
  %684 = vmatpush1.bf16.msra.mxu0 0
  %685 = vmatprep.subr.bf16.mxu0 0
  %686 = vmatpush1.bf16.msra.mxu0 0
  %687 = vmatprep.subr.bf16.mxu0 0
  %688 = vmatpush1.bf16.msra.mxu0 0
  %689 = vmatprep.subr.bf16.mxu0 0
  %690 = vmatpush1.bf16.msra.mxu0 0
  %691 = vmatprep.subr.bf16.mxu0 0
  %692 = vmatpush1.bf16.msra.mxu0 0
  %693 = vmatprep.subr.bf16.mxu0 0
  %694 = vmatpush1.bf16.msra.mxu0 0
  %695 = vmatprep.subr.bf16.mxu0 0
  %696 = vmatpush1.bf16.msra.mxu0 0
  %697 = vmatprep.subr.bf16.mxu0 0
  %698 = vmatpush1.bf16.msra.mxu0 0
  %699 = vmatprep.subr.bf16.mxu0 0
  %700 = vmatpush1.bf16.msra.mxu0 0
  %701 = vmatprep.subr.bf16.mxu0 0
  %702 = vmatpush1.bf16.msra.mxu0 0
  %703 = vmatprep.mubr.bf16.mxu0 0
  %704 = vmatmul.mubr.bf16.gmra.mrb[0].mxu0 %v669
  %v705 = vpop.f32.mrb[0].mxu0
  %v706 = vadd.f32 0.0, %v705
  %v707 = vpop.f32.mrb[0].mxu0
  %v708 = vpop.f32.mrb[0].mxu0
  %v709 = vpop.f32.mrb[0].mxu0
  %710 = vdwg.mxu0
  %v711 = vadd.f32 %v443, %v706
  %v712 = vpack.c.bf16 %v646, %v646
  %v713 = vpack.c.bf16 %v647, %v647
  %v716 = vunpack.c.l.b16 %v712
  %v717 = vunpack.c.l.b16 %v713
  %v718 = vrot.slane %v717, 7
  %v719 = vsel %vm659, %v718, %v716
  %v720 = vpack.c.b16 %v719, %v719
  %v722 = vsel %vm76, %v720, 0
  %724 = vmatprep.subr.bf16.mxu0 0
  %725 = vmatpush1.bf16.msra.mxu0 %v449
  %726 = vmatprep.subr.bf16.mxu0 0
  %727 = vmatpush1.bf16.msra.mxu0 0
  %728 = vmatprep.subr.bf16.mxu0 0
  %729 = vmatpush1.bf16.msra.mxu0 0
  %730 = vmatprep.subr.bf16.mxu0 0
  %731 = vmatpush1.bf16.msra.mxu0 0
  %732 = vmatprep.subr.bf16.mxu0 0
  %733 = vmatpush1.bf16.msra.mxu0 0
  %734 = vmatprep.subr.bf16.mxu0 0
  %735 = vmatpush1.bf16.msra.mxu0 0
  %736 = vmatprep.subr.bf16.mxu0 0
  %737 = vmatpush1.bf16.msra.mxu0 0
  %738 = vmatprep.subr.bf16.mxu0 0
  %739 = vmatpush1.bf16.msra.mxu0 0
  %740 = vmatprep.subr.bf16.mxu0 0
  %741 = vmatpush1.bf16.msra.mxu0 0
  %742 = vmatprep.subr.bf16.mxu0 0
  %743 = vmatpush1.bf16.msra.mxu0 0
  %744 = vmatprep.subr.bf16.mxu0 0
  %745 = vmatpush1.bf16.msra.mxu0 0
  %746 = vmatprep.subr.bf16.mxu0 0
  %747 = vmatpush1.bf16.msra.mxu0 0
  %748 = vmatprep.subr.bf16.mxu0 0
  %749 = vmatpush1.bf16.msra.mxu0 0
  %750 = vmatprep.subr.bf16.mxu0 0
  %751 = vmatpush1.bf16.msra.mxu0 0
  %752 = vmatprep.subr.bf16.mxu0 0
  %753 = vmatpush1.bf16.msra.mxu0 0
  %754 = vmatprep.subr.bf16.mxu0 0
  %755 = vmatpush1.bf16.msra.mxu0 0
  %756 = vmatprep.mubr.bf16.mxu0 0
  %757 = vmatmul.mubr.bf16.gmra.mrb[0].mxu0 %v722
  %v758 = vpop.f32.mrb[0].mxu0
  %v759 = vadd.f32 0.0, %v758
  %v760 = vpop.f32.mrb[0].mxu0
  %v761 = vpop.f32.mrb[0].mxu0
  %v762 = vpop.f32.mrb[0].mxu0
  %763 = vdwg.mxu0
  %764 = vmatprep.subr.bf16.mxu0 0
  %765 = vmatpush1.bf16.msra.mxu0 %v498
  %766 = vmatprep.subr.bf16.mxu0 0
  %767 = vmatpush1.bf16.msra.mxu0 0
  %768 = vmatprep.subr.bf16.mxu0 0
  %769 = vmatpush1.bf16.msra.mxu0 0
  %770 = vmatprep.subr.bf16.mxu0 0
  %771 = vmatpush1.bf16.msra.mxu0 0
  %772 = vmatprep.subr.bf16.mxu0 0
  %773 = vmatpush1.bf16.msra.mxu0 0
  %774 = vmatprep.subr.bf16.mxu0 0
  %775 = vmatpush1.bf16.msra.mxu0 0
  %776 = vmatprep.subr.bf16.mxu0 0
  %777 = vmatpush1.bf16.msra.mxu0 0
  %778 = vmatprep.subr.bf16.mxu0 0
  %779 = vmatpush1.bf16.msra.mxu0 0
  %780 = vmatprep.subr.bf16.mxu0 0
  %781 = vmatpush1.bf16.msra.mxu0 0
  %782 = vmatprep.subr.bf16.mxu0 0
  %783 = vmatpush1.bf16.msra.mxu0 0
  %784 = vmatprep.subr.bf16.mxu0 0
  %785 = vmatpush1.bf16.msra.mxu0 0
  %786 = vmatprep.subr.bf16.mxu0 0
  %787 = vmatpush1.bf16.msra.mxu0 0
  %788 = vmatprep.subr.bf16.mxu0 0
  %789 = vmatpush1.bf16.msra.mxu0 0
  %790 = vmatprep.subr.bf16.mxu0 0
  %791 = vmatpush1.bf16.msra.mxu0 0
  %792 = vmatprep.subr.bf16.mxu0 0
  %793 = vmatpush1.bf16.msra.mxu0 0
  %794 = vmatprep.subr.bf16.mxu0 0
  %795 = vmatpush1.bf16.msra.mxu0 0
  %796 = vmatprep.mubr.bf16.mxu0 0
  %797 = vmatmul.mubr.bf16.gmra.mrb[0].mxu0 %v722
  %v798 = vpop.f32.mrb[0].mxu0
  %v799 = vadd.f32 0.0, %v798
  %v800 = vpop.f32.mrb[0].mxu0
  %v801 = vpop.f32.mrb[0].mxu0
  %v802 = vpop.f32.mrb[0].mxu0
  %803 = vdwg.mxu0
  %v804 = vld [vmem:[#allocation2 + $0x1] sm:$0x1]
  %v805 = vld [vmem:[#allocation2 + $0x21] sm:$0x1]
  %v807 = vrot.slane %v759, 1
  %v810 = vadd.f32 %v804, %v759
  %v811 = vadd.f32 %v805, %v807
  %v812 = vxor.u32 %v810, 2147483648
  %v813 = vxor.u32 %v811, 2147483648
  %v814 = vmul.f32 %v812, 1.442695
  %v815 = vpow.pop %v814
  %v816 = vmul.f32 %v813, 1.442695
  %v817 = vpow.pop %v816
  %v818 = vadd.f32 %v815, 1.0
  %v819 = vadd.f32 %v817, 1.0
  %v820 = vrcp.pop %v818
  %v821 = vmul.f32 1.0, %v820
  %v822 = vrcp.pop %v819
  %v823 = vmul.f32 1.0, %v822
  %v824 = vld [vmem:[#allocation3 + $0x1] sm:$0x1]
  %v825 = vld [vmem:[#allocation3 + $0x21] sm:$0x1]
  %v827 = vrot.slane %v799, 1
  %v830 = vadd.f32 %v824, %v799
  %v831 = vadd.f32 %v825, %v827
  %v832 = vxor.u32 %v830, 2147483648
  %v833 = vxor.u32 %v831, 2147483648
  %v834 = vmul.f32 %v832, 1.442695
  %v835 = vpow.pop %v834
  %v836 = vmul.f32 %v833, 1.442695
  %v837 = vpow.pop %v836
  %v838 = vadd.f32 %v835, 1.0
  %v839 = vadd.f32 %v837, 1.0
  %v840 = vrcp.pop %v838
  %v841 = vmul.f32 1.0, %v840
  %v842 = vrcp.pop %v839
  %v843 = vmul.f32 1.0, %v842
  %v844 = vld [vmem:[#allocation4 + $0x1] sm:$0x1]
  %v845 = vld [vmem:[#allocation4 + $0x21] sm:$0x1]
  %846 = vmatprep.subr.bf16.mxu0 0
  %847 = vmatpush1.bf16.msra.mxu0 %v590
  %848 = vmatprep.subr.bf16.mxu0 0
  %849 = vmatpush1.bf16.msra.mxu0 0
  %850 = vmatprep.subr.bf16.mxu0 0
  %851 = vmatpush1.bf16.msra.mxu0 0
  %852 = vmatprep.subr.bf16.mxu0 0
  %853 = vmatpush1.bf16.msra.mxu0 0
  %854 = vmatprep.subr.bf16.mxu0 0
  %855 = vmatpush1.bf16.msra.mxu0 0
  %856 = vmatprep.subr.bf16.mxu0 0
  %857 = vmatpush1.bf16.msra.mxu0 0
  %858 = vmatprep.subr.bf16.mxu0 0
  %859 = vmatpush1.bf16.msra.mxu0 0
  %860 = vmatprep.subr.bf16.mxu0 0
  %861 = vmatpush1.bf16.msra.mxu0 0
  %862 = vmatprep.subr.bf16.mxu0 0
  %863 = vmatpush1.bf16.msra.mxu0 0
  %864 = vmatprep.subr.bf16.mxu0 0
  %865 = vmatpush1.bf16.msra.mxu0 0
  %866 = vmatprep.subr.bf16.mxu0 0
  %867 = vmatpush1.bf16.msra.mxu0 0
  %868 = vmatprep.subr.bf16.mxu0 0
  %869 = vmatpush1.bf16.msra.mxu0 0
  %870 = vmatprep.subr.bf16.mxu0 0
  %871 = vmatpush1.bf16.msra.mxu0 0
  %872 = vmatprep.subr.bf16.mxu0 0
  %873 = vmatpush1.bf16.msra.mxu0 0
  %874 = vmatprep.subr.bf16.mxu0 0
  %875 = vmatpush1.bf16.msra.mxu0 0
  %876 = vmatprep.subr.bf16.mxu0 0
  %877 = vmatpush1.bf16.msra.mxu0 0
  %878 = vmatprep.mubr.bf16.mxu0 0
  %879 = vmatmul.mubr.bf16.gmra.mrb[0].mxu0 %v722
  %v880 = vpop.f32.mrb[0].mxu0
  %v881 = vadd.f32 %v585, %v880
  %v882 = vpop.f32.mrb[0].mxu0
  %v883 = vpop.f32.mrb[0].mxu0
  %v884 = vpop.f32.mrb[0].mxu0
  %885 = vdwg.mxu0
  %v887 = vrot.slane %v881, 1
  %v890 = vmul.f32 %v821, %v881
  %v891 = vmul.f32 %v823, %v887
  %v892 = vadd.f32 %v844, %v890
  %v893 = vadd.f32 %v845, %v891
  %v894 = vtanh.pop %v892
  %v895 = vtanh.pop %v893
  %v896 = vsub.f32 %v646, %v894
  %v897 = vsub.f32 %v647, %v895
  %v898 = vmul.f32 %v841, %v896
  %v899 = vmul.f32 %v843, %v897
  %v900 = vadd.f32 %v894, %v898
  %v901 = vadd.f32 %v895, %v899
  %v902 = vmax.f32 %v900, 0.0
  %v903 = vmax.f32 %v901, 0.0
  %v904 = vpack.c.bf16 %v902, %v902
  %v905 = vpack.c.bf16 %v903, %v903
  %v906 = vld [vmem:[%s6 + $0x8] sm:$0xf]
  %v907 = vld [vmem:[%s6 + $0xc] sm:$0xf]
  %v910 = vunpack.c.l.b16 %v904
  %v911 = vunpack.c.l.b16 %v905
  %v912 = vrot.slane %v911, 7
  %v913 = vsel %vm659, %v912, %v910
  %v914 = vpack.c.b16 %v913, %v913
  %v917 = vunpack.c.l.b16 %v906
  %v918 = vunpack.c.l.b16 %v907
  %v919 = vpack.c.b16 %v918, %v917
  %v922 = vsel %vm76, %v914, 0
  %924 = vmatprep.subr.bf16.mxu0 0
  %925 = vmatpush1.bf16.msra.mxu0 %v919
  %926 = vmatprep.subr.bf16.mxu0 0
  %927 = vmatpush1.bf16.msra.mxu0 0
  %928 = vmatprep.subr.bf16.mxu0 0
  %929 = vmatpush1.bf16.msra.mxu0 0
  %930 = vmatprep.subr.bf16.mxu0 0
  %931 = vmatpush1.bf16.msra.mxu0 0
  %932 = vmatprep.subr.bf16.mxu0 0
  %933 = vmatpush1.bf16.msra.mxu0 0
  %934 = vmatprep.subr.bf16.mxu0 0
  %935 = vmatpush1.bf16.msra.mxu0 0
  %936 = vmatprep.subr.bf16.mxu0 0
  %937 = vmatpush1.bf16.msra.mxu0 0
  %938 = vmatprep.subr.bf16.mxu0 0
  %939 = vmatpush1.bf16.msra.mxu0 0
  %940 = vmatprep.subr.bf16.mxu0 0
  %941 = vmatpush1.bf16.msra.mxu0 0
  %942 = vmatprep.subr.bf16.mxu0 0
  %943 = vmatpush1.bf16.msra.mxu0 0
  %944 = vmatprep.subr.bf16.mxu0 0
  %945 = vmatpush1.bf16.msra.mxu0 0
  %946 = vmatprep.subr.bf16.mxu0 0
  %947 = vmatpush1.bf16.msra.mxu0 0
  %948 = vmatprep.subr.bf16.mxu0 0
  %949 = vmatpush1.bf16.msra.mxu0 0
  %950 = vmatprep.subr.bf16.mxu0 0
  %951 = vmatpush1.bf16.msra.mxu0 0
  %952 = vmatprep.subr.bf16.mxu0 0
  %953 = vmatpush1.bf16.msra.mxu0 0
  %954 = vmatprep.subr.bf16.mxu0 0
  %955 = vmatpush1.bf16.msra.mxu0 0
  %956 = vmatprep.mubr.bf16.mxu0 0
  %957 = vmatmul.mubr.bf16.gmra.mrb[0].mxu0 %v922
  %v958 = vpop.f32.mrb[0].mxu0
  %v959 = vadd.f32 0.0, %v958
  %v960 = vpop.f32.mrb[0].mxu0
  %v961 = vpop.f32.mrb[0].mxu0
  %v962 = vpop.f32.mrb[0].mxu0
  %963 = vdwg.mxu0
  %v964 = vadd.f32 %v711, %v959
  %v965 = vpack.c.bf16 %v900, %v900
  %v966 = vpack.c.bf16 %v901, %v901
  %v969 = vunpack.c.l.b16 %v965
  %v970 = vunpack.c.l.b16 %v966
  %v971 = vrot.slane %v970, 7
  %v972 = vsel %vm659, %v971, %v969
  %v973 = vpack.c.b16 %v972, %v972
  %v975 = vsel %vm76, %v973, 0
  %977 = vmatprep.subr.bf16.mxu0 0
  %978 = vmatpush1.bf16.msra.mxu0 %v449
  %979 = vmatprep.subr.bf16.mxu0 0
  %980 = vmatpush1.bf16.msra.mxu0 0
  %981 = vmatprep.subr.bf16.mxu0 0
  %982 = vmatpush1.bf16.msra.mxu0 0
  %983 = vmatprep.subr.bf16.mxu0 0
  %984 = vmatpush1.bf16.msra.mxu0 0
  %985 = vmatprep.subr.bf16.mxu0 0
  %986 = vmatpush1.bf16.msra.mxu0 0
  %987 = vmatprep.subr.bf16.mxu0 0
  %988 = vmatpush1.bf16.msra.mxu0 0
  %989 = vmatprep.subr.bf16.mxu0 0
  %990 = vmatpush1.bf16.msra.mxu0 0
  %991 = vmatprep.subr.bf16.mxu0 0
  %992 = vmatpush1.bf16.msra.mxu0 0
  %993 = vmatprep.subr.bf16.mxu0 0
  %994 = vmatpush1.bf16.msra.mxu0 0
  %995 = vmatprep.subr.bf16.mxu0 0
  %996 = vmatpush1.bf16.msra.mxu0 0
  %997 = vmatprep.subr.bf16.mxu0 0
  %998 = vmatpush1.bf16.msra.mxu0 0
  %999 = vmatprep.subr.bf16.mxu0 0
  %1000 = vmatpush1.bf16.msra.mxu0 0
  %1001 = vmatprep.subr.bf16.mxu0 0
  %1002 = vmatpush1.bf16.msra.mxu0 0
  %1003 = vmatprep.subr.bf16.mxu0 0
  %1004 = vmatpush1.bf16.msra.mxu0 0
  %1005 = vmatprep.subr.bf16.mxu0 0
  %1006 = vmatpush1.bf16.msra.mxu0 0
  %1007 = vmatprep.subr.bf16.mxu0 0
  %1008 = vmatpush1.bf16.msra.mxu0 0
  %1009 = vmatprep.mubr.bf16.mxu0 0
  %1010 = vmatmul.mubr.bf16.gmra.mrb[0].mxu0 %v975
  %v1011 = vpop.f32.mrb[0].mxu0
  %v1012 = vadd.f32 0.0, %v1011
  %v1013 = vpop.f32.mrb[0].mxu0
  %v1014 = vpop.f32.mrb[0].mxu0
  %v1015 = vpop.f32.mrb[0].mxu0
  %1016 = vdwg.mxu0
  %1017 = vmatprep.subr.bf16.mxu0 0
  %1018 = vmatpush1.bf16.msra.mxu0 %v498
  %1019 = vmatprep.subr.bf16.mxu0 0
  %1020 = vmatpush1.bf16.msra.mxu0 0
  %1021 = vmatprep.subr.bf16.mxu0 0
  %1022 = vmatpush1.bf16.msra.mxu0 0
  %1023 = vmatprep.subr.bf16.mxu0 0
  %1024 = vmatpush1.bf16.msra.mxu0 0
  %1025 = vmatprep.subr.bf16.mxu0 0
  %1026 = vmatpush1.bf16.msra.mxu0 0
  %1027 = vmatprep.subr.bf16.mxu0 0
  %1028 = vmatpush1.bf16.msra.mxu0 0
  %1029 = vmatprep.subr.bf16.mxu0 0
  %1030 = vmatpush1.bf16.msra.mxu0 0
  %1031 = vmatprep.subr.bf16.mxu0 0
  %1032 = vmatpush1.bf16.msra.mxu0 0
  %1033 = vmatprep.subr.bf16.mxu0 0
  %1034 = vmatpush1.bf16.msra.mxu0 0
  %1035 = vmatprep.subr.bf16.mxu0 0
  %1036 = vmatpush1.bf16.msra.mxu0 0
  %1037 = vmatprep.subr.bf16.mxu0 0
  %1038 = vmatpush1.bf16.msra.mxu0 0
  %1039 = vmatprep.subr.bf16.mxu0 0
  %1040 = vmatpush1.bf16.msra.mxu0 0
  %1041 = vmatprep.subr.bf16.mxu0 0
  %1042 = vmatpush1.bf16.msra.mxu0 0
  %1043 = vmatprep.subr.bf16.mxu0 0
  %1044 = vmatpush1.bf16.msra.mxu0 0
  %1045 = vmatprep.subr.bf16.mxu0 0
  %1046 = vmatpush1.bf16.msra.mxu0 0
  %1047 = vmatprep.subr.bf16.mxu0 0
  %1048 = vmatpush1.bf16.msra.mxu0 0
  %1049 = vmatprep.mubr.bf16.mxu0 0
  %1050 = vmatmul.mubr.bf16.gmra.mrb[0].mxu0 %v975
  %v1051 = vpop.f32.mrb[0].mxu0
  %v1052 = vadd.f32 0.0, %v1051
  %v1053 = vpop.f32.mrb[0].mxu0
  %v1054 = vpop.f32.mrb[0].mxu0
  %v1055 = vpop.f32.mrb[0].mxu0
  %1056 = vdwg.mxu0
  %v1057 = vld [vmem:[#allocation2 + $0x2] sm:$0x1]
  %v1058 = vld [vmem:[#allocation2 + $0x22] sm:$0x1]
  %v1060 = vrot.slane %v1012, 1
  %v1063 = vadd.f32 %v1057, %v1012
  %v1064 = vadd.f32 %v1058, %v1060
  %v1065 = vxor.u32 %v1063, 2147483648
  %v1066 = vxor.u32 %v1064, 2147483648
  %v1067 = vmul.f32 %v1065, 1.442695
  %v1068 = vpow.pop %v1067
  %v1069 = vmul.f32 %v1066, 1.442695
  %v1070 = vpow.pop %v1069
  %v1071 = vadd.f32 %v1068, 1.0
  %v1072 = vadd.f32 %v1070, 1.0
  %v1073 = vrcp.pop %v1071
  %v1074 = vmul.f32 1.0, %v1073
  %v1075 = vrcp.pop %v1072
  %v1076 = vmul.f32 1.0, %v1075
  %v1077 = vld [vmem:[#allocation3 + $0x2] sm:$0x1]
  %v1078 = vld [vmem:[#allocation3 + $0x22] sm:$0x1]
  %v1080 = vrot.slane %v1052, 1
  %v1083 = vadd.f32 %v1077, %v1052
  %v1084 = vadd.f32 %v1078, %v1080
  %v1085 = vxor.u32 %v1083, 2147483648
  %v1086 = vxor.u32 %v1084, 2147483648
  %v1087 = vmul.f32 %v1085, 1.442695
  %v1088 = vpow.pop %v1087
  %v1089 = vmul.f32 %v1086, 1.442695
  %v1090 = vpow.pop %v1089
  %v1091 = vadd.f32 %v1088, 1.0
  %v1092 = vadd.f32 %v1090, 1.0
  %v1093 = vrcp.pop %v1091
  %v1094 = vmul.f32 1.0, %v1093
  %v1095 = vrcp.pop %v1092
  %v1096 = vmul.f32 1.0, %v1095
  %v1097 = vld [vmem:[#allocation4 + $0x2] sm:$0x1]
  %v1098 = vld [vmem:[#allocation4 + $0x22] sm:$0x1]
  %1099 = vmatprep.subr.bf16.mxu0 0
  %1100 = vmatpush1.bf16.msra.mxu0 %v590
  %1101 = vmatprep.subr.bf16.mxu0 0
  %1102 = vmatpush1.bf16.msra.mxu0 0
  %1103 = vmatprep.subr.bf16.mxu0 0
  %1104 = vmatpush1.bf16.msra.mxu0 0
  %1105 = vmatprep.subr.bf16.mxu0 0
  %1106 = vmatpush1.bf16.msra.mxu0 0
  %1107 = vmatprep.subr.bf16.mxu0 0
  %1108 = vmatpush1.bf16.msra.mxu0 0
  %1109 = vmatprep.subr.bf16.mxu0 0
  %1110 = vmatpush1.bf16.msra.mxu0 0
  %1111 = vmatprep.subr.bf16.mxu0 0
  %1112 = vmatpush1.bf16.msra.mxu0 0
  %1113 = vmatprep.subr.bf16.mxu0 0
  %1114 = vmatpush1.bf16.msra.mxu0 0
  %1115 = vmatprep.subr.bf16.mxu0 0
  %1116 = vmatpush1.bf16.msra.mxu0 0
  %1117 = vmatprep.subr.bf16.mxu0 0
  %1118 = vmatpush1.bf16.msra.mxu0 0
  %1119 = vmatprep.subr.bf16.mxu0 0
  %1120 = vmatpush1.bf16.msra.mxu0 0
  %1121 = vmatprep.subr.bf16.mxu0 0
  %1122 = vmatpush1.bf16.msra.mxu0 0
  %1123 = vmatprep.subr.bf16.mxu0 0
  %1124 = vmatpush1.bf16.msra.mxu0 0
  %1125 = vmatprep.subr.bf16.mxu0 0
  %1126 = vmatpush1.bf16.msra.mxu0 0
  %1127 = vmatprep.subr.bf16.mxu0 0
  %1128 = vmatpush1.bf16.msra.mxu0 0
  %1129 = vmatprep.subr.bf16.mxu0 0
  %1130 = vmatpush1.bf16.msra.mxu0 0
  %1131 = vmatprep.mubr.bf16.mxu0 0
  %1132 = vmatmul.mubr.bf16.gmra.mrb[0].mxu0 %v975
  %v1133 = vpop.f32.mrb[0].mxu0
  %v1134 = vadd.f32 %v585, %v1133
  %v1135 = vpop.f32.mrb[0].mxu0
  %v1136 = vpop.f32.mrb[0].mxu0
  %v1137 = vpop.f32.mrb[0].mxu0
  %1138 = vdwg.mxu0
  %v1140 = vrot.slane %v1134, 1
  %v1143 = vmul.f32 %v1074, %v1134
  %v1144 = vmul.f32 %v1076, %v1140
  %v1145 = vadd.f32 %v1097, %v1143
  %v1146 = vadd.f32 %v1098, %v1144
  %v1147 = vtanh.pop %v1145
  %v1148 = vtanh.pop %v1146
  %v1149 = vsub.f32 %v900, %v1147
  %v1150 = vsub.f32 %v901, %v1148
  %v1151 = vmul.f32 %v1094, %v1149
  %v1152 = vmul.f32 %v1096, %v1150
  %v1153 = vadd.f32 %v1147, %v1151
  %v1154 = vadd.f32 %v1148, %v1152
  %v1155 = vmax.f32 %v1153, 0.0
  %v1156 = vmax.f32 %v1154, 0.0
  %v1157 = vpack.c.bf16 %v1155, %v1155
  %v1158 = vpack.c.bf16 %v1156, %v1156
  %v1159 = vld [vmem:[%s6 + $0x10] sm:$0xf]
  %v1160 = vld [vmem:[%s6 + $0x14] sm:$0xf]
  %v1163 = vunpack.c.l.b16 %v1157
  %v1164 = vunpack.c.l.b16 %v1158
  %v1165 = vrot.slane %v1164, 7
  %v1166 = vsel %vm659, %v1165, %v1163
  %v1167 = vpack.c.b16 %v1166, %v1166
  %v1170 = vunpack.c.l.b16 %v1159
  %v1171 = vunpack.c.l.b16 %v1160
  %v1172 = vpack.c.b16 %v1171, %v1170
  %v1175 = vsel %vm76, %v1167, 0
  %1177 = vmatprep.subr.bf16.mxu0 0
  %1178 = vmatpush1.bf16.msra.mxu0 %v1172
  %1179 = vmatprep.subr.bf16.mxu0 0
  %1180 = vmatpush1.bf16.msra.mxu0 0
  %1181 = vmatprep.subr.bf16.mxu0 0
  %1182 = vmatpush1.bf16.msra.mxu0 0
  %1183 = vmatprep.subr.bf16.mxu0 0
  %1184 = vmatpush1.bf16.msra.mxu0 0
  %1185 = vmatprep.subr.bf16.mxu0 0
  %1186 = vmatpush1.bf16.msra.mxu0 0
  %1187 = vmatprep.subr.bf16.mxu0 0
  %1188 = vmatpush1.bf16.msra.mxu0 0
  %1189 = vmatprep.subr.bf16.mxu0 0
  %1190 = vmatpush1.bf16.msra.mxu0 0
  %1191 = vmatprep.subr.bf16.mxu0 0
  %1192 = vmatpush1.bf16.msra.mxu0 0
  %1193 = vmatprep.subr.bf16.mxu0 0
  %1194 = vmatpush1.bf16.msra.mxu0 0
  %1195 = vmatprep.subr.bf16.mxu0 0
  %1196 = vmatpush1.bf16.msra.mxu0 0
  %1197 = vmatprep.subr.bf16.mxu0 0
  %1198 = vmatpush1.bf16.msra.mxu0 0
  %1199 = vmatprep.subr.bf16.mxu0 0
  %1200 = vmatpush1.bf16.msra.mxu0 0
  %1201 = vmatprep.subr.bf16.mxu0 0
  %1202 = vmatpush1.bf16.msra.mxu0 0
  %1203 = vmatprep.subr.bf16.mxu0 0
  %1204 = vmatpush1.bf16.msra.mxu0 0
  %1205 = vmatprep.subr.bf16.mxu0 0
  %1206 = vmatpush1.bf16.msra.mxu0 0
  %1207 = vmatprep.subr.bf16.mxu0 0
  %1208 = vmatpush1.bf16.msra.mxu0 0
  %1209 = vmatprep.mubr.bf16.mxu0 0
  %1210 = vmatmul.mubr.bf16.gmra.mrb[0].mxu0 %v1175
  %v1211 = vpop.f32.mrb[0].mxu0
  %v1212 = vadd.f32 0.0, %v1211
  %v1213 = vpop.f32.mrb[0].mxu0
  %v1214 = vpop.f32.mrb[0].mxu0
  %v1215 = vpop.f32.mrb[0].mxu0
  %1216 = vdwg.mxu0
  %v1217 = vadd.f32 %v964, %v1212
  %v1218 = vpack.c.bf16 %v1153, %v1153
  %v1219 = vpack.c.bf16 %v1154, %v1154
  %v1222 = vunpack.c.l.b16 %v1218
  %v1223 = vunpack.c.l.b16 %v1219
  %v1224 = vrot.slane %v1223, 7
  %v1225 = vsel %vm659, %v1224, %v1222
  %v1226 = vpack.c.b16 %v1225, %v1225
  %v1228 = vsel %vm76, %v1226, 0
  %1230 = vmatprep.subr.bf16.mxu0 0
  %1231 = vmatpush1.bf16.msra.mxu0 %v449
  %1232 = vmatprep.subr.bf16.mxu0 0
  %1233 = vmatpush1.bf16.msra.mxu0 0
  %1234 = vmatprep.subr.bf16.mxu0 0
  %1235 = vmatpush1.bf16.msra.mxu0 0
  %1236 = vmatprep.subr.bf16.mxu0 0
  %1237 = vmatpush1.bf16.msra.mxu0 0
  %1238 = vmatprep.subr.bf16.mxu0 0
  %1239 = vmatpush1.bf16.msra.mxu0 0
  %1240 = vmatprep.subr.bf16.mxu0 0
  %1241 = vmatpush1.bf16.msra.mxu0 0
  %1242 = vmatprep.subr.bf16.mxu0 0
  %1243 = vmatpush1.bf16.msra.mxu0 0
  %1244 = vmatprep.subr.bf16.mxu0 0
  %1245 = vmatpush1.bf16.msra.mxu0 0
  %1246 = vmatprep.subr.bf16.mxu0 0
  %1247 = vmatpush1.bf16.msra.mxu0 0
  %1248 = vmatprep.subr.bf16.mxu0 0
  %1249 = vmatpush1.bf16.msra.mxu0 0
  %1250 = vmatprep.subr.bf16.mxu0 0
  %1251 = vmatpush1.bf16.msra.mxu0 0
  %1252 = vmatprep.subr.bf16.mxu0 0
  %1253 = vmatpush1.bf16.msra.mxu0 0
  %1254 = vmatprep.subr.bf16.mxu0 0
  %1255 = vmatpush1.bf16.msra.mxu0 0
  %1256 = vmatprep.subr.bf16.mxu0 0
  %1257 = vmatpush1.bf16.msra.mxu0 0
  %1258 = vmatprep.subr.bf16.mxu0 0
  %1259 = vmatpush1.bf16.msra.mxu0 0
  %1260 = vmatprep.subr.bf16.mxu0 0
  %1261 = vmatpush1.bf16.msra.mxu0 0
  %1262 = vmatprep.mubr.bf16.mxu0 0
  %1263 = vmatmul.mubr.bf16.gmra.mrb[0].mxu0 %v1228
  %v1264 = vpop.f32.mrb[0].mxu0
  %v1265 = vadd.f32 0.0, %v1264
  %v1266 = vpop.f32.mrb[0].mxu0
  %v1267 = vpop.f32.mrb[0].mxu0
  %v1268 = vpop.f32.mrb[0].mxu0
  %1269 = vdwg.mxu0
  %1270 = vmatprep.subr.bf16.mxu0 0
  %1271 = vmatpush1.bf16.msra.mxu0 %v498
  %1272 = vmatprep.subr.bf16.mxu0 0
  %1273 = vmatpush1.bf16.msra.mxu0 0
  %1274 = vmatprep.subr.bf16.mxu0 0
  %1275 = vmatpush1.bf16.msra.mxu0 0
  %1276 = vmatprep.subr.bf16.mxu0 0
  %1277 = vmatpush1.bf16.msra.mxu0 0
  %1278 = vmatprep.subr.bf16.mxu0 0
  %1279 = vmatpush1.bf16.msra.mxu0 0
  %1280 = vmatprep.subr.bf16.mxu0 0
  %1281 = vmatpush1.bf16.msra.mxu0 0
  %1282 = vmatprep.subr.bf16.mxu0 0
  %1283 = vmatpush1.bf16.msra.mxu0 0
  %1284 = vmatprep.subr.bf16.mxu0 0
  %1285 = vmatpush1.bf16.msra.mxu0 0
  %1286 = vmatprep.subr.bf16.mxu0 0
  %1287 = vmatpush1.bf16.msra.mxu0 0
  %1288 = vmatprep.subr.bf16.mxu0 0
  %1289 = vmatpush1.bf16.msra.mxu0 0
  %1290 = vmatprep.subr.bf16.mxu0 0
  %1291 = vmatpush1.bf16.msra.mxu0 0
  %1292 = vmatprep.subr.bf16.mxu0 0
  %1293 = vmatpush1.bf16.msra.mxu0 0
  %1294 = vmatprep.subr.bf16.mxu0 0
  %1295 = vmatpush1.bf16.msra.mxu0 0
  %1296 = vmatprep.subr.bf16.mxu0 0
  %1297 = vmatpush1.bf16.msra.mxu0 0
  %1298 = vmatprep.subr.bf16.mxu0 0
  %1299 = vmatpush1.bf16.msra.mxu0 0
  %1300 = vmatprep.subr.bf16.mxu0 0
  %1301 = vmatpush1.bf16.msra.mxu0 0
  %1302 = vmatprep.mubr.bf16.mxu0 0
  %1303 = vmatmul.mubr.bf16.gmra.mrb[0].mxu0 %v1228
  %v1304 = vpop.f32.mrb[0].mxu0
  %v1305 = vadd.f32 0.0, %v1304
  %v1306 = vpop.f32.mrb[0].mxu0
  %v1307 = vpop.f32.mrb[0].mxu0
  %v1308 = vpop.f32.mrb[0].mxu0
  %1309 = vdwg.mxu0
  %v1310 = vld [vmem:[#allocation2 + $0x3] sm:$0x1]
  %v1311 = vld [vmem:[#allocation2 + $0x23] sm:$0x1]
  %v1313 = vrot.slane %v1265, 1
  %v1316 = vadd.f32 %v1310, %v1265
  %v1317 = vadd.f32 %v1311, %v1313
  %v1318 = vxor.u32 %v1316, 2147483648
  %v1319 = vxor.u32 %v1317, 2147483648
  %v1320 = vmul.f32 %v1318, 1.442695
  %v1321 = vpow.pop %v1320
  %v1322 = vmul.f32 %v1319, 1.442695
  %v1323 = vpow.pop %v1322
  %v1324 = vadd.f32 %v1321, 1.0
  %v1325 = vadd.f32 %v1323, 1.0
  %v1326 = vrcp.pop %v1324
  %v1327 = vmul.f32 1.0, %v1326
  %v1328 = vrcp.pop %v1325
  %v1329 = vmul.f32 1.0, %v1328
  %v1330 = vld [vmem:[#allocation3 + $0x3] sm:$0x1]
  %v1331 = vld [vmem:[#allocation3 + $0x23] sm:$0x1]
  %v1333 = vrot.slane %v1305, 1
  %v1336 = vadd.f32 %v1330, %v1305
  %v1337 = vadd.f32 %v1331, %v1333
  %v1338 = vxor.u32 %v1336, 2147483648
  %v1339 = vxor.u32 %v1337, 2147483648
  %v1340 = vmul.f32 %v1338, 1.442695
  %v1341 = vpow.pop %v1340
  %v1342 = vmul.f32 %v1339, 1.442695
  %v1343 = vpow.pop %v1342
  %v1344 = vadd.f32 %v1341, 1.0
  %v1345 = vadd.f32 %v1343, 1.0
  %v1346 = vrcp.pop %v1344
  %v1347 = vmul.f32 1.0, %v1346
  %v1348 = vrcp.pop %v1345
  %v1349 = vmul.f32 1.0, %v1348
  %v1350 = vld [vmem:[#allocation4 + $0x3] sm:$0x1]
  %v1351 = vld [vmem:[#allocation4 + $0x23] sm:$0x1]
  %1352 = vmatprep.subr.bf16.mxu0 0
  %1353 = vmatpush1.bf16.msra.mxu0 %v590
  %1354 = vmatprep.subr.bf16.mxu0 0
  %1355 = vmatpush1.bf16.msra.mxu0 0
  %1356 = vmatprep.subr.bf16.mxu0 0
  %1357 = vmatpush1.bf16.msra.mxu0 0
  %1358 = vmatprep.subr.bf16.mxu0 0
  %1359 = vmatpush1.bf16.msra.mxu0 0
  %1360 = vmatprep.subr.bf16.mxu0 0
  %1361 = vmatpush1.bf16.msra.mxu0 0
  %1362 = vmatprep.subr.bf16.mxu0 0
  %1363 = vmatpush1.bf16.msra.mxu0 0
  %1364 = vmatprep.subr.bf16.mxu0 0
  %1365 = vmatpush1.bf16.msra.mxu0 0
  %1366 = vmatprep.subr.bf16.mxu0 0
  %1367 = vmatpush1.bf16.msra.mxu0 0
  %1368 = vmatprep.subr.bf16.mxu0 0
  %1369 = vmatpush1.bf16.msra.mxu0 0
  %1370 = vmatprep.subr.bf16.mxu0 0
  %1371 = vmatpush1.bf16.msra.mxu0 0
  %1372 = vmatprep.subr.bf16.mxu0 0
  %1373 = vmatpush1.bf16.msra.mxu0 0
  %1374 = vmatprep.subr.bf16.mxu0 0
  %1375 = vmatpush1.bf16.msra.mxu0 0
  %1376 = vmatprep.subr.bf16.mxu0 0
  %1377 = vmatpush1.bf16.msra.mxu0 0
  %1378 = vmatprep.subr.bf16.mxu0 0
  %1379 = vmatpush1.bf16.msra.mxu0 0
  %1380 = vmatprep.subr.bf16.mxu0 0
  %1381 = vmatpush1.bf16.msra.mxu0 0
  %1382 = vmatprep.subr.bf16.mxu0 0
  %1383 = vmatpush1.bf16.msra.mxu0 0
  %1384 = vmatprep.mubr.bf16.mxu0 0
  %1385 = vmatmul.mubr.bf16.gmra.mrb[0].mxu0 %v1228
  %v1386 = vpop.f32.mrb[0].mxu0
  %v1387 = vadd.f32 %v585, %v1386
  %v1388 = vpop.f32.mrb[0].mxu0
  %v1389 = vpop.f32.mrb[0].mxu0
  %v1390 = vpop.f32.mrb[0].mxu0
  %1391 = vdwg.mxu0
  %v1393 = vrot.slane %v1387, 1
  %v1396 = vmul.f32 %v1327, %v1387
  %v1397 = vmul.f32 %v1329, %v1393
  %v1398 = vadd.f32 %v1350, %v1396
  %v1399 = vadd.f32 %v1351, %v1397
  %v1400 = vtanh.pop %v1398
  %v1401 = vtanh.pop %v1399
  %v1402 = vsub.f32 %v1153, %v1400
  %v1403 = vsub.f32 %v1154, %v1401
  %v1404 = vmul.f32 %v1347, %v1402
  %v1405 = vmul.f32 %v1349, %v1403
  %v1406 = vadd.f32 %v1400, %v1404
  %v1407 = vadd.f32 %v1401, %v1405
  %v1408 = vmax.f32 %v1406, 0.0
  %v1409 = vmax.f32 %v1407, 0.0
  %v1410 = vpack.c.bf16 %v1408, %v1408
  %v1411 = vpack.c.bf16 %v1409, %v1409
  %v1412 = vld [vmem:[%s6 + $0x18] sm:$0xf]
  %v1413 = vld [vmem:[%s6 + $0x1c] sm:$0xf]
  %v1416 = vunpack.c.l.b16 %v1410
  %v1417 = vunpack.c.l.b16 %v1411
  %v1418 = vrot.slane %v1417, 7
  %v1419 = vsel %vm659, %v1418, %v1416
  %v1420 = vpack.c.b16 %v1419, %v1419
  %v1423 = vunpack.c.l.b16 %v1412
  %v1424 = vunpack.c.l.b16 %v1413
  %v1425 = vpack.c.b16 %v1424, %v1423
  %v1428 = vsel %vm76, %v1420, 0
  %1430 = vmatprep.subr.bf16.mxu0 0
  %1431 = vmatpush1.bf16.msra.mxu0 %v1425
  %1432 = vmatprep.subr.bf16.mxu0 0
  %1433 = vmatpush1.bf16.msra.mxu0 0
  %1434 = vmatprep.subr.bf16.mxu0 0
  %1435 = vmatpush1.bf16.msra.mxu0 0
  %1436 = vmatprep.subr.bf16.mxu0 0
  %1437 = vmatpush1.bf16.msra.mxu0 0
  %1438 = vmatprep.subr.bf16.mxu0 0
  %1439 = vmatpush1.bf16.msra.mxu0 0
  %1440 = vmatprep.subr.bf16.mxu0 0
  %1441 = vmatpush1.bf16.msra.mxu0 0
  %1442 = vmatprep.subr.bf16.mxu0 0
  %1443 = vmatpush1.bf16.msra.mxu0 0
  %1444 = vmatprep.subr.bf16.mxu0 0
  %1445 = vmatpush1.bf16.msra.mxu0 0
  %1446 = vmatprep.subr.bf16.mxu0 0
  %1447 = vmatpush1.bf16.msra.mxu0 0
  %1448 = vmatprep.subr.bf16.mxu0 0
  %1449 = vmatpush1.bf16.msra.mxu0 0
  %1450 = vmatprep.subr.bf16.mxu0 0
  %1451 = vmatpush1.bf16.msra.mxu0 0
  %1452 = vmatprep.subr.bf16.mxu0 0
  %1453 = vmatpush1.bf16.msra.mxu0 0
  %1454 = vmatprep.subr.bf16.mxu0 0
  %1455 = vmatpush1.bf16.msra.mxu0 0
  %1456 = vmatprep.subr.bf16.mxu0 0
  %1457 = vmatpush1.bf16.msra.mxu0 0
  %1458 = vmatprep.subr.bf16.mxu0 0
  %1459 = vmatpush1.bf16.msra.mxu0 0
  %1460 = vmatprep.subr.bf16.mxu0 0
  %1461 = vmatpush1.bf16.msra.mxu0 0
  %1462 = vmatprep.mubr.bf16.mxu0 0
  %1463 = vmatmul.mubr.bf16.gmra.mrb[0].mxu0 %v1428
  %v1464 = vpop.f32.mrb[0].mxu0
  %v1465 = vadd.f32 0.0, %v1464
  %v1466 = vpop.f32.mrb[0].mxu0
  %v1467 = vpop.f32.mrb[0].mxu0
  %v1468 = vpop.f32.mrb[0].mxu0
  %1469 = vdwg.mxu0
  %v1470 = vadd.f32 %v1217, %v1465
  %v1471 = vpack.c.bf16 %v1406, %v1406
  %v1472 = vpack.c.bf16 %v1407, %v1407
  %v1475 = vunpack.c.l.b16 %v1471
  %v1476 = vunpack.c.l.b16 %v1472
  %v1477 = vrot.slane %v1476, 7
  %v1478 = vsel %vm659, %v1477, %v1475
  %v1479 = vpack.c.b16 %v1478, %v1478
  %v1481 = vsel %vm76, %v1479, 0
  %1483 = vmatprep.subr.bf16.mxu0 0
  %1484 = vmatpush1.bf16.msra.mxu0 %v449
  %1485 = vmatprep.subr.bf16.mxu0 0
  %1486 = vmatpush1.bf16.msra.mxu0 0
  %1487 = vmatprep.subr.bf16.mxu0 0
  %1488 = vmatpush1.bf16.msra.mxu0 0
  %1489 = vmatprep.subr.bf16.mxu0 0
  %1490 = vmatpush1.bf16.msra.mxu0 0
  %1491 = vmatprep.subr.bf16.mxu0 0
  %1492 = vmatpush1.bf16.msra.mxu0 0
  %1493 = vmatprep.subr.bf16.mxu0 0
  %1494 = vmatpush1.bf16.msra.mxu0 0
  %1495 = vmatprep.subr.bf16.mxu0 0
  %1496 = vmatpush1.bf16.msra.mxu0 0
  %1497 = vmatprep.subr.bf16.mxu0 0
  %1498 = vmatpush1.bf16.msra.mxu0 0
  %1499 = vmatprep.subr.bf16.mxu0 0
  %1500 = vmatpush1.bf16.msra.mxu0 0
  %1501 = vmatprep.subr.bf16.mxu0 0
  %1502 = vmatpush1.bf16.msra.mxu0 0
  %1503 = vmatprep.subr.bf16.mxu0 0
  %1504 = vmatpush1.bf16.msra.mxu0 0
  %1505 = vmatprep.subr.bf16.mxu0 0
  %1506 = vmatpush1.bf16.msra.mxu0 0
  %1507 = vmatprep.subr.bf16.mxu0 0
  %1508 = vmatpush1.bf16.msra.mxu0 0
  %1509 = vmatprep.subr.bf16.mxu0 0
  %1510 = vmatpush1.bf16.msra.mxu0 0
  %1511 = vmatprep.subr.bf16.mxu0 0
  %1512 = vmatpush1.bf16.msra.mxu0 0
  %1513 = vmatprep.subr.bf16.mxu0 0
  %1514 = vmatpush1.bf16.msra.mxu0 0
  %1515 = vmatprep.mubr.bf16.mxu0 0
  %1516 = vmatmul.mubr.bf16.gmra.mrb[0].mxu0 %v1481
  %v1517 = vpop.f32.mrb[0].mxu0
  %v1518 = vadd.f32 0.0, %v1517
  %v1519 = vpop.f32.mrb[0].mxu0
  %v1520 = vpop.f32.mrb[0].mxu0
  %v1521 = vpop.f32.mrb[0].mxu0
  %1522 = vdwg.mxu0
  %1523 = vmatprep.subr.bf16.mxu0 0
  %1524 = vmatpush1.bf16.msra.mxu0 %v498
  %1525 = vmatprep.subr.bf16.mxu0 0
  %1526 = vmatpush1.bf16.msra.mxu0 0
  %1527 = vmatprep.subr.bf16.mxu0 0
  %1528 = vmatpush1.bf16.msra.mxu0 0
  %1529 = vmatprep.subr.bf16.mxu0 0
  %1530 = vmatpush1.bf16.msra.mxu0 0
  %1531 = vmatprep.subr.bf16.mxu0 0
  %1532 = vmatpush1.bf16.msra.mxu0 0
  %1533 = vmatprep.subr.bf16.mxu0 0
  %1534 = vmatpush1.bf16.msra.mxu0 0
  %1535 = vmatprep.subr.bf16.mxu0 0
  %1536 = vmatpush1.bf16.msra.mxu0 0
  %1537 = vmatprep.subr.bf16.mxu0 0
  %1538 = vmatpush1.bf16.msra.mxu0 0
  %1539 = vmatprep.subr.bf16.mxu0 0
  %1540 = vmatpush1.bf16.msra.mxu0 0
  %1541 = vmatprep.subr.bf16.mxu0 0
  %1542 = vmatpush1.bf16.msra.mxu0 0
  %1543 = vmatprep.subr.bf16.mxu0 0
  %1544 = vmatpush1.bf16.msra.mxu0 0
  %1545 = vmatprep.subr.bf16.mxu0 0
  %1546 = vmatpush1.bf16.msra.mxu0 0
  %1547 = vmatprep.subr.bf16.mxu0 0
  %1548 = vmatpush1.bf16.msra.mxu0 0
  %1549 = vmatprep.subr.bf16.mxu0 0
  %1550 = vmatpush1.bf16.msra.mxu0 0
  %1551 = vmatprep.subr.bf16.mxu0 0
  %1552 = vmatpush1.bf16.msra.mxu0 0
  %1553 = vmatprep.subr.bf16.mxu0 0
  %1554 = vmatpush1.bf16.msra.mxu0 0
  %1555 = vmatprep.mubr.bf16.mxu0 0
  %1556 = vmatmul.mubr.bf16.gmra.mrb[0].mxu0 %v1481
  %v1557 = vpop.f32.mrb[0].mxu0
  %v1558 = vadd.f32 0.0, %v1557
  %v1559 = vpop.f32.mrb[0].mxu0
  %v1560 = vpop.f32.mrb[0].mxu0
  %v1561 = vpop.f32.mrb[0].mxu0
  %1562 = vdwg.mxu0
  %v1563 = vld [vmem:[#allocation2 + $0x4] sm:$0x1]
  %v1564 = vld [vmem:[#allocation2 + $0x24] sm:$0x1]
  %v1566 = vrot.slane %v1518, 1
  %v1569 = vadd.f32 %v1563, %v1518
  %v1570 = vadd.f32 %v1564, %v1566
  %v1571 = vxor.u32 %v1569, 2147483648
  %v1572 = vxor.u32 %v1570, 2147483648
  %v1573 = vmul.f32 %v1571, 1.442695
  %v1574 = vpow.pop %v1573
  %v1575 = vmul.f32 %v1572, 1.442695
  %v1576 = vpow.pop %v1575
  %v1577 = vadd.f32 %v1574, 1.0
  %v1578 = vadd.f32 %v1576, 1.0
  %v1579 = vrcp.pop %v1577
  %v1580 = vmul.f32 1.0, %v1579
  %v1581 = vrcp.pop %v1578
  %v1582 = vmul.f32 1.0, %v1581
  %v1583 = vld [vmem:[#allocation3 + $0x4] sm:$0x1]
  %v1584 = vld [vmem:[#allocation3 + $0x24] sm:$0x1]
  %v1586 = vrot.slane %v1558, 1
  %v1589 = vadd.f32 %v1583, %v1558
  %v1590 = vadd.f32 %v1584, %v1586
  %v1591 = vxor.u32 %v1589, 2147483648
  %v1592 = vxor.u32 %v1590, 2147483648
  %v1593 = vmul.f32 %v1591, 1.442695
  %v1594 = vpow.pop %v1593
  %v1595 = vmul.f32 %v1592, 1.442695
  %v1596 = vpow.pop %v1595
  %v1597 = vadd.f32 %v1594, 1.0
  %v1598 = vadd.f32 %v1596, 1.0
  %v1599 = vrcp.pop %v1597
  %v1600 = vmul.f32 1.0, %v1599
  %v1601 = vrcp.pop %v1598
  %v1602 = vmul.f32 1.0, %v1601
  %v1603 = vld [vmem:[#allocation4 + $0x4] sm:$0x1]
  %v1604 = vld [vmem:[#allocation4 + $0x24] sm:$0x1]
  %1605 = vmatprep.subr.bf16.mxu0 0
  %1606 = vmatpush1.bf16.msra.mxu0 %v590
  %1607 = vmatprep.subr.bf16.mxu0 0
  %1608 = vmatpush1.bf16.msra.mxu0 0
  %1609 = vmatprep.subr.bf16.mxu0 0
  %1610 = vmatpush1.bf16.msra.mxu0 0
  %1611 = vmatprep.subr.bf16.mxu0 0
  %1612 = vmatpush1.bf16.msra.mxu0 0
  %1613 = vmatprep.subr.bf16.mxu0 0
  %1614 = vmatpush1.bf16.msra.mxu0 0
  %1615 = vmatprep.subr.bf16.mxu0 0
  %1616 = vmatpush1.bf16.msra.mxu0 0
  %1617 = vmatprep.subr.bf16.mxu0 0
  %1618 = vmatpush1.bf16.msra.mxu0 0
  %1619 = vmatprep.subr.bf16.mxu0 0
  %1620 = vmatpush1.bf16.msra.mxu0 0
  %1621 = vmatprep.subr.bf16.mxu0 0
  %1622 = vmatpush1.bf16.msra.mxu0 0
  %1623 = vmatprep.subr.bf16.mxu0 0
  %1624 = vmatpush1.bf16.msra.mxu0 0
  %1625 = vmatprep.subr.bf16.mxu0 0
  %1626 = vmatpush1.bf16.msra.mxu0 0
  %1627 = vmatprep.subr.bf16.mxu0 0
  %1628 = vmatpush1.bf16.msra.mxu0 0
  %1629 = vmatprep.subr.bf16.mxu0 0
  %1630 = vmatpush1.bf16.msra.mxu0 0
  %1631 = vmatprep.subr.bf16.mxu0 0
  %1632 = vmatpush1.bf16.msra.mxu0 0
  %1633 = vmatprep.subr.bf16.mxu0 0
  %1634 = vmatpush1.bf16.msra.mxu0 0
  %1635 = vmatprep.subr.bf16.mxu0 0
  %1636 = vmatpush1.bf16.msra.mxu0 0
  %1637 = vmatprep.mubr.bf16.mxu0 0
  %1638 = vmatmul.mubr.bf16.gmra.mrb[0].mxu0 %v1481
  %v1639 = vpop.f32.mrb[0].mxu0
  %v1640 = vadd.f32 %v585, %v1639
  %v1641 = vpop.f32.mrb[0].mxu0
  %v1642 = vpop.f32.mrb[0].mxu0
  %v1643 = vpop.f32.mrb[0].mxu0
  %1644 = vdwg.mxu0
  %v1646 = vrot.slane %v1640, 1
  %v1649 = vmul.f32 %v1580, %v1640
  %v1650 = vmul.f32 %v1582, %v1646
  %v1651 = vadd.f32 %v1603, %v1649
  %v1652 = vadd.f32 %v1604, %v1650
  %v1653 = vtanh.pop %v1651
  %v1654 = vtanh.pop %v1652
  %v1655 = vsub.f32 %v1406, %v1653
  %v1656 = vsub.f32 %v1407, %v1654
  %v1657 = vmul.f32 %v1600, %v1655
  %v1658 = vmul.f32 %v1602, %v1656
  %v1659 = vadd.f32 %v1653, %v1657
  %v1660 = vadd.f32 %v1654, %v1658
  %v1661 = vmax.f32 %v1659, 0.0
  %v1662 = vmax.f32 %v1660, 0.0
  %v1663 = vpack.c.bf16 %v1661, %v1661
  %v1664 = vpack.c.bf16 %v1662, %v1662
  %v1665 = vld [vmem:[%s6 + $0x20] sm:$0xf]
  %v1666 = vld [vmem:[%s6 + $0x24] sm:$0xf]
  %v1669 = vunpack.c.l.b16 %v1663
  %v1670 = vunpack.c.l.b16 %v1664
  %v1671 = vrot.slane %v1670, 7
  %v1672 = vsel %vm659, %v1671, %v1669
  %v1673 = vpack.c.b16 %v1672, %v1672
  %v1676 = vunpack.c.l.b16 %v1665
  %v1677 = vunpack.c.l.b16 %v1666
  %v1678 = vpack.c.b16 %v1677, %v1676
  %v1681 = vsel %vm76, %v1673, 0
  %1683 = vmatprep.subr.bf16.mxu0 0
  %1684 = vmatpush1.bf16.msra.mxu0 %v1678
  %1685 = vmatprep.subr.bf16.mxu0 0
  %1686 = vmatpush1.bf16.msra.mxu0 0
  %1687 = vmatprep.subr.bf16.mxu0 0
  %1688 = vmatpush1.bf16.msra.mxu0 0
  %1689 = vmatprep.subr.bf16.mxu0 0
  %1690 = vmatpush1.bf16.msra.mxu0 0
  %1691 = vmatprep.subr.bf16.mxu0 0
  %1692 = vmatpush1.bf16.msra.mxu0 0
  %1693 = vmatprep.subr.bf16.mxu0 0
  %1694 = vmatpush1.bf16.msra.mxu0 0
  %1695 = vmatprep.subr.bf16.mxu0 0
  %1696 = vmatpush1.bf16.msra.mxu0 0
  %1697 = vmatprep.subr.bf16.mxu0 0
  %1698 = vmatpush1.bf16.msra.mxu0 0
  %1699 = vmatprep.subr.bf16.mxu0 0
  %1700 = vmatpush1.bf16.msra.mxu0 0
  %1701 = vmatprep.subr.bf16.mxu0 0
  %1702 = vmatpush1.bf16.msra.mxu0 0
  %1703 = vmatprep.subr.bf16.mxu0 0
  %1704 = vmatpush1.bf16.msra.mxu0 0
  %1705 = vmatprep.subr.bf16.mxu0 0
  %1706 = vmatpush1.bf16.msra.mxu0 0
  %1707 = vmatprep.subr.bf16.mxu0 0
  %1708 = vmatpush1.bf16.msra.mxu0 0
  %1709 = vmatprep.subr.bf16.mxu0 0
  %1710 = vmatpush1.bf16.msra.mxu0 0
  %1711 = vmatprep.subr.bf16.mxu0 0
  %1712 = vmatpush1.bf16.msra.mxu0 0
  %1713 = vmatprep.subr.bf16.mxu0 0
  %1714 = vmatpush1.bf16.msra.mxu0 0
  %1715 = vmatprep.mubr.bf16.mxu0 0
  %1716 = vmatmul.mubr.bf16.gmra.mrb[0].mxu0 %v1681
  %v1717 = vpop.f32.mrb[0].mxu0
  %v1718 = vadd.f32 0.0, %v1717
  %v1719 = vpop.f32.mrb[0].mxu0
  %v1720 = vpop.f32.mrb[0].mxu0
  %v1721 = vpop.f32.mrb[0].mxu0
  %1722 = vdwg.mxu0
  %v1723 = vadd.f32 %v1470, %v1718
  %v1724 = vpack.c.bf16 %v1659, %v1659
  %v1725 = vpack.c.bf16 %v1660, %v1660
  %v1728 = vunpack.c.l.b16 %v1724
  %v1729 = vunpack.c.l.b16 %v1725
  %v1730 = vrot.slane %v1729, 7
  %v1731 = vsel %vm659, %v1730, %v1728
  %v1732 = vpack.c.b16 %v1731, %v1731
  %v1734 = vsel %vm76, %v1732, 0
  %1736 = vmatprep.subr.bf16.mxu0 0
  %1737 = vmatpush1.bf16.msra.mxu0 %v449
  %1738 = vmatprep.subr.bf16.mxu0 0
  %1739 = vmatpush1.bf16.msra.mxu0 0
  %1740 = vmatprep.subr.bf16.mxu0 0
  %1741 = vmatpush1.bf16.msra.mxu0 0
  %1742 = vmatprep.subr.bf16.mxu0 0
  %1743 = vmatpush1.bf16.msra.mxu0 0
  %1744 = vmatprep.subr.bf16.mxu0 0
  %1745 = vmatpush1.bf16.msra.mxu0 0
  %1746 = vmatprep.subr.bf16.mxu0 0
  %1747 = vmatpush1.bf16.msra.mxu0 0
  %1748 = vmatprep.subr.bf16.mxu0 0
  %1749 = vmatpush1.bf16.msra.mxu0 0
  %1750 = vmatprep.subr.bf16.mxu0 0
  %1751 = vmatpush1.bf16.msra.mxu0 0
  %1752 = vmatprep.subr.bf16.mxu0 0
  %1753 = vmatpush1.bf16.msra.mxu0 0
  %1754 = vmatprep.subr.bf16.mxu0 0
  %1755 = vmatpush1.bf16.msra.mxu0 0
  %1756 = vmatprep.subr.bf16.mxu0 0
  %1757 = vmatpush1.bf16.msra.mxu0 0
  %1758 = vmatprep.subr.bf16.mxu0 0
  %1759 = vmatpush1.bf16.msra.mxu0 0
  %1760 = vmatprep.subr.bf16.mxu0 0
  %1761 = vmatpush1.bf16.msra.mxu0 0
  %1762 = vmatprep.subr.bf16.mxu0 0
  %1763 = vmatpush1.bf16.msra.mxu0 0
  %1764 = vmatprep.subr.bf16.mxu0 0
  %1765 = vmatpush1.bf16.msra.mxu0 0
  %1766 = vmatprep.subr.bf16.mxu0 0
  %1767 = vmatpush1.bf16.msra.mxu0 0
  %1768 = vmatprep.mubr.bf16.mxu0 0
  %1769 = vmatmul.mubr.bf16.gmra.mrb[0].mxu0 %v1734
  %v1770 = vpop.f32.mrb[0].mxu0
  %v1771 = vadd.f32 0.0, %v1770
  %v1772 = vpop.f32.mrb[0].mxu0
  %v1773 = vpop.f32.mrb[0].mxu0
  %v1774 = vpop.f32.mrb[0].mxu0
  %1775 = vdwg.mxu0
  %1776 = vmatprep.subr.bf16.mxu0 0
  %1777 = vmatpush1.bf16.msra.mxu0 %v498
  %1778 = vmatprep.subr.bf16.mxu0 0
  %1779 = vmatpush1.bf16.msra.mxu0 0
  %1780 = vmatprep.subr.bf16.mxu0 0
  %1781 = vmatpush1.bf16.msra.mxu0 0
  %1782 = vmatprep.subr.bf16.mxu0 0
  %1783 = vmatpush1.bf16.msra.mxu0 0
  %1784 = vmatprep.subr.bf16.mxu0 0
  %1785 = vmatpush1.bf16.msra.mxu0 0
  %1786 = vmatprep.subr.bf16.mxu0 0
  %1787 = vmatpush1.bf16.msra.mxu0 0
  %1788 = vmatprep.subr.bf16.mxu0 0
  %1789 = vmatpush1.bf16.msra.mxu0 0
  %1790 = vmatprep.subr.bf16.mxu0 0
  %1791 = vmatpush1.bf16.msra.mxu0 0
  %1792 = vmatprep.subr.bf16.mxu0 0
  %1793 = vmatpush1.bf16.msra.mxu0 0
  %1794 = vmatprep.subr.bf16.mxu0 0
  %1795 = vmatpush1.bf16.msra.mxu0 0
  %1796 = vmatprep.subr.bf16.mxu0 0
  %1797 = vmatpush1.bf16.msra.mxu0 0
  %1798 = vmatprep.subr.bf16.mxu0 0
  %1799 = vmatpush1.bf16.msra.mxu0 0
  %1800 = vmatprep.subr.bf16.mxu0 0
  %1801 = vmatpush1.bf16.msra.mxu0 0
  %1802 = vmatprep.subr.bf16.mxu0 0
  %1803 = vmatpush1.bf16.msra.mxu0 0
  %1804 = vmatprep.subr.bf16.mxu0 0
  %1805 = vmatpush1.bf16.msra.mxu0 0
  %1806 = vmatprep.subr.bf16.mxu0 0
  %1807 = vmatpush1.bf16.msra.mxu0 0
  %1808 = vmatprep.mubr.bf16.mxu0 0
  %1809 = vmatmul.mubr.bf16.gmra.mrb[0].mxu0 %v1734
  %v1810 = vpop.f32.mrb[0].mxu0
  %v1811 = vadd.f32 0.0, %v1810
  %v1812 = vpop.f32.mrb[0].mxu0
  %v1813 = vpop.f32.mrb[0].mxu0
  %v1814 = vpop.f32.mrb[0].mxu0
  %1815 = vdwg.mxu0
  %v1816 = vld [vmem:[#allocation2 + $0x5] sm:$0x1]
  %v1817 = vld [vmem:[#allocation2 + $0x25] sm:$0x1]
  %v1819 = vrot.slane %v1771, 1
  %v1822 = vadd.f32 %v1816, %v1771
  %v1823 = vadd.f32 %v1817, %v1819
  %v1824 = vxor.u32 %v1822, 2147483648
  %v1825 = vxor.u32 %v1823, 2147483648
  %v1826 = vmul.f32 %v1824, 1.442695
  %v1827 = vpow.pop %v1826
  %v1828 = vmul.f32 %v1825, 1.442695
  %v1829 = vpow.pop %v1828
  %v1830 = vadd.f32 %v1827, 1.0
  %v1831 = vadd.f32 %v1829, 1.0
  %v1832 = vrcp.pop %v1830
  %v1833 = vmul.f32 1.0, %v1832
  %v1834 = vrcp.pop %v1831
  %v1835 = vmul.f32 1.0, %v1834
  %v1836 = vld [vmem:[#allocation3 + $0x5] sm:$0x1]
  %v1837 = vld [vmem:[#allocation3 + $0x25] sm:$0x1]
  %v1839 = vrot.slane %v1811, 1
  %v1842 = vadd.f32 %v1836, %v1811
  %v1843 = vadd.f32 %v1837, %v1839
  %v1844 = vxor.u32 %v1842, 2147483648
  %v1845 = vxor.u32 %v1843, 2147483648
  %v1846 = vmul.f32 %v1844, 1.442695
  %v1847 = vpow.pop %v1846
  %v1848 = vmul.f32 %v1845, 1.442695
  %v1849 = vpow.pop %v1848
  %v1850 = vadd.f32 %v1847, 1.0
  %v1851 = vadd.f32 %v1849, 1.0
  %v1852 = vrcp.pop %v1850
  %v1853 = vmul.f32 1.0, %v1852
  %v1854 = vrcp.pop %v1851
  %v1855 = vmul.f32 1.0, %v1854
  %v1856 = vld [vmem:[#allocation4 + $0x5] sm:$0x1]
  %v1857 = vld [vmem:[#allocation4 + $0x25] sm:$0x1]
  %1858 = vmatprep.subr.bf16.mxu0 0
  %1859 = vmatpush1.bf16.msra.mxu0 %v590
  %1860 = vmatprep.subr.bf16.mxu0 0
  %1861 = vmatpush1.bf16.msra.mxu0 0
  %1862 = vmatprep.subr.bf16.mxu0 0
  %1863 = vmatpush1.bf16.msra.mxu0 0
  %1864 = vmatprep.subr.bf16.mxu0 0
  %1865 = vmatpush1.bf16.msra.mxu0 0
  %1866 = vmatprep.subr.bf16.mxu0 0
  %1867 = vmatpush1.bf16.msra.mxu0 0
  %1868 = vmatprep.subr.bf16.mxu0 0
  %1869 = vmatpush1.bf16.msra.mxu0 0
  %1870 = vmatprep.subr.bf16.mxu0 0
  %1871 = vmatpush1.bf16.msra.mxu0 0
  %1872 = vmatprep.subr.bf16.mxu0 0
  %1873 = vmatpush1.bf16.msra.mxu0 0
  %1874 = vmatprep.subr.bf16.mxu0 0
  %1875 = vmatpush1.bf16.msra.mxu0 0
  %1876 = vmatprep.subr.bf16.mxu0 0
  %1877 = vmatpush1.bf16.msra.mxu0 0
  %1878 = vmatprep.subr.bf16.mxu0 0
  %1879 = vmatpush1.bf16.msra.mxu0 0
  %1880 = vmatprep.subr.bf16.mxu0 0
  %1881 = vmatpush1.bf16.msra.mxu0 0
  %1882 = vmatprep.subr.bf16.mxu0 0
  %1883 = vmatpush1.bf16.msra.mxu0 0
  %1884 = vmatprep.subr.bf16.mxu0 0
  %1885 = vmatpush1.bf16.msra.mxu0 0
  %1886 = vmatprep.subr.bf16.mxu0 0
  %1887 = vmatpush1.bf16.msra.mxu0 0
  %1888 = vmatprep.subr.bf16.mxu0 0
  %1889 = vmatpush1.bf16.msra.mxu0 0
  %1890 = vmatprep.mubr.bf16.mxu0 0
  %1891 = vmatmul.mubr.bf16.gmra.mrb[0].mxu0 %v1734
  %v1892 = vpop.f32.mrb[0].mxu0
  %v1893 = vadd.f32 %v585, %v1892
  %v1894 = vpop.f32.mrb[0].mxu0
  %v1895 = vpop.f32.mrb[0].mxu0
  %v1896 = vpop.f32.mrb[0].mxu0
  %1897 = vdwg.mxu0
  %v1899 = vrot.slane %v1893, 1
  %v1902 = vmul.f32 %v1833, %v1893
  %v1903 = vmul.f32 %v1835, %v1899
  %v1904 = vadd.f32 %v1856, %v1902
  %v1905 = vadd.f32 %v1857, %v1903
  %v1906 = vtanh.pop %v1904
  %v1907 = vtanh.pop %v1905
  %v1908 = vsub.f32 %v1659, %v1906
  %v1909 = vsub.f32 %v1660, %v1907
  %v1910 = vmul.f32 %v1853, %v1908
  %v1911 = vmul.f32 %v1855, %v1909
  %v1912 = vadd.f32 %v1906, %v1910
  %v1913 = vadd.f32 %v1907, %v1911
  %v1914 = vmax.f32 %v1912, 0.0
  %v1915 = vmax.f32 %v1913, 0.0
  %v1916 = vpack.c.bf16 %v1914, %v1914
  %v1917 = vpack.c.bf16 %v1915, %v1915
  %v1918 = vld [vmem:[%s6 + $0x28] sm:$0xf]
  %v1919 = vld [vmem:[%s6 + $0x2c] sm:$0xf]
  %v1922 = vunpack.c.l.b16 %v1916
  %v1923 = vunpack.c.l.b16 %v1917
  %v1924 = vrot.slane %v1923, 7
  %v1925 = vsel %vm659, %v1924, %v1922
  %v1926 = vpack.c.b16 %v1925, %v1925
  %v1929 = vunpack.c.l.b16 %v1918
  %v1930 = vunpack.c.l.b16 %v1919
  %v1931 = vpack.c.b16 %v1930, %v1929
  %v1934 = vsel %vm76, %v1926, 0
  %1936 = vmatprep.subr.bf16.mxu0 0
  %1937 = vmatpush1.bf16.msra.mxu0 %v1931
  %1938 = vmatprep.subr.bf16.mxu0 0
  %1939 = vmatpush1.bf16.msra.mxu0 0
  %1940 = vmatprep.subr.bf16.mxu0 0
  %1941 = vmatpush1.bf16.msra.mxu0 0
  %1942 = vmatprep.subr.bf16.mxu0 0
  %1943 = vmatpush1.bf16.msra.mxu0 0
  %1944 = vmatprep.subr.bf16.mxu0 0
  %1945 = vmatpush1.bf16.msra.mxu0 0
  %1946 = vmatprep.subr.bf16.mxu0 0
  %1947 = vmatpush1.bf16.msra.mxu0 0
  %1948 = vmatprep.subr.bf16.mxu0 0
  %1949 = vmatpush1.bf16.msra.mxu0 0
  %1950 = vmatprep.subr.bf16.mxu0 0
  %1951 = vmatpush1.bf16.msra.mxu0 0
  %1952 = vmatprep.subr.bf16.mxu0 0
  %1953 = vmatpush1.bf16.msra.mxu0 0
  %1954 = vmatprep.subr.bf16.mxu0 0
  %1955 = vmatpush1.bf16.msra.mxu0 0
  %1956 = vmatprep.subr.bf16.mxu0 0
  %1957 = vmatpush1.bf16.msra.mxu0 0
  %1958 = vmatprep.subr.bf16.mxu0 0
  %1959 = vmatpush1.bf16.msra.mxu0 0
  %1960 = vmatprep.subr.bf16.mxu0 0
  %1961 = vmatpush1.bf16.msra.mxu0 0
  %1962 = vmatprep.subr.bf16.mxu0 0
  %1963 = vmatpush1.bf16.msra.mxu0 0
  %1964 = vmatprep.subr.bf16.mxu0 0
  %1965 = vmatpush1.bf16.msra.mxu0 0
  %1966 = vmatprep.subr.bf16.mxu0 0
  %1967 = vmatpush1.bf16.msra.mxu0 0
  %1968 = vmatprep.mubr.bf16.mxu0 0
  %1969 = vmatmul.mubr.bf16.gmra.mrb[0].mxu0 %v1934
  %v1970 = vpop.f32.mrb[0].mxu0
  %v1971 = vadd.f32 0.0, %v1970
  %v1972 = vpop.f32.mrb[0].mxu0
  %v1973 = vpop.f32.mrb[0].mxu0
  %v1974 = vpop.f32.mrb[0].mxu0
  %1975 = vdwg.mxu0
  %v1976 = vadd.f32 %v1723, %v1971
  %v1977 = vpack.c.bf16 %v1912, %v1912
  %v1978 = vpack.c.bf16 %v1913, %v1913
  %v1981 = vunpack.c.l.b16 %v1977
  %v1982 = vunpack.c.l.b16 %v1978
  %v1983 = vrot.slane %v1982, 7
  %v1984 = vsel %vm659, %v1983, %v1981
  %v1985 = vpack.c.b16 %v1984, %v1984
  %v1987 = vsel %vm76, %v1985, 0
  %1989 = vmatprep.subr.bf16.mxu0 0
  %1990 = vmatpush1.bf16.msra.mxu0 %v449
  %1991 = vmatprep.subr.bf16.mxu0 0
  %1992 = vmatpush1.bf16.msra.mxu0 0
  %1993 = vmatprep.subr.bf16.mxu0 0
  %1994 = vmatpush1.bf16.msra.mxu0 0
  %1995 = vmatprep.subr.bf16.mxu0 0
  %1996 = vmatpush1.bf16.msra.mxu0 0
  %1997 = vmatprep.subr.bf16.mxu0 0
  %1998 = vmatpush1.bf16.msra.mxu0 0
  %1999 = vmatprep.subr.bf16.mxu0 0
  %2000 = vmatpush1.bf16.msra.mxu0 0
  %2001 = vmatprep.subr.bf16.mxu0 0
  %2002 = vmatpush1.bf16.msra.mxu0 0
  %2003 = vmatprep.subr.bf16.mxu0 0
  %2004 = vmatpush1.bf16.msra.mxu0 0
  %2005 = vmatprep.subr.bf16.mxu0 0
  %2006 = vmatpush1.bf16.msra.mxu0 0
  %2007 = vmatprep.subr.bf16.mxu0 0
  %2008 = vmatpush1.bf16.msra.mxu0 0
  %2009 = vmatprep.subr.bf16.mxu0 0
  %2010 = vmatpush1.bf16.msra.mxu0 0
  %2011 = vmatprep.subr.bf16.mxu0 0
  %2012 = vmatpush1.bf16.msra.mxu0 0
  %2013 = vmatprep.subr.bf16.mxu0 0
  %2014 = vmatpush1.bf16.msra.mxu0 0
  %2015 = vmatprep.subr.bf16.mxu0 0
  %2016 = vmatpush1.bf16.msra.mxu0 0
  %2017 = vmatprep.subr.bf16.mxu0 0
  %2018 = vmatpush1.bf16.msra.mxu0 0
  %2019 = vmatprep.subr.bf16.mxu0 0
  %2020 = vmatpush1.bf16.msra.mxu0 0
  %2021 = vmatprep.mubr.bf16.mxu0 0
  %2022 = vmatmul.mubr.bf16.gmra.mrb[0].mxu0 %v1987
  %v2023 = vpop.f32.mrb[0].mxu0
  %v2024 = vadd.f32 0.0, %v2023
  %v2025 = vpop.f32.mrb[0].mxu0
  %v2026 = vpop.f32.mrb[0].mxu0
  %v2027 = vpop.f32.mrb[0].mxu0
  %2028 = vdwg.mxu0
  %2029 = vmatprep.subr.bf16.mxu0 0
  %2030 = vmatpush1.bf16.msra.mxu0 %v498
  %2031 = vmatprep.subr.bf16.mxu0 0
  %2032 = vmatpush1.bf16.msra.mxu0 0
  %2033 = vmatprep.subr.bf16.mxu0 0
  %2034 = vmatpush1.bf16.msra.mxu0 0
  %2035 = vmatprep.subr.bf16.mxu0 0
  %2036 = vmatpush1.bf16.msra.mxu0 0
  %2037 = vmatprep.subr.bf16.mxu0 0
  %2038 = vmatpush1.bf16.msra.mxu0 0
  %2039 = vmatprep.subr.bf16.mxu0 0
  %2040 = vmatpush1.bf16.msra.mxu0 0
  %2041 = vmatprep.subr.bf16.mxu0 0
  %2042 = vmatpush1.bf16.msra.mxu0 0
  %2043 = vmatprep.subr.bf16.mxu0 0
  %2044 = vmatpush1.bf16.msra.mxu0 0
  %2045 = vmatprep.subr.bf16.mxu0 0
  %2046 = vmatpush1.bf16.msra.mxu0 0
  %2047 = vmatprep.subr.bf16.mxu0 0
  %2048 = vmatpush1.bf16.msra.mxu0 0
  %2049 = vmatprep.subr.bf16.mxu0 0
  %2050 = vmatpush1.bf16.msra.mxu0 0
  %2051 = vmatprep.subr.bf16.mxu0 0
  %2052 = vmatpush1.bf16.msra.mxu0 0
  %2053 = vmatprep.subr.bf16.mxu0 0
  %2054 = vmatpush1.bf16.msra.mxu0 0
  %2055 = vmatprep.subr.bf16.mxu0 0
  %2056 = vmatpush1.bf16.msra.mxu0 0
  %2057 = vmatprep.subr.bf16.mxu0 0
  %2058 = vmatpush1.bf16.msra.mxu0 0
  %2059 = vmatprep.subr.bf16.mxu0 0
  %2060 = vmatpush1.bf16.msra.mxu0 0
  %2061 = vmatprep.mubr.bf16.mxu0 0
  %2062 = vmatmul.mubr.bf16.gmra.mrb[0].mxu0 %v1987
  %v2063 = vpop.f32.mrb[0].mxu0
  %v2064 = vadd.f32 0.0, %v2063
  %v2065 = vpop.f32.mrb[0].mxu0
  %v2066 = vpop.f32.mrb[0].mxu0
  %v2067 = vpop.f32.mrb[0].mxu0
  %2068 = vdwg.mxu0
  %v2069 = vld [vmem:[#allocation2 + $0x6] sm:$0x1]
  %v2070 = vld [vmem:[#allocation2 + $0x26] sm:$0x1]
  %v2072 = vrot.slane %v2024, 1
  %v2075 = vadd.f32 %v2069, %v2024
  %v2076 = vadd.f32 %v2070, %v2072
  %v2077 = vxor.u32 %v2075, 2147483648
  %v2078 = vxor.u32 %v2076, 2147483648
  %v2079 = vmul.f32 %v2077, 1.442695
  %v2080 = vpow.pop %v2079
  %v2081 = vmul.f32 %v2078, 1.442695
  %v2082 = vpow.pop %v2081
  %v2083 = vadd.f32 %v2080, 1.0
  %v2084 = vadd.f32 %v2082, 1.0
  %v2085 = vrcp.pop %v2083
  %v2086 = vmul.f32 1.0, %v2085
  %v2087 = vrcp.pop %v2084
  %v2088 = vmul.f32 1.0, %v2087
  %v2089 = vld [vmem:[#allocation3 + $0x6] sm:$0x1]
  %v2090 = vld [vmem:[#allocation3 + $0x26] sm:$0x1]
  %v2092 = vrot.slane %v2064, 1
  %v2095 = vadd.f32 %v2089, %v2064
  %v2096 = vadd.f32 %v2090, %v2092
  %v2097 = vxor.u32 %v2095, 2147483648
  %v2098 = vxor.u32 %v2096, 2147483648
  %v2099 = vmul.f32 %v2097, 1.442695
  %v2100 = vpow.pop %v2099
  %v2101 = vmul.f32 %v2098, 1.442695
  %v2102 = vpow.pop %v2101
  %v2103 = vadd.f32 %v2100, 1.0
  %v2104 = vadd.f32 %v2102, 1.0
  %v2105 = vrcp.pop %v2103
  %v2106 = vmul.f32 1.0, %v2105
  %v2107 = vrcp.pop %v2104
  %v2108 = vmul.f32 1.0, %v2107
  %v2109 = vld [vmem:[#allocation4 + $0x6] sm:$0x1]
  %v2110 = vld [vmem:[#allocation4 + $0x26] sm:$0x1]
  %2111 = vmatprep.subr.bf16.mxu0 0
  %2112 = vmatpush1.bf16.msra.mxu0 %v590
  %2113 = vmatprep.subr.bf16.mxu0 0
  %2114 = vmatpush1.bf16.msra.mxu0 0
  %2115 = vmatprep.subr.bf16.mxu0 0
  %2116 = vmatpush1.bf16.msra.mxu0 0
  %2117 = vmatprep.subr.bf16.mxu0 0
  %2118 = vmatpush1.bf16.msra.mxu0 0
  %2119 = vmatprep.subr.bf16.mxu0 0
  %2120 = vmatpush1.bf16.msra.mxu0 0
  %2121 = vmatprep.subr.bf16.mxu0 0
  %2122 = vmatpush1.bf16.msra.mxu0 0
  %2123 = vmatprep.subr.bf16.mxu0 0
  %2124 = vmatpush1.bf16.msra.mxu0 0
  %2125 = vmatprep.subr.bf16.mxu0 0
  %2126 = vmatpush1.bf16.msra.mxu0 0
  %2127 = vmatprep.subr.bf16.mxu0 0
  %2128 = vmatpush1.bf16.msra.mxu0 0
  %2129 = vmatprep.subr.bf16.mxu0 0
  %2130 = vmatpush1.bf16.msra.mxu0 0
  %2131 = vmatprep.subr.bf16.mxu0 0
  %2132 = vmatpush1.bf16.msra.mxu0 0
  %2133 = vmatprep.subr.bf16.mxu0 0
  %2134 = vmatpush1.bf16.msra.mxu0 0
  %2135 = vmatprep.subr.bf16.mxu0 0
  %2136 = vmatpush1.bf16.msra.mxu0 0
  %2137 = vmatprep.subr.bf16.mxu0 0
  %2138 = vmatpush1.bf16.msra.mxu0 0
  %2139 = vmatprep.subr.bf16.mxu0 0
  %2140 = vmatpush1.bf16.msra.mxu0 0
  %2141 = vmatprep.subr.bf16.mxu0 0
  %2142 = vmatpush1.bf16.msra.mxu0 0
  %2143 = vmatprep.mubr.bf16.mxu0 0
  %2144 = vmatmul.mubr.bf16.gmra.mrb[0].mxu0 %v1987
  %v2145 = vpop.f32.mrb[0].mxu0
  %v2146 = vadd.f32 %v585, %v2145
  %v2147 = vpop.f32.mrb[0].mxu0
  %v2148 = vpop.f32.mrb[0].mxu0
  %v2149 = vpop.f32.mrb[0].mxu0
  %2150 = vdwg.mxu0
  %v2152 = vrot.slane %v2146, 1
  %v2155 = vmul.f32 %v2086, %v2146
  %v2156 = vmul.f32 %v2088, %v2152
  %v2157 = vadd.f32 %v2109, %v2155
  %v2158 = vadd.f32 %v2110, %v2156
  %v2159 = vtanh.pop %v2157
  %v2160 = vtanh.pop %v2158
  %v2161 = vsub.f32 %v1912, %v2159
  %v2162 = vsub.f32 %v1913, %v2160
  %v2163 = vmul.f32 %v2106, %v2161
  %v2164 = vmul.f32 %v2108, %v2162
  %v2165 = vadd.f32 %v2159, %v2163
  %v2166 = vadd.f32 %v2160, %v2164
  %v2167 = vmax.f32 %v2165, 0.0
  %v2168 = vmax.f32 %v2166, 0.0
  %v2169 = vpack.c.bf16 %v2167, %v2167
  %v2170 = vpack.c.bf16 %v2168, %v2168
  %v2171 = vld [vmem:[%s6 + $0x30] sm:$0xf]
  %v2172 = vld [vmem:[%s6 + $0x34] sm:$0xf]
  %v2175 = vunpack.c.l.b16 %v2169
  %v2176 = vunpack.c.l.b16 %v2170
  %v2177 = vrot.slane %v2176, 7
  %v2178 = vsel %vm659, %v2177, %v2175
  %v2179 = vpack.c.b16 %v2178, %v2178
  %v2182 = vunpack.c.l.b16 %v2171
  %v2183 = vunpack.c.l.b16 %v2172
  %v2184 = vpack.c.b16 %v2183, %v2182
  %v2187 = vsel %vm76, %v2179, 0
  %2189 = vmatprep.subr.bf16.mxu0 0
  %2190 = vmatpush1.bf16.msra.mxu0 %v2184
  %2191 = vmatprep.subr.bf16.mxu0 0
  %2192 = vmatpush1.bf16.msra.mxu0 0
  %2193 = vmatprep.subr.bf16.mxu0 0
  %2194 = vmatpush1.bf16.msra.mxu0 0
  %2195 = vmatprep.subr.bf16.mxu0 0
  %2196 = vmatpush1.bf16.msra.mxu0 0
  %2197 = vmatprep.subr.bf16.mxu0 0
  %2198 = vmatpush1.bf16.msra.mxu0 0
  %2199 = vmatprep.subr.bf16.mxu0 0
  %2200 = vmatpush1.bf16.msra.mxu0 0
  %2201 = vmatprep.subr.bf16.mxu0 0
  %2202 = vmatpush1.bf16.msra.mxu0 0
  %2203 = vmatprep.subr.bf16.mxu0 0
  %2204 = vmatpush1.bf16.msra.mxu0 0
  %2205 = vmatprep.subr.bf16.mxu0 0
  %2206 = vmatpush1.bf16.msra.mxu0 0
  %2207 = vmatprep.subr.bf16.mxu0 0
  %2208 = vmatpush1.bf16.msra.mxu0 0
  %2209 = vmatprep.subr.bf16.mxu0 0
  %2210 = vmatpush1.bf16.msra.mxu0 0
  %2211 = vmatprep.subr.bf16.mxu0 0
  %2212 = vmatpush1.bf16.msra.mxu0 0
  %2213 = vmatprep.subr.bf16.mxu0 0
  %2214 = vmatpush1.bf16.msra.mxu0 0
  %2215 = vmatprep.subr.bf16.mxu0 0
  %2216 = vmatpush1.bf16.msra.mxu0 0
  %2217 = vmatprep.subr.bf16.mxu0 0
  %2218 = vmatpush1.bf16.msra.mxu0 0
  %2219 = vmatprep.subr.bf16.mxu0 0
  %2220 = vmatpush1.bf16.msra.mxu0 0
  %2221 = vmatprep.mubr.bf16.mxu0 0
  %2222 = vmatmul.mubr.bf16.gmra.mrb[0].mxu0 %v2187
  %v2223 = vpop.f32.mrb[0].mxu0
  %v2224 = vadd.f32 0.0, %v2223
  %v2225 = vpop.f32.mrb[0].mxu0
  %v2226 = vpop.f32.mrb[0].mxu0
  %v2227 = vpop.f32.mrb[0].mxu0
  %2228 = vdwg.mxu0
  %v2229 = vadd.f32 %v1976, %v2224
  %v2230 = vpack.c.bf16 %v2165, %v2165
  %v2231 = vpack.c.bf16 %v2166, %v2166
  %v2234 = vunpack.c.l.b16 %v2230
  %v2235 = vunpack.c.l.b16 %v2231
  %v2236 = vrot.slane %v2235, 7
  %v2237 = vsel %vm659, %v2236, %v2234
  %v2238 = vpack.c.b16 %v2237, %v2237
  %v2240 = vsel %vm76, %v2238, 0
  %2242 = vmatprep.subr.bf16.mxu0 0
  %2243 = vmatpush1.bf16.msra.mxu0 %v449
  %2244 = vmatprep.subr.bf16.mxu0 0
  %2245 = vmatpush1.bf16.msra.mxu0 0
  %2246 = vmatprep.subr.bf16.mxu0 0
  %2247 = vmatpush1.bf16.msra.mxu0 0
  %2248 = vmatprep.subr.bf16.mxu0 0
  %2249 = vmatpush1.bf16.msra.mxu0 0
  %2250 = vmatprep.subr.bf16.mxu0 0
  %2251 = vmatpush1.bf16.msra.mxu0 0
  %2252 = vmatprep.subr.bf16.mxu0 0
  %2253 = vmatpush1.bf16.msra.mxu0 0
  %2254 = vmatprep.subr.bf16.mxu0 0
  %2255 = vmatpush1.bf16.msra.mxu0 0
  %2256 = vmatprep.subr.bf16.mxu0 0
  %2257 = vmatpush1.bf16.msra.mxu0 0
  %2258 = vmatprep.subr.bf16.mxu0 0
  %2259 = vmatpush1.bf16.msra.mxu0 0
  %2260 = vmatprep.subr.bf16.mxu0 0
  %2261 = vmatpush1.bf16.msra.mxu0 0
  %2262 = vmatprep.subr.bf16.mxu0 0
  %2263 = vmatpush1.bf16.msra.mxu0 0
  %2264 = vmatprep.subr.bf16.mxu0 0
  %2265 = vmatpush1.bf16.msra.mxu0 0
  %2266 = vmatprep.subr.bf16.mxu0 0
  %2267 = vmatpush1.bf16.msra.mxu0 0
  %2268 = vmatprep.subr.bf16.mxu0 0
  %2269 = vmatpush1.bf16.msra.mxu0 0
  %2270 = vmatprep.subr.bf16.mxu0 0
  %2271 = vmatpush1.bf16.msra.mxu0 0
  %2272 = vmatprep.subr.bf16.mxu0 0
  %2273 = vmatpush1.bf16.msra.mxu0 0
  %2274 = vmatprep.mubr.bf16.mxu0 0
  %2275 = vmatmul.mubr.bf16.gmra.mrb[0].mxu0 %v2240
  %v2276 = vpop.f32.mrb[0].mxu0
  %v2277 = vadd.f32 0.0, %v2276
  %v2278 = vpop.f32.mrb[0].mxu0
  %v2279 = vpop.f32.mrb[0].mxu0
  %v2280 = vpop.f32.mrb[0].mxu0
  %2281 = vdwg.mxu0
  %2282 = vmatprep.subr.bf16.mxu0 0
  %2283 = vmatpush1.bf16.msra.mxu0 %v498
  %2284 = vmatprep.subr.bf16.mxu0 0
  %2285 = vmatpush1.bf16.msra.mxu0 0
  %2286 = vmatprep.subr.bf16.mxu0 0
  %2287 = vmatpush1.bf16.msra.mxu0 0
  %2288 = vmatprep.subr.bf16.mxu0 0
  %2289 = vmatpush1.bf16.msra.mxu0 0
  %2290 = vmatprep.subr.bf16.mxu0 0
  %2291 = vmatpush1.bf16.msra.mxu0 0
  %2292 = vmatprep.subr.bf16.mxu0 0
  %2293 = vmatpush1.bf16.msra.mxu0 0
  %2294 = vmatprep.subr.bf16.mxu0 0
  %2295 = vmatpush1.bf16.msra.mxu0 0
  %2296 = vmatprep.subr.bf16.mxu0 0
  %2297 = vmatpush1.bf16.msra.mxu0 0
  %2298 = vmatprep.subr.bf16.mxu0 0
  %2299 = vmatpush1.bf16.msra.mxu0 0
  %2300 = vmatprep.subr.bf16.mxu0 0
  %2301 = vmatpush1.bf16.msra.mxu0 0
  %2302 = vmatprep.subr.bf16.mxu0 0
  %2303 = vmatpush1.bf16.msra.mxu0 0
  %2304 = vmatprep.subr.bf16.mxu0 0
  %2305 = vmatpush1.bf16.msra.mxu0 0
  %2306 = vmatprep.subr.bf16.mxu0 0
  %2307 = vmatpush1.bf16.msra.mxu0 0
  %2308 = vmatprep.subr.bf16.mxu0 0
  %2309 = vmatpush1.bf16.msra.mxu0 0
  %2310 = vmatprep.subr.bf16.mxu0 0
  %2311 = vmatpush1.bf16.msra.mxu0 0
  %2312 = vmatprep.subr.bf16.mxu0 0
  %2313 = vmatpush1.bf16.msra.mxu0 0
  %2314 = vmatprep.mubr.bf16.mxu0 0
  %2315 = vmatmul.mubr.bf16.gmra.mrb[0].mxu0 %v2240
  %v2316 = vpop.f32.mrb[0].mxu0
  %v2317 = vadd.f32 0.0, %v2316
  %v2318 = vpop.f32.mrb[0].mxu0
  %v2319 = vpop.f32.mrb[0].mxu0
  %v2320 = vpop.f32.mrb[0].mxu0
  %2321 = vdwg.mxu0
  %v2322 = vld [vmem:[#allocation2 + $0x7] sm:$0x1]
  %v2323 = vld [vmem:[#allocation2 + $0x27] sm:$0x1]
  %v2325 = vrot.slane %v2277, 1
  %v2328 = vadd.f32 %v2322, %v2277
  %v2329 = vadd.f32 %v2323, %v2325
  %v2330 = vxor.u32 %v2328, 2147483648
  %v2331 = vxor.u32 %v2329, 2147483648
  %v2332 = vmul.f32 %v2330, 1.442695
  %v2333 = vpow.pop %v2332
  %v2334 = vmul.f32 %v2331, 1.442695
  %v2335 = vpow.pop %v2334
  %v2336 = vadd.f32 %v2333, 1.0
  %v2337 = vadd.f32 %v2335, 1.0
  %v2338 = vrcp.pop %v2336
  %v2339 = vmul.f32 1.0, %v2338
  %v2340 = vrcp.pop %v2337
  %v2341 = vmul.f32 1.0, %v2340
  %v2342 = vld [vmem:[#allocation3 + $0x7] sm:$0x1]
  %v2343 = vld [vmem:[#allocation3 + $0x27] sm:$0x1]
  %v2345 = vrot.slane %v2317, 1
  %v2348 = vadd.f32 %v2342, %v2317
  %v2349 = vadd.f32 %v2343, %v2345
  %v2350 = vxor.u32 %v2348, 2147483648
  %v2351 = vxor.u32 %v2349, 2147483648
  %v2352 = vmul.f32 %v2350, 1.442695
  %v2353 = vpow.pop %v2352
  %v2354 = vmul.f32 %v2351, 1.442695
  %v2355 = vpow.pop %v2354
  %v2356 = vadd.f32 %v2353, 1.0
  %v2357 = vadd.f32 %v2355, 1.0
  %v2358 = vrcp.pop %v2356
  %v2359 = vmul.f32 1.0, %v2358
  %v2360 = vrcp.pop %v2357
  %v2361 = vmul.f32 1.0, %v2360
  %v2362 = vld [vmem:[#allocation4 + $0x7] sm:$0x1]
  %v2363 = vld [vmem:[#allocation4 + $0x27] sm:$0x1]
  %2364 = vmatprep.subr.bf16.mxu0 0
  %2365 = vmatpush1.bf16.msra.mxu0 %v590
  %2366 = vmatprep.subr.bf16.mxu0 0
  %2367 = vmatpush1.bf16.msra.mxu0 0
  %2368 = vmatprep.subr.bf16.mxu0 0
  %2369 = vmatpush1.bf16.msra.mxu0 0
  %2370 = vmatprep.subr.bf16.mxu0 0
  %2371 = vmatpush1.bf16.msra.mxu0 0
  %2372 = vmatprep.subr.bf16.mxu0 0
  %2373 = vmatpush1.bf16.msra.mxu0 0
  %2374 = vmatprep.subr.bf16.mxu0 0
  %2375 = vmatpush1.bf16.msra.mxu0 0
  %2376 = vmatprep.subr.bf16.mxu0 0
  %2377 = vmatpush1.bf16.msra.mxu0 0
  %2378 = vmatprep.subr.bf16.mxu0 0
  %2379 = vmatpush1.bf16.msra.mxu0 0
  %2380 = vmatprep.subr.bf16.mxu0 0
  %2381 = vmatpush1.bf16.msra.mxu0 0
  %2382 = vmatprep.subr.bf16.mxu0 0
  %2383 = vmatpush1.bf16.msra.mxu0 0
  %2384 = vmatprep.subr.bf16.mxu0 0
  %2385 = vmatpush1.bf16.msra.mxu0 0
  %2386 = vmatprep.subr.bf16.mxu0 0
  %2387 = vmatpush1.bf16.msra.mxu0 0
  %2388 = vmatprep.subr.bf16.mxu0 0
  %2389 = vmatpush1.bf16.msra.mxu0 0
  %2390 = vmatprep.subr.bf16.mxu0 0
  %2391 = vmatpush1.bf16.msra.mxu0 0
  %2392 = vmatprep.subr.bf16.mxu0 0
  %2393 = vmatpush1.bf16.msra.mxu0 0
  %2394 = vmatprep.subr.bf16.mxu0 0
  %2395 = vmatpush1.bf16.msra.mxu0 0
  %2396 = vmatprep.mubr.bf16.mxu0 0
  %2397 = vmatmul.mubr.bf16.gmra.mrb[0].mxu0 %v2240
  %v2398 = vpop.f32.mrb[0].mxu0
  %v2399 = vadd.f32 %v585, %v2398
  %v2400 = vpop.f32.mrb[0].mxu0
  %v2401 = vpop.f32.mrb[0].mxu0
  %v2402 = vpop.f32.mrb[0].mxu0
  %2403 = vdwg.mxu0
  %v2405 = vrot.slane %v2399, 1
  %v2408 = vmul.f32 %v2339, %v2399
  %v2409 = vmul.f32 %v2341, %v2405
  %v2410 = vadd.f32 %v2362, %v2408
  %v2411 = vadd.f32 %v2363, %v2409
  %v2412 = vtanh.pop %v2410
  %v2413 = vtanh.pop %v2411
  %v2414 = vsub.f32 %v2165, %v2412
  %v2415 = vsub.f32 %v2166, %v2413
  %v2416 = vmul.f32 %v2359, %v2414
  %v2417 = vmul.f32 %v2361, %v2415
  %v2418 = vadd.f32 %v2412, %v2416
  %v2419 = vadd.f32 %v2413, %v2417
  %v2420 = vmax.f32 %v2418, 0.0
  %v2421 = vmax.f32 %v2419, 0.0
  %v2422 = vpack.c.bf16 %v2420, %v2420
  %v2423 = vpack.c.bf16 %v2421, %v2421
  %v2424 = vld [vmem:[%s6 + $0x38] sm:$0xf]
  %v2425 = vld [vmem:[%s6 + $0x3c] sm:$0xf]
  %v2428 = vunpack.c.l.b16 %v2422
  %v2429 = vunpack.c.l.b16 %v2423
  %v2430 = vrot.slane %v2429, 7
  %v2431 = vsel %vm659, %v2430, %v2428
  %v2432 = vpack.c.b16 %v2431, %v2431
  %v2435 = vunpack.c.l.b16 %v2424
  %v2436 = vunpack.c.l.b16 %v2425
  %v2437 = vpack.c.b16 %v2436, %v2435
  %v2440 = vsel %vm76, %v2432, 0
  %2442 = vmatprep.subr.bf16.mxu0 0
  %2443 = vmatpush1.bf16.msra.mxu0 %v2437
  %2444 = vmatprep.subr.bf16.mxu0 0
  %2445 = vmatpush1.bf16.msra.mxu0 0
  %2446 = vmatprep.subr.bf16.mxu0 0
  %2447 = vmatpush1.bf16.msra.mxu0 0
  %2448 = vmatprep.subr.bf16.mxu0 0
  %2449 = vmatpush1.bf16.msra.mxu0 0
  %2450 = vmatprep.subr.bf16.mxu0 0
  %2451 = vmatpush1.bf16.msra.mxu0 0
  %2452 = vmatprep.subr.bf16.mxu0 0
  %2453 = vmatpush1.bf16.msra.mxu0 0
  %2454 = vmatprep.subr.bf16.mxu0 0
  %2455 = vmatpush1.bf16.msra.mxu0 0
  %2456 = vmatprep.subr.bf16.mxu0 0
  %2457 = vmatpush1.bf16.msra.mxu0 0
  %2458 = vmatprep.subr.bf16.mxu0 0
  %2459 = vmatpush1.bf16.msra.mxu0 0
  %2460 = vmatprep.subr.bf16.mxu0 0
  %2461 = vmatpush1.bf16.msra.mxu0 0
  %2462 = vmatprep.subr.bf16.mxu0 0
  %2463 = vmatpush1.bf16.msra.mxu0 0
  %2464 = vmatprep.subr.bf16.mxu0 0
  %2465 = vmatpush1.bf16.msra.mxu0 0
  %2466 = vmatprep.subr.bf16.mxu0 0
  %2467 = vmatpush1.bf16.msra.mxu0 0
  %2468 = vmatprep.subr.bf16.mxu0 0
  %2469 = vmatpush1.bf16.msra.mxu0 0
  %2470 = vmatprep.subr.bf16.mxu0 0
  %2471 = vmatpush1.bf16.msra.mxu0 0
  %2472 = vmatprep.subr.bf16.mxu0 0
  %2473 = vmatpush1.bf16.msra.mxu0 0
  %2474 = vmatprep.mubr.bf16.mxu0 0
  %2475 = vmatmul.mubr.bf16.gmra.mrb[0].mxu0 %v2440
  %v2476 = vpop.f32.mrb[0].mxu0
  %v2477 = vadd.f32 0.0, %v2476
  %v2478 = vpop.f32.mrb[0].mxu0
  %v2479 = vpop.f32.mrb[0].mxu0
  %v2480 = vpop.f32.mrb[0].mxu0
  %2481 = vdwg.mxu0
  %v2482 = vadd.f32 %v2229, %v2477
  %v2483 = vpack.c.bf16 %v2418, %v2418
  %v2484 = vpack.c.bf16 %v2419, %v2419
  %v2487 = vunpack.c.l.b16 %v2483
  %v2488 = vunpack.c.l.b16 %v2484
  %v2489 = vrot.slane %v2488, 7
  %v2490 = vsel %vm659, %v2489, %v2487
  %v2491 = vpack.c.b16 %v2490, %v2490
  %v2493 = vsel %vm76, %v2491, 0
  %2495 = vmatprep.subr.bf16.mxu0 0
  %2496 = vmatpush1.bf16.msra.mxu0 %v449
  %2497 = vmatprep.subr.bf16.mxu0 0
  %2498 = vmatpush1.bf16.msra.mxu0 0
  %2499 = vmatprep.subr.bf16.mxu0 0
  %2500 = vmatpush1.bf16.msra.mxu0 0
  %2501 = vmatprep.subr.bf16.mxu0 0
  %2502 = vmatpush1.bf16.msra.mxu0 0
  %2503 = vmatprep.subr.bf16.mxu0 0
  %2504 = vmatpush1.bf16.msra.mxu0 0
  %2505 = vmatprep.subr.bf16.mxu0 0
  %2506 = vmatpush1.bf16.msra.mxu0 0
  %2507 = vmatprep.subr.bf16.mxu0 0
  %2508 = vmatpush1.bf16.msra.mxu0 0
  %2509 = vmatprep.subr.bf16.mxu0 0
  %2510 = vmatpush1.bf16.msra.mxu0 0
  %2511 = vmatprep.subr.bf16.mxu0 0
  %2512 = vmatpush1.bf16.msra.mxu0 0
  %2513 = vmatprep.subr.bf16.mxu0 0
  %2514 = vmatpush1.bf16.msra.mxu0 0
  %2515 = vmatprep.subr.bf16.mxu0 0
  %2516 = vmatpush1.bf16.msra.mxu0 0
  %2517 = vmatprep.subr.bf16.mxu0 0
  %2518 = vmatpush1.bf16.msra.mxu0 0
  %2519 = vmatprep.subr.bf16.mxu0 0
  %2520 = vmatpush1.bf16.msra.mxu0 0
  %2521 = vmatprep.subr.bf16.mxu0 0
  %2522 = vmatpush1.bf16.msra.mxu0 0
  %2523 = vmatprep.subr.bf16.mxu0 0
  %2524 = vmatpush1.bf16.msra.mxu0 0
  %2525 = vmatprep.subr.bf16.mxu0 0
  %2526 = vmatpush1.bf16.msra.mxu0 0
  %2527 = vmatprep.mubr.bf16.mxu0 0
  %2528 = vmatmul.mubr.bf16.gmra.mrb[0].mxu0 %v2493
  %v2529 = vpop.f32.mrb[0].mxu0
  %v2530 = vadd.f32 0.0, %v2529
  %v2531 = vpop.f32.mrb[0].mxu0
  %v2532 = vpop.f32.mrb[0].mxu0
  %v2533 = vpop.f32.mrb[0].mxu0
  %2534 = vdwg.mxu0
  %2535 = vmatprep.subr.bf16.mxu0 0
  %2536 = vmatpush1.bf16.msra.mxu0 %v498
  %2537 = vmatprep.subr.bf16.mxu0 0
  %2538 = vmatpush1.bf16.msra.mxu0 0
  %2539 = vmatprep.subr.bf16.mxu0 0
  %2540 = vmatpush1.bf16.msra.mxu0 0
  %2541 = vmatprep.subr.bf16.mxu0 0
  %2542 = vmatpush1.bf16.msra.mxu0 0
  %2543 = vmatprep.subr.bf16.mxu0 0
  %2544 = vmatpush1.bf16.msra.mxu0 0
  %2545 = vmatprep.subr.bf16.mxu0 0
  %2546 = vmatpush1.bf16.msra.mxu0 0
  %2547 = vmatprep.subr.bf16.mxu0 0
  %2548 = vmatpush1.bf16.msra.mxu0 0
  %2549 = vmatprep.subr.bf16.mxu0 0
  %2550 = vmatpush1.bf16.msra.mxu0 0
  %2551 = vmatprep.subr.bf16.mxu0 0
  %2552 = vmatpush1.bf16.msra.mxu0 0
  %2553 = vmatprep.subr.bf16.mxu0 0
  %2554 = vmatpush1.bf16.msra.mxu0 0
  %2555 = vmatprep.subr.bf16.mxu0 0
  %2556 = vmatpush1.bf16.msra.mxu0 0
  %2557 = vmatprep.subr.bf16.mxu0 0
  %2558 = vmatpush1.bf16.msra.mxu0 0
  %2559 = vmatprep.subr.bf16.mxu0 0
  %2560 = vmatpush1.bf16.msra.mxu0 0
  %2561 = vmatprep.subr.bf16.mxu0 0
  %2562 = vmatpush1.bf16.msra.mxu0 0
  %2563 = vmatprep.subr.bf16.mxu0 0
  %2564 = vmatpush1.bf16.msra.mxu0 0
  %2565 = vmatprep.subr.bf16.mxu0 0
  %2566 = vmatpush1.bf16.msra.mxu0 0
  %2567 = vmatprep.mubr.bf16.mxu0 0
  %2568 = vmatmul.mubr.bf16.gmra.mrb[0].mxu0 %v2493
  %v2569 = vpop.f32.mrb[0].mxu0
  %v2570 = vadd.f32 0.0, %v2569
  %v2571 = vpop.f32.mrb[0].mxu0
  %v2572 = vpop.f32.mrb[0].mxu0
  %v2573 = vpop.f32.mrb[0].mxu0
  %2574 = vdwg.mxu0
  %v2575 = vld [vmem:[#allocation2 + $0x8] sm:$0x1]
  %v2576 = vld [vmem:[#allocation2 + $0x28] sm:$0x1]
  %v2578 = vrot.slane %v2530, 1
  %v2581 = vadd.f32 %v2575, %v2530
  %v2582 = vadd.f32 %v2576, %v2578
  %v2583 = vxor.u32 %v2581, 2147483648
  %v2584 = vxor.u32 %v2582, 2147483648
  %v2585 = vmul.f32 %v2583, 1.442695
  %v2586 = vpow.pop %v2585
  %v2587 = vmul.f32 %v2584, 1.442695
  %v2588 = vpow.pop %v2587
  %v2589 = vadd.f32 %v2586, 1.0
  %v2590 = vadd.f32 %v2588, 1.0
  %v2591 = vrcp.pop %v2589
  %v2592 = vmul.f32 1.0, %v2591
  %v2593 = vrcp.pop %v2590
  %v2594 = vmul.f32 1.0, %v2593
  %v2595 = vld [vmem:[#allocation3 + $0x8] sm:$0x1]
  %v2596 = vld [vmem:[#allocation3 + $0x28] sm:$0x1]
  %v2598 = vrot.slane %v2570, 1
  %v2601 = vadd.f32 %v2595, %v2570
  %v2602 = vadd.f32 %v2596, %v2598
  %v2603 = vxor.u32 %v2601, 2147483648
  %v2604 = vxor.u32 %v2602, 2147483648
  %v2605 = vmul.f32 %v2603, 1.442695
  %v2606 = vpow.pop %v2605
  %v2607 = vmul.f32 %v2604, 1.442695
  %v2608 = vpow.pop %v2607
  %v2609 = vadd.f32 %v2606, 1.0
  %v2610 = vadd.f32 %v2608, 1.0
  %v2611 = vrcp.pop %v2609
  %v2612 = vmul.f32 1.0, %v2611
  %v2613 = vrcp.pop %v2610
  %v2614 = vmul.f32 1.0, %v2613
  %v2615 = vld [vmem:[#allocation4 + $0x8] sm:$0x1]
  %v2616 = vld [vmem:[#allocation4 + $0x28] sm:$0x1]
  %2617 = vmatprep.subr.bf16.mxu0 0
  %2618 = vmatpush1.bf16.msra.mxu0 %v590
  %2619 = vmatprep.subr.bf16.mxu0 0
  %2620 = vmatpush1.bf16.msra.mxu0 0
  %2621 = vmatprep.subr.bf16.mxu0 0
  %2622 = vmatpush1.bf16.msra.mxu0 0
  %2623 = vmatprep.subr.bf16.mxu0 0
  %2624 = vmatpush1.bf16.msra.mxu0 0
  %2625 = vmatprep.subr.bf16.mxu0 0
  %2626 = vmatpush1.bf16.msra.mxu0 0
  %2627 = vmatprep.subr.bf16.mxu0 0
  %2628 = vmatpush1.bf16.msra.mxu0 0
  %2629 = vmatprep.subr.bf16.mxu0 0
  %2630 = vmatpush1.bf16.msra.mxu0 0
  %2631 = vmatprep.subr.bf16.mxu0 0
  %2632 = vmatpush1.bf16.msra.mxu0 0
  %2633 = vmatprep.subr.bf16.mxu0 0
  %2634 = vmatpush1.bf16.msra.mxu0 0
  %2635 = vmatprep.subr.bf16.mxu0 0
  %2636 = vmatpush1.bf16.msra.mxu0 0
  %2637 = vmatprep.subr.bf16.mxu0 0
  %2638 = vmatpush1.bf16.msra.mxu0 0
  %2639 = vmatprep.subr.bf16.mxu0 0
  %2640 = vmatpush1.bf16.msra.mxu0 0
  %2641 = vmatprep.subr.bf16.mxu0 0
  %2642 = vmatpush1.bf16.msra.mxu0 0
  %2643 = vmatprep.subr.bf16.mxu0 0
  %2644 = vmatpush1.bf16.msra.mxu0 0
  %2645 = vmatprep.subr.bf16.mxu0 0
  %2646 = vmatpush1.bf16.msra.mxu0 0
  %2647 = vmatprep.subr.bf16.mxu0 0
  %2648 = vmatpush1.bf16.msra.mxu0 0
  %2649 = vmatprep.mubr.bf16.mxu0 0
  %2650 = vmatmul.mubr.bf16.gmra.mrb[0].mxu0 %v2493
  %v2651 = vpop.f32.mrb[0].mxu0
  %v2652 = vadd.f32 %v585, %v2651
  %v2653 = vpop.f32.mrb[0].mxu0
  %v2654 = vpop.f32.mrb[0].mxu0
  %v2655 = vpop.f32.mrb[0].mxu0
  %2656 = vdwg.mxu0
  %v2658 = vrot.slane %v2652, 1
  %v2661 = vmul.f32 %v2592, %v2652
  %v2662 = vmul.f32 %v2594, %v2658
  %v2663 = vadd.f32 %v2615, %v2661
  %v2664 = vadd.f32 %v2616, %v2662
  %v2665 = vtanh.pop %v2663
  %v2666 = vtanh.pop %v2664
  %v2667 = vsub.f32 %v2418, %v2665
  %v2668 = vsub.f32 %v2419, %v2666
  %v2669 = vmul.f32 %v2612, %v2667
  %v2670 = vmul.f32 %v2614, %v2668
  %v2671 = vadd.f32 %v2665, %v2669
  %v2672 = vadd.f32 %v2666, %v2670
  %v2673 = vmax.f32 %v2671, 0.0
  %v2674 = vmax.f32 %v2672, 0.0
  %v2675 = vpack.c.bf16 %v2673, %v2673
  %v2676 = vpack.c.bf16 %v2674, %v2674
  %v2677 = vld [vmem:[%s6 + $0x40] sm:$0xf]
  %v2678 = vld [vmem:[%s6 + $0x44] sm:$0xf]
  %v2681 = vunpack.c.l.b16 %v2675
  %v2682 = vunpack.c.l.b16 %v2676
  %v2683 = vrot.slane %v2682, 7
  %v2684 = vsel %vm659, %v2683, %v2681
  %v2685 = vpack.c.b16 %v2684, %v2684
  %v2688 = vunpack.c.l.b16 %v2677
  %v2689 = vunpack.c.l.b16 %v2678
  %v2690 = vpack.c.b16 %v2689, %v2688
  %v2693 = vsel %vm76, %v2685, 0
  %2695 = vmatprep.subr.bf16.mxu0 0
  %2696 = vmatpush1.bf16.msra.mxu0 %v2690
  %2697 = vmatprep.subr.bf16.mxu0 0
  %2698 = vmatpush1.bf16.msra.mxu0 0
  %2699 = vmatprep.subr.bf16.mxu0 0
  %2700 = vmatpush1.bf16.msra.mxu0 0
  %2701 = vmatprep.subr.bf16.mxu0 0
  %2702 = vmatpush1.bf16.msra.mxu0 0
  %2703 = vmatprep.subr.bf16.mxu0 0
  %2704 = vmatpush1.bf16.msra.mxu0 0
  %2705 = vmatprep.subr.bf16.mxu0 0
  %2706 = vmatpush1.bf16.msra.mxu0 0
  %2707 = vmatprep.subr.bf16.mxu0 0
  %2708 = vmatpush1.bf16.msra.mxu0 0
  %2709 = vmatprep.subr.bf16.mxu0 0
  %2710 = vmatpush1.bf16.msra.mxu0 0
  %2711 = vmatprep.subr.bf16.mxu0 0
  %2712 = vmatpush1.bf16.msra.mxu0 0
  %2713 = vmatprep.subr.bf16.mxu0 0
  %2714 = vmatpush1.bf16.msra.mxu0 0
  %2715 = vmatprep.subr.bf16.mxu0 0
  %2716 = vmatpush1.bf16.msra.mxu0 0
  %2717 = vmatprep.subr.bf16.mxu0 0
  %2718 = vmatpush1.bf16.msra.mxu0 0
  %2719 = vmatprep.subr.bf16.mxu0 0
  %2720 = vmatpush1.bf16.msra.mxu0 0
  %2721 = vmatprep.subr.bf16.mxu0 0
  %2722 = vmatpush1.bf16.msra.mxu0 0
  %2723 = vmatprep.subr.bf16.mxu0 0
  %2724 = vmatpush1.bf16.msra.mxu0 0
  %2725 = vmatprep.subr.bf16.mxu0 0
  %2726 = vmatpush1.bf16.msra.mxu0 0
  %2727 = vmatprep.mubr.bf16.mxu0 0
  %2728 = vmatmul.mubr.bf16.gmra.mrb[0].mxu0 %v2693
  %v2729 = vpop.f32.mrb[0].mxu0
  %v2730 = vadd.f32 0.0, %v2729
  %v2731 = vpop.f32.mrb[0].mxu0
  %v2732 = vpop.f32.mrb[0].mxu0
  %v2733 = vpop.f32.mrb[0].mxu0
  %2734 = vdwg.mxu0
  %v2735 = vadd.f32 %v2482, %v2730
  %v2736 = vpack.c.bf16 %v2671, %v2671
  %v2737 = vpack.c.bf16 %v2672, %v2672
  %v2740 = vunpack.c.l.b16 %v2736
  %v2741 = vunpack.c.l.b16 %v2737
  %v2742 = vrot.slane %v2741, 7
  %v2743 = vsel %vm659, %v2742, %v2740
  %v2744 = vpack.c.b16 %v2743, %v2743
  %v2746 = vsel %vm76, %v2744, 0
  %2748 = vmatprep.subr.bf16.mxu0 0
  %2749 = vmatpush1.bf16.msra.mxu0 %v449
  %2750 = vmatprep.subr.bf16.mxu0 0
  %2751 = vmatpush1.bf16.msra.mxu0 0
  %2752 = vmatprep.subr.bf16.mxu0 0
  %2753 = vmatpush1.bf16.msra.mxu0 0
  %2754 = vmatprep.subr.bf16.mxu0 0
  %2755 = vmatpush1.bf16.msra.mxu0 0
  %2756 = vmatprep.subr.bf16.mxu0 0
  %2757 = vmatpush1.bf16.msra.mxu0 0
  %2758 = vmatprep.subr.bf16.mxu0 0
  %2759 = vmatpush1.bf16.msra.mxu0 0
  %2760 = vmatprep.subr.bf16.mxu0 0
  %2761 = vmatpush1.bf16.msra.mxu0 0
  %2762 = vmatprep.subr.bf16.mxu0 0
  %2763 = vmatpush1.bf16.msra.mxu0 0
  %2764 = vmatprep.subr.bf16.mxu0 0
  %2765 = vmatpush1.bf16.msra.mxu0 0
  %2766 = vmatprep.subr.bf16.mxu0 0
  %2767 = vmatpush1.bf16.msra.mxu0 0
  %2768 = vmatprep.subr.bf16.mxu0 0
  %2769 = vmatpush1.bf16.msra.mxu0 0
  %2770 = vmatprep.subr.bf16.mxu0 0
  %2771 = vmatpush1.bf16.msra.mxu0 0
  %2772 = vmatprep.subr.bf16.mxu0 0
  %2773 = vmatpush1.bf16.msra.mxu0 0
  %2774 = vmatprep.subr.bf16.mxu0 0
  %2775 = vmatpush1.bf16.msra.mxu0 0
  %2776 = vmatprep.subr.bf16.mxu0 0
  %2777 = vmatpush1.bf16.msra.mxu0 0
  %2778 = vmatprep.subr.bf16.mxu0 0
  %2779 = vmatpush1.bf16.msra.mxu0 0
  %2780 = vmatprep.mubr.bf16.mxu0 0
  %2781 = vmatmul.mubr.bf16.gmra.mrb[0].mxu0 %v2746
  %v2782 = vpop.f32.mrb[0].mxu0
  %v2783 = vadd.f32 0.0, %v2782
  %v2784 = vpop.f32.mrb[0].mxu0
  %v2785 = vpop.f32.mrb[0].mxu0
  %v2786 = vpop.f32.mrb[0].mxu0
  %2787 = vdwg.mxu0
  %2788 = vmatprep.subr.bf16.mxu0 0
  %2789 = vmatpush1.bf16.msra.mxu0 %v498
  %2790 = vmatprep.subr.bf16.mxu0 0
  %2791 = vmatpush1.bf16.msra.mxu0 0
  %2792 = vmatprep.subr.bf16.mxu0 0
  %2793 = vmatpush1.bf16.msra.mxu0 0
  %2794 = vmatprep.subr.bf16.mxu0 0
  %2795 = vmatpush1.bf16.msra.mxu0 0
  %2796 = vmatprep.subr.bf16.mxu0 0
  %2797 = vmatpush1.bf16.msra.mxu0 0
  %2798 = vmatprep.subr.bf16.mxu0 0
  %2799 = vmatpush1.bf16.msra.mxu0 0
  %2800 = vmatprep.subr.bf16.mxu0 0
  %2801 = vmatpush1.bf16.msra.mxu0 0
  %2802 = vmatprep.subr.bf16.mxu0 0
  %2803 = vmatpush1.bf16.msra.mxu0 0
  %2804 = vmatprep.subr.bf16.mxu0 0
  %2805 = vmatpush1.bf16.msra.mxu0 0
  %2806 = vmatprep.subr.bf16.mxu0 0
  %2807 = vmatpush1.bf16.msra.mxu0 0
  %2808 = vmatprep.subr.bf16.mxu0 0
  %2809 = vmatpush1.bf16.msra.mxu0 0
  %2810 = vmatprep.subr.bf16.mxu0 0
  %2811 = vmatpush1.bf16.msra.mxu0 0
  %2812 = vmatprep.subr.bf16.mxu0 0
  %2813 = vmatpush1.bf16.msra.mxu0 0
  %2814 = vmatprep.subr.bf16.mxu0 0
  %2815 = vmatpush1.bf16.msra.mxu0 0
  %2816 = vmatprep.subr.bf16.mxu0 0
  %2817 = vmatpush1.bf16.msra.mxu0 0
  %2818 = vmatprep.subr.bf16.mxu0 0
  %2819 = vmatpush1.bf16.msra.mxu0 0
  %2820 = vmatprep.mubr.bf16.mxu0 0
  %2821 = vmatmul.mubr.bf16.gmra.mrb[0].mxu0 %v2746
  %v2822 = vpop.f32.mrb[0].mxu0
  %v2823 = vadd.f32 0.0, %v2822
  %v2824 = vpop.f32.mrb[0].mxu0
  %v2825 = vpop.f32.mrb[0].mxu0
  %v2826 = vpop.f32.mrb[0].mxu0
  %2827 = vdwg.mxu0
  %v2828 = vld [vmem:[#allocation2 + $0x9] sm:$0x1]
  %v2829 = vld [vmem:[#allocation2 + $0x29] sm:$0x1]
  %v2831 = vrot.slane %v2783, 1
  %v2834 = vadd.f32 %v2828, %v2783
  %v2835 = vadd.f32 %v2829, %v2831
  %v2836 = vxor.u32 %v2834, 2147483648
  %v2837 = vxor.u32 %v2835, 2147483648
  %v2838 = vmul.f32 %v2836, 1.442695
  %v2839 = vpow.pop %v2838
  %v2840 = vmul.f32 %v2837, 1.442695
  %v2841 = vpow.pop %v2840
  %v2842 = vadd.f32 %v2839, 1.0
  %v2843 = vadd.f32 %v2841, 1.0
  %v2844 = vrcp.pop %v2842
  %v2845 = vmul.f32 1.0, %v2844
  %v2846 = vrcp.pop %v2843
  %v2847 = vmul.f32 1.0, %v2846
  %v2848 = vld [vmem:[#allocation3 + $0x9] sm:$0x1]
  %v2849 = vld [vmem:[#allocation3 + $0x29] sm:$0x1]
  %v2851 = vrot.slane %v2823, 1
  %v2854 = vadd.f32 %v2848, %v2823
  %v2855 = vadd.f32 %v2849, %v2851
  %v2856 = vxor.u32 %v2854, 2147483648
  %v2857 = vxor.u32 %v2855, 2147483648
  %v2858 = vmul.f32 %v2856, 1.442695
  %v2859 = vpow.pop %v2858
  %v2860 = vmul.f32 %v2857, 1.442695
  %v2861 = vpow.pop %v2860
  %v2862 = vadd.f32 %v2859, 1.0
  %v2863 = vadd.f32 %v2861, 1.0
  %v2864 = vrcp.pop %v2862
  %v2865 = vmul.f32 1.0, %v2864
  %v2866 = vrcp.pop %v2863
  %v2867 = vmul.f32 1.0, %v2866
  %v2868 = vld [vmem:[#allocation4 + $0x9] sm:$0x1]
  %v2869 = vld [vmem:[#allocation4 + $0x29] sm:$0x1]
  %2870 = vmatprep.subr.bf16.mxu0 0
  %2871 = vmatpush1.bf16.msra.mxu0 %v590
  %2872 = vmatprep.subr.bf16.mxu0 0
  %2873 = vmatpush1.bf16.msra.mxu0 0
  %2874 = vmatprep.subr.bf16.mxu0 0
  %2875 = vmatpush1.bf16.msra.mxu0 0
  %2876 = vmatprep.subr.bf16.mxu0 0
  %2877 = vmatpush1.bf16.msra.mxu0 0
  %2878 = vmatprep.subr.bf16.mxu0 0
  %2879 = vmatpush1.bf16.msra.mxu0 0
  %2880 = vmatprep.subr.bf16.mxu0 0
  %2881 = vmatpush1.bf16.msra.mxu0 0
  %2882 = vmatprep.subr.bf16.mxu0 0
  %2883 = vmatpush1.bf16.msra.mxu0 0
  %2884 = vmatprep.subr.bf16.mxu0 0
  %2885 = vmatpush1.bf16.msra.mxu0 0
  %2886 = vmatprep.subr.bf16.mxu0 0
  %2887 = vmatpush1.bf16.msra.mxu0 0
  %2888 = vmatprep.subr.bf16.mxu0 0
  %2889 = vmatpush1.bf16.msra.mxu0 0
  %2890 = vmatprep.subr.bf16.mxu0 0
  %2891 = vmatpush1.bf16.msra.mxu0 0
  %2892 = vmatprep.subr.bf16.mxu0 0
  %2893 = vmatpush1.bf16.msra.mxu0 0
  %2894 = vmatprep.subr.bf16.mxu0 0
  %2895 = vmatpush1.bf16.msra.mxu0 0
  %2896 = vmatprep.subr.bf16.mxu0 0
  %2897 = vmatpush1.bf16.msra.mxu0 0
  %2898 = vmatprep.subr.bf16.mxu0 0
  %2899 = vmatpush1.bf16.msra.mxu0 0
  %2900 = vmatprep.subr.bf16.mxu0 0
  %2901 = vmatpush1.bf16.msra.mxu0 0
  %2902 = vmatprep.mubr.bf16.mxu0 0
  %2903 = vmatmul.mubr.bf16.gmra.mrb[0].mxu0 %v2746
  %v2904 = vpop.f32.mrb[0].mxu0
  %v2905 = vadd.f32 %v585, %v2904
  %v2906 = vpop.f32.mrb[0].mxu0
  %v2907 = vpop.f32.mrb[0].mxu0
  %v2908 = vpop.f32.mrb[0].mxu0
  %2909 = vdwg.mxu0
  %v2911 = vrot.slane %v2905, 1
  %v2914 = vmul.f32 %v2845, %v2905
  %v2915 = vmul.f32 %v2847, %v2911
  %v2916 = vadd.f32 %v2868, %v2914
  %v2917 = vadd.f32 %v2869, %v2915
  %v2918 = vtanh.pop %v2916
  %v2919 = vtanh.pop %v2917
  %v2920 = vsub.f32 %v2671, %v2918
  %v2921 = vsub.f32 %v2672, %v2919
  %v2922 = vmul.f32 %v2865, %v2920
  %v2923 = vmul.f32 %v2867, %v2921
  %v2924 = vadd.f32 %v2918, %v2922
  %v2925 = vadd.f32 %v2919, %v2923
  %v2926 = vmax.f32 %v2924, 0.0
  %v2927 = vmax.f32 %v2925, 0.0
  %v2928 = vpack.c.bf16 %v2926, %v2926
  %v2929 = vpack.c.bf16 %v2927, %v2927
  %v2930 = vld [vmem:[%s6 + $0x48] sm:$0xf]
  %v2931 = vld [vmem:[%s6 + $0x4c] sm:$0xf]
  %v2934 = vunpack.c.l.b16 %v2928
  %v2935 = vunpack.c.l.b16 %v2929
  %v2936 = vrot.slane %v2935, 7
  %v2937 = vsel %vm659, %v2936, %v2934
  %v2938 = vpack.c.b16 %v2937, %v2937
  %v2941 = vunpack.c.l.b16 %v2930
  %v2942 = vunpack.c.l.b16 %v2931
  %v2943 = vpack.c.b16 %v2942, %v2941
  %v2946 = vsel %vm76, %v2938, 0
  %2948 = vmatprep.subr.bf16.mxu0 0
  %2949 = vmatpush1.bf16.msra.mxu0 %v2943
  %2950 = vmatprep.subr.bf16.mxu0 0
  %2951 = vmatpush1.bf16.msra.mxu0 0
  %2952 = vmatprep.subr.bf16.mxu0 0
  %2953 = vmatpush1.bf16.msra.mxu0 0
  %2954 = vmatprep.subr.bf16.mxu0 0
  %2955 = vmatpush1.bf16.msra.mxu0 0
  %2956 = vmatprep.subr.bf16.mxu0 0
  %2957 = vmatpush1.bf16.msra.mxu0 0
  %2958 = vmatprep.subr.bf16.mxu0 0
  %2959 = vmatpush1.bf16.msra.mxu0 0
  %2960 = vmatprep.subr.bf16.mxu0 0
  %2961 = vmatpush1.bf16.msra.mxu0 0
  %2962 = vmatprep.subr.bf16.mxu0 0
  %2963 = vmatpush1.bf16.msra.mxu0 0
  %2964 = vmatprep.subr.bf16.mxu0 0
  %2965 = vmatpush1.bf16.msra.mxu0 0
  %2966 = vmatprep.subr.bf16.mxu0 0
  %2967 = vmatpush1.bf16.msra.mxu0 0
  %2968 = vmatprep.subr.bf16.mxu0 0
  %2969 = vmatpush1.bf16.msra.mxu0 0
  %2970 = vmatprep.subr.bf16.mxu0 0
  %2971 = vmatpush1.bf16.msra.mxu0 0
  %2972 = vmatprep.subr.bf16.mxu0 0
  %2973 = vmatpush1.bf16.msra.mxu0 0
  %2974 = vmatprep.subr.bf16.mxu0 0
  %2975 = vmatpush1.bf16.msra.mxu0 0
  %2976 = vmatprep.subr.bf16.mxu0 0
  %2977 = vmatpush1.bf16.msra.mxu0 0
  %2978 = vmatprep.subr.bf16.mxu0 0
  %2979 = vmatpush1.bf16.msra.mxu0 0
  %2980 = vmatprep.mubr.bf16.mxu0 0
  %2981 = vmatmul.mubr.bf16.gmra.mrb[0].mxu0 %v2946
  %v2982 = vpop.f32.mrb[0].mxu0
  %v2983 = vadd.f32 0.0, %v2982
  %v2984 = vpop.f32.mrb[0].mxu0
  %v2985 = vpop.f32.mrb[0].mxu0
  %v2986 = vpop.f32.mrb[0].mxu0
  %2987 = vdwg.mxu0
  %v2988 = vadd.f32 %v2735, %v2983
  %v2989 = vpack.c.bf16 %v2924, %v2924
  %v2990 = vpack.c.bf16 %v2925, %v2925
  %v2993 = vunpack.c.l.b16 %v2989
  %v2994 = vunpack.c.l.b16 %v2990
  %v2995 = vrot.slane %v2994, 7
  %v2996 = vsel %vm659, %v2995, %v2993
  %v2997 = vpack.c.b16 %v2996, %v2996
  %v2999 = vsel %vm76, %v2997, 0
  %3001 = vmatprep.subr.bf16.mxu0 0
  %3002 = vmatpush1.bf16.msra.mxu0 %v449
  %3003 = vmatprep.subr.bf16.mxu0 0
  %3004 = vmatpush1.bf16.msra.mxu0 0
  %3005 = vmatprep.subr.bf16.mxu0 0
  %3006 = vmatpush1.bf16.msra.mxu0 0
  %3007 = vmatprep.subr.bf16.mxu0 0
  %3008 = vmatpush1.bf16.msra.mxu0 0
  %3009 = vmatprep.subr.bf16.mxu0 0
  %3010 = vmatpush1.bf16.msra.mxu0 0
  %3011 = vmatprep.subr.bf16.mxu0 0
  %3012 = vmatpush1.bf16.msra.mxu0 0
  %3013 = vmatprep.subr.bf16.mxu0 0
  %3014 = vmatpush1.bf16.msra.mxu0 0
  %3015 = vmatprep.subr.bf16.mxu0 0
  %3016 = vmatpush1.bf16.msra.mxu0 0
  %3017 = vmatprep.subr.bf16.mxu0 0
  %3018 = vmatpush1.bf16.msra.mxu0 0
  %3019 = vmatprep.subr.bf16.mxu0 0
  %3020 = vmatpush1.bf16.msra.mxu0 0
  %3021 = vmatprep.subr.bf16.mxu0 0
  %3022 = vmatpush1.bf16.msra.mxu0 0
  %3023 = vmatprep.subr.bf16.mxu0 0
  %3024 = vmatpush1.bf16.msra.mxu0 0
  %3025 = vmatprep.subr.bf16.mxu0 0
  %3026 = vmatpush1.bf16.msra.mxu0 0
  %3027 = vmatprep.subr.bf16.mxu0 0
  %3028 = vmatpush1.bf16.msra.mxu0 0
  %3029 = vmatprep.subr.bf16.mxu0 0
  %3030 = vmatpush1.bf16.msra.mxu0 0
  %3031 = vmatprep.subr.bf16.mxu0 0
  %3032 = vmatpush1.bf16.msra.mxu0 0
  %3033 = vmatprep.mubr.bf16.mxu0 0
  %3034 = vmatmul.mubr.bf16.gmra.mrb[0].mxu0 %v2999
  %v3035 = vpop.f32.mrb[0].mxu0
  %v3036 = vadd.f32 0.0, %v3035
  %v3037 = vpop.f32.mrb[0].mxu0
  %v3038 = vpop.f32.mrb[0].mxu0
  %v3039 = vpop.f32.mrb[0].mxu0
  %3040 = vdwg.mxu0
  %3041 = vmatprep.subr.bf16.mxu0 0
  %3042 = vmatpush1.bf16.msra.mxu0 %v498
  %3043 = vmatprep.subr.bf16.mxu0 0
  %3044 = vmatpush1.bf16.msra.mxu0 0
  %3045 = vmatprep.subr.bf16.mxu0 0
  %3046 = vmatpush1.bf16.msra.mxu0 0
  %3047 = vmatprep.subr.bf16.mxu0 0
  %3048 = vmatpush1.bf16.msra.mxu0 0
  %3049 = vmatprep.subr.bf16.mxu0 0
  %3050 = vmatpush1.bf16.msra.mxu0 0
  %3051 = vmatprep.subr.bf16.mxu0 0
  %3052 = vmatpush1.bf16.msra.mxu0 0
  %3053 = vmatprep.subr.bf16.mxu0 0
  %3054 = vmatpush1.bf16.msra.mxu0 0
  %3055 = vmatprep.subr.bf16.mxu0 0
  %3056 = vmatpush1.bf16.msra.mxu0 0
  %3057 = vmatprep.subr.bf16.mxu0 0
  %3058 = vmatpush1.bf16.msra.mxu0 0
  %3059 = vmatprep.subr.bf16.mxu0 0
  %3060 = vmatpush1.bf16.msra.mxu0 0
  %3061 = vmatprep.subr.bf16.mxu0 0
  %3062 = vmatpush1.bf16.msra.mxu0 0
  %3063 = vmatprep.subr.bf16.mxu0 0
  %3064 = vmatpush1.bf16.msra.mxu0 0
  %3065 = vmatprep.subr.bf16.mxu0 0
  %3066 = vmatpush1.bf16.msra.mxu0 0
  %3067 = vmatprep.subr.bf16.mxu0 0
  %3068 = vmatpush1.bf16.msra.mxu0 0
  %3069 = vmatprep.subr.bf16.mxu0 0
  %3070 = vmatpush1.bf16.msra.mxu0 0
  %3071 = vmatprep.subr.bf16.mxu0 0
  %3072 = vmatpush1.bf16.msra.mxu0 0
  %3073 = vmatprep.mubr.bf16.mxu0 0
  %3074 = vmatmul.mubr.bf16.gmra.mrb[0].mxu0 %v2999
  %v3075 = vpop.f32.mrb[0].mxu0
  %v3076 = vadd.f32 0.0, %v3075
  %v3077 = vpop.f32.mrb[0].mxu0
  %v3078 = vpop.f32.mrb[0].mxu0
  %v3079 = vpop.f32.mrb[0].mxu0
  %3080 = vdwg.mxu0
  %v3081 = vld [vmem:[#allocation2 + $0xa] sm:$0x1]
  %v3082 = vld [vmem:[#allocation2 + $0x2a] sm:$0x1]
  %v3084 = vrot.slane %v3036, 1
  %v3087 = vadd.f32 %v3081, %v3036
  %v3088 = vadd.f32 %v3082, %v3084
  %v3089 = vxor.u32 %v3087, 2147483648
  %v3090 = vxor.u32 %v3088, 2147483648
  %v3091 = vmul.f32 %v3089, 1.442695
  %v3092 = vpow.pop %v3091
  %v3093 = vmul.f32 %v3090, 1.442695
  %v3094 = vpow.pop %v3093
  %v3095 = vadd.f32 %v3092, 1.0
  %v3096 = vadd.f32 %v3094, 1.0
  %v3097 = vrcp.pop %v3095
  %v3098 = vmul.f32 1.0, %v3097
  %v3099 = vrcp.pop %v3096
  %v3100 = vmul.f32 1.0, %v3099
  %v3101 = vld [vmem:[#allocation3 + $0xa] sm:$0x1]
  %v3102 = vld [vmem:[#allocation3 + $0x2a] sm:$0x1]
  %v3104 = vrot.slane %v3076, 1
  %v3107 = vadd.f32 %v3101, %v3076
  %v3108 = vadd.f32 %v3102, %v3104
  %v3109 = vxor.u32 %v3107, 2147483648
  %v3110 = vxor.u32 %v3108, 2147483648
  %v3111 = vmul.f32 %v3109, 1.442695
  %v3112 = vpow.pop %v3111
  %v3113 = vmul.f32 %v3110, 1.442695
  %v3114 = vpow.pop %v3113
  %v3115 = vadd.f32 %v3112, 1.0
  %v3116 = vadd.f32 %v3114, 1.0
  %v3117 = vrcp.pop %v3115
  %v3118 = vmul.f32 1.0, %v3117
  %v3119 = vrcp.pop %v3116
  %v3120 = vmul.f32 1.0, %v3119
  %v3121 = vld [vmem:[#allocation4 + $0xa] sm:$0x1]
  %v3122 = vld [vmem:[#allocation4 + $0x2a] sm:$0x1]
  %3123 = vmatprep.subr.bf16.mxu0 0
  %3124 = vmatpush1.bf16.msra.mxu0 %v590
  %3125 = vmatprep.subr.bf16.mxu0 0
  %3126 = vmatpush1.bf16.msra.mxu0 0
  %3127 = vmatprep.subr.bf16.mxu0 0
  %3128 = vmatpush1.bf16.msra.mxu0 0
  %3129 = vmatprep.subr.bf16.mxu0 0
  %3130 = vmatpush1.bf16.msra.mxu0 0
  %3131 = vmatprep.subr.bf16.mxu0 0
  %3132 = vmatpush1.bf16.msra.mxu0 0
  %3133 = vmatprep.subr.bf16.mxu0 0
  %3134 = vmatpush1.bf16.msra.mxu0 0
  %3135 = vmatprep.subr.bf16.mxu0 0
  %3136 = vmatpush1.bf16.msra.mxu0 0
  %3137 = vmatprep.subr.bf16.mxu0 0
  %3138 = vmatpush1.bf16.msra.mxu0 0
  %3139 = vmatprep.subr.bf16.mxu0 0
  %3140 = vmatpush1.bf16.msra.mxu0 0
  %3141 = vmatprep.subr.bf16.mxu0 0
  %3142 = vmatpush1.bf16.msra.mxu0 0
  %3143 = vmatprep.subr.bf16.mxu0 0
  %3144 = vmatpush1.bf16.msra.mxu0 0
  %3145 = vmatprep.subr.bf16.mxu0 0
  %3146 = vmatpush1.bf16.msra.mxu0 0
  %3147 = vmatprep.subr.bf16.mxu0 0
  %3148 = vmatpush1.bf16.msra.mxu0 0
  %3149 = vmatprep.subr.bf16.mxu0 0
  %3150 = vmatpush1.bf16.msra.mxu0 0
  %3151 = vmatprep.subr.bf16.mxu0 0
  %3152 = vmatpush1.bf16.msra.mxu0 0
  %3153 = vmatprep.subr.bf16.mxu0 0
  %3154 = vmatpush1.bf16.msra.mxu0 0
  %3155 = vmatprep.mubr.bf16.mxu0 0
  %3156 = vmatmul.mubr.bf16.gmra.mrb[0].mxu0 %v2999
  %v3157 = vpop.f32.mrb[0].mxu0
  %v3158 = vadd.f32 %v585, %v3157
  %v3159 = vpop.f32.mrb[0].mxu0
  %v3160 = vpop.f32.mrb[0].mxu0
  %v3161 = vpop.f32.mrb[0].mxu0
  %3162 = vdwg.mxu0
  %v3164 = vrot.slane %v3158, 1
  %v3167 = vmul.f32 %v3098, %v3158
  %v3168 = vmul.f32 %v3100, %v3164
  %v3169 = vadd.f32 %v3121, %v3167
  %v3170 = vadd.f32 %v3122, %v3168
  %v3171 = vtanh.pop %v3169
  %v3172 = vtanh.pop %v3170
  %v3173 = vsub.f32 %v2924, %v3171
  %v3174 = vsub.f32 %v2925, %v3172
  %v3175 = vmul.f32 %v3118, %v3173
  %v3176 = vmul.f32 %v3120, %v3174
  %v3177 = vadd.f32 %v3171, %v3175
  %v3178 = vadd.f32 %v3172, %v3176
  %v3179 = vmax.f32 %v3177, 0.0
  %v3180 = vmax.f32 %v3178, 0.0
  %v3181 = vpack.c.bf16 %v3179, %v3179
  %v3182 = vpack.c.bf16 %v3180, %v3180
  %v3183 = vld [vmem:[%s6 + $0x50] sm:$0xf]
  %v3184 = vld [vmem:[%s6 + $0x54] sm:$0xf]
  %v3187 = vunpack.c.l.b16 %v3181
  %v3188 = vunpack.c.l.b16 %v3182
  %v3189 = vrot.slane %v3188, 7
  %v3190 = vsel %vm659, %v3189, %v3187
  %v3191 = vpack.c.b16 %v3190, %v3190
  %v3194 = vunpack.c.l.b16 %v3183
  %v3195 = vunpack.c.l.b16 %v3184
  %v3196 = vpack.c.b16 %v3195, %v3194
  %v3199 = vsel %vm76, %v3191, 0
  %3201 = vmatprep.subr.bf16.mxu0 0
  %3202 = vmatpush1.bf16.msra.mxu0 %v3196
  %3203 = vmatprep.subr.bf16.mxu0 0
  %3204 = vmatpush1.bf16.msra.mxu0 0
  %3205 = vmatprep.subr.bf16.mxu0 0
  %3206 = vmatpush1.bf16.msra.mxu0 0
  %3207 = vmatprep.subr.bf16.mxu0 0
  %3208 = vmatpush1.bf16.msra.mxu0 0
  %3209 = vmatprep.subr.bf16.mxu0 0
  %3210 = vmatpush1.bf16.msra.mxu0 0
  %3211 = vmatprep.subr.bf16.mxu0 0
  %3212 = vmatpush1.bf16.msra.mxu0 0
  %3213 = vmatprep.subr.bf16.mxu0 0
  %3214 = vmatpush1.bf16.msra.mxu0 0
  %3215 = vmatprep.subr.bf16.mxu0 0
  %3216 = vmatpush1.bf16.msra.mxu0 0
  %3217 = vmatprep.subr.bf16.mxu0 0
  %3218 = vmatpush1.bf16.msra.mxu0 0
  %3219 = vmatprep.subr.bf16.mxu0 0
  %3220 = vmatpush1.bf16.msra.mxu0 0
  %3221 = vmatprep.subr.bf16.mxu0 0
  %3222 = vmatpush1.bf16.msra.mxu0 0
  %3223 = vmatprep.subr.bf16.mxu0 0
  %3224 = vmatpush1.bf16.msra.mxu0 0
  %3225 = vmatprep.subr.bf16.mxu0 0
  %3226 = vmatpush1.bf16.msra.mxu0 0
  %3227 = vmatprep.subr.bf16.mxu0 0
  %3228 = vmatpush1.bf16.msra.mxu0 0
  %3229 = vmatprep.subr.bf16.mxu0 0
  %3230 = vmatpush1.bf16.msra.mxu0 0
  %3231 = vmatprep.subr.bf16.mxu0 0
  %3232 = vmatpush1.bf16.msra.mxu0 0
  %3233 = vmatprep.mubr.bf16.mxu0 0
  %3234 = vmatmul.mubr.bf16.gmra.mrb[0].mxu0 %v3199
  %v3235 = vpop.f32.mrb[0].mxu0
  %v3236 = vadd.f32 0.0, %v3235
  %v3237 = vpop.f32.mrb[0].mxu0
  %v3238 = vpop.f32.mrb[0].mxu0
  %v3239 = vpop.f32.mrb[0].mxu0
  %3240 = vdwg.mxu0
  %v3241 = vadd.f32 %v2988, %v3236
  %v3242 = vpack.c.bf16 %v3177, %v3177
  %v3243 = vpack.c.bf16 %v3178, %v3178
  %v3246 = vunpack.c.l.b16 %v3242
  %v3247 = vunpack.c.l.b16 %v3243
  %v3248 = vrot.slane %v3247, 7
  %v3249 = vsel %vm659, %v3248, %v3246
  %v3250 = vpack.c.b16 %v3249, %v3249
  %v3252 = vsel %vm76, %v3250, 0
  %3254 = vmatprep.subr.bf16.mxu0 0
  %3255 = vmatpush1.bf16.msra.mxu0 %v449
  %3256 = vmatprep.subr.bf16.mxu0 0
  %3257 = vmatpush1.bf16.msra.mxu0 0
  %3258 = vmatprep.subr.bf16.mxu0 0
  %3259 = vmatpush1.bf16.msra.mxu0 0
  %3260 = vmatprep.subr.bf16.mxu0 0
  %3261 = vmatpush1.bf16.msra.mxu0 0
  %3262 = vmatprep.subr.bf16.mxu0 0
  %3263 = vmatpush1.bf16.msra.mxu0 0
  %3264 = vmatprep.subr.bf16.mxu0 0
  %3265 = vmatpush1.bf16.msra.mxu0 0
  %3266 = vmatprep.subr.bf16.mxu0 0
  %3267 = vmatpush1.bf16.msra.mxu0 0
  %3268 = vmatprep.subr.bf16.mxu0 0
  %3269 = vmatpush1.bf16.msra.mxu0 0
  %3270 = vmatprep.subr.bf16.mxu0 0
  %3271 = vmatpush1.bf16.msra.mxu0 0
  %3272 = vmatprep.subr.bf16.mxu0 0
  %3273 = vmatpush1.bf16.msra.mxu0 0
  %3274 = vmatprep.subr.bf16.mxu0 0
  %3275 = vmatpush1.bf16.msra.mxu0 0
  %3276 = vmatprep.subr.bf16.mxu0 0
  %3277 = vmatpush1.bf16.msra.mxu0 0
  %3278 = vmatprep.subr.bf16.mxu0 0
  %3279 = vmatpush1.bf16.msra.mxu0 0
  %3280 = vmatprep.subr.bf16.mxu0 0
  %3281 = vmatpush1.bf16.msra.mxu0 0
  %3282 = vmatprep.subr.bf16.mxu0 0
  %3283 = vmatpush1.bf16.msra.mxu0 0
  %3284 = vmatprep.subr.bf16.mxu0 0
  %3285 = vmatpush1.bf16.msra.mxu0 0
  %3286 = vmatprep.mubr.bf16.mxu0 0
  %3287 = vmatmul.mubr.bf16.gmra.mrb[0].mxu0 %v3252
  %v3288 = vpop.f32.mrb[0].mxu0
  %v3289 = vadd.f32 0.0, %v3288
  %v3290 = vpop.f32.mrb[0].mxu0
  %v3291 = vpop.f32.mrb[0].mxu0
  %v3292 = vpop.f32.mrb[0].mxu0
  %3293 = vdwg.mxu0
  %3294 = vmatprep.subr.bf16.mxu0 0
  %3295 = vmatpush1.bf16.msra.mxu0 %v498
  %3296 = vmatprep.subr.bf16.mxu0 0
  %3297 = vmatpush1.bf16.msra.mxu0 0
  %3298 = vmatprep.subr.bf16.mxu0 0
  %3299 = vmatpush1.bf16.msra.mxu0 0
  %3300 = vmatprep.subr.bf16.mxu0 0
  %3301 = vmatpush1.bf16.msra.mxu0 0
  %3302 = vmatprep.subr.bf16.mxu0 0
  %3303 = vmatpush1.bf16.msra.mxu0 0
  %3304 = vmatprep.subr.bf16.mxu0 0
  %3305 = vmatpush1.bf16.msra.mxu0 0
  %3306 = vmatprep.subr.bf16.mxu0 0
  %3307 = vmatpush1.bf16.msra.mxu0 0
  %3308 = vmatprep.subr.bf16.mxu0 0
  %3309 = vmatpush1.bf16.msra.mxu0 0
  %3310 = vmatprep.subr.bf16.mxu0 0
  %3311 = vmatpush1.bf16.msra.mxu0 0
  %3312 = vmatprep.subr.bf16.mxu0 0
  %3313 = vmatpush1.bf16.msra.mxu0 0
  %3314 = vmatprep.subr.bf16.mxu0 0
  %3315 = vmatpush1.bf16.msra.mxu0 0
  %3316 = vmatprep.subr.bf16.mxu0 0
  %3317 = vmatpush1.bf16.msra.mxu0 0
  %3318 = vmatprep.subr.bf16.mxu0 0
  %3319 = vmatpush1.bf16.msra.mxu0 0
  %3320 = vmatprep.subr.bf16.mxu0 0
  %3321 = vmatpush1.bf16.msra.mxu0 0
  %3322 = vmatprep.subr.bf16.mxu0 0
  %3323 = vmatpush1.bf16.msra.mxu0 0
  %3324 = vmatprep.subr.bf16.mxu0 0
  %3325 = vmatpush1.bf16.msra.mxu0 0
  %3326 = vmatprep.mubr.bf16.mxu0 0
  %3327 = vmatmul.mubr.bf16.gmra.mrb[0].mxu0 %v3252
  %v3328 = vpop.f32.mrb[0].mxu0
  %v3329 = vadd.f32 0.0, %v3328
  %v3330 = vpop.f32.mrb[0].mxu0
  %v3331 = vpop.f32.mrb[0].mxu0
  %v3332 = vpop.f32.mrb[0].mxu0
  %3333 = vdwg.mxu0
  %v3334 = vld [vmem:[#allocation2 + $0xb] sm:$0x1]
  %v3335 = vld [vmem:[#allocation2 + $0x2b] sm:$0x1]
  %v3337 = vrot.slane %v3289, 1
  %v3340 = vadd.f32 %v3334, %v3289
  %v3341 = vadd.f32 %v3335, %v3337
  %v3342 = vxor.u32 %v3340, 2147483648
  %v3343 = vxor.u32 %v3341, 2147483648
  %v3344 = vmul.f32 %v3342, 1.442695
  %v3345 = vpow.pop %v3344
  %v3346 = vmul.f32 %v3343, 1.442695
  %v3347 = vpow.pop %v3346
  %v3348 = vadd.f32 %v3345, 1.0
  %v3349 = vadd.f32 %v3347, 1.0
  %v3350 = vrcp.pop %v3348
  %v3351 = vmul.f32 1.0, %v3350
  %v3352 = vrcp.pop %v3349
  %v3353 = vmul.f32 1.0, %v3352
  %v3354 = vld [vmem:[#allocation3 + $0xb] sm:$0x1]
  %v3355 = vld [vmem:[#allocation3 + $0x2b] sm:$0x1]
  %v3357 = vrot.slane %v3329, 1
  %v3360 = vadd.f32 %v3354, %v3329
  %v3361 = vadd.f32 %v3355, %v3357
  %v3362 = vxor.u32 %v3360, 2147483648
  %v3363 = vxor.u32 %v3361, 2147483648
  %v3364 = vmul.f32 %v3362, 1.442695
  %v3365 = vpow.pop %v3364
  %v3366 = vmul.f32 %v3363, 1.442695
  %v3367 = vpow.pop %v3366
  %v3368 = vadd.f32 %v3365, 1.0
  %v3369 = vadd.f32 %v3367, 1.0
  %v3370 = vrcp.pop %v3368
  %v3371 = vmul.f32 1.0, %v3370
  %v3372 = vrcp.pop %v3369
  %v3373 = vmul.f32 1.0, %v3372
  %v3374 = vld [vmem:[#allocation4 + $0xb] sm:$0x1]
  %v3375 = vld [vmem:[#allocation4 + $0x2b] sm:$0x1]
  %3376 = vmatprep.subr.bf16.mxu0 0
  %3377 = vmatpush1.bf16.msra.mxu0 %v590
  %3378 = vmatprep.subr.bf16.mxu0 0
  %3379 = vmatpush1.bf16.msra.mxu0 0
  %3380 = vmatprep.subr.bf16.mxu0 0
  %3381 = vmatpush1.bf16.msra.mxu0 0
  %3382 = vmatprep.subr.bf16.mxu0 0
  %3383 = vmatpush1.bf16.msra.mxu0 0
  %3384 = vmatprep.subr.bf16.mxu0 0
  %3385 = vmatpush1.bf16.msra.mxu0 0
  %3386 = vmatprep.subr.bf16.mxu0 0
  %3387 = vmatpush1.bf16.msra.mxu0 0
  %3388 = vmatprep.subr.bf16.mxu0 0
  %3389 = vmatpush1.bf16.msra.mxu0 0
  %3390 = vmatprep.subr.bf16.mxu0 0
  %3391 = vmatpush1.bf16.msra.mxu0 0
  %3392 = vmatprep.subr.bf16.mxu0 0
  %3393 = vmatpush1.bf16.msra.mxu0 0
  %3394 = vmatprep.subr.bf16.mxu0 0
  %3395 = vmatpush1.bf16.msra.mxu0 0
  %3396 = vmatprep.subr.bf16.mxu0 0
  %3397 = vmatpush1.bf16.msra.mxu0 0
  %3398 = vmatprep.subr.bf16.mxu0 0
  %3399 = vmatpush1.bf16.msra.mxu0 0
  %3400 = vmatprep.subr.bf16.mxu0 0
  %3401 = vmatpush1.bf16.msra.mxu0 0
  %3402 = vmatprep.subr.bf16.mxu0 0
  %3403 = vmatpush1.bf16.msra.mxu0 0
  %3404 = vmatprep.subr.bf16.mxu0 0
  %3405 = vmatpush1.bf16.msra.mxu0 0
  %3406 = vmatprep.subr.bf16.mxu0 0
  %3407 = vmatpush1.bf16.msra.mxu0 0
  %3408 = vmatprep.mubr.bf16.mxu0 0
  %3409 = vmatmul.mubr.bf16.gmra.mrb[0].mxu0 %v3252
  %v3410 = vpop.f32.mrb[0].mxu0
  %v3411 = vadd.f32 %v585, %v3410
  %v3412 = vpop.f32.mrb[0].mxu0
  %v3413 = vpop.f32.mrb[0].mxu0
  %v3414 = vpop.f32.mrb[0].mxu0
  %3415 = vdwg.mxu0
  %v3417 = vrot.slane %v3411, 1
  %v3420 = vmul.f32 %v3351, %v3411
  %v3421 = vmul.f32 %v3353, %v3417
  %v3422 = vadd.f32 %v3374, %v3420
  %v3423 = vadd.f32 %v3375, %v3421
  %v3424 = vtanh.pop %v3422
  %v3425 = vtanh.pop %v3423
  %v3426 = vsub.f32 %v3177, %v3424
  %v3427 = vsub.f32 %v3178, %v3425
  %v3428 = vmul.f32 %v3371, %v3426
  %v3429 = vmul.f32 %v3373, %v3427
  %v3430 = vadd.f32 %v3424, %v3428
  %v3431 = vadd.f32 %v3425, %v3429
  %v3432 = vmax.f32 %v3430, 0.0
  %v3433 = vmax.f32 %v3431, 0.0
  %v3434 = vpack.c.bf16 %v3432, %v3432
  %v3435 = vpack.c.bf16 %v3433, %v3433
  %v3436 = vld [vmem:[%s6 + $0x58] sm:$0xf]
  %v3437 = vld [vmem:[%s6 + $0x5c] sm:$0xf]
  %v3440 = vunpack.c.l.b16 %v3434
  %v3441 = vunpack.c.l.b16 %v3435
  %v3442 = vrot.slane %v3441, 7
  %v3443 = vsel %vm659, %v3442, %v3440
  %v3444 = vpack.c.b16 %v3443, %v3443
  %v3447 = vunpack.c.l.b16 %v3436
  %v3448 = vunpack.c.l.b16 %v3437
  %v3449 = vpack.c.b16 %v3448, %v3447
  %v3452 = vsel %vm76, %v3444, 0
  %3454 = vmatprep.subr.bf16.mxu0 0
  %3455 = vmatpush1.bf16.msra.mxu0 %v3449
  %3456 = vmatprep.subr.bf16.mxu0 0
  %3457 = vmatpush1.bf16.msra.mxu0 0
  %3458 = vmatprep.subr.bf16.mxu0 0
  %3459 = vmatpush1.bf16.msra.mxu0 0
  %3460 = vmatprep.subr.bf16.mxu0 0
  %3461 = vmatpush1.bf16.msra.mxu0 0
  %3462 = vmatprep.subr.bf16.mxu0 0
  %3463 = vmatpush1.bf16.msra.mxu0 0
  %3464 = vmatprep.subr.bf16.mxu0 0
  %3465 = vmatpush1.bf16.msra.mxu0 0
  %3466 = vmatprep.subr.bf16.mxu0 0
  %3467 = vmatpush1.bf16.msra.mxu0 0
  %3468 = vmatprep.subr.bf16.mxu0 0
  %3469 = vmatpush1.bf16.msra.mxu0 0
  %3470 = vmatprep.subr.bf16.mxu0 0
  %3471 = vmatpush1.bf16.msra.mxu0 0
  %3472 = vmatprep.subr.bf16.mxu0 0
  %3473 = vmatpush1.bf16.msra.mxu0 0
  %3474 = vmatprep.subr.bf16.mxu0 0
  %3475 = vmatpush1.bf16.msra.mxu0 0
  %3476 = vmatprep.subr.bf16.mxu0 0
  %3477 = vmatpush1.bf16.msra.mxu0 0
  %3478 = vmatprep.subr.bf16.mxu0 0
  %3479 = vmatpush1.bf16.msra.mxu0 0
  %3480 = vmatprep.subr.bf16.mxu0 0
  %3481 = vmatpush1.bf16.msra.mxu0 0
  %3482 = vmatprep.subr.bf16.mxu0 0
  %3483 = vmatpush1.bf16.msra.mxu0 0
  %3484 = vmatprep.subr.bf16.mxu0 0
  %3485 = vmatpush1.bf16.msra.mxu0 0
  %3486 = vmatprep.mubr.bf16.mxu0 0
  %3487 = vmatmul.mubr.bf16.gmra.mrb[0].mxu0 %v3452
  %v3488 = vpop.f32.mrb[0].mxu0
  %v3489 = vadd.f32 0.0, %v3488
  %v3490 = vpop.f32.mrb[0].mxu0
  %v3491 = vpop.f32.mrb[0].mxu0
  %v3492 = vpop.f32.mrb[0].mxu0
  %3493 = vdwg.mxu0
  %v3494 = vadd.f32 %v3241, %v3489
  %v3495 = vpack.c.bf16 %v3430, %v3430
  %v3496 = vpack.c.bf16 %v3431, %v3431
  %v3499 = vunpack.c.l.b16 %v3495
  %v3500 = vunpack.c.l.b16 %v3496
  %v3501 = vrot.slane %v3500, 7
  %v3502 = vsel %vm659, %v3501, %v3499
  %v3503 = vpack.c.b16 %v3502, %v3502
  %v3505 = vsel %vm76, %v3503, 0
  %3507 = vmatprep.subr.bf16.mxu0 0
  %3508 = vmatpush1.bf16.msra.mxu0 %v449
  %3509 = vmatprep.subr.bf16.mxu0 0
  %3510 = vmatpush1.bf16.msra.mxu0 0
  %3511 = vmatprep.subr.bf16.mxu0 0
  %3512 = vmatpush1.bf16.msra.mxu0 0
  %3513 = vmatprep.subr.bf16.mxu0 0
  %3514 = vmatpush1.bf16.msra.mxu0 0
  %3515 = vmatprep.subr.bf16.mxu0 0
  %3516 = vmatpush1.bf16.msra.mxu0 0
  %3517 = vmatprep.subr.bf16.mxu0 0
  %3518 = vmatpush1.bf16.msra.mxu0 0
  %3519 = vmatprep.subr.bf16.mxu0 0
  %3520 = vmatpush1.bf16.msra.mxu0 0
  %3521 = vmatprep.subr.bf16.mxu0 0
  %3522 = vmatpush1.bf16.msra.mxu0 0
  %3523 = vmatprep.subr.bf16.mxu0 0
  %3524 = vmatpush1.bf16.msra.mxu0 0
  %3525 = vmatprep.subr.bf16.mxu0 0
  %3526 = vmatpush1.bf16.msra.mxu0 0
  %3527 = vmatprep.subr.bf16.mxu0 0
  %3528 = vmatpush1.bf16.msra.mxu0 0
  %3529 = vmatprep.subr.bf16.mxu0 0
  %3530 = vmatpush1.bf16.msra.mxu0 0
  %3531 = vmatprep.subr.bf16.mxu0 0
  %3532 = vmatpush1.bf16.msra.mxu0 0
  %3533 = vmatprep.subr.bf16.mxu0 0
  %3534 = vmatpush1.bf16.msra.mxu0 0
  %3535 = vmatprep.subr.bf16.mxu0 0
  %3536 = vmatpush1.bf16.msra.mxu0 0
  %3537 = vmatprep.subr.bf16.mxu0 0
  %3538 = vmatpush1.bf16.msra.mxu0 0
  %3539 = vmatprep.mubr.bf16.mxu0 0
  %3540 = vmatmul.mubr.bf16.gmra.mrb[0].mxu0 %v3505
  %v3541 = vpop.f32.mrb[0].mxu0
  %v3542 = vadd.f32 0.0, %v3541
  %v3543 = vpop.f32.mrb[0].mxu0
  %v3544 = vpop.f32.mrb[0].mxu0
  %v3545 = vpop.f32.mrb[0].mxu0
  %3546 = vdwg.mxu0
  %3547 = vmatprep.subr.bf16.mxu0 0
  %3548 = vmatpush1.bf16.msra.mxu0 %v498
  %3549 = vmatprep.subr.bf16.mxu0 0
  %3550 = vmatpush1.bf16.msra.mxu0 0
  %3551 = vmatprep.subr.bf16.mxu0 0
  %3552 = vmatpush1.bf16.msra.mxu0 0
  %3553 = vmatprep.subr.bf16.mxu0 0
  %3554 = vmatpush1.bf16.msra.mxu0 0
  %3555 = vmatprep.subr.bf16.mxu0 0
  %3556 = vmatpush1.bf16.msra.mxu0 0
  %3557 = vmatprep.subr.bf16.mxu0 0
  %3558 = vmatpush1.bf16.msra.mxu0 0
  %3559 = vmatprep.subr.bf16.mxu0 0
  %3560 = vmatpush1.bf16.msra.mxu0 0
  %3561 = vmatprep.subr.bf16.mxu0 0
  %3562 = vmatpush1.bf16.msra.mxu0 0
  %3563 = vmatprep.subr.bf16.mxu0 0
  %3564 = vmatpush1.bf16.msra.mxu0 0
  %3565 = vmatprep.subr.bf16.mxu0 0
  %3566 = vmatpush1.bf16.msra.mxu0 0
  %3567 = vmatprep.subr.bf16.mxu0 0
  %3568 = vmatpush1.bf16.msra.mxu0 0
  %3569 = vmatprep.subr.bf16.mxu0 0
  %3570 = vmatpush1.bf16.msra.mxu0 0
  %3571 = vmatprep.subr.bf16.mxu0 0
  %3572 = vmatpush1.bf16.msra.mxu0 0
  %3573 = vmatprep.subr.bf16.mxu0 0
  %3574 = vmatpush1.bf16.msra.mxu0 0
  %3575 = vmatprep.subr.bf16.mxu0 0
  %3576 = vmatpush1.bf16.msra.mxu0 0
  %3577 = vmatprep.subr.bf16.mxu0 0
  %3578 = vmatpush1.bf16.msra.mxu0 0
  %3579 = vmatprep.mubr.bf16.mxu0 0
  %3580 = vmatmul.mubr.bf16.gmra.mrb[0].mxu0 %v3505
  %v3581 = vpop.f32.mrb[0].mxu0
  %v3582 = vadd.f32 0.0, %v3581
  %v3583 = vpop.f32.mrb[0].mxu0
  %v3584 = vpop.f32.mrb[0].mxu0
  %v3585 = vpop.f32.mrb[0].mxu0
  %3586 = vdwg.mxu0
  %v3587 = vld [vmem:[#allocation2 + $0xc] sm:$0x1]
  %v3588 = vld [vmem:[#allocation2 + $0x2c] sm:$0x1]
  %v3590 = vrot.slane %v3542, 1
  %v3593 = vadd.f32 %v3587, %v3542
  %v3594 = vadd.f32 %v3588, %v3590
  %v3595 = vxor.u32 %v3593, 2147483648
  %v3596 = vxor.u32 %v3594, 2147483648
  %v3597 = vmul.f32 %v3595, 1.442695
  %v3598 = vpow.pop %v3597
  %v3599 = vmul.f32 %v3596, 1.442695
  %v3600 = vpow.pop %v3599
  %v3601 = vadd.f32 %v3598, 1.0
  %v3602 = vadd.f32 %v3600, 1.0
  %v3603 = vrcp.pop %v3601
  %v3604 = vmul.f32 1.0, %v3603
  %v3605 = vrcp.pop %v3602
  %v3606 = vmul.f32 1.0, %v3605
  %v3607 = vld [vmem:[#allocation3 + $0xc] sm:$0x1]
  %v3608 = vld [vmem:[#allocation3 + $0x2c] sm:$0x1]
  %v3610 = vrot.slane %v3582, 1
  %v3613 = vadd.f32 %v3607, %v3582
  %v3614 = vadd.f32 %v3608, %v3610
  %v3615 = vxor.u32 %v3613, 2147483648
  %v3616 = vxor.u32 %v3614, 2147483648
  %v3617 = vmul.f32 %v3615, 1.442695
  %v3618 = vpow.pop %v3617
  %v3619 = vmul.f32 %v3616, 1.442695
  %v3620 = vpow.pop %v3619
  %v3621 = vadd.f32 %v3618, 1.0
  %v3622 = vadd.f32 %v3620, 1.0
  %v3623 = vrcp.pop %v3621
  %v3624 = vmul.f32 1.0, %v3623
  %v3625 = vrcp.pop %v3622
  %v3626 = vmul.f32 1.0, %v3625
  %v3627 = vld [vmem:[#allocation4 + $0xc] sm:$0x1]
  %v3628 = vld [vmem:[#allocation4 + $0x2c] sm:$0x1]
  %3629 = vmatprep.subr.bf16.mxu0 0
  %3630 = vmatpush1.bf16.msra.mxu0 %v590
  %3631 = vmatprep.subr.bf16.mxu0 0
  %3632 = vmatpush1.bf16.msra.mxu0 0
  %3633 = vmatprep.subr.bf16.mxu0 0
  %3634 = vmatpush1.bf16.msra.mxu0 0
  %3635 = vmatprep.subr.bf16.mxu0 0
  %3636 = vmatpush1.bf16.msra.mxu0 0
  %3637 = vmatprep.subr.bf16.mxu0 0
  %3638 = vmatpush1.bf16.msra.mxu0 0
  %3639 = vmatprep.subr.bf16.mxu0 0
  %3640 = vmatpush1.bf16.msra.mxu0 0
  %3641 = vmatprep.subr.bf16.mxu0 0
  %3642 = vmatpush1.bf16.msra.mxu0 0
  %3643 = vmatprep.subr.bf16.mxu0 0
  %3644 = vmatpush1.bf16.msra.mxu0 0
  %3645 = vmatprep.subr.bf16.mxu0 0
  %3646 = vmatpush1.bf16.msra.mxu0 0
  %3647 = vmatprep.subr.bf16.mxu0 0
  %3648 = vmatpush1.bf16.msra.mxu0 0
  %3649 = vmatprep.subr.bf16.mxu0 0
  %3650 = vmatpush1.bf16.msra.mxu0 0
  %3651 = vmatprep.subr.bf16.mxu0 0
  %3652 = vmatpush1.bf16.msra.mxu0 0
  %3653 = vmatprep.subr.bf16.mxu0 0
  %3654 = vmatpush1.bf16.msra.mxu0 0
  %3655 = vmatprep.subr.bf16.mxu0 0
  %3656 = vmatpush1.bf16.msra.mxu0 0
  %3657 = vmatprep.subr.bf16.mxu0 0
  %3658 = vmatpush1.bf16.msra.mxu0 0
  %3659 = vmatprep.subr.bf16.mxu0 0
  %3660 = vmatpush1.bf16.msra.mxu0 0
  %3661 = vmatprep.mubr.bf16.mxu0 0
  %3662 = vmatmul.mubr.bf16.gmra.mrb[0].mxu0 %v3505
  %v3663 = vpop.f32.mrb[0].mxu0
  %v3664 = vadd.f32 %v585, %v3663
  %v3665 = vpop.f32.mrb[0].mxu0
  %v3666 = vpop.f32.mrb[0].mxu0
  %v3667 = vpop.f32.mrb[0].mxu0
  %3668 = vdwg.mxu0
  %v3670 = vrot.slane %v3664, 1
  %v3673 = vmul.f32 %v3604, %v3664
  %v3674 = vmul.f32 %v3606, %v3670
  %v3675 = vadd.f32 %v3627, %v3673
  %v3676 = vadd.f32 %v3628, %v3674
  %v3677 = vtanh.pop %v3675
  %v3678 = vtanh.pop %v3676
  %v3679 = vsub.f32 %v3430, %v3677
  %v3680 = vsub.f32 %v3431, %v3678
  %v3681 = vmul.f32 %v3624, %v3679
  %v3682 = vmul.f32 %v3626, %v3680
  %v3683 = vadd.f32 %v3677, %v3681
  %v3684 = vadd.f32 %v3678, %v3682
  %v3685 = vmax.f32 %v3683, 0.0
  %v3686 = vmax.f32 %v3684, 0.0
  %v3687 = vpack.c.bf16 %v3685, %v3685
  %v3688 = vpack.c.bf16 %v3686, %v3686
  %v3689 = vld [vmem:[%s6 + $0x60] sm:$0xf]
  %v3690 = vld [vmem:[%s6 + $0x64] sm:$0xf]
  %v3693 = vunpack.c.l.b16 %v3687
  %v3694 = vunpack.c.l.b16 %v3688
  %v3695 = vrot.slane %v3694, 7
  %v3696 = vsel %vm659, %v3695, %v3693
  %v3697 = vpack.c.b16 %v3696, %v3696
  %v3700 = vunpack.c.l.b16 %v3689
  %v3701 = vunpack.c.l.b16 %v3690
  %v3702 = vpack.c.b16 %v3701, %v3700
  %v3705 = vsel %vm76, %v3697, 0
  %3707 = vmatprep.subr.bf16.mxu0 0
  %3708 = vmatpush1.bf16.msra.mxu0 %v3702
  %3709 = vmatprep.subr.bf16.mxu0 0
  %3710 = vmatpush1.bf16.msra.mxu0 0
  %3711 = vmatprep.subr.bf16.mxu0 0
  %3712 = vmatpush1.bf16.msra.mxu0 0
  %3713 = vmatprep.subr.bf16.mxu0 0
  %3714 = vmatpush1.bf16.msra.mxu0 0
  %3715 = vmatprep.subr.bf16.mxu0 0
  %3716 = vmatpush1.bf16.msra.mxu0 0
  %3717 = vmatprep.subr.bf16.mxu0 0
  %3718 = vmatpush1.bf16.msra.mxu0 0
  %3719 = vmatprep.subr.bf16.mxu0 0
  %3720 = vmatpush1.bf16.msra.mxu0 0
  %3721 = vmatprep.subr.bf16.mxu0 0
  %3722 = vmatpush1.bf16.msra.mxu0 0
  %3723 = vmatprep.subr.bf16.mxu0 0
  %3724 = vmatpush1.bf16.msra.mxu0 0
  %3725 = vmatprep.subr.bf16.mxu0 0
  %3726 = vmatpush1.bf16.msra.mxu0 0
  %3727 = vmatprep.subr.bf16.mxu0 0
  %3728 = vmatpush1.bf16.msra.mxu0 0
  %3729 = vmatprep.subr.bf16.mxu0 0
  %3730 = vmatpush1.bf16.msra.mxu0 0
  %3731 = vmatprep.subr.bf16.mxu0 0
  %3732 = vmatpush1.bf16.msra.mxu0 0
  %3733 = vmatprep.subr.bf16.mxu0 0
  %3734 = vmatpush1.bf16.msra.mxu0 0
  %3735 = vmatprep.subr.bf16.mxu0 0
  %3736 = vmatpush1.bf16.msra.mxu0 0
  %3737 = vmatprep.subr.bf16.mxu0 0
  %3738 = vmatpush1.bf16.msra.mxu0 0
  %3739 = vmatprep.mubr.bf16.mxu0 0
  %3740 = vmatmul.mubr.bf16.gmra.mrb[0].mxu0 %v3705
  %v3741 = vpop.f32.mrb[0].mxu0
  %v3742 = vadd.f32 0.0, %v3741
  %v3743 = vpop.f32.mrb[0].mxu0
  %v3744 = vpop.f32.mrb[0].mxu0
  %v3745 = vpop.f32.mrb[0].mxu0
  %3746 = vdwg.mxu0
  %v3747 = vadd.f32 %v3494, %v3742
  %v3748 = vpack.c.bf16 %v3683, %v3683
  %v3749 = vpack.c.bf16 %v3684, %v3684
  %v3752 = vunpack.c.l.b16 %v3748
  %v3753 = vunpack.c.l.b16 %v3749
  %v3754 = vrot.slane %v3753, 7
  %v3755 = vsel %vm659, %v3754, %v3752
  %v3756 = vpack.c.b16 %v3755, %v3755
  %v3758 = vsel %vm76, %v3756, 0
  %3760 = vmatprep.subr.bf16.mxu0 0
  %3761 = vmatpush1.bf16.msra.mxu0 %v449
  %3762 = vmatprep.subr.bf16.mxu0 0
  %3763 = vmatpush1.bf16.msra.mxu0 0
  %3764 = vmatprep.subr.bf16.mxu0 0
  %3765 = vmatpush1.bf16.msra.mxu0 0
  %3766 = vmatprep.subr.bf16.mxu0 0
  %3767 = vmatpush1.bf16.msra.mxu0 0
  %3768 = vmatprep.subr.bf16.mxu0 0
  %3769 = vmatpush1.bf16.msra.mxu0 0
  %3770 = vmatprep.subr.bf16.mxu0 0
  %3771 = vmatpush1.bf16.msra.mxu0 0
  %3772 = vmatprep.subr.bf16.mxu0 0
  %3773 = vmatpush1.bf16.msra.mxu0 0
  %3774 = vmatprep.subr.bf16.mxu0 0
  %3775 = vmatpush1.bf16.msra.mxu0 0
  %3776 = vmatprep.subr.bf16.mxu0 0
  %3777 = vmatpush1.bf16.msra.mxu0 0
  %3778 = vmatprep.subr.bf16.mxu0 0
  %3779 = vmatpush1.bf16.msra.mxu0 0
  %3780 = vmatprep.subr.bf16.mxu0 0
  %3781 = vmatpush1.bf16.msra.mxu0 0
  %3782 = vmatprep.subr.bf16.mxu0 0
  %3783 = vmatpush1.bf16.msra.mxu0 0
  %3784 = vmatprep.subr.bf16.mxu0 0
  %3785 = vmatpush1.bf16.msra.mxu0 0
  %3786 = vmatprep.subr.bf16.mxu0 0
  %3787 = vmatpush1.bf16.msra.mxu0 0
  %3788 = vmatprep.subr.bf16.mxu0 0
  %3789 = vmatpush1.bf16.msra.mxu0 0
  %3790 = vmatprep.subr.bf16.mxu0 0
  %3791 = vmatpush1.bf16.msra.mxu0 0
  %3792 = vmatprep.mubr.bf16.mxu0 0
  %3793 = vmatmul.mubr.bf16.gmra.mrb[0].mxu0 %v3758
  %v3794 = vpop.f32.mrb[0].mxu0
  %v3795 = vadd.f32 0.0, %v3794
  %v3796 = vpop.f32.mrb[0].mxu0
  %v3797 = vpop.f32.mrb[0].mxu0
  %v3798 = vpop.f32.mrb[0].mxu0
  %3799 = vdwg.mxu0
  %3800 = vmatprep.subr.bf16.mxu0 0
  %3801 = vmatpush1.bf16.msra.mxu0 %v498
  %3802 = vmatprep.subr.bf16.mxu0 0
  %3803 = vmatpush1.bf16.msra.mxu0 0
  %3804 = vmatprep.subr.bf16.mxu0 0
  %3805 = vmatpush1.bf16.msra.mxu0 0
  %3806 = vmatprep.subr.bf16.mxu0 0
  %3807 = vmatpush1.bf16.msra.mxu0 0
  %3808 = vmatprep.subr.bf16.mxu0 0
  %3809 = vmatpush1.bf16.msra.mxu0 0
  %3810 = vmatprep.subr.bf16.mxu0 0
  %3811 = vmatpush1.bf16.msra.mxu0 0
  %3812 = vmatprep.subr.bf16.mxu0 0
  %3813 = vmatpush1.bf16.msra.mxu0 0
  %3814 = vmatprep.subr.bf16.mxu0 0
  %3815 = vmatpush1.bf16.msra.mxu0 0
  %3816 = vmatprep.subr.bf16.mxu0 0
  %3817 = vmatpush1.bf16.msra.mxu0 0
  %3818 = vmatprep.subr.bf16.mxu0 0
  %3819 = vmatpush1.bf16.msra.mxu0 0
  %3820 = vmatprep.subr.bf16.mxu0 0
  %3821 = vmatpush1.bf16.msra.mxu0 0
  %3822 = vmatprep.subr.bf16.mxu0 0
  %3823 = vmatpush1.bf16.msra.mxu0 0
  %3824 = vmatprep.subr.bf16.mxu0 0
  %3825 = vmatpush1.bf16.msra.mxu0 0
  %3826 = vmatprep.subr.bf16.mxu0 0
  %3827 = vmatpush1.bf16.msra.mxu0 0
  %3828 = vmatprep.subr.bf16.mxu0 0
  %3829 = vmatpush1.bf16.msra.mxu0 0
  %3830 = vmatprep.subr.bf16.mxu0 0
  %3831 = vmatpush1.bf16.msra.mxu0 0
  %3832 = vmatprep.mubr.bf16.mxu0 0
  %3833 = vmatmul.mubr.bf16.gmra.mrb[0].mxu0 %v3758
  %v3834 = vpop.f32.mrb[0].mxu0
  %v3835 = vadd.f32 0.0, %v3834
  %v3836 = vpop.f32.mrb[0].mxu0
  %v3837 = vpop.f32.mrb[0].mxu0
  %v3838 = vpop.f32.mrb[0].mxu0
  %3839 = vdwg.mxu0
  %v3840 = vld [vmem:[#allocation2 + $0xd] sm:$0x1]
  %v3841 = vld [vmem:[#allocation2 + $0x2d] sm:$0x1]
  %v3843 = vrot.slane %v3795, 1
  %v3846 = vadd.f32 %v3840, %v3795
  %v3847 = vadd.f32 %v3841, %v3843
  %v3848 = vxor.u32 %v3846, 2147483648
  %v3849 = vxor.u32 %v3847, 2147483648
  %v3850 = vmul.f32 %v3848, 1.442695
  %v3851 = vpow.pop %v3850
  %v3852 = vmul.f32 %v3849, 1.442695
  %v3853 = vpow.pop %v3852
  %v3854 = vadd.f32 %v3851, 1.0
  %v3855 = vadd.f32 %v3853, 1.0
  %v3856 = vrcp.pop %v3854
  %v3857 = vmul.f32 1.0, %v3856
  %v3858 = vrcp.pop %v3855
  %v3859 = vmul.f32 1.0, %v3858
  %v3860 = vld [vmem:[#allocation3 + $0xd] sm:$0x1]
  %v3861 = vld [vmem:[#allocation3 + $0x2d] sm:$0x1]
  %v3863 = vrot.slane %v3835, 1
  %v3866 = vadd.f32 %v3860, %v3835
  %v3867 = vadd.f32 %v3861, %v3863
  %v3868 = vxor.u32 %v3866, 2147483648
  %v3869 = vxor.u32 %v3867, 2147483648
  %v3870 = vmul.f32 %v3868, 1.442695
  %v3871 = vpow.pop %v3870
  %v3872 = vmul.f32 %v3869, 1.442695
  %v3873 = vpow.pop %v3872
  %v3874 = vadd.f32 %v3871, 1.0
  %v3875 = vadd.f32 %v3873, 1.0
  %v3876 = vrcp.pop %v3874
  %v3877 = vmul.f32 1.0, %v3876
  %v3878 = vrcp.pop %v3875
  %v3879 = vmul.f32 1.0, %v3878
  %v3880 = vld [vmem:[#allocation4 + $0xd] sm:$0x1]
  %v3881 = vld [vmem:[#allocation4 + $0x2d] sm:$0x1]
  %3882 = vmatprep.subr.bf16.mxu0 0
  %3883 = vmatpush1.bf16.msra.mxu0 %v590
  %3884 = vmatprep.subr.bf16.mxu0 0
  %3885 = vmatpush1.bf16.msra.mxu0 0
  %3886 = vmatprep.subr.bf16.mxu0 0
  %3887 = vmatpush1.bf16.msra.mxu0 0
  %3888 = vmatprep.subr.bf16.mxu0 0
  %3889 = vmatpush1.bf16.msra.mxu0 0
  %3890 = vmatprep.subr.bf16.mxu0 0
  %3891 = vmatpush1.bf16.msra.mxu0 0
  %3892 = vmatprep.subr.bf16.mxu0 0
  %3893 = vmatpush1.bf16.msra.mxu0 0
  %3894 = vmatprep.subr.bf16.mxu0 0
  %3895 = vmatpush1.bf16.msra.mxu0 0
  %3896 = vmatprep.subr.bf16.mxu0 0
  %3897 = vmatpush1.bf16.msra.mxu0 0
  %3898 = vmatprep.subr.bf16.mxu0 0
  %3899 = vmatpush1.bf16.msra.mxu0 0
  %3900 = vmatprep.subr.bf16.mxu0 0
  %3901 = vmatpush1.bf16.msra.mxu0 0
  %3902 = vmatprep.subr.bf16.mxu0 0
  %3903 = vmatpush1.bf16.msra.mxu0 0
  %3904 = vmatprep.subr.bf16.mxu0 0
  %3905 = vmatpush1.bf16.msra.mxu0 0
  %3906 = vmatprep.subr.bf16.mxu0 0
  %3907 = vmatpush1.bf16.msra.mxu0 0
  %3908 = vmatprep.subr.bf16.mxu0 0
  %3909 = vmatpush1.bf16.msra.mxu0 0
  %3910 = vmatprep.subr.bf16.mxu0 0
  %3911 = vmatpush1.bf16.msra.mxu0 0
  %3912 = vmatprep.subr.bf16.mxu0 0
  %3913 = vmatpush1.bf16.msra.mxu0 0
  %3914 = vmatprep.mubr.bf16.mxu0 0
  %3915 = vmatmul.mubr.bf16.gmra.mrb[0].mxu0 %v3758
  %v3916 = vpop.f32.mrb[0].mxu0
  %v3917 = vadd.f32 %v585, %v3916
  %v3918 = vpop.f32.mrb[0].mxu0
  %v3919 = vpop.f32.mrb[0].mxu0
  %v3920 = vpop.f32.mrb[0].mxu0
  %3921 = vdwg.mxu0
  %v3923 = vrot.slane %v3917, 1
  %v3926 = vmul.f32 %v3857, %v3917
  %v3927 = vmul.f32 %v3859, %v3923
  %v3928 = vadd.f32 %v3880, %v3926
  %v3929 = vadd.f32 %v3881, %v3927
  %v3930 = vtanh.pop %v3928
  %v3931 = vtanh.pop %v3929
  %v3932 = vsub.f32 %v3683, %v3930
  %v3933 = vsub.f32 %v3684, %v3931
  %v3934 = vmul.f32 %v3877, %v3932
  %v3935 = vmul.f32 %v3879, %v3933
  %v3936 = vadd.f32 %v3930, %v3934
  %v3937 = vadd.f32 %v3931, %v3935
  %v3938 = vmax.f32 %v3936, 0.0
  %v3939 = vmax.f32 %v3937, 0.0
  %v3940 = vpack.c.bf16 %v3938, %v3938
  %v3941 = vpack.c.bf16 %v3939, %v3939
  %v3942 = vld [vmem:[%s6 + $0x68] sm:$0xf]
  %v3943 = vld [vmem:[%s6 + $0x6c] sm:$0xf]
  %v3946 = vunpack.c.l.b16 %v3940
  %v3947 = vunpack.c.l.b16 %v3941
  %v3948 = vrot.slane %v3947, 7
  %v3949 = vsel %vm659, %v3948, %v3946
  %v3950 = vpack.c.b16 %v3949, %v3949
  %v3953 = vunpack.c.l.b16 %v3942
  %v3954 = vunpack.c.l.b16 %v3943
  %v3955 = vpack.c.b16 %v3954, %v3953
  %v3958 = vsel %vm76, %v3950, 0
  %3960 = vmatprep.subr.bf16.mxu0 0
  %3961 = vmatpush1.bf16.msra.mxu0 %v3955
  %3962 = vmatprep.subr.bf16.mxu0 0
  %3963 = vmatpush1.bf16.msra.mxu0 0
  %3964 = vmatprep.subr.bf16.mxu0 0
  %3965 = vmatpush1.bf16.msra.mxu0 0
  %3966 = vmatprep.subr.bf16.mxu0 0
  %3967 = vmatpush1.bf16.msra.mxu0 0
  %3968 = vmatprep.subr.bf16.mxu0 0
  %3969 = vmatpush1.bf16.msra.mxu0 0
  %3970 = vmatprep.subr.bf16.mxu0 0
  %3971 = vmatpush1.bf16.msra.mxu0 0
  %3972 = vmatprep.subr.bf16.mxu0 0
  %3973 = vmatpush1.bf16.msra.mxu0 0
  %3974 = vmatprep.subr.bf16.mxu0 0
  %3975 = vmatpush1.bf16.msra.mxu0 0
  %3976 = vmatprep.subr.bf16.mxu0 0
  %3977 = vmatpush1.bf16.msra.mxu0 0
  %3978 = vmatprep.subr.bf16.mxu0 0
  %3979 = vmatpush1.bf16.msra.mxu0 0
  %3980 = vmatprep.subr.bf16.mxu0 0
  %3981 = vmatpush1.bf16.msra.mxu0 0
  %3982 = vmatprep.subr.bf16.mxu0 0
  %3983 = vmatpush1.bf16.msra.mxu0 0
  %3984 = vmatprep.subr.bf16.mxu0 0
  %3985 = vmatpush1.bf16.msra.mxu0 0
  %3986 = vmatprep.subr.bf16.mxu0 0
  %3987 = vmatpush1.bf16.msra.mxu0 0
  %3988 = vmatprep.subr.bf16.mxu0 0
  %3989 = vmatpush1.bf16.msra.mxu0 0
  %3990 = vmatprep.subr.bf16.mxu0 0
  %3991 = vmatpush1.bf16.msra.mxu0 0
  %3992 = vmatprep.mubr.bf16.mxu0 0
  %3993 = vmatmul.mubr.bf16.gmra.mrb[0].mxu0 %v3958
  %v3994 = vpop.f32.mrb[0].mxu0
  %v3995 = vadd.f32 0.0, %v3994
  %v3996 = vpop.f32.mrb[0].mxu0
  %v3997 = vpop.f32.mrb[0].mxu0
  %v3998 = vpop.f32.mrb[0].mxu0
  %3999 = vdwg.mxu0
  %v4000 = vadd.f32 %v3747, %v3995
  %v4001 = vpack.c.bf16 %v3936, %v3936
  %v4002 = vpack.c.bf16 %v3937, %v3937
  %v4005 = vunpack.c.l.b16 %v4001
  %v4006 = vunpack.c.l.b16 %v4002
  %v4007 = vrot.slane %v4006, 7
  %v4008 = vsel %vm659, %v4007, %v4005
  %v4009 = vpack.c.b16 %v4008, %v4008
  %v4011 = vsel %vm76, %v4009, 0
  %4013 = vmatprep.subr.bf16.mxu0 0
  %4014 = vmatpush1.bf16.msra.mxu0 %v449
  %4015 = vmatprep.subr.bf16.mxu0 0
  %4016 = vmatpush1.bf16.msra.mxu0 0
  %4017 = vmatprep.subr.bf16.mxu0 0
  %4018 = vmatpush1.bf16.msra.mxu0 0
  %4019 = vmatprep.subr.bf16.mxu0 0
  %4020 = vmatpush1.bf16.msra.mxu0 0
  %4021 = vmatprep.subr.bf16.mxu0 0
  %4022 = vmatpush1.bf16.msra.mxu0 0
  %4023 = vmatprep.subr.bf16.mxu0 0
  %4024 = vmatpush1.bf16.msra.mxu0 0
  %4025 = vmatprep.subr.bf16.mxu0 0
  %4026 = vmatpush1.bf16.msra.mxu0 0
  %4027 = vmatprep.subr.bf16.mxu0 0
  %4028 = vmatpush1.bf16.msra.mxu0 0
  %4029 = vmatprep.subr.bf16.mxu0 0
  %4030 = vmatpush1.bf16.msra.mxu0 0
  %4031 = vmatprep.subr.bf16.mxu0 0
  %4032 = vmatpush1.bf16.msra.mxu0 0
  %4033 = vmatprep.subr.bf16.mxu0 0
  %4034 = vmatpush1.bf16.msra.mxu0 0
  %4035 = vmatprep.subr.bf16.mxu0 0
  %4036 = vmatpush1.bf16.msra.mxu0 0
  %4037 = vmatprep.subr.bf16.mxu0 0
  %4038 = vmatpush1.bf16.msra.mxu0 0
  %4039 = vmatprep.subr.bf16.mxu0 0
  %4040 = vmatpush1.bf16.msra.mxu0 0
  %4041 = vmatprep.subr.bf16.mxu0 0
  %4042 = vmatpush1.bf16.msra.mxu0 0
  %4043 = vmatprep.subr.bf16.mxu0 0
  %4044 = vmatpush1.bf16.msra.mxu0 0
  %4045 = vmatprep.mubr.bf16.mxu0 0
  %4046 = vmatmul.mubr.bf16.gmra.mrb[0].mxu0 %v4011
  %v4047 = vpop.f32.mrb[0].mxu0
  %v4048 = vadd.f32 0.0, %v4047
  %v4049 = vpop.f32.mrb[0].mxu0
  %v4050 = vpop.f32.mrb[0].mxu0
  %v4051 = vpop.f32.mrb[0].mxu0
  %4052 = vdwg.mxu0
  %4053 = vmatprep.subr.bf16.mxu0 0
  %4054 = vmatpush1.bf16.msra.mxu0 %v498
  %4055 = vmatprep.subr.bf16.mxu0 0
  %4056 = vmatpush1.bf16.msra.mxu0 0
  %4057 = vmatprep.subr.bf16.mxu0 0
  %4058 = vmatpush1.bf16.msra.mxu0 0
  %4059 = vmatprep.subr.bf16.mxu0 0
  %4060 = vmatpush1.bf16.msra.mxu0 0
  %4061 = vmatprep.subr.bf16.mxu0 0
  %4062 = vmatpush1.bf16.msra.mxu0 0
  %4063 = vmatprep.subr.bf16.mxu0 0
  %4064 = vmatpush1.bf16.msra.mxu0 0
  %4065 = vmatprep.subr.bf16.mxu0 0
  %4066 = vmatpush1.bf16.msra.mxu0 0
  %4067 = vmatprep.subr.bf16.mxu0 0
  %4068 = vmatpush1.bf16.msra.mxu0 0
  %4069 = vmatprep.subr.bf16.mxu0 0
  %4070 = vmatpush1.bf16.msra.mxu0 0
  %4071 = vmatprep.subr.bf16.mxu0 0
  %4072 = vmatpush1.bf16.msra.mxu0 0
  %4073 = vmatprep.subr.bf16.mxu0 0
  %4074 = vmatpush1.bf16.msra.mxu0 0
  %4075 = vmatprep.subr.bf16.mxu0 0
  %4076 = vmatpush1.bf16.msra.mxu0 0
  %4077 = vmatprep.subr.bf16.mxu0 0
  %4078 = vmatpush1.bf16.msra.mxu0 0
  %4079 = vmatprep.subr.bf16.mxu0 0
  %4080 = vmatpush1.bf16.msra.mxu0 0
  %4081 = vmatprep.subr.bf16.mxu0 0
  %4082 = vmatpush1.bf16.msra.mxu0 0
  %4083 = vmatprep.subr.bf16.mxu0 0
  %4084 = vmatpush1.bf16.msra.mxu0 0
  %4085 = vmatprep.mubr.bf16.mxu0 0
  %4086 = vmatmul.mubr.bf16.gmra.mrb[0].mxu0 %v4011
  %v4087 = vpop.f32.mrb[0].mxu0
  %v4088 = vadd.f32 0.0, %v4087
  %v4089 = vpop.f32.mrb[0].mxu0
  %v4090 = vpop.f32.mrb[0].mxu0
  %v4091 = vpop.f32.mrb[0].mxu0
  %4092 = vdwg.mxu0
  %v4093 = vld [vmem:[#allocation2 + $0xe] sm:$0x1]
  %v4094 = vld [vmem:[#allocation2 + $0x2e] sm:$0x1]
  %v4096 = vrot.slane %v4048, 1
  %v4099 = vadd.f32 %v4093, %v4048
  %v4100 = vadd.f32 %v4094, %v4096
  %v4101 = vxor.u32 %v4099, 2147483648
  %v4102 = vxor.u32 %v4100, 2147483648
  %v4103 = vmul.f32 %v4101, 1.442695
  %v4104 = vpow.pop %v4103
  %v4105 = vmul.f32 %v4102, 1.442695
  %v4106 = vpow.pop %v4105
  %v4107 = vadd.f32 %v4104, 1.0
  %v4108 = vadd.f32 %v4106, 1.0
  %v4109 = vrcp.pop %v4107
  %v4110 = vmul.f32 1.0, %v4109
  %v4111 = vrcp.pop %v4108
  %v4112 = vmul.f32 1.0, %v4111
  %v4113 = vld [vmem:[#allocation3 + $0xe] sm:$0x1]
  %v4114 = vld [vmem:[#allocation3 + $0x2e] sm:$0x1]
  %v4116 = vrot.slane %v4088, 1
  %v4119 = vadd.f32 %v4113, %v4088
  %v4120 = vadd.f32 %v4114, %v4116
  %v4121 = vxor.u32 %v4119, 2147483648
  %v4122 = vxor.u32 %v4120, 2147483648
  %v4123 = vmul.f32 %v4121, 1.442695
  %v4124 = vpow.pop %v4123
  %v4125 = vmul.f32 %v4122, 1.442695
  %v4126 = vpow.pop %v4125
  %v4127 = vadd.f32 %v4124, 1.0
  %v4128 = vadd.f32 %v4126, 1.0
  %v4129 = vrcp.pop %v4127
  %v4130 = vmul.f32 1.0, %v4129
  %v4131 = vrcp.pop %v4128
  %v4132 = vmul.f32 1.0, %v4131
  %v4133 = vld [vmem:[#allocation4 + $0xe] sm:$0x1]
  %v4134 = vld [vmem:[#allocation4 + $0x2e] sm:$0x1]
  %4135 = vmatprep.subr.bf16.mxu0 0
  %4136 = vmatpush1.bf16.msra.mxu0 %v590
  %4137 = vmatprep.subr.bf16.mxu0 0
  %4138 = vmatpush1.bf16.msra.mxu0 0
  %4139 = vmatprep.subr.bf16.mxu0 0
  %4140 = vmatpush1.bf16.msra.mxu0 0
  %4141 = vmatprep.subr.bf16.mxu0 0
  %4142 = vmatpush1.bf16.msra.mxu0 0
  %4143 = vmatprep.subr.bf16.mxu0 0
  %4144 = vmatpush1.bf16.msra.mxu0 0
  %4145 = vmatprep.subr.bf16.mxu0 0
  %4146 = vmatpush1.bf16.msra.mxu0 0
  %4147 = vmatprep.subr.bf16.mxu0 0
  %4148 = vmatpush1.bf16.msra.mxu0 0
  %4149 = vmatprep.subr.bf16.mxu0 0
  %4150 = vmatpush1.bf16.msra.mxu0 0
  %4151 = vmatprep.subr.bf16.mxu0 0
  %4152 = vmatpush1.bf16.msra.mxu0 0
  %4153 = vmatprep.subr.bf16.mxu0 0
  %4154 = vmatpush1.bf16.msra.mxu0 0
  %4155 = vmatprep.subr.bf16.mxu0 0
  %4156 = vmatpush1.bf16.msra.mxu0 0
  %4157 = vmatprep.subr.bf16.mxu0 0
  %4158 = vmatpush1.bf16.msra.mxu0 0
  %4159 = vmatprep.subr.bf16.mxu0 0
  %4160 = vmatpush1.bf16.msra.mxu0 0
  %4161 = vmatprep.subr.bf16.mxu0 0
  %4162 = vmatpush1.bf16.msra.mxu0 0
  %4163 = vmatprep.subr.bf16.mxu0 0
  %4164 = vmatpush1.bf16.msra.mxu0 0
  %4165 = vmatprep.subr.bf16.mxu0 0
  %4166 = vmatpush1.bf16.msra.mxu0 0
  %4167 = vmatprep.mubr.bf16.mxu0 0
  %4168 = vmatmul.mubr.bf16.gmra.mrb[0].mxu0 %v4011
  %v4169 = vpop.f32.mrb[0].mxu0
  %v4170 = vadd.f32 %v585, %v4169
  %v4171 = vpop.f32.mrb[0].mxu0
  %v4172 = vpop.f32.mrb[0].mxu0
  %v4173 = vpop.f32.mrb[0].mxu0
  %4174 = vdwg.mxu0
  %v4176 = vrot.slane %v4170, 1
  %v4179 = vmul.f32 %v4110, %v4170
  %v4180 = vmul.f32 %v4112, %v4176
  %v4181 = vadd.f32 %v4133, %v4179
  %v4182 = vadd.f32 %v4134, %v4180
  %v4183 = vtanh.pop %v4181
  %v4184 = vtanh.pop %v4182
  %v4185 = vsub.f32 %v3936, %v4183
  %v4186 = vsub.f32 %v3937, %v4184
  %v4187 = vmul.f32 %v4130, %v4185
  %v4188 = vmul.f32 %v4132, %v4186
  %v4189 = vadd.f32 %v4183, %v4187
  %v4190 = vadd.f32 %v4184, %v4188
  %v4191 = vmax.f32 %v4189, 0.0
  %v4192 = vmax.f32 %v4190, 0.0
  %v4193 = vpack.c.bf16 %v4191, %v4191
  %v4194 = vpack.c.bf16 %v4192, %v4192
  %v4195 = vld [vmem:[%s6 + $0x70] sm:$0xf]
  %v4196 = vld [vmem:[%s6 + $0x74] sm:$0xf]
  %v4199 = vunpack.c.l.b16 %v4193
  %v4200 = vunpack.c.l.b16 %v4194
  %v4201 = vrot.slane %v4200, 7
  %v4202 = vsel %vm659, %v4201, %v4199
  %v4203 = vpack.c.b16 %v4202, %v4202
  %v4206 = vunpack.c.l.b16 %v4195
  %v4207 = vunpack.c.l.b16 %v4196
  %v4208 = vpack.c.b16 %v4207, %v4206
  %v4211 = vsel %vm76, %v4203, 0
  %4213 = vmatprep.subr.bf16.mxu0 0
  %4214 = vmatpush1.bf16.msra.mxu0 %v4208
  %4215 = vmatprep.subr.bf16.mxu0 0
  %4216 = vmatpush1.bf16.msra.mxu0 0
  %4217 = vmatprep.subr.bf16.mxu0 0
  %4218 = vmatpush1.bf16.msra.mxu0 0
  %4219 = vmatprep.subr.bf16.mxu0 0
  %4220 = vmatpush1.bf16.msra.mxu0 0
  %4221 = vmatprep.subr.bf16.mxu0 0
  %4222 = vmatpush1.bf16.msra.mxu0 0
  %4223 = vmatprep.subr.bf16.mxu0 0
  %4224 = vmatpush1.bf16.msra.mxu0 0
  %4225 = vmatprep.subr.bf16.mxu0 0
  %4226 = vmatpush1.bf16.msra.mxu0 0
  %4227 = vmatprep.subr.bf16.mxu0 0
  %4228 = vmatpush1.bf16.msra.mxu0 0
  %4229 = vmatprep.subr.bf16.mxu0 0
  %4230 = vmatpush1.bf16.msra.mxu0 0
  %4231 = vmatprep.subr.bf16.mxu0 0
  %4232 = vmatpush1.bf16.msra.mxu0 0
  %4233 = vmatprep.subr.bf16.mxu0 0
  %4234 = vmatpush1.bf16.msra.mxu0 0
  %4235 = vmatprep.subr.bf16.mxu0 0
  %4236 = vmatpush1.bf16.msra.mxu0 0
  %4237 = vmatprep.subr.bf16.mxu0 0
  %4238 = vmatpush1.bf16.msra.mxu0 0
  %4239 = vmatprep.subr.bf16.mxu0 0
  %4240 = vmatpush1.bf16.msra.mxu0 0
  %4241 = vmatprep.subr.bf16.mxu0 0
  %4242 = vmatpush1.bf16.msra.mxu0 0
  %4243 = vmatprep.subr.bf16.mxu0 0
  %4244 = vmatpush1.bf16.msra.mxu0 0
  %4245 = vmatprep.mubr.bf16.mxu0 0
  %4246 = vmatmul.mubr.bf16.gmra.mrb[0].mxu0 %v4211
  %v4247 = vpop.f32.mrb[0].mxu0
  %v4248 = vadd.f32 0.0, %v4247
  %v4249 = vpop.f32.mrb[0].mxu0
  %v4250 = vpop.f32.mrb[0].mxu0
  %v4251 = vpop.f32.mrb[0].mxu0
  %4252 = vdwg.mxu0
  %v4253 = vadd.f32 %v4000, %v4248
  %v4254 = vpack.c.bf16 %v4189, %v4189
  %v4255 = vpack.c.bf16 %v4190, %v4190
  %v4258 = vunpack.c.l.b16 %v4254
  %v4259 = vunpack.c.l.b16 %v4255
  %v4260 = vrot.slane %v4259, 7
  %v4261 = vsel %vm659, %v4260, %v4258
  %v4262 = vpack.c.b16 %v4261, %v4261
  %v4264 = vsel %vm76, %v4262, 0
  %4266 = vmatprep.subr.bf16.mxu0 0
  %4267 = vmatpush1.bf16.msra.mxu0 %v449
  %4268 = vmatprep.subr.bf16.mxu0 0
  %4269 = vmatpush1.bf16.msra.mxu0 0
  %4270 = vmatprep.subr.bf16.mxu0 0
  %4271 = vmatpush1.bf16.msra.mxu0 0
  %4272 = vmatprep.subr.bf16.mxu0 0
  %4273 = vmatpush1.bf16.msra.mxu0 0
  %4274 = vmatprep.subr.bf16.mxu0 0
  %4275 = vmatpush1.bf16.msra.mxu0 0
  %4276 = vmatprep.subr.bf16.mxu0 0
  %4277 = vmatpush1.bf16.msra.mxu0 0
  %4278 = vmatprep.subr.bf16.mxu0 0
  %4279 = vmatpush1.bf16.msra.mxu0 0
  %4280 = vmatprep.subr.bf16.mxu0 0
  %4281 = vmatpush1.bf16.msra.mxu0 0
  %4282 = vmatprep.subr.bf16.mxu0 0
  %4283 = vmatpush1.bf16.msra.mxu0 0
  %4284 = vmatprep.subr.bf16.mxu0 0
  %4285 = vmatpush1.bf16.msra.mxu0 0
  %4286 = vmatprep.subr.bf16.mxu0 0
  %4287 = vmatpush1.bf16.msra.mxu0 0
  %4288 = vmatprep.subr.bf16.mxu0 0
  %4289 = vmatpush1.bf16.msra.mxu0 0
  %4290 = vmatprep.subr.bf16.mxu0 0
  %4291 = vmatpush1.bf16.msra.mxu0 0
  %4292 = vmatprep.subr.bf16.mxu0 0
  %4293 = vmatpush1.bf16.msra.mxu0 0
  %4294 = vmatprep.subr.bf16.mxu0 0
  %4295 = vmatpush1.bf16.msra.mxu0 0
  %4296 = vmatprep.subr.bf16.mxu0 0
  %4297 = vmatpush1.bf16.msra.mxu0 0
  %4298 = vmatprep.mubr.bf16.mxu0 0
  %4299 = vmatmul.mubr.bf16.gmra.mrb[0].mxu0 %v4264
  %v4300 = vpop.f32.mrb[0].mxu0
  %v4301 = vadd.f32 0.0, %v4300
  %v4302 = vpop.f32.mrb[0].mxu0
  %v4303 = vpop.f32.mrb[0].mxu0
  %v4304 = vpop.f32.mrb[0].mxu0
  %4305 = vdwg.mxu0
  %4306 = vmatprep.subr.bf16.mxu0 0
  %4307 = vmatpush1.bf16.msra.mxu0 %v498
  %4308 = vmatprep.subr.bf16.mxu0 0
  %4309 = vmatpush1.bf16.msra.mxu0 0
  %4310 = vmatprep.subr.bf16.mxu0 0
  %4311 = vmatpush1.bf16.msra.mxu0 0
  %4312 = vmatprep.subr.bf16.mxu0 0
  %4313 = vmatpush1.bf16.msra.mxu0 0
  %4314 = vmatprep.subr.bf16.mxu0 0
  %4315 = vmatpush1.bf16.msra.mxu0 0
  %4316 = vmatprep.subr.bf16.mxu0 0
  %4317 = vmatpush1.bf16.msra.mxu0 0
  %4318 = vmatprep.subr.bf16.mxu0 0
  %4319 = vmatpush1.bf16.msra.mxu0 0
  %4320 = vmatprep.subr.bf16.mxu0 0
  %4321 = vmatpush1.bf16.msra.mxu0 0
  %4322 = vmatprep.subr.bf16.mxu0 0
  %4323 = vmatpush1.bf16.msra.mxu0 0
  %4324 = vmatprep.subr.bf16.mxu0 0
  %4325 = vmatpush1.bf16.msra.mxu0 0
  %4326 = vmatprep.subr.bf16.mxu0 0
  %4327 = vmatpush1.bf16.msra.mxu0 0
  %4328 = vmatprep.subr.bf16.mxu0 0
  %4329 = vmatpush1.bf16.msra.mxu0 0
  %4330 = vmatprep.subr.bf16.mxu0 0
  %4331 = vmatpush1.bf16.msra.mxu0 0
  %4332 = vmatprep.subr.bf16.mxu0 0
  %4333 = vmatpush1.bf16.msra.mxu0 0
  %4334 = vmatprep.subr.bf16.mxu0 0
  %4335 = vmatpush1.bf16.msra.mxu0 0
  %4336 = vmatprep.subr.bf16.mxu0 0
  %4337 = vmatpush1.bf16.msra.mxu0 0
  %4338 = vmatprep.mubr.bf16.mxu0 0
  %4339 = vmatmul.mubr.bf16.gmra.mrb[0].mxu0 %v4264
  %v4340 = vpop.f32.mrb[0].mxu0
  %v4341 = vadd.f32 0.0, %v4340
  %v4342 = vpop.f32.mrb[0].mxu0
  %v4343 = vpop.f32.mrb[0].mxu0
  %v4344 = vpop.f32.mrb[0].mxu0
  %4345 = vdwg.mxu0
  %v4346 = vld [vmem:[#allocation2 + $0xf] sm:$0x1]
  %v4347 = vld [vmem:[#allocation2 + $0x2f] sm:$0x1]
  %v4349 = vrot.slane %v4301, 1
  %v4352 = vadd.f32 %v4346, %v4301
  %v4353 = vadd.f32 %v4347, %v4349
  %v4354 = vxor.u32 %v4352, 2147483648
  %v4355 = vxor.u32 %v4353, 2147483648
  %v4356 = vmul.f32 %v4354, 1.442695
  %v4357 = vpow.pop %v4356
  %v4358 = vmul.f32 %v4355, 1.442695
  %v4359 = vpow.pop %v4358
  %v4360 = vadd.f32 %v4357, 1.0
  %v4361 = vadd.f32 %v4359, 1.0
  %v4362 = vrcp.pop %v4360
  %v4363 = vmul.f32 1.0, %v4362
  %v4364 = vrcp.pop %v4361
  %v4365 = vmul.f32 1.0, %v4364
  %v4366 = vld [vmem:[#allocation3 + $0xf] sm:$0x1]
  %v4367 = vld [vmem:[#allocation3 + $0x2f] sm:$0x1]
  %v4369 = vrot.slane %v4341, 1
  %v4372 = vadd.f32 %v4366, %v4341
  %v4373 = vadd.f32 %v4367, %v4369
  %v4374 = vxor.u32 %v4372, 2147483648
  %v4375 = vxor.u32 %v4373, 2147483648
  %v4376 = vmul.f32 %v4374, 1.442695
  %v4377 = vpow.pop %v4376
  %v4378 = vmul.f32 %v4375, 1.442695
  %v4379 = vpow.pop %v4378
  %v4380 = vadd.f32 %v4377, 1.0
  %v4381 = vadd.f32 %v4379, 1.0
  %v4382 = vrcp.pop %v4380
  %v4383 = vmul.f32 1.0, %v4382
  %v4384 = vrcp.pop %v4381
  %v4385 = vmul.f32 1.0, %v4384
  %v4386 = vld [vmem:[#allocation4 + $0xf] sm:$0x1]
  %v4387 = vld [vmem:[#allocation4 + $0x2f] sm:$0x1]
  %4388 = vmatprep.subr.bf16.mxu0 0
  %4389 = vmatpush1.bf16.msra.mxu0 %v590
  %4390 = vmatprep.subr.bf16.mxu0 0
  %4391 = vmatpush1.bf16.msra.mxu0 0
  %4392 = vmatprep.subr.bf16.mxu0 0
  %4393 = vmatpush1.bf16.msra.mxu0 0
  %4394 = vmatprep.subr.bf16.mxu0 0
  %4395 = vmatpush1.bf16.msra.mxu0 0
  %4396 = vmatprep.subr.bf16.mxu0 0
  %4397 = vmatpush1.bf16.msra.mxu0 0
  %4398 = vmatprep.subr.bf16.mxu0 0
  %4399 = vmatpush1.bf16.msra.mxu0 0
  %4400 = vmatprep.subr.bf16.mxu0 0
  %4401 = vmatpush1.bf16.msra.mxu0 0
  %4402 = vmatprep.subr.bf16.mxu0 0
  %4403 = vmatpush1.bf16.msra.mxu0 0
  %4404 = vmatprep.subr.bf16.mxu0 0
  %4405 = vmatpush1.bf16.msra.mxu0 0
  %4406 = vmatprep.subr.bf16.mxu0 0
  %4407 = vmatpush1.bf16.msra.mxu0 0
  %4408 = vmatprep.subr.bf16.mxu0 0
  %4409 = vmatpush1.bf16.msra.mxu0 0
  %4410 = vmatprep.subr.bf16.mxu0 0
  %4411 = vmatpush1.bf16.msra.mxu0 0
  %4412 = vmatprep.subr.bf16.mxu0 0
  %4413 = vmatpush1.bf16.msra.mxu0 0
  %4414 = vmatprep.subr.bf16.mxu0 0
  %4415 = vmatpush1.bf16.msra.mxu0 0
  %4416 = vmatprep.subr.bf16.mxu0 0
  %4417 = vmatpush1.bf16.msra.mxu0 0
  %4418 = vmatprep.subr.bf16.mxu0 0
  %4419 = vmatpush1.bf16.msra.mxu0 0
  %4420 = vmatprep.mubr.bf16.mxu0 0
  %4421 = vmatmul.mubr.bf16.gmra.mrb[0].mxu0 %v4264
  %v4422 = vpop.f32.mrb[0].mxu0
  %v4423 = vadd.f32 %v585, %v4422
  %v4424 = vpop.f32.mrb[0].mxu0
  %v4425 = vpop.f32.mrb[0].mxu0
  %v4426 = vpop.f32.mrb[0].mxu0
  %4427 = vdwg.mxu0
  %v4429 = vrot.slane %v4423, 1
  %v4432 = vmul.f32 %v4363, %v4423
  %v4433 = vmul.f32 %v4365, %v4429
  %v4434 = vadd.f32 %v4386, %v4432
  %v4435 = vadd.f32 %v4387, %v4433
  %v4436 = vtanh.pop %v4434
  %v4437 = vtanh.pop %v4435
  %v4438 = vsub.f32 %v4189, %v4436
  %v4439 = vsub.f32 %v4190, %v4437
  %v4440 = vmul.f32 %v4383, %v4438
  %v4441 = vmul.f32 %v4385, %v4439
  %v4442 = vadd.f32 %v4436, %v4440
  %v4443 = vadd.f32 %v4437, %v4441
  %v4444 = vmax.f32 %v4442, 0.0
  %v4445 = vmax.f32 %v4443, 0.0
  %v4446 = vpack.c.bf16 %v4444, %v4444
  %v4447 = vpack.c.bf16 %v4445, %v4445
  %v4448 = vld [vmem:[%s6 + $0x78] sm:$0xf]
  %v4449 = vld [vmem:[%s6 + $0x7c] sm:$0xf]
  %v4452 = vunpack.c.l.b16 %v4446
  %v4453 = vunpack.c.l.b16 %v4447
  %v4454 = vrot.slane %v4453, 7
  %v4455 = vsel %vm659, %v4454, %v4452
  %v4456 = vpack.c.b16 %v4455, %v4455
  %v4459 = vunpack.c.l.b16 %v4448
  %v4460 = vunpack.c.l.b16 %v4449
  %v4461 = vpack.c.b16 %v4460, %v4459
  %v4464 = vsel %vm76, %v4456, 0
  %4466 = vmatprep.subr.bf16.mxu0 0
  %4467 = vmatpush1.bf16.msra.mxu0 %v4461
  %4468 = vmatprep.subr.bf16.mxu0 0
  %4469 = vmatpush1.bf16.msra.mxu0 0
  %4470 = vmatprep.subr.bf16.mxu0 0
  %4471 = vmatpush1.bf16.msra.mxu0 0
  %4472 = vmatprep.subr.bf16.mxu0 0
  %4473 = vmatpush1.bf16.msra.mxu0 0
  %4474 = vmatprep.subr.bf16.mxu0 0
  %4475 = vmatpush1.bf16.msra.mxu0 0
  %4476 = vmatprep.subr.bf16.mxu0 0
  %4477 = vmatpush1.bf16.msra.mxu0 0
  %4478 = vmatprep.subr.bf16.mxu0 0
  %4479 = vmatpush1.bf16.msra.mxu0 0
  %4480 = vmatprep.subr.bf16.mxu0 0
  %4481 = vmatpush1.bf16.msra.mxu0 0
  %4482 = vmatprep.subr.bf16.mxu0 0
  %4483 = vmatpush1.bf16.msra.mxu0 0
  %4484 = vmatprep.subr.bf16.mxu0 0
  %4485 = vmatpush1.bf16.msra.mxu0 0
  %4486 = vmatprep.subr.bf16.mxu0 0
  %4487 = vmatpush1.bf16.msra.mxu0 0
  %4488 = vmatprep.subr.bf16.mxu0 0
  %4489 = vmatpush1.bf16.msra.mxu0 0
  %4490 = vmatprep.subr.bf16.mxu0 0
  %4491 = vmatpush1.bf16.msra.mxu0 0
  %4492 = vmatprep.subr.bf16.mxu0 0
  %4493 = vmatpush1.bf16.msra.mxu0 0
  %4494 = vmatprep.subr.bf16.mxu0 0
  %4495 = vmatpush1.bf16.msra.mxu0 0
  %4496 = vmatprep.subr.bf16.mxu0 0
  %4497 = vmatpush1.bf16.msra.mxu0 0
  %4498 = vmatprep.mubr.bf16.mxu0 0
  %4499 = vmatmul.mubr.bf16.gmra.mrb[0].mxu0 %v4464
  %v4500 = vpop.f32.mrb[0].mxu0
  %v4501 = vadd.f32 0.0, %v4500
  %v4502 = vpop.f32.mrb[0].mxu0
  %v4503 = vpop.f32.mrb[0].mxu0
  %v4504 = vpop.f32.mrb[0].mxu0
  %4505 = vdwg.mxu0
  %v4506 = vadd.f32 %v4253, %v4501
  %v4507 = vpack.c.bf16 %v4442, %v4442
  %v4508 = vpack.c.bf16 %v4443, %v4443
  %v4511 = vunpack.c.l.b16 %v4507
  %v4512 = vunpack.c.l.b16 %v4508
  %v4513 = vrot.slane %v4512, 7
  %v4514 = vsel %vm659, %v4513, %v4511
  %v4515 = vpack.c.b16 %v4514, %v4514
  %v4517 = vsel %vm76, %v4515, 0
  %4519 = vmatprep.subr.bf16.mxu0 0
  %4520 = vmatpush1.bf16.msra.mxu0 %v449
  %4521 = vmatprep.subr.bf16.mxu0 0
  %4522 = vmatpush1.bf16.msra.mxu0 0
  %4523 = vmatprep.subr.bf16.mxu0 0
  %4524 = vmatpush1.bf16.msra.mxu0 0
  %4525 = vmatprep.subr.bf16.mxu0 0
  %4526 = vmatpush1.bf16.msra.mxu0 0
  %4527 = vmatprep.subr.bf16.mxu0 0
  %4528 = vmatpush1.bf16.msra.mxu0 0
  %4529 = vmatprep.subr.bf16.mxu0 0
  %4530 = vmatpush1.bf16.msra.mxu0 0
  %4531 = vmatprep.subr.bf16.mxu0 0
  %4532 = vmatpush1.bf16.msra.mxu0 0
  %4533 = vmatprep.subr.bf16.mxu0 0
  %4534 = vmatpush1.bf16.msra.mxu0 0
  %4535 = vmatprep.subr.bf16.mxu0 0
  %4536 = vmatpush1.bf16.msra.mxu0 0
  %4537 = vmatprep.subr.bf16.mxu0 0
  %4538 = vmatpush1.bf16.msra.mxu0 0
  %4539 = vmatprep.subr.bf16.mxu0 0
  %4540 = vmatpush1.bf16.msra.mxu0 0
  %4541 = vmatprep.subr.bf16.mxu0 0
  %4542 = vmatpush1.bf16.msra.mxu0 0
  %4543 = vmatprep.subr.bf16.mxu0 0
  %4544 = vmatpush1.bf16.msra.mxu0 0
  %4545 = vmatprep.subr.bf16.mxu0 0
  %4546 = vmatpush1.bf16.msra.mxu0 0
  %4547 = vmatprep.subr.bf16.mxu0 0
  %4548 = vmatpush1.bf16.msra.mxu0 0
  %4549 = vmatprep.subr.bf16.mxu0 0
  %4550 = vmatpush1.bf16.msra.mxu0 0
  %4551 = vmatprep.mubr.bf16.mxu0 0
  %4552 = vmatmul.mubr.bf16.gmra.mrb[0].mxu0 %v4517
  %v4553 = vpop.f32.mrb[0].mxu0
  %v4554 = vadd.f32 0.0, %v4553
  %v4555 = vpop.f32.mrb[0].mxu0
  %v4556 = vpop.f32.mrb[0].mxu0
  %v4557 = vpop.f32.mrb[0].mxu0
  %4558 = vdwg.mxu0
  %4559 = vmatprep.subr.bf16.mxu0 0
  %4560 = vmatpush1.bf16.msra.mxu0 %v498
  %4561 = vmatprep.subr.bf16.mxu0 0
  %4562 = vmatpush1.bf16.msra.mxu0 0
  %4563 = vmatprep.subr.bf16.mxu0 0
  %4564 = vmatpush1.bf16.msra.mxu0 0
  %4565 = vmatprep.subr.bf16.mxu0 0
  %4566 = vmatpush1.bf16.msra.mxu0 0
  %4567 = vmatprep.subr.bf16.mxu0 0
  %4568 = vmatpush1.bf16.msra.mxu0 0
  %4569 = vmatprep.subr.bf16.mxu0 0
  %4570 = vmatpush1.bf16.msra.mxu0 0
  %4571 = vmatprep.subr.bf16.mxu0 0
  %4572 = vmatpush1.bf16.msra.mxu0 0
  %4573 = vmatprep.subr.bf16.mxu0 0
  %4574 = vmatpush1.bf16.msra.mxu0 0
  %4575 = vmatprep.subr.bf16.mxu0 0
  %4576 = vmatpush1.bf16.msra.mxu0 0
  %4577 = vmatprep.subr.bf16.mxu0 0
  %4578 = vmatpush1.bf16.msra.mxu0 0
  %4579 = vmatprep.subr.bf16.mxu0 0
  %4580 = vmatpush1.bf16.msra.mxu0 0
  %4581 = vmatprep.subr.bf16.mxu0 0
  %4582 = vmatpush1.bf16.msra.mxu0 0
  %4583 = vmatprep.subr.bf16.mxu0 0
  %4584 = vmatpush1.bf16.msra.mxu0 0
  %4585 = vmatprep.subr.bf16.mxu0 0
  %4586 = vmatpush1.bf16.msra.mxu0 0
  %4587 = vmatprep.subr.bf16.mxu0 0
  %4588 = vmatpush1.bf16.msra.mxu0 0
  %4589 = vmatprep.subr.bf16.mxu0 0
  %4590 = vmatpush1.bf16.msra.mxu0 0
  %4591 = vmatprep.mubr.bf16.mxu0 0
  %4592 = vmatmul.mubr.bf16.gmra.mrb[0].mxu0 %v4517
  %v4593 = vpop.f32.mrb[0].mxu0
  %v4594 = vadd.f32 0.0, %v4593
  %v4595 = vpop.f32.mrb[0].mxu0
  %v4596 = vpop.f32.mrb[0].mxu0
  %v4597 = vpop.f32.mrb[0].mxu0
  %4598 = vdwg.mxu0
  %v4599 = vld [vmem:[#allocation2 + $0x10] sm:$0x1]
  %v4600 = vld [vmem:[#allocation2 + $0x30] sm:$0x1]
  %v4602 = vrot.slane %v4554, 1
  %v4605 = vadd.f32 %v4599, %v4554
  %v4606 = vadd.f32 %v4600, %v4602
  %v4607 = vxor.u32 %v4605, 2147483648
  %v4608 = vxor.u32 %v4606, 2147483648
  %v4609 = vmul.f32 %v4607, 1.442695
  %v4610 = vpow.pop %v4609
  %v4611 = vmul.f32 %v4608, 1.442695
  %v4612 = vpow.pop %v4611
  %v4613 = vadd.f32 %v4610, 1.0
  %v4614 = vadd.f32 %v4612, 1.0
  %v4615 = vrcp.pop %v4613
  %v4616 = vmul.f32 1.0, %v4615
  %v4617 = vrcp.pop %v4614
  %v4618 = vmul.f32 1.0, %v4617
  %v4619 = vld [vmem:[#allocation3 + $0x10] sm:$0x1]
  %v4620 = vld [vmem:[#allocation3 + $0x30] sm:$0x1]
  %v4622 = vrot.slane %v4594, 1
  %v4625 = vadd.f32 %v4619, %v4594
  %v4626 = vadd.f32 %v4620, %v4622
  %v4627 = vxor.u32 %v4625, 2147483648
  %v4628 = vxor.u32 %v4626, 2147483648
  %v4629 = vmul.f32 %v4627, 1.442695
  %v4630 = vpow.pop %v4629
  %v4631 = vmul.f32 %v4628, 1.442695
  %v4632 = vpow.pop %v4631
  %v4633 = vadd.f32 %v4630, 1.0
  %v4634 = vadd.f32 %v4632, 1.0
  %v4635 = vrcp.pop %v4633
  %v4636 = vmul.f32 1.0, %v4635
  %v4637 = vrcp.pop %v4634
  %v4638 = vmul.f32 1.0, %v4637
  %v4639 = vld [vmem:[#allocation4 + $0x10] sm:$0x1]
  %v4640 = vld [vmem:[#allocation4 + $0x30] sm:$0x1]
  %4641 = vmatprep.subr.bf16.mxu0 0
  %4642 = vmatpush1.bf16.msra.mxu0 %v590
  %4643 = vmatprep.subr.bf16.mxu0 0
  %4644 = vmatpush1.bf16.msra.mxu0 0
  %4645 = vmatprep.subr.bf16.mxu0 0
  %4646 = vmatpush1.bf16.msra.mxu0 0
  %4647 = vmatprep.subr.bf16.mxu0 0
  %4648 = vmatpush1.bf16.msra.mxu0 0
  %4649 = vmatprep.subr.bf16.mxu0 0
  %4650 = vmatpush1.bf16.msra.mxu0 0
  %4651 = vmatprep.subr.bf16.mxu0 0
  %4652 = vmatpush1.bf16.msra.mxu0 0
  %4653 = vmatprep.subr.bf16.mxu0 0
  %4654 = vmatpush1.bf16.msra.mxu0 0
  %4655 = vmatprep.subr.bf16.mxu0 0
  %4656 = vmatpush1.bf16.msra.mxu0 0
  %4657 = vmatprep.subr.bf16.mxu0 0
  %4658 = vmatpush1.bf16.msra.mxu0 0
  %4659 = vmatprep.subr.bf16.mxu0 0
  %4660 = vmatpush1.bf16.msra.mxu0 0
  %4661 = vmatprep.subr.bf16.mxu0 0
  %4662 = vmatpush1.bf16.msra.mxu0 0
  %4663 = vmatprep.subr.bf16.mxu0 0
  %4664 = vmatpush1.bf16.msra.mxu0 0
  %4665 = vmatprep.subr.bf16.mxu0 0
  %4666 = vmatpush1.bf16.msra.mxu0 0
  %4667 = vmatprep.subr.bf16.mxu0 0
  %4668 = vmatpush1.bf16.msra.mxu0 0
  %4669 = vmatprep.subr.bf16.mxu0 0
  %4670 = vmatpush1.bf16.msra.mxu0 0
  %4671 = vmatprep.subr.bf16.mxu0 0
  %4672 = vmatpush1.bf16.msra.mxu0 0
  %4673 = vmatprep.mubr.bf16.mxu0 0
  %4674 = vmatmul.mubr.bf16.gmra.mrb[0].mxu0 %v4517
  %v4675 = vpop.f32.mrb[0].mxu0
  %v4676 = vadd.f32 %v585, %v4675
  %v4677 = vpop.f32.mrb[0].mxu0
  %v4678 = vpop.f32.mrb[0].mxu0
  %v4679 = vpop.f32.mrb[0].mxu0
  %4680 = vdwg.mxu0
  %v4682 = vrot.slane %v4676, 1
  %v4685 = vmul.f32 %v4616, %v4676
  %v4686 = vmul.f32 %v4618, %v4682
  %v4687 = vadd.f32 %v4639, %v4685
  %v4688 = vadd.f32 %v4640, %v4686
  %v4689 = vtanh.pop %v4687
  %v4690 = vtanh.pop %v4688
  %v4691 = vsub.f32 %v4442, %v4689
  %v4692 = vsub.f32 %v4443, %v4690
  %v4693 = vmul.f32 %v4636, %v4691
  %v4694 = vmul.f32 %v4638, %v4692
  %v4695 = vadd.f32 %v4689, %v4693
  %v4696 = vadd.f32 %v4690, %v4694
  %v4697 = vmax.f32 %v4695, 0.0
  %v4698 = vmax.f32 %v4696, 0.0
  %v4699 = vpack.c.bf16 %v4697, %v4697
  %v4700 = vpack.c.bf16 %v4698, %v4698
  %v4701 = vld [vmem:[%s6 + $0x80] sm:$0xf]
  %v4702 = vld [vmem:[%s6 + $0x84] sm:$0xf]
  %v4705 = vunpack.c.l.b16 %v4699
  %v4706 = vunpack.c.l.b16 %v4700
  %v4707 = vrot.slane %v4706, 7
  %v4708 = vsel %vm659, %v4707, %v4705
  %v4709 = vpack.c.b16 %v4708, %v4708
  %v4712 = vunpack.c.l.b16 %v4701
  %v4713 = vunpack.c.l.b16 %v4702
  %v4714 = vpack.c.b16 %v4713, %v4712
  %v4717 = vsel %vm76, %v4709, 0
  %4719 = vmatprep.subr.bf16.mxu0 0
  %4720 = vmatpush1.bf16.msra.mxu0 %v4714
  %4721 = vmatprep.subr.bf16.mxu0 0
  %4722 = vmatpush1.bf16.msra.mxu0 0
  %4723 = vmatprep.subr.bf16.mxu0 0
  %4724 = vmatpush1.bf16.msra.mxu0 0
  %4725 = vmatprep.subr.bf16.mxu0 0
  %4726 = vmatpush1.bf16.msra.mxu0 0
  %4727 = vmatprep.subr.bf16.mxu0 0
  %4728 = vmatpush1.bf16.msra.mxu0 0
  %4729 = vmatprep.subr.bf16.mxu0 0
  %4730 = vmatpush1.bf16.msra.mxu0 0
  %4731 = vmatprep.subr.bf16.mxu0 0
  %4732 = vmatpush1.bf16.msra.mxu0 0
  %4733 = vmatprep.subr.bf16.mxu0 0
  %4734 = vmatpush1.bf16.msra.mxu0 0
  %4735 = vmatprep.subr.bf16.mxu0 0
  %4736 = vmatpush1.bf16.msra.mxu0 0
  %4737 = vmatprep.subr.bf16.mxu0 0
  %4738 = vmatpush1.bf16.msra.mxu0 0
  %4739 = vmatprep.subr.bf16.mxu0 0
  %4740 = vmatpush1.bf16.msra.mxu0 0
  %4741 = vmatprep.subr.bf16.mxu0 0
  %4742 = vmatpush1.bf16.msra.mxu0 0
  %4743 = vmatprep.subr.bf16.mxu0 0
  %4744 = vmatpush1.bf16.msra.mxu0 0
  %4745 = vmatprep.subr.bf16.mxu0 0
  %4746 = vmatpush1.bf16.msra.mxu0 0
  %4747 = vmatprep.subr.bf16.mxu0 0
  %4748 = vmatpush1.bf16.msra.mxu0 0
  %4749 = vmatprep.subr.bf16.mxu0 0
  %4750 = vmatpush1.bf16.msra.mxu0 0
  %4751 = vmatprep.mubr.bf16.mxu0 0
  %4752 = vmatmul.mubr.bf16.gmra.mrb[0].mxu0 %v4717
  %v4753 = vpop.f32.mrb[0].mxu0
  %v4754 = vadd.f32 0.0, %v4753
  %v4755 = vpop.f32.mrb[0].mxu0
  %v4756 = vpop.f32.mrb[0].mxu0
  %v4757 = vpop.f32.mrb[0].mxu0
  %4758 = vdwg.mxu0
  %v4759 = vadd.f32 %v4506, %v4754
  %v4760 = vpack.c.bf16 %v4695, %v4695
  %v4761 = vpack.c.bf16 %v4696, %v4696
  %v4764 = vunpack.c.l.b16 %v4760
  %v4765 = vunpack.c.l.b16 %v4761
  %v4766 = vrot.slane %v4765, 7
  %v4767 = vsel %vm659, %v4766, %v4764
  %v4768 = vpack.c.b16 %v4767, %v4767
  %v4770 = vsel %vm76, %v4768, 0
  %4772 = vmatprep.subr.bf16.mxu0 0
  %4773 = vmatpush1.bf16.msra.mxu0 %v449
  %4774 = vmatprep.subr.bf16.mxu0 0
  %4775 = vmatpush1.bf16.msra.mxu0 0
  %4776 = vmatprep.subr.bf16.mxu0 0
  %4777 = vmatpush1.bf16.msra.mxu0 0
  %4778 = vmatprep.subr.bf16.mxu0 0
  %4779 = vmatpush1.bf16.msra.mxu0 0
  %4780 = vmatprep.subr.bf16.mxu0 0
  %4781 = vmatpush1.bf16.msra.mxu0 0
  %4782 = vmatprep.subr.bf16.mxu0 0
  %4783 = vmatpush1.bf16.msra.mxu0 0
  %4784 = vmatprep.subr.bf16.mxu0 0
  %4785 = vmatpush1.bf16.msra.mxu0 0
  %4786 = vmatprep.subr.bf16.mxu0 0
  %4787 = vmatpush1.bf16.msra.mxu0 0
  %4788 = vmatprep.subr.bf16.mxu0 0
  %4789 = vmatpush1.bf16.msra.mxu0 0
  %4790 = vmatprep.subr.bf16.mxu0 0
  %4791 = vmatpush1.bf16.msra.mxu0 0
  %4792 = vmatprep.subr.bf16.mxu0 0
  %4793 = vmatpush1.bf16.msra.mxu0 0
  %4794 = vmatprep.subr.bf16.mxu0 0
  %4795 = vmatpush1.bf16.msra.mxu0 0
  %4796 = vmatprep.subr.bf16.mxu0 0
  %4797 = vmatpush1.bf16.msra.mxu0 0
  %4798 = vmatprep.subr.bf16.mxu0 0
  %4799 = vmatpush1.bf16.msra.mxu0 0
  %4800 = vmatprep.subr.bf16.mxu0 0
  %4801 = vmatpush1.bf16.msra.mxu0 0
  %4802 = vmatprep.subr.bf16.mxu0 0
  %4803 = vmatpush1.bf16.msra.mxu0 0
  %4804 = vmatprep.mubr.bf16.mxu0 0
  %4805 = vmatmul.mubr.bf16.gmra.mrb[0].mxu0 %v4770
  %v4806 = vpop.f32.mrb[0].mxu0
  %v4807 = vadd.f32 0.0, %v4806
  %v4808 = vpop.f32.mrb[0].mxu0
  %v4809 = vpop.f32.mrb[0].mxu0
  %v4810 = vpop.f32.mrb[0].mxu0
  %4811 = vdwg.mxu0
  %4812 = vmatprep.subr.bf16.mxu0 0
  %4813 = vmatpush1.bf16.msra.mxu0 %v498
  %4814 = vmatprep.subr.bf16.mxu0 0
  %4815 = vmatpush1.bf16.msra.mxu0 0
  %4816 = vmatprep.subr.bf16.mxu0 0
  %4817 = vmatpush1.bf16.msra.mxu0 0
  %4818 = vmatprep.subr.bf16.mxu0 0
  %4819 = vmatpush1.bf16.msra.mxu0 0
  %4820 = vmatprep.subr.bf16.mxu0 0
  %4821 = vmatpush1.bf16.msra.mxu0 0
  %4822 = vmatprep.subr.bf16.mxu0 0
  %4823 = vmatpush1.bf16.msra.mxu0 0
  %4824 = vmatprep.subr.bf16.mxu0 0
  %4825 = vmatpush1.bf16.msra.mxu0 0
  %4826 = vmatprep.subr.bf16.mxu0 0
  %4827 = vmatpush1.bf16.msra.mxu0 0
  %4828 = vmatprep.subr.bf16.mxu0 0
  %4829 = vmatpush1.bf16.msra.mxu0 0
  %4830 = vmatprep.subr.bf16.mxu0 0
  %4831 = vmatpush1.bf16.msra.mxu0 0
  %4832 = vmatprep.subr.bf16.mxu0 0
  %4833 = vmatpush1.bf16.msra.mxu0 0
  %4834 = vmatprep.subr.bf16.mxu0 0
  %4835 = vmatpush1.bf16.msra.mxu0 0
  %4836 = vmatprep.subr.bf16.mxu0 0
  %4837 = vmatpush1.bf16.msra.mxu0 0
  %4838 = vmatprep.subr.bf16.mxu0 0
  %4839 = vmatpush1.bf16.msra.mxu0 0
  %4840 = vmatprep.subr.bf16.mxu0 0
  %4841 = vmatpush1.bf16.msra.mxu0 0
  %4842 = vmatprep.subr.bf16.mxu0 0
  %4843 = vmatpush1.bf16.msra.mxu0 0
  %4844 = vmatprep.mubr.bf16.mxu0 0
  %4845 = vmatmul.mubr.bf16.gmra.mrb[0].mxu0 %v4770
  %v4846 = vpop.f32.mrb[0].mxu0
  %v4847 = vadd.f32 0.0, %v4846
  %v4848 = vpop.f32.mrb[0].mxu0
  %v4849 = vpop.f32.mrb[0].mxu0
  %v4850 = vpop.f32.mrb[0].mxu0
  %4851 = vdwg.mxu0
  %v4852 = vld [vmem:[#allocation2 + $0x11] sm:$0x1]
  %v4853 = vld [vmem:[#allocation2 + $0x31] sm:$0x1]
  %v4855 = vrot.slane %v4807, 1
  %v4858 = vadd.f32 %v4852, %v4807
  %v4859 = vadd.f32 %v4853, %v4855
  %v4860 = vxor.u32 %v4858, 2147483648
  %v4861 = vxor.u32 %v4859, 2147483648
  %v4862 = vmul.f32 %v4860, 1.442695
  %v4863 = vpow.pop %v4862
  %v4864 = vmul.f32 %v4861, 1.442695
  %v4865 = vpow.pop %v4864
  %v4866 = vadd.f32 %v4863, 1.0
  %v4867 = vadd.f32 %v4865, 1.0
  %v4868 = vrcp.pop %v4866
  %v4869 = vmul.f32 1.0, %v4868
  %v4870 = vrcp.pop %v4867
  %v4871 = vmul.f32 1.0, %v4870
  %v4872 = vld [vmem:[#allocation3 + $0x11] sm:$0x1]
  %v4873 = vld [vmem:[#allocation3 + $0x31] sm:$0x1]
  %v4875 = vrot.slane %v4847, 1
  %v4878 = vadd.f32 %v4872, %v4847
  %v4879 = vadd.f32 %v4873, %v4875
  %v4880 = vxor.u32 %v4878, 2147483648
  %v4881 = vxor.u32 %v4879, 2147483648
  %v4882 = vmul.f32 %v4880, 1.442695
  %v4883 = vpow.pop %v4882
  %v4884 = vmul.f32 %v4881, 1.442695
  %v4885 = vpow.pop %v4884
  %v4886 = vadd.f32 %v4883, 1.0
  %v4887 = vadd.f32 %v4885, 1.0
  %v4888 = vrcp.pop %v4886
  %v4889 = vmul.f32 1.0, %v4888
  %v4890 = vrcp.pop %v4887
  %v4891 = vmul.f32 1.0, %v4890
  %v4892 = vld [vmem:[#allocation4 + $0x11] sm:$0x1]
  %v4893 = vld [vmem:[#allocation4 + $0x31] sm:$0x1]
  %4894 = vmatprep.subr.bf16.mxu0 0
  %4895 = vmatpush1.bf16.msra.mxu0 %v590
  %4896 = vmatprep.subr.bf16.mxu0 0
  %4897 = vmatpush1.bf16.msra.mxu0 0
  %4898 = vmatprep.subr.bf16.mxu0 0
  %4899 = vmatpush1.bf16.msra.mxu0 0
  %4900 = vmatprep.subr.bf16.mxu0 0
  %4901 = vmatpush1.bf16.msra.mxu0 0
  %4902 = vmatprep.subr.bf16.mxu0 0
  %4903 = vmatpush1.bf16.msra.mxu0 0
  %4904 = vmatprep.subr.bf16.mxu0 0
  %4905 = vmatpush1.bf16.msra.mxu0 0
  %4906 = vmatprep.subr.bf16.mxu0 0
  %4907 = vmatpush1.bf16.msra.mxu0 0
  %4908 = vmatprep.subr.bf16.mxu0 0
  %4909 = vmatpush1.bf16.msra.mxu0 0
  %4910 = vmatprep.subr.bf16.mxu0 0
  %4911 = vmatpush1.bf16.msra.mxu0 0
  %4912 = vmatprep.subr.bf16.mxu0 0
  %4913 = vmatpush1.bf16.msra.mxu0 0
  %4914 = vmatprep.subr.bf16.mxu0 0
  %4915 = vmatpush1.bf16.msra.mxu0 0
  %4916 = vmatprep.subr.bf16.mxu0 0
  %4917 = vmatpush1.bf16.msra.mxu0 0
  %4918 = vmatprep.subr.bf16.mxu0 0
  %4919 = vmatpush1.bf16.msra.mxu0 0
  %4920 = vmatprep.subr.bf16.mxu0 0
  %4921 = vmatpush1.bf16.msra.mxu0 0
  %4922 = vmatprep.subr.bf16.mxu0 0
  %4923 = vmatpush1.bf16.msra.mxu0 0
  %4924 = vmatprep.subr.bf16.mxu0 0
  %4925 = vmatpush1.bf16.msra.mxu0 0
  %4926 = vmatprep.mubr.bf16.mxu0 0
  %4927 = vmatmul.mubr.bf16.gmra.mrb[0].mxu0 %v4770
  %v4928 = vpop.f32.mrb[0].mxu0
  %v4929 = vadd.f32 %v585, %v4928
  %v4930 = vpop.f32.mrb[0].mxu0
  %v4931 = vpop.f32.mrb[0].mxu0
  %v4932 = vpop.f32.mrb[0].mxu0
  %4933 = vdwg.mxu0
  %v4935 = vrot.slane %v4929, 1
  %v4938 = vmul.f32 %v4869, %v4929
  %v4939 = vmul.f32 %v4871, %v4935
  %v4940 = vadd.f32 %v4892, %v4938
  %v4941 = vadd.f32 %v4893, %v4939
  %v4942 = vtanh.pop %v4940
  %v4943 = vtanh.pop %v4941
  %v4944 = vsub.f32 %v4695, %v4942
  %v4945 = vsub.f32 %v4696, %v4943
  %v4946 = vmul.f32 %v4889, %v4944
  %v4947 = vmul.f32 %v4891, %v4945
  %v4948 = vadd.f32 %v4942, %v4946
  %v4949 = vadd.f32 %v4943, %v4947
  %v4950 = vmax.f32 %v4948, 0.0
  %v4951 = vmax.f32 %v4949, 0.0
  %v4952 = vpack.c.bf16 %v4950, %v4950
  %v4953 = vpack.c.bf16 %v4951, %v4951
  %v4954 = vld [vmem:[%s6 + $0x88] sm:$0xf]
  %v4955 = vld [vmem:[%s6 + $0x8c] sm:$0xf]
  %v4958 = vunpack.c.l.b16 %v4952
  %v4959 = vunpack.c.l.b16 %v4953
  %v4960 = vrot.slane %v4959, 7
  %v4961 = vsel %vm659, %v4960, %v4958
  %v4962 = vpack.c.b16 %v4961, %v4961
  %v4965 = vunpack.c.l.b16 %v4954
  %v4966 = vunpack.c.l.b16 %v4955
  %v4967 = vpack.c.b16 %v4966, %v4965
  %v4970 = vsel %vm76, %v4962, 0
  %4972 = vmatprep.subr.bf16.mxu0 0
  %4973 = vmatpush1.bf16.msra.mxu0 %v4967
  %4974 = vmatprep.subr.bf16.mxu0 0
  %4975 = vmatpush1.bf16.msra.mxu0 0
  %4976 = vmatprep.subr.bf16.mxu0 0
  %4977 = vmatpush1.bf16.msra.mxu0 0
  %4978 = vmatprep.subr.bf16.mxu0 0
  %4979 = vmatpush1.bf16.msra.mxu0 0
  %4980 = vmatprep.subr.bf16.mxu0 0
  %4981 = vmatpush1.bf16.msra.mxu0 0
  %4982 = vmatprep.subr.bf16.mxu0 0
  %4983 = vmatpush1.bf16.msra.mxu0 0
  %4984 = vmatprep.subr.bf16.mxu0 0
  %4985 = vmatpush1.bf16.msra.mxu0 0
  %4986 = vmatprep.subr.bf16.mxu0 0
  %4987 = vmatpush1.bf16.msra.mxu0 0
  %4988 = vmatprep.subr.bf16.mxu0 0
  %4989 = vmatpush1.bf16.msra.mxu0 0
  %4990 = vmatprep.subr.bf16.mxu0 0
  %4991 = vmatpush1.bf16.msra.mxu0 0
  %4992 = vmatprep.subr.bf16.mxu0 0
  %4993 = vmatpush1.bf16.msra.mxu0 0
  %4994 = vmatprep.subr.bf16.mxu0 0
  %4995 = vmatpush1.bf16.msra.mxu0 0
  %4996 = vmatprep.subr.bf16.mxu0 0
  %4997 = vmatpush1.bf16.msra.mxu0 0
  %4998 = vmatprep.subr.bf16.mxu0 0
  %4999 = vmatpush1.bf16.msra.mxu0 0
  %5000 = vmatprep.subr.bf16.mxu0 0
  %5001 = vmatpush1.bf16.msra.mxu0 0
  %5002 = vmatprep.subr.bf16.mxu0 0
  %5003 = vmatpush1.bf16.msra.mxu0 0
  %5004 = vmatprep.mubr.bf16.mxu0 0
  %5005 = vmatmul.mubr.bf16.gmra.mrb[0].mxu0 %v4970
  %v5006 = vpop.f32.mrb[0].mxu0
  %v5007 = vadd.f32 0.0, %v5006
  %v5008 = vpop.f32.mrb[0].mxu0
  %v5009 = vpop.f32.mrb[0].mxu0
  %v5010 = vpop.f32.mrb[0].mxu0
  %5011 = vdwg.mxu0
  %v5012 = vadd.f32 %v4759, %v5007
  %v5013 = vpack.c.bf16 %v4948, %v4948
  %v5014 = vpack.c.bf16 %v4949, %v4949
  %v5017 = vunpack.c.l.b16 %v5013
  %v5018 = vunpack.c.l.b16 %v5014
  %v5019 = vrot.slane %v5018, 7
  %v5020 = vsel %vm659, %v5019, %v5017
  %v5021 = vpack.c.b16 %v5020, %v5020
  %v5023 = vsel %vm76, %v5021, 0
  %5025 = vmatprep.subr.bf16.mxu0 0
  %5026 = vmatpush1.bf16.msra.mxu0 %v449
  %5027 = vmatprep.subr.bf16.mxu0 0
  %5028 = vmatpush1.bf16.msra.mxu0 0
  %5029 = vmatprep.subr.bf16.mxu0 0
  %5030 = vmatpush1.bf16.msra.mxu0 0
  %5031 = vmatprep.subr.bf16.mxu0 0
  %5032 = vmatpush1.bf16.msra.mxu0 0
  %5033 = vmatprep.subr.bf16.mxu0 0
  %5034 = vmatpush1.bf16.msra.mxu0 0
  %5035 = vmatprep.subr.bf16.mxu0 0
  %5036 = vmatpush1.bf16.msra.mxu0 0
  %5037 = vmatprep.subr.bf16.mxu0 0
  %5038 = vmatpush1.bf16.msra.mxu0 0
  %5039 = vmatprep.subr.bf16.mxu0 0
  %5040 = vmatpush1.bf16.msra.mxu0 0
  %5041 = vmatprep.subr.bf16.mxu0 0
  %5042 = vmatpush1.bf16.msra.mxu0 0
  %5043 = vmatprep.subr.bf16.mxu0 0
  %5044 = vmatpush1.bf16.msra.mxu0 0
  %5045 = vmatprep.subr.bf16.mxu0 0
  %5046 = vmatpush1.bf16.msra.mxu0 0
  %5047 = vmatprep.subr.bf16.mxu0 0
  %5048 = vmatpush1.bf16.msra.mxu0 0
  %5049 = vmatprep.subr.bf16.mxu0 0
  %5050 = vmatpush1.bf16.msra.mxu0 0
  %5051 = vmatprep.subr.bf16.mxu0 0
  %5052 = vmatpush1.bf16.msra.mxu0 0
  %5053 = vmatprep.subr.bf16.mxu0 0
  %5054 = vmatpush1.bf16.msra.mxu0 0
  %5055 = vmatprep.subr.bf16.mxu0 0
  %5056 = vmatpush1.bf16.msra.mxu0 0
  %5057 = vmatprep.mubr.bf16.mxu0 0
  %5058 = vmatmul.mubr.bf16.gmra.mrb[0].mxu0 %v5023
  %v5059 = vpop.f32.mrb[0].mxu0
  %v5060 = vadd.f32 0.0, %v5059
  %v5061 = vpop.f32.mrb[0].mxu0
  %v5062 = vpop.f32.mrb[0].mxu0
  %v5063 = vpop.f32.mrb[0].mxu0
  %5064 = vdwg.mxu0
  %5065 = vmatprep.subr.bf16.mxu0 0
  %5066 = vmatpush1.bf16.msra.mxu0 %v498
  %5067 = vmatprep.subr.bf16.mxu0 0
  %5068 = vmatpush1.bf16.msra.mxu0 0
  %5069 = vmatprep.subr.bf16.mxu0 0
  %5070 = vmatpush1.bf16.msra.mxu0 0
  %5071 = vmatprep.subr.bf16.mxu0 0
  %5072 = vmatpush1.bf16.msra.mxu0 0
  %5073 = vmatprep.subr.bf16.mxu0 0
  %5074 = vmatpush1.bf16.msra.mxu0 0
  %5075 = vmatprep.subr.bf16.mxu0 0
  %5076 = vmatpush1.bf16.msra.mxu0 0
  %5077 = vmatprep.subr.bf16.mxu0 0
  %5078 = vmatpush1.bf16.msra.mxu0 0
  %5079 = vmatprep.subr.bf16.mxu0 0
  %5080 = vmatpush1.bf16.msra.mxu0 0
  %5081 = vmatprep.subr.bf16.mxu0 0
  %5082 = vmatpush1.bf16.msra.mxu0 0
  %5083 = vmatprep.subr.bf16.mxu0 0
  %5084 = vmatpush1.bf16.msra.mxu0 0
  %5085 = vmatprep.subr.bf16.mxu0 0
  %5086 = vmatpush1.bf16.msra.mxu0 0
  %5087 = vmatprep.subr.bf16.mxu0 0
  %5088 = vmatpush1.bf16.msra.mxu0 0
  %5089 = vmatprep.subr.bf16.mxu0 0
  %5090 = vmatpush1.bf16.msra.mxu0 0
  %5091 = vmatprep.subr.bf16.mxu0 0
  %5092 = vmatpush1.bf16.msra.mxu0 0
  %5093 = vmatprep.subr.bf16.mxu0 0
  %5094 = vmatpush1.bf16.msra.mxu0 0
  %5095 = vmatprep.subr.bf16.mxu0 0
  %5096 = vmatpush1.bf16.msra.mxu0 0
  %5097 = vmatprep.mubr.bf16.mxu0 0
  %5098 = vmatmul.mubr.bf16.gmra.mrb[0].mxu0 %v5023
  %v5099 = vpop.f32.mrb[0].mxu0
  %v5100 = vadd.f32 0.0, %v5099
  %v5101 = vpop.f32.mrb[0].mxu0
  %v5102 = vpop.f32.mrb[0].mxu0
  %v5103 = vpop.f32.mrb[0].mxu0
  %5104 = vdwg.mxu0
  %v5105 = vld [vmem:[#allocation2 + $0x12] sm:$0x1]
  %v5106 = vld [vmem:[#allocation2 + $0x32] sm:$0x1]
  %v5108 = vrot.slane %v5060, 1
  %v5111 = vadd.f32 %v5105, %v5060
  %v5112 = vadd.f32 %v5106, %v5108
  %v5113 = vxor.u32 %v5111, 2147483648
  %v5114 = vxor.u32 %v5112, 2147483648
  %v5115 = vmul.f32 %v5113, 1.442695
  %v5116 = vpow.pop %v5115
  %v5117 = vmul.f32 %v5114, 1.442695
  %v5118 = vpow.pop %v5117
  %v5119 = vadd.f32 %v5116, 1.0
  %v5120 = vadd.f32 %v5118, 1.0
  %v5121 = vrcp.pop %v5119
  %v5122 = vmul.f32 1.0, %v5121
  %v5123 = vrcp.pop %v5120
  %v5124 = vmul.f32 1.0, %v5123
  %v5125 = vld [vmem:[#allocation3 + $0x12] sm:$0x1]
  %v5126 = vld [vmem:[#allocation3 + $0x32] sm:$0x1]
  %v5128 = vrot.slane %v5100, 1
  %v5131 = vadd.f32 %v5125, %v5100
  %v5132 = vadd.f32 %v5126, %v5128
  %v5133 = vxor.u32 %v5131, 2147483648
  %v5134 = vxor.u32 %v5132, 2147483648
  %v5135 = vmul.f32 %v5133, 1.442695
  %v5136 = vpow.pop %v5135
  %v5137 = vmul.f32 %v5134, 1.442695
  %v5138 = vpow.pop %v5137
  %v5139 = vadd.f32 %v5136, 1.0
  %v5140 = vadd.f32 %v5138, 1.0
  %v5141 = vrcp.pop %v5139
  %v5142 = vmul.f32 1.0, %v5141
  %v5143 = vrcp.pop %v5140
  %v5144 = vmul.f32 1.0, %v5143
  %v5145 = vld [vmem:[#allocation4 + $0x12] sm:$0x1]
  %v5146 = vld [vmem:[#allocation4 + $0x32] sm:$0x1]
  %5147 = vmatprep.subr.bf16.mxu0 0
  %5148 = vmatpush1.bf16.msra.mxu0 %v590
  %5149 = vmatprep.subr.bf16.mxu0 0
  %5150 = vmatpush1.bf16.msra.mxu0 0
  %5151 = vmatprep.subr.bf16.mxu0 0
  %5152 = vmatpush1.bf16.msra.mxu0 0
  %5153 = vmatprep.subr.bf16.mxu0 0
  %5154 = vmatpush1.bf16.msra.mxu0 0
  %5155 = vmatprep.subr.bf16.mxu0 0
  %5156 = vmatpush1.bf16.msra.mxu0 0
  %5157 = vmatprep.subr.bf16.mxu0 0
  %5158 = vmatpush1.bf16.msra.mxu0 0
  %5159 = vmatprep.subr.bf16.mxu0 0
  %5160 = vmatpush1.bf16.msra.mxu0 0
  %5161 = vmatprep.subr.bf16.mxu0 0
  %5162 = vmatpush1.bf16.msra.mxu0 0
  %5163 = vmatprep.subr.bf16.mxu0 0
  %5164 = vmatpush1.bf16.msra.mxu0 0
  %5165 = vmatprep.subr.bf16.mxu0 0
  %5166 = vmatpush1.bf16.msra.mxu0 0
  %5167 = vmatprep.subr.bf16.mxu0 0
  %5168 = vmatpush1.bf16.msra.mxu0 0
  %5169 = vmatprep.subr.bf16.mxu0 0
  %5170 = vmatpush1.bf16.msra.mxu0 0
  %5171 = vmatprep.subr.bf16.mxu0 0
  %5172 = vmatpush1.bf16.msra.mxu0 0
  %5173 = vmatprep.subr.bf16.mxu0 0
  %5174 = vmatpush1.bf16.msra.mxu0 0
  %5175 = vmatprep.subr.bf16.mxu0 0
  %5176 = vmatpush1.bf16.msra.mxu0 0
  %5177 = vmatprep.subr.bf16.mxu0 0
  %5178 = vmatpush1.bf16.msra.mxu0 0
  %5179 = vmatprep.mubr.bf16.mxu0 0
  %5180 = vmatmul.mubr.bf16.gmra.mrb[0].mxu0 %v5023
  %v5181 = vpop.f32.mrb[0].mxu0
  %v5182 = vadd.f32 %v585, %v5181
  %v5183 = vpop.f32.mrb[0].mxu0
  %v5184 = vpop.f32.mrb[0].mxu0
  %v5185 = vpop.f32.mrb[0].mxu0
  %5186 = vdwg.mxu0
  %v5188 = vrot.slane %v5182, 1
  %v5191 = vmul.f32 %v5122, %v5182
  %v5192 = vmul.f32 %v5124, %v5188
  %v5193 = vadd.f32 %v5145, %v5191
  %v5194 = vadd.f32 %v5146, %v5192
  %v5195 = vtanh.pop %v5193
  %v5196 = vtanh.pop %v5194
  %v5197 = vsub.f32 %v4948, %v5195
  %v5198 = vsub.f32 %v4949, %v5196
  %v5199 = vmul.f32 %v5142, %v5197
  %v5200 = vmul.f32 %v5144, %v5198
  %v5201 = vadd.f32 %v5195, %v5199
  %v5202 = vadd.f32 %v5196, %v5200
  %v5203 = vmax.f32 %v5201, 0.0
  %v5204 = vmax.f32 %v5202, 0.0
  %v5205 = vpack.c.bf16 %v5203, %v5203
  %v5206 = vpack.c.bf16 %v5204, %v5204
  %v5207 = vld [vmem:[%s6 + $0x90] sm:$0xf]
  %v5208 = vld [vmem:[%s6 + $0x94] sm:$0xf]
  %v5211 = vunpack.c.l.b16 %v5205
  %v5212 = vunpack.c.l.b16 %v5206
  %v5213 = vrot.slane %v5212, 7
  %v5214 = vsel %vm659, %v5213, %v5211
  %v5215 = vpack.c.b16 %v5214, %v5214
  %v5218 = vunpack.c.l.b16 %v5207
  %v5219 = vunpack.c.l.b16 %v5208
  %v5220 = vpack.c.b16 %v5219, %v5218
  %v5223 = vsel %vm76, %v5215, 0
  %5225 = vmatprep.subr.bf16.mxu0 0
  %5226 = vmatpush1.bf16.msra.mxu0 %v5220
  %5227 = vmatprep.subr.bf16.mxu0 0
  %5228 = vmatpush1.bf16.msra.mxu0 0
  %5229 = vmatprep.subr.bf16.mxu0 0
  %5230 = vmatpush1.bf16.msra.mxu0 0
  %5231 = vmatprep.subr.bf16.mxu0 0
  %5232 = vmatpush1.bf16.msra.mxu0 0
  %5233 = vmatprep.subr.bf16.mxu0 0
  %5234 = vmatpush1.bf16.msra.mxu0 0
  %5235 = vmatprep.subr.bf16.mxu0 0
  %5236 = vmatpush1.bf16.msra.mxu0 0
  %5237 = vmatprep.subr.bf16.mxu0 0
  %5238 = vmatpush1.bf16.msra.mxu0 0
  %5239 = vmatprep.subr.bf16.mxu0 0
  %5240 = vmatpush1.bf16.msra.mxu0 0
  %5241 = vmatprep.subr.bf16.mxu0 0
  %5242 = vmatpush1.bf16.msra.mxu0 0
  %5243 = vmatprep.subr.bf16.mxu0 0
  %5244 = vmatpush1.bf16.msra.mxu0 0
  %5245 = vmatprep.subr.bf16.mxu0 0
  %5246 = vmatpush1.bf16.msra.mxu0 0
  %5247 = vmatprep.subr.bf16.mxu0 0
  %5248 = vmatpush1.bf16.msra.mxu0 0
  %5249 = vmatprep.subr.bf16.mxu0 0
  %5250 = vmatpush1.bf16.msra.mxu0 0
  %5251 = vmatprep.subr.bf16.mxu0 0
  %5252 = vmatpush1.bf16.msra.mxu0 0
  %5253 = vmatprep.subr.bf16.mxu0 0
  %5254 = vmatpush1.bf16.msra.mxu0 0
  %5255 = vmatprep.subr.bf16.mxu0 0
  %5256 = vmatpush1.bf16.msra.mxu0 0
  %5257 = vmatprep.mubr.bf16.mxu0 0
  %5258 = vmatmul.mubr.bf16.gmra.mrb[0].mxu0 %v5223
  %v5259 = vpop.f32.mrb[0].mxu0
  %v5260 = vadd.f32 0.0, %v5259
  %v5261 = vpop.f32.mrb[0].mxu0
  %v5262 = vpop.f32.mrb[0].mxu0
  %v5263 = vpop.f32.mrb[0].mxu0
  %5264 = vdwg.mxu0
  %v5265 = vadd.f32 %v5012, %v5260
  %v5266 = vpack.c.bf16 %v5201, %v5201
  %v5267 = vpack.c.bf16 %v5202, %v5202
  %v5270 = vunpack.c.l.b16 %v5266
  %v5271 = vunpack.c.l.b16 %v5267
  %v5272 = vrot.slane %v5271, 7
  %v5273 = vsel %vm659, %v5272, %v5270
  %v5274 = vpack.c.b16 %v5273, %v5273
  %v5276 = vsel %vm76, %v5274, 0
  %5278 = vmatprep.subr.bf16.mxu0 0
  %5279 = vmatpush1.bf16.msra.mxu0 %v449
  %5280 = vmatprep.subr.bf16.mxu0 0
  %5281 = vmatpush1.bf16.msra.mxu0 0
  %5282 = vmatprep.subr.bf16.mxu0 0
  %5283 = vmatpush1.bf16.msra.mxu0 0
  %5284 = vmatprep.subr.bf16.mxu0 0
  %5285 = vmatpush1.bf16.msra.mxu0 0
  %5286 = vmatprep.subr.bf16.mxu0 0
  %5287 = vmatpush1.bf16.msra.mxu0 0
  %5288 = vmatprep.subr.bf16.mxu0 0
  %5289 = vmatpush1.bf16.msra.mxu0 0
  %5290 = vmatprep.subr.bf16.mxu0 0
  %5291 = vmatpush1.bf16.msra.mxu0 0
  %5292 = vmatprep.subr.bf16.mxu0 0
  %5293 = vmatpush1.bf16.msra.mxu0 0
  %5294 = vmatprep.subr.bf16.mxu0 0
  %5295 = vmatpush1.bf16.msra.mxu0 0
  %5296 = vmatprep.subr.bf16.mxu0 0
  %5297 = vmatpush1.bf16.msra.mxu0 0
  %5298 = vmatprep.subr.bf16.mxu0 0
  %5299 = vmatpush1.bf16.msra.mxu0 0
  %5300 = vmatprep.subr.bf16.mxu0 0
  %5301 = vmatpush1.bf16.msra.mxu0 0
  %5302 = vmatprep.subr.bf16.mxu0 0
  %5303 = vmatpush1.bf16.msra.mxu0 0
  %5304 = vmatprep.subr.bf16.mxu0 0
  %5305 = vmatpush1.bf16.msra.mxu0 0
  %5306 = vmatprep.subr.bf16.mxu0 0
  %5307 = vmatpush1.bf16.msra.mxu0 0
  %5308 = vmatprep.subr.bf16.mxu0 0
  %5309 = vmatpush1.bf16.msra.mxu0 0
  %5310 = vmatprep.mubr.bf16.mxu0 0
  %5311 = vmatmul.mubr.bf16.gmra.mrb[0].mxu0 %v5276
  %v5312 = vpop.f32.mrb[0].mxu0
  %v5313 = vadd.f32 0.0, %v5312
  %v5314 = vpop.f32.mrb[0].mxu0
  %v5315 = vpop.f32.mrb[0].mxu0
  %v5316 = vpop.f32.mrb[0].mxu0
  %5317 = vdwg.mxu0
  %5318 = vmatprep.subr.bf16.mxu0 0
  %5319 = vmatpush1.bf16.msra.mxu0 %v498
  %5320 = vmatprep.subr.bf16.mxu0 0
  %5321 = vmatpush1.bf16.msra.mxu0 0
  %5322 = vmatprep.subr.bf16.mxu0 0
  %5323 = vmatpush1.bf16.msra.mxu0 0
  %5324 = vmatprep.subr.bf16.mxu0 0
  %5325 = vmatpush1.bf16.msra.mxu0 0
  %5326 = vmatprep.subr.bf16.mxu0 0
  %5327 = vmatpush1.bf16.msra.mxu0 0
  %5328 = vmatprep.subr.bf16.mxu0 0
  %5329 = vmatpush1.bf16.msra.mxu0 0
  %5330 = vmatprep.subr.bf16.mxu0 0
  %5331 = vmatpush1.bf16.msra.mxu0 0
  %5332 = vmatprep.subr.bf16.mxu0 0
  %5333 = vmatpush1.bf16.msra.mxu0 0
  %5334 = vmatprep.subr.bf16.mxu0 0
  %5335 = vmatpush1.bf16.msra.mxu0 0
  %5336 = vmatprep.subr.bf16.mxu0 0
  %5337 = vmatpush1.bf16.msra.mxu0 0
  %5338 = vmatprep.subr.bf16.mxu0 0
  %5339 = vmatpush1.bf16.msra.mxu0 0
  %5340 = vmatprep.subr.bf16.mxu0 0
  %5341 = vmatpush1.bf16.msra.mxu0 0
  %5342 = vmatprep.subr.bf16.mxu0 0
  %5343 = vmatpush1.bf16.msra.mxu0 0
  %5344 = vmatprep.subr.bf16.mxu0 0
  %5345 = vmatpush1.bf16.msra.mxu0 0
  %5346 = vmatprep.subr.bf16.mxu0 0
  %5347 = vmatpush1.bf16.msra.mxu0 0
  %5348 = vmatprep.subr.bf16.mxu0 0
  %5349 = vmatpush1.bf16.msra.mxu0 0
  %5350 = vmatprep.mubr.bf16.mxu0 0
  %5351 = vmatmul.mubr.bf16.gmra.mrb[0].mxu0 %v5276
  %v5352 = vpop.f32.mrb[0].mxu0
  %v5353 = vadd.f32 0.0, %v5352
  %v5354 = vpop.f32.mrb[0].mxu0
  %v5355 = vpop.f32.mrb[0].mxu0
  %v5356 = vpop.f32.mrb[0].mxu0
  %5357 = vdwg.mxu0
  %v5358 = vld [vmem:[#allocation2 + $0x13] sm:$0x1]
  %v5359 = vld [vmem:[#allocation2 + $0x33] sm:$0x1]
  %v5361 = vrot.slane %v5313, 1
  %v5364 = vadd.f32 %v5358, %v5313
  %v5365 = vadd.f32 %v5359, %v5361
  %v5366 = vxor.u32 %v5364, 2147483648
  %v5367 = vxor.u32 %v5365, 2147483648
  %v5368 = vmul.f32 %v5366, 1.442695
  %v5369 = vpow.pop %v5368
  %v5370 = vmul.f32 %v5367, 1.442695
  %v5371 = vpow.pop %v5370
  %v5372 = vadd.f32 %v5369, 1.0
  %v5373 = vadd.f32 %v5371, 1.0
  %v5374 = vrcp.pop %v5372
  %v5375 = vmul.f32 1.0, %v5374
  %v5376 = vrcp.pop %v5373
  %v5377 = vmul.f32 1.0, %v5376
  %v5378 = vld [vmem:[#allocation3 + $0x13] sm:$0x1]
  %v5379 = vld [vmem:[#allocation3 + $0x33] sm:$0x1]
  %v5381 = vrot.slane %v5353, 1
  %v5384 = vadd.f32 %v5378, %v5353
  %v5385 = vadd.f32 %v5379, %v5381
  %v5386 = vxor.u32 %v5384, 2147483648
  %v5387 = vxor.u32 %v5385, 2147483648
  %v5388 = vmul.f32 %v5386, 1.442695
  %v5389 = vpow.pop %v5388
  %v5390 = vmul.f32 %v5387, 1.442695
  %v5391 = vpow.pop %v5390
  %v5392 = vadd.f32 %v5389, 1.0
  %v5393 = vadd.f32 %v5391, 1.0
  %v5394 = vrcp.pop %v5392
  %v5395 = vmul.f32 1.0, %v5394
  %v5396 = vrcp.pop %v5393
  %v5397 = vmul.f32 1.0, %v5396
  %v5398 = vld [vmem:[#allocation4 + $0x13] sm:$0x1]
  %v5399 = vld [vmem:[#allocation4 + $0x33] sm:$0x1]
  %5400 = vmatprep.subr.bf16.mxu0 0
  %5401 = vmatpush1.bf16.msra.mxu0 %v590
  %5402 = vmatprep.subr.bf16.mxu0 0
  %5403 = vmatpush1.bf16.msra.mxu0 0
  %5404 = vmatprep.subr.bf16.mxu0 0
  %5405 = vmatpush1.bf16.msra.mxu0 0
  %5406 = vmatprep.subr.bf16.mxu0 0
  %5407 = vmatpush1.bf16.msra.mxu0 0
  %5408 = vmatprep.subr.bf16.mxu0 0
  %5409 = vmatpush1.bf16.msra.mxu0 0
  %5410 = vmatprep.subr.bf16.mxu0 0
  %5411 = vmatpush1.bf16.msra.mxu0 0
  %5412 = vmatprep.subr.bf16.mxu0 0
  %5413 = vmatpush1.bf16.msra.mxu0 0
  %5414 = vmatprep.subr.bf16.mxu0 0
  %5415 = vmatpush1.bf16.msra.mxu0 0
  %5416 = vmatprep.subr.bf16.mxu0 0
  %5417 = vmatpush1.bf16.msra.mxu0 0
  %5418 = vmatprep.subr.bf16.mxu0 0
  %5419 = vmatpush1.bf16.msra.mxu0 0
  %5420 = vmatprep.subr.bf16.mxu0 0
  %5421 = vmatpush1.bf16.msra.mxu0 0
  %5422 = vmatprep.subr.bf16.mxu0 0
  %5423 = vmatpush1.bf16.msra.mxu0 0
  %5424 = vmatprep.subr.bf16.mxu0 0
  %5425 = vmatpush1.bf16.msra.mxu0 0
  %5426 = vmatprep.subr.bf16.mxu0 0
  %5427 = vmatpush1.bf16.msra.mxu0 0
  %5428 = vmatprep.subr.bf16.mxu0 0
  %5429 = vmatpush1.bf16.msra.mxu0 0
  %5430 = vmatprep.subr.bf16.mxu0 0
  %5431 = vmatpush1.bf16.msra.mxu0 0
  %5432 = vmatprep.mubr.bf16.mxu0 0
  %5433 = vmatmul.mubr.bf16.gmra.mrb[0].mxu0 %v5276
  %v5434 = vpop.f32.mrb[0].mxu0
  %v5435 = vadd.f32 %v585, %v5434
  %v5436 = vpop.f32.mrb[0].mxu0
  %v5437 = vpop.f32.mrb[0].mxu0
  %v5438 = vpop.f32.mrb[0].mxu0
  %5439 = vdwg.mxu0
  %v5441 = vrot.slane %v5435, 1
  %v5444 = vmul.f32 %v5375, %v5435
  %v5445 = vmul.f32 %v5377, %v5441
  %v5446 = vadd.f32 %v5398, %v5444
  %v5447 = vadd.f32 %v5399, %v5445
  %v5448 = vtanh.pop %v5446
  %v5449 = vtanh.pop %v5447
  %v5450 = vsub.f32 %v5201, %v5448
  %v5451 = vsub.f32 %v5202, %v5449
  %v5452 = vmul.f32 %v5395, %v5450
  %v5453 = vmul.f32 %v5397, %v5451
  %v5454 = vadd.f32 %v5448, %v5452
  %v5455 = vadd.f32 %v5449, %v5453
  %v5456 = vmax.f32 %v5454, 0.0
  %v5457 = vmax.f32 %v5455, 0.0
  %v5458 = vpack.c.bf16 %v5456, %v5456
  %v5459 = vpack.c.bf16 %v5457, %v5457
  %v5460 = vld [vmem:[%s6 + $0x98] sm:$0xf]
  %v5461 = vld [vmem:[%s6 + $0x9c] sm:$0xf]
  %v5464 = vunpack.c.l.b16 %v5458
  %v5465 = vunpack.c.l.b16 %v5459
  %v5466 = vrot.slane %v5465, 7
  %v5467 = vsel %vm659, %v5466, %v5464
  %v5468 = vpack.c.b16 %v5467, %v5467
  %v5471 = vunpack.c.l.b16 %v5460
  %v5472 = vunpack.c.l.b16 %v5461
  %v5473 = vpack.c.b16 %v5472, %v5471
  %v5476 = vsel %vm76, %v5468, 0
  %5478 = vmatprep.subr.bf16.mxu0 0
  %5479 = vmatpush1.bf16.msra.mxu0 %v5473
  %5480 = vmatprep.subr.bf16.mxu0 0
  %5481 = vmatpush1.bf16.msra.mxu0 0
  %5482 = vmatprep.subr.bf16.mxu0 0
  %5483 = vmatpush1.bf16.msra.mxu0 0
  %5484 = vmatprep.subr.bf16.mxu0 0
  %5485 = vmatpush1.bf16.msra.mxu0 0
  %5486 = vmatprep.subr.bf16.mxu0 0
  %5487 = vmatpush1.bf16.msra.mxu0 0
  %5488 = vmatprep.subr.bf16.mxu0 0
  %5489 = vmatpush1.bf16.msra.mxu0 0
  %5490 = vmatprep.subr.bf16.mxu0 0
  %5491 = vmatpush1.bf16.msra.mxu0 0
  %5492 = vmatprep.subr.bf16.mxu0 0
  %5493 = vmatpush1.bf16.msra.mxu0 0
  %5494 = vmatprep.subr.bf16.mxu0 0
  %5495 = vmatpush1.bf16.msra.mxu0 0
  %5496 = vmatprep.subr.bf16.mxu0 0
  %5497 = vmatpush1.bf16.msra.mxu0 0
  %5498 = vmatprep.subr.bf16.mxu0 0
  %5499 = vmatpush1.bf16.msra.mxu0 0
  %5500 = vmatprep.subr.bf16.mxu0 0
  %5501 = vmatpush1.bf16.msra.mxu0 0
  %5502 = vmatprep.subr.bf16.mxu0 0
  %5503 = vmatpush1.bf16.msra.mxu0 0
  %5504 = vmatprep.subr.bf16.mxu0 0
  %5505 = vmatpush1.bf16.msra.mxu0 0
  %5506 = vmatprep.subr.bf16.mxu0 0
  %5507 = vmatpush1.bf16.msra.mxu0 0
  %5508 = vmatprep.subr.bf16.mxu0 0
  %5509 = vmatpush1.bf16.msra.mxu0 0
  %5510 = vmatprep.mubr.bf16.mxu0 0
  %5511 = vmatmul.mubr.bf16.gmra.mrb[0].mxu0 %v5476
  %v5512 = vpop.f32.mrb[0].mxu0
  %v5513 = vadd.f32 0.0, %v5512
  %v5514 = vpop.f32.mrb[0].mxu0
  %v5515 = vpop.f32.mrb[0].mxu0
  %v5516 = vpop.f32.mrb[0].mxu0
  %5517 = vdwg.mxu0
  %v5518 = vadd.f32 %v5265, %v5513
  %v5519 = vpack.c.bf16 %v5454, %v5454
  %v5520 = vpack.c.bf16 %v5455, %v5455
  %v5523 = vunpack.c.l.b16 %v5519
  %v5524 = vunpack.c.l.b16 %v5520
  %v5525 = vrot.slane %v5524, 7
  %v5526 = vsel %vm659, %v5525, %v5523
  %v5527 = vpack.c.b16 %v5526, %v5526
  %v5529 = vsel %vm76, %v5527, 0
  %5531 = vmatprep.subr.bf16.mxu0 0
  %5532 = vmatpush1.bf16.msra.mxu0 %v449
  %5533 = vmatprep.subr.bf16.mxu0 0
  %5534 = vmatpush1.bf16.msra.mxu0 0
  %5535 = vmatprep.subr.bf16.mxu0 0
  %5536 = vmatpush1.bf16.msra.mxu0 0
  %5537 = vmatprep.subr.bf16.mxu0 0
  %5538 = vmatpush1.bf16.msra.mxu0 0
  %5539 = vmatprep.subr.bf16.mxu0 0
  %5540 = vmatpush1.bf16.msra.mxu0 0
  %5541 = vmatprep.subr.bf16.mxu0 0
  %5542 = vmatpush1.bf16.msra.mxu0 0
  %5543 = vmatprep.subr.bf16.mxu0 0
  %5544 = vmatpush1.bf16.msra.mxu0 0
  %5545 = vmatprep.subr.bf16.mxu0 0
  %5546 = vmatpush1.bf16.msra.mxu0 0
  %5547 = vmatprep.subr.bf16.mxu0 0
  %5548 = vmatpush1.bf16.msra.mxu0 0
  %5549 = vmatprep.subr.bf16.mxu0 0
  %5550 = vmatpush1.bf16.msra.mxu0 0
  %5551 = vmatprep.subr.bf16.mxu0 0
  %5552 = vmatpush1.bf16.msra.mxu0 0
  %5553 = vmatprep.subr.bf16.mxu0 0
  %5554 = vmatpush1.bf16.msra.mxu0 0
  %5555 = vmatprep.subr.bf16.mxu0 0
  %5556 = vmatpush1.bf16.msra.mxu0 0
  %5557 = vmatprep.subr.bf16.mxu0 0
  %5558 = vmatpush1.bf16.msra.mxu0 0
  %5559 = vmatprep.subr.bf16.mxu0 0
  %5560 = vmatpush1.bf16.msra.mxu0 0
  %5561 = vmatprep.subr.bf16.mxu0 0
  %5562 = vmatpush1.bf16.msra.mxu0 0
  %5563 = vmatprep.mubr.bf16.mxu0 0
  %5564 = vmatmul.mubr.bf16.gmra.mrb[0].mxu0 %v5529
  %v5565 = vpop.f32.mrb[0].mxu0
  %v5566 = vadd.f32 0.0, %v5565
  %v5567 = vpop.f32.mrb[0].mxu0
  %v5568 = vpop.f32.mrb[0].mxu0
  %v5569 = vpop.f32.mrb[0].mxu0
  %5570 = vdwg.mxu0
  %5571 = vmatprep.subr.bf16.mxu0 0
  %5572 = vmatpush1.bf16.msra.mxu0 %v498
  %5573 = vmatprep.subr.bf16.mxu0 0
  %5574 = vmatpush1.bf16.msra.mxu0 0
  %5575 = vmatprep.subr.bf16.mxu0 0
  %5576 = vmatpush1.bf16.msra.mxu0 0
  %5577 = vmatprep.subr.bf16.mxu0 0
  %5578 = vmatpush1.bf16.msra.mxu0 0
  %5579 = vmatprep.subr.bf16.mxu0 0
  %5580 = vmatpush1.bf16.msra.mxu0 0
  %5581 = vmatprep.subr.bf16.mxu0 0
  %5582 = vmatpush1.bf16.msra.mxu0 0
  %5583 = vmatprep.subr.bf16.mxu0 0
  %5584 = vmatpush1.bf16.msra.mxu0 0
  %5585 = vmatprep.subr.bf16.mxu0 0
  %5586 = vmatpush1.bf16.msra.mxu0 0
  %5587 = vmatprep.subr.bf16.mxu0 0
  %5588 = vmatpush1.bf16.msra.mxu0 0
  %5589 = vmatprep.subr.bf16.mxu0 0
  %5590 = vmatpush1.bf16.msra.mxu0 0
  %5591 = vmatprep.subr.bf16.mxu0 0
  %5592 = vmatpush1.bf16.msra.mxu0 0
  %5593 = vmatprep.subr.bf16.mxu0 0
  %5594 = vmatpush1.bf16.msra.mxu0 0
  %5595 = vmatprep.subr.bf16.mxu0 0
  %5596 = vmatpush1.bf16.msra.mxu0 0
  %5597 = vmatprep.subr.bf16.mxu0 0
  %5598 = vmatpush1.bf16.msra.mxu0 0
  %5599 = vmatprep.subr.bf16.mxu0 0
  %5600 = vmatpush1.bf16.msra.mxu0 0
  %5601 = vmatprep.subr.bf16.mxu0 0
  %5602 = vmatpush1.bf16.msra.mxu0 0
  %5603 = vmatprep.mubr.bf16.mxu0 0
  %5604 = vmatmul.mubr.bf16.gmra.mrb[0].mxu0 %v5529
  %v5605 = vpop.f32.mrb[0].mxu0
  %v5606 = vadd.f32 0.0, %v5605
  %v5607 = vpop.f32.mrb[0].mxu0
  %v5608 = vpop.f32.mrb[0].mxu0
  %v5609 = vpop.f32.mrb[0].mxu0
  %5610 = vdwg.mxu0
  %v5611 = vld [vmem:[#allocation2 + $0x14] sm:$0x1]
  %v5612 = vld [vmem:[#allocation2 + $0x34] sm:$0x1]
  %v5614 = vrot.slane %v5566, 1
  %v5617 = vadd.f32 %v5611, %v5566
  %v5618 = vadd.f32 %v5612, %v5614
  %v5619 = vxor.u32 %v5617, 2147483648
  %v5620 = vxor.u32 %v5618, 2147483648
  %v5621 = vmul.f32 %v5619, 1.442695
  %v5622 = vpow.pop %v5621
  %v5623 = vmul.f32 %v5620, 1.442695
  %v5624 = vpow.pop %v5623
  %v5625 = vadd.f32 %v5622, 1.0
  %v5626 = vadd.f32 %v5624, 1.0
  %v5627 = vrcp.pop %v5625
  %v5628 = vmul.f32 1.0, %v5627
  %v5629 = vrcp.pop %v5626
  %v5630 = vmul.f32 1.0, %v5629
  %v5631 = vld [vmem:[#allocation3 + $0x14] sm:$0x1]
  %v5632 = vld [vmem:[#allocation3 + $0x34] sm:$0x1]
  %v5634 = vrot.slane %v5606, 1
  %v5637 = vadd.f32 %v5631, %v5606
  %v5638 = vadd.f32 %v5632, %v5634
  %v5639 = vxor.u32 %v5637, 2147483648
  %v5640 = vxor.u32 %v5638, 2147483648
  %v5641 = vmul.f32 %v5639, 1.442695
  %v5642 = vpow.pop %v5641
  %v5643 = vmul.f32 %v5640, 1.442695
  %v5644 = vpow.pop %v5643
  %v5645 = vadd.f32 %v5642, 1.0
  %v5646 = vadd.f32 %v5644, 1.0
  %v5647 = vrcp.pop %v5645
  %v5648 = vmul.f32 1.0, %v5647
  %v5649 = vrcp.pop %v5646
  %v5650 = vmul.f32 1.0, %v5649
  %v5651 = vld [vmem:[#allocation4 + $0x14] sm:$0x1]
  %v5652 = vld [vmem:[#allocation4 + $0x34] sm:$0x1]
  %5653 = vmatprep.subr.bf16.mxu0 0
  %5654 = vmatpush1.bf16.msra.mxu0 %v590
  %5655 = vmatprep.subr.bf16.mxu0 0
  %5656 = vmatpush1.bf16.msra.mxu0 0
  %5657 = vmatprep.subr.bf16.mxu0 0
  %5658 = vmatpush1.bf16.msra.mxu0 0
  %5659 = vmatprep.subr.bf16.mxu0 0
  %5660 = vmatpush1.bf16.msra.mxu0 0
  %5661 = vmatprep.subr.bf16.mxu0 0
  %5662 = vmatpush1.bf16.msra.mxu0 0
  %5663 = vmatprep.subr.bf16.mxu0 0
  %5664 = vmatpush1.bf16.msra.mxu0 0
  %5665 = vmatprep.subr.bf16.mxu0 0
  %5666 = vmatpush1.bf16.msra.mxu0 0
  %5667 = vmatprep.subr.bf16.mxu0 0
  %5668 = vmatpush1.bf16.msra.mxu0 0
  %5669 = vmatprep.subr.bf16.mxu0 0
  %5670 = vmatpush1.bf16.msra.mxu0 0
  %5671 = vmatprep.subr.bf16.mxu0 0
  %5672 = vmatpush1.bf16.msra.mxu0 0
  %5673 = vmatprep.subr.bf16.mxu0 0
  %5674 = vmatpush1.bf16.msra.mxu0 0
  %5675 = vmatprep.subr.bf16.mxu0 0
  %5676 = vmatpush1.bf16.msra.mxu0 0
  %5677 = vmatprep.subr.bf16.mxu0 0
  %5678 = vmatpush1.bf16.msra.mxu0 0
  %5679 = vmatprep.subr.bf16.mxu0 0
  %5680 = vmatpush1.bf16.msra.mxu0 0
  %5681 = vmatprep.subr.bf16.mxu0 0
  %5682 = vmatpush1.bf16.msra.mxu0 0
  %5683 = vmatprep.subr.bf16.mxu0 0
  %5684 = vmatpush1.bf16.msra.mxu0 0
  %5685 = vmatprep.mubr.bf16.mxu0 0
  %5686 = vmatmul.mubr.bf16.gmra.mrb[0].mxu0 %v5529
  %v5687 = vpop.f32.mrb[0].mxu0
  %v5688 = vadd.f32 %v585, %v5687
  %v5689 = vpop.f32.mrb[0].mxu0
  %v5690 = vpop.f32.mrb[0].mxu0
  %v5691 = vpop.f32.mrb[0].mxu0
  %5692 = vdwg.mxu0
  %v5694 = vrot.slane %v5688, 1
  %v5697 = vmul.f32 %v5628, %v5688
  %v5698 = vmul.f32 %v5630, %v5694
  %v5699 = vadd.f32 %v5651, %v5697
  %v5700 = vadd.f32 %v5652, %v5698
  %v5701 = vtanh.pop %v5699
  %v5702 = vtanh.pop %v5700
  %v5703 = vsub.f32 %v5454, %v5701
  %v5704 = vsub.f32 %v5455, %v5702
  %v5705 = vmul.f32 %v5648, %v5703
  %v5706 = vmul.f32 %v5650, %v5704
  %v5707 = vadd.f32 %v5701, %v5705
  %v5708 = vadd.f32 %v5702, %v5706
  %v5709 = vmax.f32 %v5707, 0.0
  %v5710 = vmax.f32 %v5708, 0.0
  %v5711 = vpack.c.bf16 %v5709, %v5709
  %v5712 = vpack.c.bf16 %v5710, %v5710
  %v5713 = vld [vmem:[%s6 + $0xa0] sm:$0xf]
  %v5714 = vld [vmem:[%s6 + $0xa4] sm:$0xf]
  %v5717 = vunpack.c.l.b16 %v5711
  %v5718 = vunpack.c.l.b16 %v5712
  %v5719 = vrot.slane %v5718, 7
  %v5720 = vsel %vm659, %v5719, %v5717
  %v5721 = vpack.c.b16 %v5720, %v5720
  %v5724 = vunpack.c.l.b16 %v5713
  %v5725 = vunpack.c.l.b16 %v5714
  %v5726 = vpack.c.b16 %v5725, %v5724
  %v5729 = vsel %vm76, %v5721, 0
  %5731 = vmatprep.subr.bf16.mxu0 0
  %5732 = vmatpush1.bf16.msra.mxu0 %v5726
  %5733 = vmatprep.subr.bf16.mxu0 0
  %5734 = vmatpush1.bf16.msra.mxu0 0
  %5735 = vmatprep.subr.bf16.mxu0 0
  %5736 = vmatpush1.bf16.msra.mxu0 0
  %5737 = vmatprep.subr.bf16.mxu0 0
  %5738 = vmatpush1.bf16.msra.mxu0 0
  %5739 = vmatprep.subr.bf16.mxu0 0
  %5740 = vmatpush1.bf16.msra.mxu0 0
  %5741 = vmatprep.subr.bf16.mxu0 0
  %5742 = vmatpush1.bf16.msra.mxu0 0
  %5743 = vmatprep.subr.bf16.mxu0 0
  %5744 = vmatpush1.bf16.msra.mxu0 0
  %5745 = vmatprep.subr.bf16.mxu0 0
  %5746 = vmatpush1.bf16.msra.mxu0 0
  %5747 = vmatprep.subr.bf16.mxu0 0
  %5748 = vmatpush1.bf16.msra.mxu0 0
  %5749 = vmatprep.subr.bf16.mxu0 0
  %5750 = vmatpush1.bf16.msra.mxu0 0
  %5751 = vmatprep.subr.bf16.mxu0 0
  %5752 = vmatpush1.bf16.msra.mxu0 0
  %5753 = vmatprep.subr.bf16.mxu0 0
  %5754 = vmatpush1.bf16.msra.mxu0 0
  %5755 = vmatprep.subr.bf16.mxu0 0
  %5756 = vmatpush1.bf16.msra.mxu0 0
  %5757 = vmatprep.subr.bf16.mxu0 0
  %5758 = vmatpush1.bf16.msra.mxu0 0
  %5759 = vmatprep.subr.bf16.mxu0 0
  %5760 = vmatpush1.bf16.msra.mxu0 0
  %5761 = vmatprep.subr.bf16.mxu0 0
  %5762 = vmatpush1.bf16.msra.mxu0 0
  %5763 = vmatprep.mubr.bf16.mxu0 0
  %5764 = vmatmul.mubr.bf16.gmra.mrb[0].mxu0 %v5729
  %v5765 = vpop.f32.mrb[0].mxu0
  %v5766 = vadd.f32 0.0, %v5765
  %v5767 = vpop.f32.mrb[0].mxu0
  %v5768 = vpop.f32.mrb[0].mxu0
  %v5769 = vpop.f32.mrb[0].mxu0
  %5770 = vdwg.mxu0
  %v5771 = vadd.f32 %v5518, %v5766
  %v5772 = vpack.c.bf16 %v5707, %v5707
  %v5773 = vpack.c.bf16 %v5708, %v5708
  %v5776 = vunpack.c.l.b16 %v5772
  %v5777 = vunpack.c.l.b16 %v5773
  %v5778 = vrot.slane %v5777, 7
  %v5779 = vsel %vm659, %v5778, %v5776
  %v5780 = vpack.c.b16 %v5779, %v5779
  %v5782 = vsel %vm76, %v5780, 0
  %5784 = vmatprep.subr.bf16.mxu0 0
  %5785 = vmatpush1.bf16.msra.mxu0 %v449
  %5786 = vmatprep.subr.bf16.mxu0 0
  %5787 = vmatpush1.bf16.msra.mxu0 0
  %5788 = vmatprep.subr.bf16.mxu0 0
  %5789 = vmatpush1.bf16.msra.mxu0 0
  %5790 = vmatprep.subr.bf16.mxu0 0
  %5791 = vmatpush1.bf16.msra.mxu0 0
  %5792 = vmatprep.subr.bf16.mxu0 0
  %5793 = vmatpush1.bf16.msra.mxu0 0
  %5794 = vmatprep.subr.bf16.mxu0 0
  %5795 = vmatpush1.bf16.msra.mxu0 0
  %5796 = vmatprep.subr.bf16.mxu0 0
  %5797 = vmatpush1.bf16.msra.mxu0 0
  %5798 = vmatprep.subr.bf16.mxu0 0
  %5799 = vmatpush1.bf16.msra.mxu0 0
  %5800 = vmatprep.subr.bf16.mxu0 0
  %5801 = vmatpush1.bf16.msra.mxu0 0
  %5802 = vmatprep.subr.bf16.mxu0 0
  %5803 = vmatpush1.bf16.msra.mxu0 0
  %5804 = vmatprep.subr.bf16.mxu0 0
  %5805 = vmatpush1.bf16.msra.mxu0 0
  %5806 = vmatprep.subr.bf16.mxu0 0
  %5807 = vmatpush1.bf16.msra.mxu0 0
  %5808 = vmatprep.subr.bf16.mxu0 0
  %5809 = vmatpush1.bf16.msra.mxu0 0
  %5810 = vmatprep.subr.bf16.mxu0 0
  %5811 = vmatpush1.bf16.msra.mxu0 0
  %5812 = vmatprep.subr.bf16.mxu0 0
  %5813 = vmatpush1.bf16.msra.mxu0 0
  %5814 = vmatprep.subr.bf16.mxu0 0
  %5815 = vmatpush1.bf16.msra.mxu0 0
  %5816 = vmatprep.mubr.bf16.mxu0 0
  %5817 = vmatmul.mubr.bf16.gmra.mrb[0].mxu0 %v5782
  %v5818 = vpop.f32.mrb[0].mxu0
  %v5819 = vadd.f32 0.0, %v5818
  %v5820 = vpop.f32.mrb[0].mxu0
  %v5821 = vpop.f32.mrb[0].mxu0
  %v5822 = vpop.f32.mrb[0].mxu0
  %5823 = vdwg.mxu0
  %5824 = vmatprep.subr.bf16.mxu0 0
  %5825 = vmatpush1.bf16.msra.mxu0 %v498
  %5826 = vmatprep.subr.bf16.mxu0 0
  %5827 = vmatpush1.bf16.msra.mxu0 0
  %5828 = vmatprep.subr.bf16.mxu0 0
  %5829 = vmatpush1.bf16.msra.mxu0 0
  %5830 = vmatprep.subr.bf16.mxu0 0
  %5831 = vmatpush1.bf16.msra.mxu0 0
  %5832 = vmatprep.subr.bf16.mxu0 0
  %5833 = vmatpush1.bf16.msra.mxu0 0
  %5834 = vmatprep.subr.bf16.mxu0 0
  %5835 = vmatpush1.bf16.msra.mxu0 0
  %5836 = vmatprep.subr.bf16.mxu0 0
  %5837 = vmatpush1.bf16.msra.mxu0 0
  %5838 = vmatprep.subr.bf16.mxu0 0
  %5839 = vmatpush1.bf16.msra.mxu0 0
  %5840 = vmatprep.subr.bf16.mxu0 0
  %5841 = vmatpush1.bf16.msra.mxu0 0
  %5842 = vmatprep.subr.bf16.mxu0 0
  %5843 = vmatpush1.bf16.msra.mxu0 0
  %5844 = vmatprep.subr.bf16.mxu0 0
  %5845 = vmatpush1.bf16.msra.mxu0 0
  %5846 = vmatprep.subr.bf16.mxu0 0
  %5847 = vmatpush1.bf16.msra.mxu0 0
  %5848 = vmatprep.subr.bf16.mxu0 0
  %5849 = vmatpush1.bf16.msra.mxu0 0
  %5850 = vmatprep.subr.bf16.mxu0 0
  %5851 = vmatpush1.bf16.msra.mxu0 0
  %5852 = vmatprep.subr.bf16.mxu0 0
  %5853 = vmatpush1.bf16.msra.mxu0 0
  %5854 = vmatprep.subr.bf16.mxu0 0
  %5855 = vmatpush1.bf16.msra.mxu0 0
  %5856 = vmatprep.mubr.bf16.mxu0 0
  %5857 = vmatmul.mubr.bf16.gmra.mrb[0].mxu0 %v5782
  %v5858 = vpop.f32.mrb[0].mxu0
  %v5859 = vadd.f32 0.0, %v5858
  %v5860 = vpop.f32.mrb[0].mxu0
  %v5861 = vpop.f32.mrb[0].mxu0
  %v5862 = vpop.f32.mrb[0].mxu0
  %5863 = vdwg.mxu0
  %v5864 = vld [vmem:[#allocation2 + $0x15] sm:$0x1]
  %v5865 = vld [vmem:[#allocation2 + $0x35] sm:$0x1]
  %v5867 = vrot.slane %v5819, 1
  %v5870 = vadd.f32 %v5864, %v5819
  %v5871 = vadd.f32 %v5865, %v5867
  %v5872 = vxor.u32 %v5870, 2147483648
  %v5873 = vxor.u32 %v5871, 2147483648
  %v5874 = vmul.f32 %v5872, 1.442695
  %v5875 = vpow.pop %v5874
  %v5876 = vmul.f32 %v5873, 1.442695
  %v5877 = vpow.pop %v5876
  %v5878 = vadd.f32 %v5875, 1.0
  %v5879 = vadd.f32 %v5877, 1.0
  %v5880 = vrcp.pop %v5878
  %v5881 = vmul.f32 1.0, %v5880
  %v5882 = vrcp.pop %v5879
  %v5883 = vmul.f32 1.0, %v5882
  %v5884 = vld [vmem:[#allocation3 + $0x15] sm:$0x1]
  %v5885 = vld [vmem:[#allocation3 + $0x35] sm:$0x1]
  %v5887 = vrot.slane %v5859, 1
  %v5890 = vadd.f32 %v5884, %v5859
  %v5891 = vadd.f32 %v5885, %v5887
  %v5892 = vxor.u32 %v5890, 2147483648
  %v5893 = vxor.u32 %v5891, 2147483648
  %v5894 = vmul.f32 %v5892, 1.442695
  %v5895 = vpow.pop %v5894
  %v5896 = vmul.f32 %v5893, 1.442695
  %v5897 = vpow.pop %v5896
  %v5898 = vadd.f32 %v5895, 1.0
  %v5899 = vadd.f32 %v5897, 1.0
  %v5900 = vrcp.pop %v5898
  %v5901 = vmul.f32 1.0, %v5900
  %v5902 = vrcp.pop %v5899
  %v5903 = vmul.f32 1.0, %v5902
  %v5904 = vld [vmem:[#allocation4 + $0x15] sm:$0x1]
  %v5905 = vld [vmem:[#allocation4 + $0x35] sm:$0x1]
  %5906 = vmatprep.subr.bf16.mxu0 0
  %5907 = vmatpush1.bf16.msra.mxu0 %v590
  %5908 = vmatprep.subr.bf16.mxu0 0
  %5909 = vmatpush1.bf16.msra.mxu0 0
  %5910 = vmatprep.subr.bf16.mxu0 0
  %5911 = vmatpush1.bf16.msra.mxu0 0
  %5912 = vmatprep.subr.bf16.mxu0 0
  %5913 = vmatpush1.bf16.msra.mxu0 0
  %5914 = vmatprep.subr.bf16.mxu0 0
  %5915 = vmatpush1.bf16.msra.mxu0 0
  %5916 = vmatprep.subr.bf16.mxu0 0
  %5917 = vmatpush1.bf16.msra.mxu0 0
  %5918 = vmatprep.subr.bf16.mxu0 0
  %5919 = vmatpush1.bf16.msra.mxu0 0
  %5920 = vmatprep.subr.bf16.mxu0 0
  %5921 = vmatpush1.bf16.msra.mxu0 0
  %5922 = vmatprep.subr.bf16.mxu0 0
  %5923 = vmatpush1.bf16.msra.mxu0 0
  %5924 = vmatprep.subr.bf16.mxu0 0
  %5925 = vmatpush1.bf16.msra.mxu0 0
  %5926 = vmatprep.subr.bf16.mxu0 0
  %5927 = vmatpush1.bf16.msra.mxu0 0
  %5928 = vmatprep.subr.bf16.mxu0 0
  %5929 = vmatpush1.bf16.msra.mxu0 0
  %5930 = vmatprep.subr.bf16.mxu0 0
  %5931 = vmatpush1.bf16.msra.mxu0 0
  %5932 = vmatprep.subr.bf16.mxu0 0
  %5933 = vmatpush1.bf16.msra.mxu0 0
  %5934 = vmatprep.subr.bf16.mxu0 0
  %5935 = vmatpush1.bf16.msra.mxu0 0
  %5936 = vmatprep.subr.bf16.mxu0 0
  %5937 = vmatpush1.bf16.msra.mxu0 0
  %5938 = vmatprep.mubr.bf16.mxu0 0
  %5939 = vmatmul.mubr.bf16.gmra.mrb[0].mxu0 %v5782
  %v5940 = vpop.f32.mrb[0].mxu0
  %v5941 = vadd.f32 %v585, %v5940
  %v5942 = vpop.f32.mrb[0].mxu0
  %v5943 = vpop.f32.mrb[0].mxu0
  %v5944 = vpop.f32.mrb[0].mxu0
  %5945 = vdwg.mxu0
  %v5947 = vrot.slane %v5941, 1
  %v5950 = vmul.f32 %v5881, %v5941
  %v5951 = vmul.f32 %v5883, %v5947
  %v5952 = vadd.f32 %v5904, %v5950
  %v5953 = vadd.f32 %v5905, %v5951
  %v5954 = vtanh.pop %v5952
  %v5955 = vtanh.pop %v5953
  %v5956 = vsub.f32 %v5707, %v5954
  %v5957 = vsub.f32 %v5708, %v5955
  %v5958 = vmul.f32 %v5901, %v5956
  %v5959 = vmul.f32 %v5903, %v5957
  %v5960 = vadd.f32 %v5954, %v5958
  %v5961 = vadd.f32 %v5955, %v5959
  %v5962 = vmax.f32 %v5960, 0.0
  %v5963 = vmax.f32 %v5961, 0.0
  %v5964 = vpack.c.bf16 %v5962, %v5962
  %v5965 = vpack.c.bf16 %v5963, %v5963
  %v5966 = vld [vmem:[%s6 + $0xa8] sm:$0xf]
  %v5967 = vld [vmem:[%s6 + $0xac] sm:$0xf]
  %v5970 = vunpack.c.l.b16 %v5964
  %v5971 = vunpack.c.l.b16 %v5965
  %v5972 = vrot.slane %v5971, 7
  %v5973 = vsel %vm659, %v5972, %v5970
  %v5974 = vpack.c.b16 %v5973, %v5973
  %v5977 = vunpack.c.l.b16 %v5966
  %v5978 = vunpack.c.l.b16 %v5967
  %v5979 = vpack.c.b16 %v5978, %v5977
  %v5982 = vsel %vm76, %v5974, 0
  %5984 = vmatprep.subr.bf16.mxu0 0
  %5985 = vmatpush1.bf16.msra.mxu0 %v5979
  %5986 = vmatprep.subr.bf16.mxu0 0
  %5987 = vmatpush1.bf16.msra.mxu0 0
  %5988 = vmatprep.subr.bf16.mxu0 0
  %5989 = vmatpush1.bf16.msra.mxu0 0
  %5990 = vmatprep.subr.bf16.mxu0 0
  %5991 = vmatpush1.bf16.msra.mxu0 0
  %5992 = vmatprep.subr.bf16.mxu0 0
  %5993 = vmatpush1.bf16.msra.mxu0 0
  %5994 = vmatprep.subr.bf16.mxu0 0
  %5995 = vmatpush1.bf16.msra.mxu0 0
  %5996 = vmatprep.subr.bf16.mxu0 0
  %5997 = vmatpush1.bf16.msra.mxu0 0
  %5998 = vmatprep.subr.bf16.mxu0 0
  %5999 = vmatpush1.bf16.msra.mxu0 0
  %6000 = vmatprep.subr.bf16.mxu0 0
  %6001 = vmatpush1.bf16.msra.mxu0 0
  %6002 = vmatprep.subr.bf16.mxu0 0
  %6003 = vmatpush1.bf16.msra.mxu0 0
  %6004 = vmatprep.subr.bf16.mxu0 0
  %6005 = vmatpush1.bf16.msra.mxu0 0
  %6006 = vmatprep.subr.bf16.mxu0 0
  %6007 = vmatpush1.bf16.msra.mxu0 0
  %6008 = vmatprep.subr.bf16.mxu0 0
  %6009 = vmatpush1.bf16.msra.mxu0 0
  %6010 = vmatprep.subr.bf16.mxu0 0
  %6011 = vmatpush1.bf16.msra.mxu0 0
  %6012 = vmatprep.subr.bf16.mxu0 0
  %6013 = vmatpush1.bf16.msra.mxu0 0
  %6014 = vmatprep.subr.bf16.mxu0 0
  %6015 = vmatpush1.bf16.msra.mxu0 0
  %6016 = vmatprep.mubr.bf16.mxu0 0
  %6017 = vmatmul.mubr.bf16.gmra.mrb[0].mxu0 %v5982
  %v6018 = vpop.f32.mrb[0].mxu0
  %v6019 = vadd.f32 0.0, %v6018
  %v6020 = vpop.f32.mrb[0].mxu0
  %v6021 = vpop.f32.mrb[0].mxu0
  %v6022 = vpop.f32.mrb[0].mxu0
  %6023 = vdwg.mxu0
  %v6024 = vadd.f32 %v5771, %v6019
  %v6025 = vpack.c.bf16 %v5960, %v5960
  %v6026 = vpack.c.bf16 %v5961, %v5961
  %v6029 = vunpack.c.l.b16 %v6025
  %v6030 = vunpack.c.l.b16 %v6026
  %v6031 = vrot.slane %v6030, 7
  %v6032 = vsel %vm659, %v6031, %v6029
  %v6033 = vpack.c.b16 %v6032, %v6032
  %v6035 = vsel %vm76, %v6033, 0
  %6037 = vmatprep.subr.bf16.mxu0 0
  %6038 = vmatpush1.bf16.msra.mxu0 %v449
  %6039 = vmatprep.subr.bf16.mxu0 0
  %6040 = vmatpush1.bf16.msra.mxu0 0
  %6041 = vmatprep.subr.bf16.mxu0 0
  %6042 = vmatpush1.bf16.msra.mxu0 0
  %6043 = vmatprep.subr.bf16.mxu0 0
  %6044 = vmatpush1.bf16.msra.mxu0 0
  %6045 = vmatprep.subr.bf16.mxu0 0
  %6046 = vmatpush1.bf16.msra.mxu0 0
  %6047 = vmatprep.subr.bf16.mxu0 0
  %6048 = vmatpush1.bf16.msra.mxu0 0
  %6049 = vmatprep.subr.bf16.mxu0 0
  %6050 = vmatpush1.bf16.msra.mxu0 0
  %6051 = vmatprep.subr.bf16.mxu0 0
  %6052 = vmatpush1.bf16.msra.mxu0 0
  %6053 = vmatprep.subr.bf16.mxu0 0
  %6054 = vmatpush1.bf16.msra.mxu0 0
  %6055 = vmatprep.subr.bf16.mxu0 0
  %6056 = vmatpush1.bf16.msra.mxu0 0
  %6057 = vmatprep.subr.bf16.mxu0 0
  %6058 = vmatpush1.bf16.msra.mxu0 0
  %6059 = vmatprep.subr.bf16.mxu0 0
  %6060 = vmatpush1.bf16.msra.mxu0 0
  %6061 = vmatprep.subr.bf16.mxu0 0
  %6062 = vmatpush1.bf16.msra.mxu0 0
  %6063 = vmatprep.subr.bf16.mxu0 0
  %6064 = vmatpush1.bf16.msra.mxu0 0
  %6065 = vmatprep.subr.bf16.mxu0 0
  %6066 = vmatpush1.bf16.msra.mxu0 0
  %6067 = vmatprep.subr.bf16.mxu0 0
  %6068 = vmatpush1.bf16.msra.mxu0 0
  %6069 = vmatprep.mubr.bf16.mxu0 0
  %6070 = vmatmul.mubr.bf16.gmra.mrb[0].mxu0 %v6035
  %v6071 = vpop.f32.mrb[0].mxu0
  %v6072 = vadd.f32 0.0, %v6071
  %v6073 = vpop.f32.mrb[0].mxu0
  %v6074 = vpop.f32.mrb[0].mxu0
  %v6075 = vpop.f32.mrb[0].mxu0
  %6076 = vdwg.mxu0
  %6077 = vmatprep.subr.bf16.mxu0 0
  %6078 = vmatpush1.bf16.msra.mxu0 %v498
  %6079 = vmatprep.subr.bf16.mxu0 0
  %6080 = vmatpush1.bf16.msra.mxu0 0
  %6081 = vmatprep.subr.bf16.mxu0 0
  %6082 = vmatpush1.bf16.msra.mxu0 0
  %6083 = vmatprep.subr.bf16.mxu0 0
  %6084 = vmatpush1.bf16.msra.mxu0 0
  %6085 = vmatprep.subr.bf16.mxu0 0
  %6086 = vmatpush1.bf16.msra.mxu0 0
  %6087 = vmatprep.subr.bf16.mxu0 0
  %6088 = vmatpush1.bf16.msra.mxu0 0
  %6089 = vmatprep.subr.bf16.mxu0 0
  %6090 = vmatpush1.bf16.msra.mxu0 0
  %6091 = vmatprep.subr.bf16.mxu0 0
  %6092 = vmatpush1.bf16.msra.mxu0 0
  %6093 = vmatprep.subr.bf16.mxu0 0
  %6094 = vmatpush1.bf16.msra.mxu0 0
  %6095 = vmatprep.subr.bf16.mxu0 0
  %6096 = vmatpush1.bf16.msra.mxu0 0
  %6097 = vmatprep.subr.bf16.mxu0 0
  %6098 = vmatpush1.bf16.msra.mxu0 0
  %6099 = vmatprep.subr.bf16.mxu0 0
  %6100 = vmatpush1.bf16.msra.mxu0 0
  %6101 = vmatprep.subr.bf16.mxu0 0
  %6102 = vmatpush1.bf16.msra.mxu0 0
  %6103 = vmatprep.subr.bf16.mxu0 0
  %6104 = vmatpush1.bf16.msra.mxu0 0
  %6105 = vmatprep.subr.bf16.mxu0 0
  %6106 = vmatpush1.bf16.msra.mxu0 0
  %6107 = vmatprep.subr.bf16.mxu0 0
  %6108 = vmatpush1.bf16.msra.mxu0 0
  %6109 = vmatprep.mubr.bf16.mxu0 0
  %6110 = vmatmul.mubr.bf16.gmra.mrb[0].mxu0 %v6035
  %v6111 = vpop.f32.mrb[0].mxu0
  %v6112 = vadd.f32 0.0, %v6111
  %v6113 = vpop.f32.mrb[0].mxu0
  %v6114 = vpop.f32.mrb[0].mxu0
  %v6115 = vpop.f32.mrb[0].mxu0
  %6116 = vdwg.mxu0
  %v6117 = vld [vmem:[#allocation2 + $0x16] sm:$0x1]
  %v6118 = vld [vmem:[#allocation2 + $0x36] sm:$0x1]
  %v6120 = vrot.slane %v6072, 1
  %v6123 = vadd.f32 %v6117, %v6072
  %v6124 = vadd.f32 %v6118, %v6120
  %v6125 = vxor.u32 %v6123, 2147483648
  %v6126 = vxor.u32 %v6124, 2147483648
  %v6127 = vmul.f32 %v6125, 1.442695
  %v6128 = vpow.pop %v6127
  %v6129 = vmul.f32 %v6126, 1.442695
  %v6130 = vpow.pop %v6129
  %v6131 = vadd.f32 %v6128, 1.0
  %v6132 = vadd.f32 %v6130, 1.0
  %v6133 = vrcp.pop %v6131
  %v6134 = vmul.f32 1.0, %v6133
  %v6135 = vrcp.pop %v6132
  %v6136 = vmul.f32 1.0, %v6135
  %v6137 = vld [vmem:[#allocation3 + $0x16] sm:$0x1]
  %v6138 = vld [vmem:[#allocation3 + $0x36] sm:$0x1]
  %v6140 = vrot.slane %v6112, 1
  %v6143 = vadd.f32 %v6137, %v6112
  %v6144 = vadd.f32 %v6138, %v6140
  %v6145 = vxor.u32 %v6143, 2147483648
  %v6146 = vxor.u32 %v6144, 2147483648
  %v6147 = vmul.f32 %v6145, 1.442695
  %v6148 = vpow.pop %v6147
  %v6149 = vmul.f32 %v6146, 1.442695
  %v6150 = vpow.pop %v6149
  %v6151 = vadd.f32 %v6148, 1.0
  %v6152 = vadd.f32 %v6150, 1.0
  %v6153 = vrcp.pop %v6151
  %v6154 = vmul.f32 1.0, %v6153
  %v6155 = vrcp.pop %v6152
  %v6156 = vmul.f32 1.0, %v6155
  %v6157 = vld [vmem:[#allocation4 + $0x16] sm:$0x1]
  %v6158 = vld [vmem:[#allocation4 + $0x36] sm:$0x1]
  %6159 = vmatprep.subr.bf16.mxu0 0
  %6160 = vmatpush1.bf16.msra.mxu0 %v590
  %6161 = vmatprep.subr.bf16.mxu0 0
  %6162 = vmatpush1.bf16.msra.mxu0 0
  %6163 = vmatprep.subr.bf16.mxu0 0
  %6164 = vmatpush1.bf16.msra.mxu0 0
  %6165 = vmatprep.subr.bf16.mxu0 0
  %6166 = vmatpush1.bf16.msra.mxu0 0
  %6167 = vmatprep.subr.bf16.mxu0 0
  %6168 = vmatpush1.bf16.msra.mxu0 0
  %6169 = vmatprep.subr.bf16.mxu0 0
  %6170 = vmatpush1.bf16.msra.mxu0 0
  %6171 = vmatprep.subr.bf16.mxu0 0
  %6172 = vmatpush1.bf16.msra.mxu0 0
  %6173 = vmatprep.subr.bf16.mxu0 0
  %6174 = vmatpush1.bf16.msra.mxu0 0
  %6175 = vmatprep.subr.bf16.mxu0 0
  %6176 = vmatpush1.bf16.msra.mxu0 0
  %6177 = vmatprep.subr.bf16.mxu0 0
  %6178 = vmatpush1.bf16.msra.mxu0 0
  %6179 = vmatprep.subr.bf16.mxu0 0
  %6180 = vmatpush1.bf16.msra.mxu0 0
  %6181 = vmatprep.subr.bf16.mxu0 0
  %6182 = vmatpush1.bf16.msra.mxu0 0
  %6183 = vmatprep.subr.bf16.mxu0 0
  %6184 = vmatpush1.bf16.msra.mxu0 0
  %6185 = vmatprep.subr.bf16.mxu0 0
  %6186 = vmatpush1.bf16.msra.mxu0 0
  %6187 = vmatprep.subr.bf16.mxu0 0
  %6188 = vmatpush1.bf16.msra.mxu0 0
  %6189 = vmatprep.subr.bf16.mxu0 0
  %6190 = vmatpush1.bf16.msra.mxu0 0
  %6191 = vmatprep.mubr.bf16.mxu0 0
  %6192 = vmatmul.mubr.bf16.gmra.mrb[0].mxu0 %v6035
  %v6193 = vpop.f32.mrb[0].mxu0
  %v6194 = vadd.f32 %v585, %v6193
  %v6195 = vpop.f32.mrb[0].mxu0
  %v6196 = vpop.f32.mrb[0].mxu0
  %v6197 = vpop.f32.mrb[0].mxu0
  %6198 = vdwg.mxu0
  %v6200 = vrot.slane %v6194, 1
  %v6203 = vmul.f32 %v6134, %v6194
  %v6204 = vmul.f32 %v6136, %v6200
  %v6205 = vadd.f32 %v6157, %v6203
  %v6206 = vadd.f32 %v6158, %v6204
  %v6207 = vtanh.pop %v6205
  %v6208 = vtanh.pop %v6206
  %v6209 = vsub.f32 %v5960, %v6207
  %v6210 = vsub.f32 %v5961, %v6208
  %v6211 = vmul.f32 %v6154, %v6209
  %v6212 = vmul.f32 %v6156, %v6210
  %v6213 = vadd.f32 %v6207, %v6211
  %v6214 = vadd.f32 %v6208, %v6212
  %v6215 = vmax.f32 %v6213, 0.0
  %v6216 = vmax.f32 %v6214, 0.0
  %v6217 = vpack.c.bf16 %v6215, %v6215
  %v6218 = vpack.c.bf16 %v6216, %v6216
  %v6219 = vld [vmem:[%s6 + $0xb0] sm:$0xf]
  %v6220 = vld [vmem:[%s6 + $0xb4] sm:$0xf]
  %v6223 = vunpack.c.l.b16 %v6217
  %v6224 = vunpack.c.l.b16 %v6218
  %v6225 = vrot.slane %v6224, 7
  %v6226 = vsel %vm659, %v6225, %v6223
  %v6227 = vpack.c.b16 %v6226, %v6226
  %v6230 = vunpack.c.l.b16 %v6219
  %v6231 = vunpack.c.l.b16 %v6220
  %v6232 = vpack.c.b16 %v6231, %v6230
  %v6235 = vsel %vm76, %v6227, 0
  %6237 = vmatprep.subr.bf16.mxu0 0
  %6238 = vmatpush1.bf16.msra.mxu0 %v6232
  %6239 = vmatprep.subr.bf16.mxu0 0
  %6240 = vmatpush1.bf16.msra.mxu0 0
  %6241 = vmatprep.subr.bf16.mxu0 0
  %6242 = vmatpush1.bf16.msra.mxu0 0
  %6243 = vmatprep.subr.bf16.mxu0 0
  %6244 = vmatpush1.bf16.msra.mxu0 0
  %6245 = vmatprep.subr.bf16.mxu0 0
  %6246 = vmatpush1.bf16.msra.mxu0 0
  %6247 = vmatprep.subr.bf16.mxu0 0
  %6248 = vmatpush1.bf16.msra.mxu0 0
  %6249 = vmatprep.subr.bf16.mxu0 0
  %6250 = vmatpush1.bf16.msra.mxu0 0
  %6251 = vmatprep.subr.bf16.mxu0 0
  %6252 = vmatpush1.bf16.msra.mxu0 0
  %6253 = vmatprep.subr.bf16.mxu0 0
  %6254 = vmatpush1.bf16.msra.mxu0 0
  %6255 = vmatprep.subr.bf16.mxu0 0
  %6256 = vmatpush1.bf16.msra.mxu0 0
  %6257 = vmatprep.subr.bf16.mxu0 0
  %6258 = vmatpush1.bf16.msra.mxu0 0
  %6259 = vmatprep.subr.bf16.mxu0 0
  %6260 = vmatpush1.bf16.msra.mxu0 0
  %6261 = vmatprep.subr.bf16.mxu0 0
  %6262 = vmatpush1.bf16.msra.mxu0 0
  %6263 = vmatprep.subr.bf16.mxu0 0
  %6264 = vmatpush1.bf16.msra.mxu0 0
  %6265 = vmatprep.subr.bf16.mxu0 0
  %6266 = vmatpush1.bf16.msra.mxu0 0
  %6267 = vmatprep.subr.bf16.mxu0 0
  %6268 = vmatpush1.bf16.msra.mxu0 0
  %6269 = vmatprep.mubr.bf16.mxu0 0
  %6270 = vmatmul.mubr.bf16.gmra.mrb[0].mxu0 %v6235
  %v6271 = vpop.f32.mrb[0].mxu0
  %v6272 = vadd.f32 0.0, %v6271
  %v6273 = vpop.f32.mrb[0].mxu0
  %v6274 = vpop.f32.mrb[0].mxu0
  %v6275 = vpop.f32.mrb[0].mxu0
  %6276 = vdwg.mxu0
  %v6277 = vadd.f32 %v6024, %v6272
  %v6278 = vpack.c.bf16 %v6213, %v6213
  %v6279 = vpack.c.bf16 %v6214, %v6214
  %v6282 = vunpack.c.l.b16 %v6278
  %v6283 = vunpack.c.l.b16 %v6279
  %v6284 = vrot.slane %v6283, 7
  %v6285 = vsel %vm659, %v6284, %v6282
  %v6286 = vpack.c.b16 %v6285, %v6285
  %v6288 = vsel %vm76, %v6286, 0
  %6290 = vmatprep.subr.bf16.mxu0 0
  %6291 = vmatpush1.bf16.msra.mxu0 %v449
  %6292 = vmatprep.subr.bf16.mxu0 0
  %6293 = vmatpush1.bf16.msra.mxu0 0
  %6294 = vmatprep.subr.bf16.mxu0 0
  %6295 = vmatpush1.bf16.msra.mxu0 0
  %6296 = vmatprep.subr.bf16.mxu0 0
  %6297 = vmatpush1.bf16.msra.mxu0 0
  %6298 = vmatprep.subr.bf16.mxu0 0
  %6299 = vmatpush1.bf16.msra.mxu0 0
  %6300 = vmatprep.subr.bf16.mxu0 0
  %6301 = vmatpush1.bf16.msra.mxu0 0
  %6302 = vmatprep.subr.bf16.mxu0 0
  %6303 = vmatpush1.bf16.msra.mxu0 0
  %6304 = vmatprep.subr.bf16.mxu0 0
  %6305 = vmatpush1.bf16.msra.mxu0 0
  %6306 = vmatprep.subr.bf16.mxu0 0
  %6307 = vmatpush1.bf16.msra.mxu0 0
  %6308 = vmatprep.subr.bf16.mxu0 0
  %6309 = vmatpush1.bf16.msra.mxu0 0
  %6310 = vmatprep.subr.bf16.mxu0 0
  %6311 = vmatpush1.bf16.msra.mxu0 0
  %6312 = vmatprep.subr.bf16.mxu0 0
  %6313 = vmatpush1.bf16.msra.mxu0 0
  %6314 = vmatprep.subr.bf16.mxu0 0
  %6315 = vmatpush1.bf16.msra.mxu0 0
  %6316 = vmatprep.subr.bf16.mxu0 0
  %6317 = vmatpush1.bf16.msra.mxu0 0
  %6318 = vmatprep.subr.bf16.mxu0 0
  %6319 = vmatpush1.bf16.msra.mxu0 0
  %6320 = vmatprep.subr.bf16.mxu0 0
  %6321 = vmatpush1.bf16.msra.mxu0 0
  %6322 = vmatprep.mubr.bf16.mxu0 0
  %6323 = vmatmul.mubr.bf16.gmra.mrb[0].mxu0 %v6288
  %v6324 = vpop.f32.mrb[0].mxu0
  %v6325 = vadd.f32 0.0, %v6324
  %v6326 = vpop.f32.mrb[0].mxu0
  %v6327 = vpop.f32.mrb[0].mxu0
  %v6328 = vpop.f32.mrb[0].mxu0
  %6329 = vdwg.mxu0
  %6330 = vmatprep.subr.bf16.mxu0 0
  %6331 = vmatpush1.bf16.msra.mxu0 %v498
  %6332 = vmatprep.subr.bf16.mxu0 0
  %6333 = vmatpush1.bf16.msra.mxu0 0
  %6334 = vmatprep.subr.bf16.mxu0 0
  %6335 = vmatpush1.bf16.msra.mxu0 0
  %6336 = vmatprep.subr.bf16.mxu0 0
  %6337 = vmatpush1.bf16.msra.mxu0 0
  %6338 = vmatprep.subr.bf16.mxu0 0
  %6339 = vmatpush1.bf16.msra.mxu0 0
  %6340 = vmatprep.subr.bf16.mxu0 0
  %6341 = vmatpush1.bf16.msra.mxu0 0
  %6342 = vmatprep.subr.bf16.mxu0 0
  %6343 = vmatpush1.bf16.msra.mxu0 0
  %6344 = vmatprep.subr.bf16.mxu0 0
  %6345 = vmatpush1.bf16.msra.mxu0 0
  %6346 = vmatprep.subr.bf16.mxu0 0
  %6347 = vmatpush1.bf16.msra.mxu0 0
  %6348 = vmatprep.subr.bf16.mxu0 0
  %6349 = vmatpush1.bf16.msra.mxu0 0
  %6350 = vmatprep.subr.bf16.mxu0 0
  %6351 = vmatpush1.bf16.msra.mxu0 0
  %6352 = vmatprep.subr.bf16.mxu0 0
  %6353 = vmatpush1.bf16.msra.mxu0 0
  %6354 = vmatprep.subr.bf16.mxu0 0
  %6355 = vmatpush1.bf16.msra.mxu0 0
  %6356 = vmatprep.subr.bf16.mxu0 0
  %6357 = vmatpush1.bf16.msra.mxu0 0
  %6358 = vmatprep.subr.bf16.mxu0 0
  %6359 = vmatpush1.bf16.msra.mxu0 0
  %6360 = vmatprep.subr.bf16.mxu0 0
  %6361 = vmatpush1.bf16.msra.mxu0 0
  %6362 = vmatprep.mubr.bf16.mxu0 0
  %6363 = vmatmul.mubr.bf16.gmra.mrb[0].mxu0 %v6288
  %v6364 = vpop.f32.mrb[0].mxu0
  %v6365 = vadd.f32 0.0, %v6364
  %v6366 = vpop.f32.mrb[0].mxu0
  %v6367 = vpop.f32.mrb[0].mxu0
  %v6368 = vpop.f32.mrb[0].mxu0
  %6369 = vdwg.mxu0
  %v6370 = vld [vmem:[#allocation2 + $0x17] sm:$0x1]
  %v6371 = vld [vmem:[#allocation2 + $0x37] sm:$0x1]
  %v6373 = vrot.slane %v6325, 1
  %v6376 = vadd.f32 %v6370, %v6325
  %v6377 = vadd.f32 %v6371, %v6373
  %v6378 = vxor.u32 %v6376, 2147483648
  %v6379 = vxor.u32 %v6377, 2147483648
  %v6380 = vmul.f32 %v6378, 1.442695
  %v6381 = vpow.pop %v6380
  %v6382 = vmul.f32 %v6379, 1.442695
  %v6383 = vpow.pop %v6382
  %v6384 = vadd.f32 %v6381, 1.0
  %v6385 = vadd.f32 %v6383, 1.0
  %v6386 = vrcp.pop %v6384
  %v6387 = vmul.f32 1.0, %v6386
  %v6388 = vrcp.pop %v6385
  %v6389 = vmul.f32 1.0, %v6388
  %v6390 = vld [vmem:[#allocation3 + $0x17] sm:$0x1]
  %v6391 = vld [vmem:[#allocation3 + $0x37] sm:$0x1]
  %v6393 = vrot.slane %v6365, 1
  %v6396 = vadd.f32 %v6390, %v6365
  %v6397 = vadd.f32 %v6391, %v6393
  %v6398 = vxor.u32 %v6396, 2147483648
  %v6399 = vxor.u32 %v6397, 2147483648
  %v6400 = vmul.f32 %v6398, 1.442695
  %v6401 = vpow.pop %v6400
  %v6402 = vmul.f32 %v6399, 1.442695
  %v6403 = vpow.pop %v6402
  %v6404 = vadd.f32 %v6401, 1.0
  %v6405 = vadd.f32 %v6403, 1.0
  %v6406 = vrcp.pop %v6404
  %v6407 = vmul.f32 1.0, %v6406
  %v6408 = vrcp.pop %v6405
  %v6409 = vmul.f32 1.0, %v6408
  %v6410 = vld [vmem:[#allocation4 + $0x17] sm:$0x1]
  %v6411 = vld [vmem:[#allocation4 + $0x37] sm:$0x1]
  %6412 = vmatprep.subr.bf16.mxu0 0
  %6413 = vmatpush1.bf16.msra.mxu0 %v590
  %6414 = vmatprep.subr.bf16.mxu0 0
  %6415 = vmatpush1.bf16.msra.mxu0 0
  %6416 = vmatprep.subr.bf16.mxu0 0
  %6417 = vmatpush1.bf16.msra.mxu0 0
  %6418 = vmatprep.subr.bf16.mxu0 0
  %6419 = vmatpush1.bf16.msra.mxu0 0
  %6420 = vmatprep.subr.bf16.mxu0 0
  %6421 = vmatpush1.bf16.msra.mxu0 0
  %6422 = vmatprep.subr.bf16.mxu0 0
  %6423 = vmatpush1.bf16.msra.mxu0 0
  %6424 = vmatprep.subr.bf16.mxu0 0
  %6425 = vmatpush1.bf16.msra.mxu0 0
  %6426 = vmatprep.subr.bf16.mxu0 0
  %6427 = vmatpush1.bf16.msra.mxu0 0
  %6428 = vmatprep.subr.bf16.mxu0 0
  %6429 = vmatpush1.bf16.msra.mxu0 0
  %6430 = vmatprep.subr.bf16.mxu0 0
  %6431 = vmatpush1.bf16.msra.mxu0 0
  %6432 = vmatprep.subr.bf16.mxu0 0
  %6433 = vmatpush1.bf16.msra.mxu0 0
  %6434 = vmatprep.subr.bf16.mxu0 0
  %6435 = vmatpush1.bf16.msra.mxu0 0
  %6436 = vmatprep.subr.bf16.mxu0 0
  %6437 = vmatpush1.bf16.msra.mxu0 0
  %6438 = vmatprep.subr.bf16.mxu0 0
  %6439 = vmatpush1.bf16.msra.mxu0 0
  %6440 = vmatprep.subr.bf16.mxu0 0
  %6441 = vmatpush1.bf16.msra.mxu0 0
  %6442 = vmatprep.subr.bf16.mxu0 0
  %6443 = vmatpush1.bf16.msra.mxu0 0
  %6444 = vmatprep.mubr.bf16.mxu0 0
  %6445 = vmatmul.mubr.bf16.gmra.mrb[0].mxu0 %v6288
  %v6446 = vpop.f32.mrb[0].mxu0
  %v6447 = vadd.f32 %v585, %v6446
  %v6448 = vpop.f32.mrb[0].mxu0
  %v6449 = vpop.f32.mrb[0].mxu0
  %v6450 = vpop.f32.mrb[0].mxu0
  %6451 = vdwg.mxu0
  %v6453 = vrot.slane %v6447, 1
  %v6456 = vmul.f32 %v6387, %v6447
  %v6457 = vmul.f32 %v6389, %v6453
  %v6458 = vadd.f32 %v6410, %v6456
  %v6459 = vadd.f32 %v6411, %v6457
  %v6460 = vtanh.pop %v6458
  %v6461 = vtanh.pop %v6459
  %v6462 = vsub.f32 %v6213, %v6460
  %v6463 = vsub.f32 %v6214, %v6461
  %v6464 = vmul.f32 %v6407, %v6462
  %v6465 = vmul.f32 %v6409, %v6463
  %v6466 = vadd.f32 %v6460, %v6464
  %v6467 = vadd.f32 %v6461, %v6465
  %v6468 = vmax.f32 %v6466, 0.0
  %v6469 = vmax.f32 %v6467, 0.0
  %v6470 = vpack.c.bf16 %v6468, %v6468
  %v6471 = vpack.c.bf16 %v6469, %v6469
  %v6472 = vld [vmem:[%s6 + $0xb8] sm:$0xf]
  %v6473 = vld [vmem:[%s6 + $0xbc] sm:$0xf]
  %v6476 = vunpack.c.l.b16 %v6470
  %v6477 = vunpack.c.l.b16 %v6471
  %v6478 = vrot.slane %v6477, 7
  %v6479 = vsel %vm659, %v6478, %v6476
  %v6480 = vpack.c.b16 %v6479, %v6479
  %v6483 = vunpack.c.l.b16 %v6472
  %v6484 = vunpack.c.l.b16 %v6473
  %v6485 = vpack.c.b16 %v6484, %v6483
  %v6488 = vsel %vm76, %v6480, 0
  %6490 = vmatprep.subr.bf16.mxu0 0
  %6491 = vmatpush1.bf16.msra.mxu0 %v6485
  %6492 = vmatprep.subr.bf16.mxu0 0
  %6493 = vmatpush1.bf16.msra.mxu0 0
  %6494 = vmatprep.subr.bf16.mxu0 0
  %6495 = vmatpush1.bf16.msra.mxu0 0
  %6496 = vmatprep.subr.bf16.mxu0 0
  %6497 = vmatpush1.bf16.msra.mxu0 0
  %6498 = vmatprep.subr.bf16.mxu0 0
  %6499 = vmatpush1.bf16.msra.mxu0 0
  %6500 = vmatprep.subr.bf16.mxu0 0
  %6501 = vmatpush1.bf16.msra.mxu0 0
  %6502 = vmatprep.subr.bf16.mxu0 0
  %6503 = vmatpush1.bf16.msra.mxu0 0
  %6504 = vmatprep.subr.bf16.mxu0 0
  %6505 = vmatpush1.bf16.msra.mxu0 0
  %6506 = vmatprep.subr.bf16.mxu0 0
  %6507 = vmatpush1.bf16.msra.mxu0 0
  %6508 = vmatprep.subr.bf16.mxu0 0
  %6509 = vmatpush1.bf16.msra.mxu0 0
  %6510 = vmatprep.subr.bf16.mxu0 0
  %6511 = vmatpush1.bf16.msra.mxu0 0
  %6512 = vmatprep.subr.bf16.mxu0 0
  %6513 = vmatpush1.bf16.msra.mxu0 0
  %6514 = vmatprep.subr.bf16.mxu0 0
  %6515 = vmatpush1.bf16.msra.mxu0 0
  %6516 = vmatprep.subr.bf16.mxu0 0
  %6517 = vmatpush1.bf16.msra.mxu0 0
  %6518 = vmatprep.subr.bf16.mxu0 0
  %6519 = vmatpush1.bf16.msra.mxu0 0
  %6520 = vmatprep.subr.bf16.mxu0 0
  %6521 = vmatpush1.bf16.msra.mxu0 0
  %6522 = vmatprep.mubr.bf16.mxu0 0
  %6523 = vmatmul.mubr.bf16.gmra.mrb[0].mxu0 %v6488
  %v6524 = vpop.f32.mrb[0].mxu0
  %v6525 = vadd.f32 0.0, %v6524
  %v6526 = vpop.f32.mrb[0].mxu0
  %v6527 = vpop.f32.mrb[0].mxu0
  %v6528 = vpop.f32.mrb[0].mxu0
  %6529 = vdwg.mxu0
  %v6530 = vadd.f32 %v6277, %v6525
  %v6531 = vpack.c.bf16 %v6466, %v6466
  %v6532 = vpack.c.bf16 %v6467, %v6467
  %v6535 = vunpack.c.l.b16 %v6531
  %v6536 = vunpack.c.l.b16 %v6532
  %v6537 = vrot.slane %v6536, 7
  %v6538 = vsel %vm659, %v6537, %v6535
  %v6539 = vpack.c.b16 %v6538, %v6538
  %v6541 = vsel %vm76, %v6539, 0
  %6543 = vmatprep.subr.bf16.mxu0 0
  %6544 = vmatpush1.bf16.msra.mxu0 %v449
  %6545 = vmatprep.subr.bf16.mxu0 0
  %6546 = vmatpush1.bf16.msra.mxu0 0
  %6547 = vmatprep.subr.bf16.mxu0 0
  %6548 = vmatpush1.bf16.msra.mxu0 0
  %6549 = vmatprep.subr.bf16.mxu0 0
  %6550 = vmatpush1.bf16.msra.mxu0 0
  %6551 = vmatprep.subr.bf16.mxu0 0
  %6552 = vmatpush1.bf16.msra.mxu0 0
  %6553 = vmatprep.subr.bf16.mxu0 0
  %6554 = vmatpush1.bf16.msra.mxu0 0
  %6555 = vmatprep.subr.bf16.mxu0 0
  %6556 = vmatpush1.bf16.msra.mxu0 0
  %6557 = vmatprep.subr.bf16.mxu0 0
  %6558 = vmatpush1.bf16.msra.mxu0 0
  %6559 = vmatprep.subr.bf16.mxu0 0
  %6560 = vmatpush1.bf16.msra.mxu0 0
  %6561 = vmatprep.subr.bf16.mxu0 0
  %6562 = vmatpush1.bf16.msra.mxu0 0
  %6563 = vmatprep.subr.bf16.mxu0 0
  %6564 = vmatpush1.bf16.msra.mxu0 0
  %6565 = vmatprep.subr.bf16.mxu0 0
  %6566 = vmatpush1.bf16.msra.mxu0 0
  %6567 = vmatprep.subr.bf16.mxu0 0
  %6568 = vmatpush1.bf16.msra.mxu0 0
  %6569 = vmatprep.subr.bf16.mxu0 0
  %6570 = vmatpush1.bf16.msra.mxu0 0
  %6571 = vmatprep.subr.bf16.mxu0 0
  %6572 = vmatpush1.bf16.msra.mxu0 0
  %6573 = vmatprep.subr.bf16.mxu0 0
  %6574 = vmatpush1.bf16.msra.mxu0 0
  %6575 = vmatprep.mubr.bf16.mxu0 0
  %6576 = vmatmul.mubr.bf16.gmra.mrb[0].mxu0 %v6541
  %v6577 = vpop.f32.mrb[0].mxu0
  %v6578 = vadd.f32 0.0, %v6577
  %v6579 = vpop.f32.mrb[0].mxu0
  %v6580 = vpop.f32.mrb[0].mxu0
  %v6581 = vpop.f32.mrb[0].mxu0
  %6582 = vdwg.mxu0
  %6583 = vmatprep.subr.bf16.mxu0 0
  %6584 = vmatpush1.bf16.msra.mxu0 %v498
  %6585 = vmatprep.subr.bf16.mxu0 0
  %6586 = vmatpush1.bf16.msra.mxu0 0
  %6587 = vmatprep.subr.bf16.mxu0 0
  %6588 = vmatpush1.bf16.msra.mxu0 0
  %6589 = vmatprep.subr.bf16.mxu0 0
  %6590 = vmatpush1.bf16.msra.mxu0 0
  %6591 = vmatprep.subr.bf16.mxu0 0
  %6592 = vmatpush1.bf16.msra.mxu0 0
  %6593 = vmatprep.subr.bf16.mxu0 0
  %6594 = vmatpush1.bf16.msra.mxu0 0
  %6595 = vmatprep.subr.bf16.mxu0 0
  %6596 = vmatpush1.bf16.msra.mxu0 0
  %6597 = vmatprep.subr.bf16.mxu0 0
  %6598 = vmatpush1.bf16.msra.mxu0 0
  %6599 = vmatprep.subr.bf16.mxu0 0
  %6600 = vmatpush1.bf16.msra.mxu0 0
  %6601 = vmatprep.subr.bf16.mxu0 0
  %6602 = vmatpush1.bf16.msra.mxu0 0
  %6603 = vmatprep.subr.bf16.mxu0 0
  %6604 = vmatpush1.bf16.msra.mxu0 0
  %6605 = vmatprep.subr.bf16.mxu0 0
  %6606 = vmatpush1.bf16.msra.mxu0 0
  %6607 = vmatprep.subr.bf16.mxu0 0
  %6608 = vmatpush1.bf16.msra.mxu0 0
  %6609 = vmatprep.subr.bf16.mxu0 0
  %6610 = vmatpush1.bf16.msra.mxu0 0
  %6611 = vmatprep.subr.bf16.mxu0 0
  %6612 = vmatpush1.bf16.msra.mxu0 0
  %6613 = vmatprep.subr.bf16.mxu0 0
  %6614 = vmatpush1.bf16.msra.mxu0 0
  %6615 = vmatprep.mubr.bf16.mxu0 0
  %6616 = vmatmul.mubr.bf16.gmra.mrb[0].mxu0 %v6541
  %v6617 = vpop.f32.mrb[0].mxu0
  %v6618 = vadd.f32 0.0, %v6617
  %v6619 = vpop.f32.mrb[0].mxu0
  %v6620 = vpop.f32.mrb[0].mxu0
  %v6621 = vpop.f32.mrb[0].mxu0
  %6622 = vdwg.mxu0
  %v6623 = vld [vmem:[#allocation2 + $0x18] sm:$0x1]
  %v6624 = vld [vmem:[#allocation2 + $0x38] sm:$0x1]
  %v6626 = vrot.slane %v6578, 1
  %v6629 = vadd.f32 %v6623, %v6578
  %v6630 = vadd.f32 %v6624, %v6626
  %v6631 = vxor.u32 %v6629, 2147483648
  %v6632 = vxor.u32 %v6630, 2147483648
  %v6633 = vmul.f32 %v6631, 1.442695
  %v6634 = vpow.pop %v6633
  %v6635 = vmul.f32 %v6632, 1.442695
  %v6636 = vpow.pop %v6635
  %v6637 = vadd.f32 %v6634, 1.0
  %v6638 = vadd.f32 %v6636, 1.0
  %v6639 = vrcp.pop %v6637
  %v6640 = vmul.f32 1.0, %v6639
  %v6641 = vrcp.pop %v6638
  %v6642 = vmul.f32 1.0, %v6641
  %v6643 = vld [vmem:[#allocation3 + $0x18] sm:$0x1]
  %v6644 = vld [vmem:[#allocation3 + $0x38] sm:$0x1]
  %v6646 = vrot.slane %v6618, 1
  %v6649 = vadd.f32 %v6643, %v6618
  %v6650 = vadd.f32 %v6644, %v6646
  %v6651 = vxor.u32 %v6649, 2147483648
  %v6652 = vxor.u32 %v6650, 2147483648
  %v6653 = vmul.f32 %v6651, 1.442695
  %v6654 = vpow.pop %v6653
  %v6655 = vmul.f32 %v6652, 1.442695
  %v6656 = vpow.pop %v6655
  %v6657 = vadd.f32 %v6654, 1.0
  %v6658 = vadd.f32 %v6656, 1.0
  %v6659 = vrcp.pop %v6657
  %v6660 = vmul.f32 1.0, %v6659
  %v6661 = vrcp.pop %v6658
  %v6662 = vmul.f32 1.0, %v6661
  %v6663 = vld [vmem:[#allocation4 + $0x18] sm:$0x1]
  %v6664 = vld [vmem:[#allocation4 + $0x38] sm:$0x1]
  %6665 = vmatprep.subr.bf16.mxu0 0
  %6666 = vmatpush1.bf16.msra.mxu0 %v590
  %6667 = vmatprep.subr.bf16.mxu0 0
  %6668 = vmatpush1.bf16.msra.mxu0 0
  %6669 = vmatprep.subr.bf16.mxu0 0
  %6670 = vmatpush1.bf16.msra.mxu0 0
  %6671 = vmatprep.subr.bf16.mxu0 0
  %6672 = vmatpush1.bf16.msra.mxu0 0
  %6673 = vmatprep.subr.bf16.mxu0 0
  %6674 = vmatpush1.bf16.msra.mxu0 0
  %6675 = vmatprep.subr.bf16.mxu0 0
  %6676 = vmatpush1.bf16.msra.mxu0 0
  %6677 = vmatprep.subr.bf16.mxu0 0
  %6678 = vmatpush1.bf16.msra.mxu0 0
  %6679 = vmatprep.subr.bf16.mxu0 0
  %6680 = vmatpush1.bf16.msra.mxu0 0
  %6681 = vmatprep.subr.bf16.mxu0 0
  %6682 = vmatpush1.bf16.msra.mxu0 0
  %6683 = vmatprep.subr.bf16.mxu0 0
  %6684 = vmatpush1.bf16.msra.mxu0 0
  %6685 = vmatprep.subr.bf16.mxu0 0
  %6686 = vmatpush1.bf16.msra.mxu0 0
  %6687 = vmatprep.subr.bf16.mxu0 0
  %6688 = vmatpush1.bf16.msra.mxu0 0
  %6689 = vmatprep.subr.bf16.mxu0 0
  %6690 = vmatpush1.bf16.msra.mxu0 0
  %6691 = vmatprep.subr.bf16.mxu0 0
  %6692 = vmatpush1.bf16.msra.mxu0 0
  %6693 = vmatprep.subr.bf16.mxu0 0
  %6694 = vmatpush1.bf16.msra.mxu0 0
  %6695 = vmatprep.subr.bf16.mxu0 0
  %6696 = vmatpush1.bf16.msra.mxu0 0
  %6697 = vmatprep.mubr.bf16.mxu0 0
  %6698 = vmatmul.mubr.bf16.gmra.mrb[0].mxu0 %v6541
  %v6699 = vpop.f32.mrb[0].mxu0
  %v6700 = vadd.f32 %v585, %v6699
  %v6701 = vpop.f32.mrb[0].mxu0
  %v6702 = vpop.f32.mrb[0].mxu0
  %v6703 = vpop.f32.mrb[0].mxu0
  %6704 = vdwg.mxu0
  %v6706 = vrot.slane %v6700, 1
  %v6709 = vmul.f32 %v6640, %v6700
  %v6710 = vmul.f32 %v6642, %v6706
  %v6711 = vadd.f32 %v6663, %v6709
  %v6712 = vadd.f32 %v6664, %v6710
  %v6713 = vtanh.pop %v6711
  %v6714 = vtanh.pop %v6712
  %v6715 = vsub.f32 %v6466, %v6713
  %v6716 = vsub.f32 %v6467, %v6714
  %v6717 = vmul.f32 %v6660, %v6715
  %v6718 = vmul.f32 %v6662, %v6716
  %v6719 = vadd.f32 %v6713, %v6717
  %v6720 = vadd.f32 %v6714, %v6718
  %v6721 = vmax.f32 %v6719, 0.0
  %v6722 = vmax.f32 %v6720, 0.0
  %v6723 = vpack.c.bf16 %v6721, %v6721
  %v6724 = vpack.c.bf16 %v6722, %v6722
  %v6725 = vld [vmem:[%s6 + $0xc0] sm:$0xf]
  %v6726 = vld [vmem:[%s6 + $0xc4] sm:$0xf]
  %v6729 = vunpack.c.l.b16 %v6723
  %v6730 = vunpack.c.l.b16 %v6724
  %v6731 = vrot.slane %v6730, 7
  %v6732 = vsel %vm659, %v6731, %v6729
  %v6733 = vpack.c.b16 %v6732, %v6732
  %v6736 = vunpack.c.l.b16 %v6725
  %v6737 = vunpack.c.l.b16 %v6726
  %v6738 = vpack.c.b16 %v6737, %v6736
  %v6741 = vsel %vm76, %v6733, 0
  %6743 = vmatprep.subr.bf16.mxu0 0
  %6744 = vmatpush1.bf16.msra.mxu0 %v6738
  %6745 = vmatprep.subr.bf16.mxu0 0
  %6746 = vmatpush1.bf16.msra.mxu0 0
  %6747 = vmatprep.subr.bf16.mxu0 0
  %6748 = vmatpush1.bf16.msra.mxu0 0
  %6749 = vmatprep.subr.bf16.mxu0 0
  %6750 = vmatpush1.bf16.msra.mxu0 0
  %6751 = vmatprep.subr.bf16.mxu0 0
  %6752 = vmatpush1.bf16.msra.mxu0 0
  %6753 = vmatprep.subr.bf16.mxu0 0
  %6754 = vmatpush1.bf16.msra.mxu0 0
  %6755 = vmatprep.subr.bf16.mxu0 0
  %6756 = vmatpush1.bf16.msra.mxu0 0
  %6757 = vmatprep.subr.bf16.mxu0 0
  %6758 = vmatpush1.bf16.msra.mxu0 0
  %6759 = vmatprep.subr.bf16.mxu0 0
  %6760 = vmatpush1.bf16.msra.mxu0 0
  %6761 = vmatprep.subr.bf16.mxu0 0
  %6762 = vmatpush1.bf16.msra.mxu0 0
  %6763 = vmatprep.subr.bf16.mxu0 0
  %6764 = vmatpush1.bf16.msra.mxu0 0
  %6765 = vmatprep.subr.bf16.mxu0 0
  %6766 = vmatpush1.bf16.msra.mxu0 0
  %6767 = vmatprep.subr.bf16.mxu0 0
  %6768 = vmatpush1.bf16.msra.mxu0 0
  %6769 = vmatprep.subr.bf16.mxu0 0
  %6770 = vmatpush1.bf16.msra.mxu0 0
  %6771 = vmatprep.subr.bf16.mxu0 0
  %6772 = vmatpush1.bf16.msra.mxu0 0
  %6773 = vmatprep.subr.bf16.mxu0 0
  %6774 = vmatpush1.bf16.msra.mxu0 0
  %6775 = vmatprep.mubr.bf16.mxu0 0
  %6776 = vmatmul.mubr.bf16.gmra.mrb[0].mxu0 %v6741
  %v6777 = vpop.f32.mrb[0].mxu0
  %v6778 = vadd.f32 0.0, %v6777
  %v6779 = vpop.f32.mrb[0].mxu0
  %v6780 = vpop.f32.mrb[0].mxu0
  %v6781 = vpop.f32.mrb[0].mxu0
  %6782 = vdwg.mxu0
  %v6783 = vadd.f32 %v6530, %v6778
  %v6784 = vpack.c.bf16 %v6719, %v6719
  %v6785 = vpack.c.bf16 %v6720, %v6720
  %v6788 = vunpack.c.l.b16 %v6784
  %v6789 = vunpack.c.l.b16 %v6785
  %v6790 = vrot.slane %v6789, 7
  %v6791 = vsel %vm659, %v6790, %v6788
  %v6792 = vpack.c.b16 %v6791, %v6791
  %v6794 = vsel %vm76, %v6792, 0
  %6796 = vmatprep.subr.bf16.mxu0 0
  %6797 = vmatpush1.bf16.msra.mxu0 %v449
  %6798 = vmatprep.subr.bf16.mxu0 0
  %6799 = vmatpush1.bf16.msra.mxu0 0
  %6800 = vmatprep.subr.bf16.mxu0 0
  %6801 = vmatpush1.bf16.msra.mxu0 0
  %6802 = vmatprep.subr.bf16.mxu0 0
  %6803 = vmatpush1.bf16.msra.mxu0 0
  %6804 = vmatprep.subr.bf16.mxu0 0
  %6805 = vmatpush1.bf16.msra.mxu0 0
  %6806 = vmatprep.subr.bf16.mxu0 0
  %6807 = vmatpush1.bf16.msra.mxu0 0
  %6808 = vmatprep.subr.bf16.mxu0 0
  %6809 = vmatpush1.bf16.msra.mxu0 0
  %6810 = vmatprep.subr.bf16.mxu0 0
  %6811 = vmatpush1.bf16.msra.mxu0 0
  %6812 = vmatprep.subr.bf16.mxu0 0
  %6813 = vmatpush1.bf16.msra.mxu0 0
  %6814 = vmatprep.subr.bf16.mxu0 0
  %6815 = vmatpush1.bf16.msra.mxu0 0
  %6816 = vmatprep.subr.bf16.mxu0 0
  %6817 = vmatpush1.bf16.msra.mxu0 0
  %6818 = vmatprep.subr.bf16.mxu0 0
  %6819 = vmatpush1.bf16.msra.mxu0 0
  %6820 = vmatprep.subr.bf16.mxu0 0
  %6821 = vmatpush1.bf16.msra.mxu0 0
  %6822 = vmatprep.subr.bf16.mxu0 0
  %6823 = vmatpush1.bf16.msra.mxu0 0
  %6824 = vmatprep.subr.bf16.mxu0 0
  %6825 = vmatpush1.bf16.msra.mxu0 0
  %6826 = vmatprep.subr.bf16.mxu0 0
  %6827 = vmatpush1.bf16.msra.mxu0 0
  %6828 = vmatprep.mubr.bf16.mxu0 0
  %6829 = vmatmul.mubr.bf16.gmra.mrb[0].mxu0 %v6794
  %v6830 = vpop.f32.mrb[0].mxu0
  %v6831 = vadd.f32 0.0, %v6830
  %v6832 = vpop.f32.mrb[0].mxu0
  %v6833 = vpop.f32.mrb[0].mxu0
  %v6834 = vpop.f32.mrb[0].mxu0
  %6835 = vdwg.mxu0
  %6836 = vmatprep.subr.bf16.mxu0 0
  %6837 = vmatpush1.bf16.msra.mxu0 %v498
  %6838 = vmatprep.subr.bf16.mxu0 0
  %6839 = vmatpush1.bf16.msra.mxu0 0
  %6840 = vmatprep.subr.bf16.mxu0 0
  %6841 = vmatpush1.bf16.msra.mxu0 0
  %6842 = vmatprep.subr.bf16.mxu0 0
  %6843 = vmatpush1.bf16.msra.mxu0 0
  %6844 = vmatprep.subr.bf16.mxu0 0
  %6845 = vmatpush1.bf16.msra.mxu0 0
  %6846 = vmatprep.subr.bf16.mxu0 0
  %6847 = vmatpush1.bf16.msra.mxu0 0
  %6848 = vmatprep.subr.bf16.mxu0 0
  %6849 = vmatpush1.bf16.msra.mxu0 0
  %6850 = vmatprep.subr.bf16.mxu0 0
  %6851 = vmatpush1.bf16.msra.mxu0 0
  %6852 = vmatprep.subr.bf16.mxu0 0
  %6853 = vmatpush1.bf16.msra.mxu0 0
  %6854 = vmatprep.subr.bf16.mxu0 0
  %6855 = vmatpush1.bf16.msra.mxu0 0
  %6856 = vmatprep.subr.bf16.mxu0 0
  %6857 = vmatpush1.bf16.msra.mxu0 0
  %6858 = vmatprep.subr.bf16.mxu0 0
  %6859 = vmatpush1.bf16.msra.mxu0 0
  %6860 = vmatprep.subr.bf16.mxu0 0
  %6861 = vmatpush1.bf16.msra.mxu0 0
  %6862 = vmatprep.subr.bf16.mxu0 0
  %6863 = vmatpush1.bf16.msra.mxu0 0
  %6864 = vmatprep.subr.bf16.mxu0 0
  %6865 = vmatpush1.bf16.msra.mxu0 0
  %6866 = vmatprep.subr.bf16.mxu0 0
  %6867 = vmatpush1.bf16.msra.mxu0 0
  %6868 = vmatprep.mubr.bf16.mxu0 0
  %6869 = vmatmul.mubr.bf16.gmra.mrb[0].mxu0 %v6794
  %v6870 = vpop.f32.mrb[0].mxu0
  %v6871 = vadd.f32 0.0, %v6870
  %v6872 = vpop.f32.mrb[0].mxu0
  %v6873 = vpop.f32.mrb[0].mxu0
  %v6874 = vpop.f32.mrb[0].mxu0
  %6875 = vdwg.mxu0
  %v6876 = vld [vmem:[#allocation2 + $0x19] sm:$0x1]
  %v6877 = vld [vmem:[#allocation2 + $0x39] sm:$0x1]
  %v6879 = vrot.slane %v6831, 1
  %v6882 = vadd.f32 %v6876, %v6831
  %v6883 = vadd.f32 %v6877, %v6879
  %v6884 = vxor.u32 %v6882, 2147483648
  %v6885 = vxor.u32 %v6883, 2147483648
  %v6886 = vmul.f32 %v6884, 1.442695
  %v6887 = vpow.pop %v6886
  %v6888 = vmul.f32 %v6885, 1.442695
  %v6889 = vpow.pop %v6888
  %v6890 = vadd.f32 %v6887, 1.0
  %v6891 = vadd.f32 %v6889, 1.0
  %v6892 = vrcp.pop %v6890
  %v6893 = vmul.f32 1.0, %v6892
  %v6894 = vrcp.pop %v6891
  %v6895 = vmul.f32 1.0, %v6894
  %v6896 = vld [vmem:[#allocation3 + $0x19] sm:$0x1]
  %v6897 = vld [vmem:[#allocation3 + $0x39] sm:$0x1]
  %v6899 = vrot.slane %v6871, 1
  %v6902 = vadd.f32 %v6896, %v6871
  %v6903 = vadd.f32 %v6897, %v6899
  %v6904 = vxor.u32 %v6902, 2147483648
  %v6905 = vxor.u32 %v6903, 2147483648
  %v6906 = vmul.f32 %v6904, 1.442695
  %v6907 = vpow.pop %v6906
  %v6908 = vmul.f32 %v6905, 1.442695
  %v6909 = vpow.pop %v6908
  %v6910 = vadd.f32 %v6907, 1.0
  %v6911 = vadd.f32 %v6909, 1.0
  %v6912 = vrcp.pop %v6910
  %v6913 = vmul.f32 1.0, %v6912
  %v6914 = vrcp.pop %v6911
  %v6915 = vmul.f32 1.0, %v6914
  %v6916 = vld [vmem:[#allocation4 + $0x19] sm:$0x1]
  %v6917 = vld [vmem:[#allocation4 + $0x39] sm:$0x1]
  %6918 = vmatprep.subr.bf16.mxu0 0
  %6919 = vmatpush1.bf16.msra.mxu0 %v590
  %6920 = vmatprep.subr.bf16.mxu0 0
  %6921 = vmatpush1.bf16.msra.mxu0 0
  %6922 = vmatprep.subr.bf16.mxu0 0
  %6923 = vmatpush1.bf16.msra.mxu0 0
  %6924 = vmatprep.subr.bf16.mxu0 0
  %6925 = vmatpush1.bf16.msra.mxu0 0
  %6926 = vmatprep.subr.bf16.mxu0 0
  %6927 = vmatpush1.bf16.msra.mxu0 0
  %6928 = vmatprep.subr.bf16.mxu0 0
  %6929 = vmatpush1.bf16.msra.mxu0 0
  %6930 = vmatprep.subr.bf16.mxu0 0
  %6931 = vmatpush1.bf16.msra.mxu0 0
  %6932 = vmatprep.subr.bf16.mxu0 0
  %6933 = vmatpush1.bf16.msra.mxu0 0
  %6934 = vmatprep.subr.bf16.mxu0 0
  %6935 = vmatpush1.bf16.msra.mxu0 0
  %6936 = vmatprep.subr.bf16.mxu0 0
  %6937 = vmatpush1.bf16.msra.mxu0 0
  %6938 = vmatprep.subr.bf16.mxu0 0
  %6939 = vmatpush1.bf16.msra.mxu0 0
  %6940 = vmatprep.subr.bf16.mxu0 0
  %6941 = vmatpush1.bf16.msra.mxu0 0
  %6942 = vmatprep.subr.bf16.mxu0 0
  %6943 = vmatpush1.bf16.msra.mxu0 0
  %6944 = vmatprep.subr.bf16.mxu0 0
  %6945 = vmatpush1.bf16.msra.mxu0 0
  %6946 = vmatprep.subr.bf16.mxu0 0
  %6947 = vmatpush1.bf16.msra.mxu0 0
  %6948 = vmatprep.subr.bf16.mxu0 0
  %6949 = vmatpush1.bf16.msra.mxu0 0
  %6950 = vmatprep.mubr.bf16.mxu0 0
  %6951 = vmatmul.mubr.bf16.gmra.mrb[0].mxu0 %v6794
  %v6952 = vpop.f32.mrb[0].mxu0
  %v6953 = vadd.f32 %v585, %v6952
  %v6954 = vpop.f32.mrb[0].mxu0
  %v6955 = vpop.f32.mrb[0].mxu0
  %v6956 = vpop.f32.mrb[0].mxu0
  %6957 = vdwg.mxu0
  %v6959 = vrot.slane %v6953, 1
  %v6962 = vmul.f32 %v6893, %v6953
  %v6963 = vmul.f32 %v6895, %v6959
  %v6964 = vadd.f32 %v6916, %v6962
  %v6965 = vadd.f32 %v6917, %v6963
  %v6966 = vtanh.pop %v6964
  %v6967 = vtanh.pop %v6965
  %v6968 = vsub.f32 %v6719, %v6966
  %v6969 = vsub.f32 %v6720, %v6967
  %v6970 = vmul.f32 %v6913, %v6968
  %v6971 = vmul.f32 %v6915, %v6969
  %v6972 = vadd.f32 %v6966, %v6970
  %v6973 = vadd.f32 %v6967, %v6971
  %v6974 = vmax.f32 %v6972, 0.0
  %v6975 = vmax.f32 %v6973, 0.0
  %v6976 = vpack.c.bf16 %v6974, %v6974
  %v6977 = vpack.c.bf16 %v6975, %v6975
  %v6978 = vld [vmem:[%s6 + $0xc8] sm:$0xf]
  %v6979 = vld [vmem:[%s6 + $0xcc] sm:$0xf]
  %v6982 = vunpack.c.l.b16 %v6976
  %v6983 = vunpack.c.l.b16 %v6977
  %v6984 = vrot.slane %v6983, 7
  %v6985 = vsel %vm659, %v6984, %v6982
  %v6986 = vpack.c.b16 %v6985, %v6985
  %v6989 = vunpack.c.l.b16 %v6978
  %v6990 = vunpack.c.l.b16 %v6979
  %v6991 = vpack.c.b16 %v6990, %v6989
  %v6994 = vsel %vm76, %v6986, 0
  %6996 = vmatprep.subr.bf16.mxu0 0
  %6997 = vmatpush1.bf16.msra.mxu0 %v6991
  %6998 = vmatprep.subr.bf16.mxu0 0
  %6999 = vmatpush1.bf16.msra.mxu0 0
  %7000 = vmatprep.subr.bf16.mxu0 0
  %7001 = vmatpush1.bf16.msra.mxu0 0
  %7002 = vmatprep.subr.bf16.mxu0 0
  %7003 = vmatpush1.bf16.msra.mxu0 0
  %7004 = vmatprep.subr.bf16.mxu0 0
  %7005 = vmatpush1.bf16.msra.mxu0 0
  %7006 = vmatprep.subr.bf16.mxu0 0
  %7007 = vmatpush1.bf16.msra.mxu0 0
  %7008 = vmatprep.subr.bf16.mxu0 0
  %7009 = vmatpush1.bf16.msra.mxu0 0
  %7010 = vmatprep.subr.bf16.mxu0 0
  %7011 = vmatpush1.bf16.msra.mxu0 0
  %7012 = vmatprep.subr.bf16.mxu0 0
  %7013 = vmatpush1.bf16.msra.mxu0 0
  %7014 = vmatprep.subr.bf16.mxu0 0
  %7015 = vmatpush1.bf16.msra.mxu0 0
  %7016 = vmatprep.subr.bf16.mxu0 0
  %7017 = vmatpush1.bf16.msra.mxu0 0
  %7018 = vmatprep.subr.bf16.mxu0 0
  %7019 = vmatpush1.bf16.msra.mxu0 0
  %7020 = vmatprep.subr.bf16.mxu0 0
  %7021 = vmatpush1.bf16.msra.mxu0 0
  %7022 = vmatprep.subr.bf16.mxu0 0
  %7023 = vmatpush1.bf16.msra.mxu0 0
  %7024 = vmatprep.subr.bf16.mxu0 0
  %7025 = vmatpush1.bf16.msra.mxu0 0
  %7026 = vmatprep.subr.bf16.mxu0 0
  %7027 = vmatpush1.bf16.msra.mxu0 0
  %7028 = vmatprep.mubr.bf16.mxu0 0
  %7029 = vmatmul.mubr.bf16.gmra.mrb[0].mxu0 %v6994
  %v7030 = vpop.f32.mrb[0].mxu0
  %v7031 = vadd.f32 0.0, %v7030
  %v7032 = vpop.f32.mrb[0].mxu0
  %v7033 = vpop.f32.mrb[0].mxu0
  %v7034 = vpop.f32.mrb[0].mxu0
  %7035 = vdwg.mxu0
  %v7036 = vadd.f32 %v6783, %v7031
  %v7037 = vpack.c.bf16 %v6972, %v6972
  %v7038 = vpack.c.bf16 %v6973, %v6973
  %v7041 = vunpack.c.l.b16 %v7037
  %v7042 = vunpack.c.l.b16 %v7038
  %v7043 = vrot.slane %v7042, 7
  %v7044 = vsel %vm659, %v7043, %v7041
  %v7045 = vpack.c.b16 %v7044, %v7044
  %v7047 = vsel %vm76, %v7045, 0
  %7049 = vmatprep.subr.bf16.mxu0 0
  %7050 = vmatpush1.bf16.msra.mxu0 %v449
  %7051 = vmatprep.subr.bf16.mxu0 0
  %7052 = vmatpush1.bf16.msra.mxu0 0
  %7053 = vmatprep.subr.bf16.mxu0 0
  %7054 = vmatpush1.bf16.msra.mxu0 0
  %7055 = vmatprep.subr.bf16.mxu0 0
  %7056 = vmatpush1.bf16.msra.mxu0 0
  %7057 = vmatprep.subr.bf16.mxu0 0
  %7058 = vmatpush1.bf16.msra.mxu0 0
  %7059 = vmatprep.subr.bf16.mxu0 0
  %7060 = vmatpush1.bf16.msra.mxu0 0
  %7061 = vmatprep.subr.bf16.mxu0 0
  %7062 = vmatpush1.bf16.msra.mxu0 0
  %7063 = vmatprep.subr.bf16.mxu0 0
  %7064 = vmatpush1.bf16.msra.mxu0 0
  %7065 = vmatprep.subr.bf16.mxu0 0
  %7066 = vmatpush1.bf16.msra.mxu0 0
  %7067 = vmatprep.subr.bf16.mxu0 0
  %7068 = vmatpush1.bf16.msra.mxu0 0
  %7069 = vmatprep.subr.bf16.mxu0 0
  %7070 = vmatpush1.bf16.msra.mxu0 0
  %7071 = vmatprep.subr.bf16.mxu0 0
  %7072 = vmatpush1.bf16.msra.mxu0 0
  %7073 = vmatprep.subr.bf16.mxu0 0
  %7074 = vmatpush1.bf16.msra.mxu0 0
  %7075 = vmatprep.subr.bf16.mxu0 0
  %7076 = vmatpush1.bf16.msra.mxu0 0
  %7077 = vmatprep.subr.bf16.mxu0 0
  %7078 = vmatpush1.bf16.msra.mxu0 0
  %7079 = vmatprep.subr.bf16.mxu0 0
  %7080 = vmatpush1.bf16.msra.mxu0 0
  %7081 = vmatprep.mubr.bf16.mxu0 0
  %7082 = vmatmul.mubr.bf16.gmra.mrb[0].mxu0 %v7047
  %v7083 = vpop.f32.mrb[0].mxu0
  %v7084 = vadd.f32 0.0, %v7083
  %v7085 = vpop.f32.mrb[0].mxu0
  %v7086 = vpop.f32.mrb[0].mxu0
  %v7087 = vpop.f32.mrb[0].mxu0
  %7088 = vdwg.mxu0
  %7089 = vmatprep.subr.bf16.mxu0 0
  %7090 = vmatpush1.bf16.msra.mxu0 %v498
  %7091 = vmatprep.subr.bf16.mxu0 0
  %7092 = vmatpush1.bf16.msra.mxu0 0
  %7093 = vmatprep.subr.bf16.mxu0 0
  %7094 = vmatpush1.bf16.msra.mxu0 0
  %7095 = vmatprep.subr.bf16.mxu0 0
  %7096 = vmatpush1.bf16.msra.mxu0 0
  %7097 = vmatprep.subr.bf16.mxu0 0
  %7098 = vmatpush1.bf16.msra.mxu0 0
  %7099 = vmatprep.subr.bf16.mxu0 0
  %7100 = vmatpush1.bf16.msra.mxu0 0
  %7101 = vmatprep.subr.bf16.mxu0 0
  %7102 = vmatpush1.bf16.msra.mxu0 0
  %7103 = vmatprep.subr.bf16.mxu0 0
  %7104 = vmatpush1.bf16.msra.mxu0 0
  %7105 = vmatprep.subr.bf16.mxu0 0
  %7106 = vmatpush1.bf16.msra.mxu0 0
  %7107 = vmatprep.subr.bf16.mxu0 0
  %7108 = vmatpush1.bf16.msra.mxu0 0
  %7109 = vmatprep.subr.bf16.mxu0 0
  %7110 = vmatpush1.bf16.msra.mxu0 0
  %7111 = vmatprep.subr.bf16.mxu0 0
  %7112 = vmatpush1.bf16.msra.mxu0 0
  %7113 = vmatprep.subr.bf16.mxu0 0
  %7114 = vmatpush1.bf16.msra.mxu0 0
  %7115 = vmatprep.subr.bf16.mxu0 0
  %7116 = vmatpush1.bf16.msra.mxu0 0
  %7117 = vmatprep.subr.bf16.mxu0 0
  %7118 = vmatpush1.bf16.msra.mxu0 0
  %7119 = vmatprep.subr.bf16.mxu0 0
  %7120 = vmatpush1.bf16.msra.mxu0 0
  %7121 = vmatprep.mubr.bf16.mxu0 0
  %7122 = vmatmul.mubr.bf16.gmra.mrb[0].mxu0 %v7047
  %v7123 = vpop.f32.mrb[0].mxu0
  %v7124 = vadd.f32 0.0, %v7123
  %v7125 = vpop.f32.mrb[0].mxu0
  %v7126 = vpop.f32.mrb[0].mxu0
  %v7127 = vpop.f32.mrb[0].mxu0
  %7128 = vdwg.mxu0
  %v7129 = vld [vmem:[#allocation2 + $0x1a] sm:$0x1]
  %v7130 = vld [vmem:[#allocation2 + $0x3a] sm:$0x1]
  %v7132 = vrot.slane %v7084, 1
  %v7135 = vadd.f32 %v7129, %v7084
  %v7136 = vadd.f32 %v7130, %v7132
  %v7137 = vxor.u32 %v7135, 2147483648
  %v7138 = vxor.u32 %v7136, 2147483648
  %v7139 = vmul.f32 %v7137, 1.442695
  %v7140 = vpow.pop %v7139
  %v7141 = vmul.f32 %v7138, 1.442695
  %v7142 = vpow.pop %v7141
  %v7143 = vadd.f32 %v7140, 1.0
  %v7144 = vadd.f32 %v7142, 1.0
  %v7145 = vrcp.pop %v7143
  %v7146 = vmul.f32 1.0, %v7145
  %v7147 = vrcp.pop %v7144
  %v7148 = vmul.f32 1.0, %v7147
  %v7149 = vld [vmem:[#allocation3 + $0x1a] sm:$0x1]
  %v7150 = vld [vmem:[#allocation3 + $0x3a] sm:$0x1]
  %v7152 = vrot.slane %v7124, 1
  %v7155 = vadd.f32 %v7149, %v7124
  %v7156 = vadd.f32 %v7150, %v7152
  %v7157 = vxor.u32 %v7155, 2147483648
  %v7158 = vxor.u32 %v7156, 2147483648
  %v7159 = vmul.f32 %v7157, 1.442695
  %v7160 = vpow.pop %v7159
  %v7161 = vmul.f32 %v7158, 1.442695
  %v7162 = vpow.pop %v7161
  %v7163 = vadd.f32 %v7160, 1.0
  %v7164 = vadd.f32 %v7162, 1.0
  %v7165 = vrcp.pop %v7163
  %v7166 = vmul.f32 1.0, %v7165
  %v7167 = vrcp.pop %v7164
  %v7168 = vmul.f32 1.0, %v7167
  %v7169 = vld [vmem:[#allocation4 + $0x1a] sm:$0x1]
  %v7170 = vld [vmem:[#allocation4 + $0x3a] sm:$0x1]
  %7171 = vmatprep.subr.bf16.mxu0 0
  %7172 = vmatpush1.bf16.msra.mxu0 %v590
  %7173 = vmatprep.subr.bf16.mxu0 0
  %7174 = vmatpush1.bf16.msra.mxu0 0
  %7175 = vmatprep.subr.bf16.mxu0 0
  %7176 = vmatpush1.bf16.msra.mxu0 0
  %7177 = vmatprep.subr.bf16.mxu0 0
  %7178 = vmatpush1.bf16.msra.mxu0 0
  %7179 = vmatprep.subr.bf16.mxu0 0
  %7180 = vmatpush1.bf16.msra.mxu0 0
  %7181 = vmatprep.subr.bf16.mxu0 0
  %7182 = vmatpush1.bf16.msra.mxu0 0
  %7183 = vmatprep.subr.bf16.mxu0 0
  %7184 = vmatpush1.bf16.msra.mxu0 0
  %7185 = vmatprep.subr.bf16.mxu0 0
  %7186 = vmatpush1.bf16.msra.mxu0 0
  %7187 = vmatprep.subr.bf16.mxu0 0
  %7188 = vmatpush1.bf16.msra.mxu0 0
  %7189 = vmatprep.subr.bf16.mxu0 0
  %7190 = vmatpush1.bf16.msra.mxu0 0
  %7191 = vmatprep.subr.bf16.mxu0 0
  %7192 = vmatpush1.bf16.msra.mxu0 0
  %7193 = vmatprep.subr.bf16.mxu0 0
  %7194 = vmatpush1.bf16.msra.mxu0 0
  %7195 = vmatprep.subr.bf16.mxu0 0
  %7196 = vmatpush1.bf16.msra.mxu0 0
  %7197 = vmatprep.subr.bf16.mxu0 0
  %7198 = vmatpush1.bf16.msra.mxu0 0
  %7199 = vmatprep.subr.bf16.mxu0 0
  %7200 = vmatpush1.bf16.msra.mxu0 0
  %7201 = vmatprep.subr.bf16.mxu0 0
  %7202 = vmatpush1.bf16.msra.mxu0 0
  %7203 = vmatprep.mubr.bf16.mxu0 0
  %7204 = vmatmul.mubr.bf16.gmra.mrb[0].mxu0 %v7047
  %v7205 = vpop.f32.mrb[0].mxu0
  %v7206 = vadd.f32 %v585, %v7205
  %v7207 = vpop.f32.mrb[0].mxu0
  %v7208 = vpop.f32.mrb[0].mxu0
  %v7209 = vpop.f32.mrb[0].mxu0
  %7210 = vdwg.mxu0
  %v7212 = vrot.slane %v7206, 1
  %v7215 = vmul.f32 %v7146, %v7206
  %v7216 = vmul.f32 %v7148, %v7212
  %v7217 = vadd.f32 %v7169, %v7215
  %v7218 = vadd.f32 %v7170, %v7216
  %v7219 = vtanh.pop %v7217
  %v7220 = vtanh.pop %v7218
  %v7221 = vsub.f32 %v6972, %v7219
  %v7222 = vsub.f32 %v6973, %v7220
  %v7223 = vmul.f32 %v7166, %v7221
  %v7224 = vmul.f32 %v7168, %v7222
  %v7225 = vadd.f32 %v7219, %v7223
  %v7226 = vadd.f32 %v7220, %v7224
  %v7227 = vmax.f32 %v7225, 0.0
  %v7228 = vmax.f32 %v7226, 0.0
  %v7229 = vpack.c.bf16 %v7227, %v7227
  %v7230 = vpack.c.bf16 %v7228, %v7228
  %v7231 = vld [vmem:[%s6 + $0xd0] sm:$0xf]
  %v7232 = vld [vmem:[%s6 + $0xd4] sm:$0xf]
  %v7235 = vunpack.c.l.b16 %v7229
  %v7236 = vunpack.c.l.b16 %v7230
  %v7237 = vrot.slane %v7236, 7
  %v7238 = vsel %vm659, %v7237, %v7235
  %v7239 = vpack.c.b16 %v7238, %v7238
  %v7242 = vunpack.c.l.b16 %v7231
  %v7243 = vunpack.c.l.b16 %v7232
  %v7244 = vpack.c.b16 %v7243, %v7242
  %v7247 = vsel %vm76, %v7239, 0
  %7249 = vmatprep.subr.bf16.mxu0 0
  %7250 = vmatpush1.bf16.msra.mxu0 %v7244
  %7251 = vmatprep.subr.bf16.mxu0 0
  %7252 = vmatpush1.bf16.msra.mxu0 0
  %7253 = vmatprep.subr.bf16.mxu0 0
  %7254 = vmatpush1.bf16.msra.mxu0 0
  %7255 = vmatprep.subr.bf16.mxu0 0
  %7256 = vmatpush1.bf16.msra.mxu0 0
  %7257 = vmatprep.subr.bf16.mxu0 0
  %7258 = vmatpush1.bf16.msra.mxu0 0
  %7259 = vmatprep.subr.bf16.mxu0 0
  %7260 = vmatpush1.bf16.msra.mxu0 0
  %7261 = vmatprep.subr.bf16.mxu0 0
  %7262 = vmatpush1.bf16.msra.mxu0 0
  %7263 = vmatprep.subr.bf16.mxu0 0
  %7264 = vmatpush1.bf16.msra.mxu0 0
  %7265 = vmatprep.subr.bf16.mxu0 0
  %7266 = vmatpush1.bf16.msra.mxu0 0
  %7267 = vmatprep.subr.bf16.mxu0 0
  %7268 = vmatpush1.bf16.msra.mxu0 0
  %7269 = vmatprep.subr.bf16.mxu0 0
  %7270 = vmatpush1.bf16.msra.mxu0 0
  %7271 = vmatprep.subr.bf16.mxu0 0
  %7272 = vmatpush1.bf16.msra.mxu0 0
  %7273 = vmatprep.subr.bf16.mxu0 0
  %7274 = vmatpush1.bf16.msra.mxu0 0
  %7275 = vmatprep.subr.bf16.mxu0 0
  %7276 = vmatpush1.bf16.msra.mxu0 0
  %7277 = vmatprep.subr.bf16.mxu0 0
  %7278 = vmatpush1.bf16.msra.mxu0 0
  %7279 = vmatprep.subr.bf16.mxu0 0
  %7280 = vmatpush1.bf16.msra.mxu0 0
  %7281 = vmatprep.mubr.bf16.mxu0 0
  %7282 = vmatmul.mubr.bf16.gmra.mrb[0].mxu0 %v7247
  %v7283 = vpop.f32.mrb[0].mxu0
  %v7284 = vadd.f32 0.0, %v7283
  %v7285 = vpop.f32.mrb[0].mxu0
  %v7286 = vpop.f32.mrb[0].mxu0
  %v7287 = vpop.f32.mrb[0].mxu0
  %7288 = vdwg.mxu0
  %v7289 = vadd.f32 %v7036, %v7284
  %v7290 = vpack.c.bf16 %v7225, %v7225
  %v7291 = vpack.c.bf16 %v7226, %v7226
  %v7294 = vunpack.c.l.b16 %v7290
  %v7295 = vunpack.c.l.b16 %v7291
  %v7296 = vrot.slane %v7295, 7
  %v7297 = vsel %vm659, %v7296, %v7294
  %v7298 = vpack.c.b16 %v7297, %v7297
  %v7300 = vsel %vm76, %v7298, 0
  %7302 = vmatprep.subr.bf16.mxu0 0
  %7303 = vmatpush1.bf16.msra.mxu0 %v449
  %7304 = vmatprep.subr.bf16.mxu0 0
  %7305 = vmatpush1.bf16.msra.mxu0 0
  %7306 = vmatprep.subr.bf16.mxu0 0
  %7307 = vmatpush1.bf16.msra.mxu0 0
  %7308 = vmatprep.subr.bf16.mxu0 0
  %7309 = vmatpush1.bf16.msra.mxu0 0
  %7310 = vmatprep.subr.bf16.mxu0 0
  %7311 = vmatpush1.bf16.msra.mxu0 0
  %7312 = vmatprep.subr.bf16.mxu0 0
  %7313 = vmatpush1.bf16.msra.mxu0 0
  %7314 = vmatprep.subr.bf16.mxu0 0
  %7315 = vmatpush1.bf16.msra.mxu0 0
  %7316 = vmatprep.subr.bf16.mxu0 0
  %7317 = vmatpush1.bf16.msra.mxu0 0
  %7318 = vmatprep.subr.bf16.mxu0 0
  %7319 = vmatpush1.bf16.msra.mxu0 0
  %7320 = vmatprep.subr.bf16.mxu0 0
  %7321 = vmatpush1.bf16.msra.mxu0 0
  %7322 = vmatprep.subr.bf16.mxu0 0
  %7323 = vmatpush1.bf16.msra.mxu0 0
  %7324 = vmatprep.subr.bf16.mxu0 0
  %7325 = vmatpush1.bf16.msra.mxu0 0
  %7326 = vmatprep.subr.bf16.mxu0 0
  %7327 = vmatpush1.bf16.msra.mxu0 0
  %7328 = vmatprep.subr.bf16.mxu0 0
  %7329 = vmatpush1.bf16.msra.mxu0 0
  %7330 = vmatprep.subr.bf16.mxu0 0
  %7331 = vmatpush1.bf16.msra.mxu0 0
  %7332 = vmatprep.subr.bf16.mxu0 0
  %7333 = vmatpush1.bf16.msra.mxu0 0
  %7334 = vmatprep.mubr.bf16.mxu0 0
  %7335 = vmatmul.mubr.bf16.gmra.mrb[0].mxu0 %v7300
  %v7336 = vpop.f32.mrb[0].mxu0
  %v7337 = vadd.f32 0.0, %v7336
  %v7338 = vpop.f32.mrb[0].mxu0
  %v7339 = vpop.f32.mrb[0].mxu0
  %v7340 = vpop.f32.mrb[0].mxu0
  %7341 = vdwg.mxu0
  %7342 = vmatprep.subr.bf16.mxu0 0
  %7343 = vmatpush1.bf16.msra.mxu0 %v498
  %7344 = vmatprep.subr.bf16.mxu0 0
  %7345 = vmatpush1.bf16.msra.mxu0 0
  %7346 = vmatprep.subr.bf16.mxu0 0
  %7347 = vmatpush1.bf16.msra.mxu0 0
  %7348 = vmatprep.subr.bf16.mxu0 0
  %7349 = vmatpush1.bf16.msra.mxu0 0
  %7350 = vmatprep.subr.bf16.mxu0 0
  %7351 = vmatpush1.bf16.msra.mxu0 0
  %7352 = vmatprep.subr.bf16.mxu0 0
  %7353 = vmatpush1.bf16.msra.mxu0 0
  %7354 = vmatprep.subr.bf16.mxu0 0
  %7355 = vmatpush1.bf16.msra.mxu0 0
  %7356 = vmatprep.subr.bf16.mxu0 0
  %7357 = vmatpush1.bf16.msra.mxu0 0
  %7358 = vmatprep.subr.bf16.mxu0 0
  %7359 = vmatpush1.bf16.msra.mxu0 0
  %7360 = vmatprep.subr.bf16.mxu0 0
  %7361 = vmatpush1.bf16.msra.mxu0 0
  %7362 = vmatprep.subr.bf16.mxu0 0
  %7363 = vmatpush1.bf16.msra.mxu0 0
  %7364 = vmatprep.subr.bf16.mxu0 0
  %7365 = vmatpush1.bf16.msra.mxu0 0
  %7366 = vmatprep.subr.bf16.mxu0 0
  %7367 = vmatpush1.bf16.msra.mxu0 0
  %7368 = vmatprep.subr.bf16.mxu0 0
  %7369 = vmatpush1.bf16.msra.mxu0 0
  %7370 = vmatprep.subr.bf16.mxu0 0
  %7371 = vmatpush1.bf16.msra.mxu0 0
  %7372 = vmatprep.subr.bf16.mxu0 0
  %7373 = vmatpush1.bf16.msra.mxu0 0
  %7374 = vmatprep.mubr.bf16.mxu0 0
  %7375 = vmatmul.mubr.bf16.gmra.mrb[0].mxu0 %v7300
  %v7376 = vpop.f32.mrb[0].mxu0
  %v7377 = vadd.f32 0.0, %v7376
  %v7378 = vpop.f32.mrb[0].mxu0
  %v7379 = vpop.f32.mrb[0].mxu0
  %v7380 = vpop.f32.mrb[0].mxu0
  %7381 = vdwg.mxu0
  %v7382 = vld [vmem:[#allocation2 + $0x1b] sm:$0x1]
  %v7383 = vld [vmem:[#allocation2 + $0x3b] sm:$0x1]
  %v7385 = vrot.slane %v7337, 1
  %v7388 = vadd.f32 %v7382, %v7337
  %v7389 = vadd.f32 %v7383, %v7385
  %v7390 = vxor.u32 %v7388, 2147483648
  %v7391 = vxor.u32 %v7389, 2147483648
  %v7392 = vmul.f32 %v7390, 1.442695
  %v7393 = vpow.pop %v7392
  %v7394 = vmul.f32 %v7391, 1.442695
  %v7395 = vpow.pop %v7394
  %v7396 = vadd.f32 %v7393, 1.0
  %v7397 = vadd.f32 %v7395, 1.0
  %v7398 = vrcp.pop %v7396
  %v7399 = vmul.f32 1.0, %v7398
  %v7400 = vrcp.pop %v7397
  %v7401 = vmul.f32 1.0, %v7400
  %v7402 = vld [vmem:[#allocation3 + $0x1b] sm:$0x1]
  %v7403 = vld [vmem:[#allocation3 + $0x3b] sm:$0x1]
  %v7405 = vrot.slane %v7377, 1
  %v7408 = vadd.f32 %v7402, %v7377
  %v7409 = vadd.f32 %v7403, %v7405
  %v7410 = vxor.u32 %v7408, 2147483648
  %v7411 = vxor.u32 %v7409, 2147483648
  %v7412 = vmul.f32 %v7410, 1.442695
  %v7413 = vpow.pop %v7412
  %v7414 = vmul.f32 %v7411, 1.442695
  %v7415 = vpow.pop %v7414
  %v7416 = vadd.f32 %v7413, 1.0
  %v7417 = vadd.f32 %v7415, 1.0
  %v7418 = vrcp.pop %v7416
  %v7419 = vmul.f32 1.0, %v7418
  %v7420 = vrcp.pop %v7417
  %v7421 = vmul.f32 1.0, %v7420
  %v7422 = vld [vmem:[#allocation4 + $0x1b] sm:$0x1]
  %v7423 = vld [vmem:[#allocation4 + $0x3b] sm:$0x1]
  %7424 = vmatprep.subr.bf16.mxu0 0
  %7425 = vmatpush1.bf16.msra.mxu0 %v590
  %7426 = vmatprep.subr.bf16.mxu0 0
  %7427 = vmatpush1.bf16.msra.mxu0 0
  %7428 = vmatprep.subr.bf16.mxu0 0
  %7429 = vmatpush1.bf16.msra.mxu0 0
  %7430 = vmatprep.subr.bf16.mxu0 0
  %7431 = vmatpush1.bf16.msra.mxu0 0
  %7432 = vmatprep.subr.bf16.mxu0 0
  %7433 = vmatpush1.bf16.msra.mxu0 0
  %7434 = vmatprep.subr.bf16.mxu0 0
  %7435 = vmatpush1.bf16.msra.mxu0 0
  %7436 = vmatprep.subr.bf16.mxu0 0
  %7437 = vmatpush1.bf16.msra.mxu0 0
  %7438 = vmatprep.subr.bf16.mxu0 0
  %7439 = vmatpush1.bf16.msra.mxu0 0
  %7440 = vmatprep.subr.bf16.mxu0 0
  %7441 = vmatpush1.bf16.msra.mxu0 0
  %7442 = vmatprep.subr.bf16.mxu0 0
  %7443 = vmatpush1.bf16.msra.mxu0 0
  %7444 = vmatprep.subr.bf16.mxu0 0
  %7445 = vmatpush1.bf16.msra.mxu0 0
  %7446 = vmatprep.subr.bf16.mxu0 0
  %7447 = vmatpush1.bf16.msra.mxu0 0
  %7448 = vmatprep.subr.bf16.mxu0 0
  %7449 = vmatpush1.bf16.msra.mxu0 0
  %7450 = vmatprep.subr.bf16.mxu0 0
  %7451 = vmatpush1.bf16.msra.mxu0 0
  %7452 = vmatprep.subr.bf16.mxu0 0
  %7453 = vmatpush1.bf16.msra.mxu0 0
  %7454 = vmatprep.subr.bf16.mxu0 0
  %7455 = vmatpush1.bf16.msra.mxu0 0
  %7456 = vmatprep.mubr.bf16.mxu0 0
  %7457 = vmatmul.mubr.bf16.gmra.mrb[0].mxu0 %v7300
  %v7458 = vpop.f32.mrb[0].mxu0
  %v7459 = vadd.f32 %v585, %v7458
  %v7460 = vpop.f32.mrb[0].mxu0
  %v7461 = vpop.f32.mrb[0].mxu0
  %v7462 = vpop.f32.mrb[0].mxu0
  %7463 = vdwg.mxu0
  %v7465 = vrot.slane %v7459, 1
  %v7468 = vmul.f32 %v7399, %v7459
  %v7469 = vmul.f32 %v7401, %v7465
  %v7470 = vadd.f32 %v7422, %v7468
  %v7471 = vadd.f32 %v7423, %v7469
  %v7472 = vtanh.pop %v7470
  %v7473 = vtanh.pop %v7471
  %v7474 = vsub.f32 %v7225, %v7472
  %v7475 = vsub.f32 %v7226, %v7473
  %v7476 = vmul.f32 %v7419, %v7474
  %v7477 = vmul.f32 %v7421, %v7475
  %v7478 = vadd.f32 %v7472, %v7476
  %v7479 = vadd.f32 %v7473, %v7477
  %v7480 = vmax.f32 %v7478, 0.0
  %v7481 = vmax.f32 %v7479, 0.0
  %v7482 = vpack.c.bf16 %v7480, %v7480
  %v7483 = vpack.c.bf16 %v7481, %v7481
  %v7484 = vld [vmem:[%s6 + $0xd8] sm:$0xf]
  %v7485 = vld [vmem:[%s6 + $0xdc] sm:$0xf]
  %v7488 = vunpack.c.l.b16 %v7482
  %v7489 = vunpack.c.l.b16 %v7483
  %v7490 = vrot.slane %v7489, 7
  %v7491 = vsel %vm659, %v7490, %v7488
  %v7492 = vpack.c.b16 %v7491, %v7491
  %v7495 = vunpack.c.l.b16 %v7484
  %v7496 = vunpack.c.l.b16 %v7485
  %v7497 = vpack.c.b16 %v7496, %v7495
  %v7500 = vsel %vm76, %v7492, 0
  %7502 = vmatprep.subr.bf16.mxu0 0
  %7503 = vmatpush1.bf16.msra.mxu0 %v7497
  %7504 = vmatprep.subr.bf16.mxu0 0
  %7505 = vmatpush1.bf16.msra.mxu0 0
  %7506 = vmatprep.subr.bf16.mxu0 0
  %7507 = vmatpush1.bf16.msra.mxu0 0
  %7508 = vmatprep.subr.bf16.mxu0 0
  %7509 = vmatpush1.bf16.msra.mxu0 0
  %7510 = vmatprep.subr.bf16.mxu0 0
  %7511 = vmatpush1.bf16.msra.mxu0 0
  %7512 = vmatprep.subr.bf16.mxu0 0
  %7513 = vmatpush1.bf16.msra.mxu0 0
  %7514 = vmatprep.subr.bf16.mxu0 0
  %7515 = vmatpush1.bf16.msra.mxu0 0
  %7516 = vmatprep.subr.bf16.mxu0 0
  %7517 = vmatpush1.bf16.msra.mxu0 0
  %7518 = vmatprep.subr.bf16.mxu0 0
  %7519 = vmatpush1.bf16.msra.mxu0 0
  %7520 = vmatprep.subr.bf16.mxu0 0
  %7521 = vmatpush1.bf16.msra.mxu0 0
  %7522 = vmatprep.subr.bf16.mxu0 0
  %7523 = vmatpush1.bf16.msra.mxu0 0
  %7524 = vmatprep.subr.bf16.mxu0 0
  %7525 = vmatpush1.bf16.msra.mxu0 0
  %7526 = vmatprep.subr.bf16.mxu0 0
  %7527 = vmatpush1.bf16.msra.mxu0 0
  %7528 = vmatprep.subr.bf16.mxu0 0
  %7529 = vmatpush1.bf16.msra.mxu0 0
  %7530 = vmatprep.subr.bf16.mxu0 0
  %7531 = vmatpush1.bf16.msra.mxu0 0
  %7532 = vmatprep.subr.bf16.mxu0 0
  %7533 = vmatpush1.bf16.msra.mxu0 0
  %7534 = vmatprep.mubr.bf16.mxu0 0
  %7535 = vmatmul.mubr.bf16.gmra.mrb[0].mxu0 %v7500
  %v7536 = vpop.f32.mrb[0].mxu0
  %v7537 = vadd.f32 0.0, %v7536
  %v7538 = vpop.f32.mrb[0].mxu0
  %v7539 = vpop.f32.mrb[0].mxu0
  %v7540 = vpop.f32.mrb[0].mxu0
  %7541 = vdwg.mxu0
  %v7542 = vadd.f32 %v7289, %v7537
  %v7543 = vmax.f32 %v7542, 0.0
  %v7544 = vld [vmem:[%s8] sm:$0xf]
  %v7545 = vld [vmem:[%s8 + $0x4] sm:$0xf]
  %v7546 = vld [vmem:[%s9] sm:$0x1]
  %v7547 = vld [vmem:[%s1] sm:$0x3]
  %v7548 = vpack.c.bf16 %v7547, %v7547
  %v7550 = vlaneseq
  %v7551 = vshrl.u32 %v7550, 7
  %v7552 = vsub.s32 0, %v7551
  %v7553 = vrot.slane %v7546, %v7552
  %v7557 = vunpack.c.l.b16 %v7544
  %v7558 = vunpack.c.l.b16 %v7545
  %v7559 = vpack.c.b16 %v7558, %v7557
  %v7562 = vsel %vm76, %v7548, 0
  %7564 = vmatprep.subr.bf16.mxu0 0
  %7565 = vmatpush1.bf16.msra.mxu0 %v7559
  %7566 = vmatprep.subr.bf16.mxu0 0
  %7567 = vmatpush1.bf16.msra.mxu0 0
  %7568 = vmatprep.subr.bf16.mxu0 0
  %7569 = vmatpush1.bf16.msra.mxu0 0
  %7570 = vmatprep.subr.bf16.mxu0 0
  %7571 = vmatpush1.bf16.msra.mxu0 0
  %7572 = vmatprep.subr.bf16.mxu0 0
  %7573 = vmatpush1.bf16.msra.mxu0 0
  %7574 = vmatprep.subr.bf16.mxu0 0
  %7575 = vmatpush1.bf16.msra.mxu0 0
  %7576 = vmatprep.subr.bf16.mxu0 0
  %7577 = vmatpush1.bf16.msra.mxu0 0
  %7578 = vmatprep.subr.bf16.mxu0 0
  %7579 = vmatpush1.bf16.msra.mxu0 0
  %7580 = vmatprep.subr.bf16.mxu0 0
  %7581 = vmatpush1.bf16.msra.mxu0 0
  %7582 = vmatprep.subr.bf16.mxu0 0
  %7583 = vmatpush1.bf16.msra.mxu0 0
  %7584 = vmatprep.subr.bf16.mxu0 0
  %7585 = vmatpush1.bf16.msra.mxu0 0
  %7586 = vmatprep.subr.bf16.mxu0 0
  %7587 = vmatpush1.bf16.msra.mxu0 0
  %7588 = vmatprep.subr.bf16.mxu0 0
  %7589 = vmatpush1.bf16.msra.mxu0 0
  %7590 = vmatprep.subr.bf16.mxu0 0
  %7591 = vmatpush1.bf16.msra.mxu0 0
  %7592 = vmatprep.subr.bf16.mxu0 0
  %7593 = vmatpush1.bf16.msra.mxu0 0
  %7594 = vmatprep.subr.bf16.mxu0 0
  %7595 = vmatpush1.bf16.msra.mxu0 0
  %7596 = vmatprep.mubr.bf16.mxu0 0
  %7597 = vmatmul.mubr.bf16.gmra.mrb[0].mxu0 %v7562
  %v7598 = vpop.f32.mrb[0].mxu0
  %v7599 = vadd.f32 %v7553, %v7598
  %v7600 = vpop.f32.mrb[0].mxu0
  %v7601 = vpop.f32.mrb[0].mxu0
  %v7602 = vpop.f32.mrb[0].mxu0
  %7603 = vdwg.mxu0
  %v7604 = vmax.f32 %v7599, 0.0
  %v7605 = vld [vmem:[%s2] sm:$0x3]
  %v7606 = vpack.c.bf16 %v7605, %v7605
  %v7608 = vsel %vm76, %v7606, 0
  %7610 = vmatprep.subr.bf16.mxu0 0
  %7611 = vmatpush1.bf16.msra.mxu0 %v7559
  %7612 = vmatprep.subr.bf16.mxu0 0
  %7613 = vmatpush1.bf16.msra.mxu0 0
  %7614 = vmatprep.subr.bf16.mxu0 0
  %7615 = vmatpush1.bf16.msra.mxu0 0
  %7616 = vmatprep.subr.bf16.mxu0 0
  %7617 = vmatpush1.bf16.msra.mxu0 0
  %7618 = vmatprep.subr.bf16.mxu0 0
  %7619 = vmatpush1.bf16.msra.mxu0 0
  %7620 = vmatprep.subr.bf16.mxu0 0
  %7621 = vmatpush1.bf16.msra.mxu0 0
  %7622 = vmatprep.subr.bf16.mxu0 0
  %7623 = vmatpush1.bf16.msra.mxu0 0
  %7624 = vmatprep.subr.bf16.mxu0 0
  %7625 = vmatpush1.bf16.msra.mxu0 0
  %7626 = vmatprep.subr.bf16.mxu0 0
  %7627 = vmatpush1.bf16.msra.mxu0 0
  %7628 = vmatprep.subr.bf16.mxu0 0
  %7629 = vmatpush1.bf16.msra.mxu0 0
  %7630 = vmatprep.subr.bf16.mxu0 0
  %7631 = vmatpush1.bf16.msra.mxu0 0
  %7632 = vmatprep.subr.bf16.mxu0 0
  %7633 = vmatpush1.bf16.msra.mxu0 0
  %7634 = vmatprep.subr.bf16.mxu0 0
  %7635 = vmatpush1.bf16.msra.mxu0 0
  %7636 = vmatprep.subr.bf16.mxu0 0
  %7637 = vmatpush1.bf16.msra.mxu0 0
  %7638 = vmatprep.subr.bf16.mxu0 0
  %7639 = vmatpush1.bf16.msra.mxu0 0
  %7640 = vmatprep.subr.bf16.mxu0 0
  %7641 = vmatpush1.bf16.msra.mxu0 0
  %7642 = vmatprep.mubr.bf16.mxu0 0
  %7643 = vmatmul.mubr.bf16.gmra.mrb[0].mxu0 %v7608
  %v7644 = vpop.f32.mrb[0].mxu0
  %v7645 = vadd.f32 %v7553, %v7644
  %v7646 = vpop.f32.mrb[0].mxu0
  %v7647 = vpop.f32.mrb[0].mxu0
  %v7648 = vpop.f32.mrb[0].mxu0
  %7649 = vdwg.mxu0
  %v7650 = vmax.f32 %v7645, 0.0
  %v7651 = vadd.f32 %v7543, %v7604
  %v7652 = vadd.f32 %v7651, %v7650
  %v7653 = vld [vmem:[%s10] sm:$0x1]
  %v7655 = vlaneseq
  %v7656 = vshrl.u32 %v7655, 7
  %v7657 = vsub.s32 0, %v7656
  %v7658 = vrot.slane %v7653, %v7657
  %v7660 = vmul.f32 %v7652, %v7658
  %vm7661 = vcmask 517120
  %v7662 = vsel %vm7661, %v7660, 0.0
  %7663 = vadd.xlane.f32.xlu0 %v7662
  %v7664 = vpop.xlane.xlu0 %7663
  %v7665 = vld [vmem:[#allocation5] sm:$0x1]
  %v7667 = vlaneseq
  %v7668 = vshrl.u32 %v7667, 7
  %v7669 = vsub.s32 0, %v7668
  %v7670 = vrot.slane %v7665, %v7669
  %v7672 = vadd.f32 %v7664, %v7670
  %vm7673 = vcmask 1024
  %7674 = vst.msk [vmem:[%s12] sm:$0x3] %vm7673, %v7672
  // Predicated region
  $region50: #{critic_forward.1} parent=0 // pred_check
    _
  $region51: #{critic_forward.1} parent=0 // pred_check_branch
    %7676 = sbr.rel (0) target = $region53
  $region52: #{critic_forward.1} parent=0 // pred_region
    _
  $region53: #{critic_forward.1} parent=0 // pred_fallthru
    _
  // Predicated region
  $region54: #{critic_forward.1} parent=0 // pred_check
    _
  $region55: #{critic_forward.1} parent=0 // pred_check_branch
    %7678 = sbr.rel (0) target = $region57
  $region56: #{critic_forward.1} parent=0 // pred_region
    _
  $region57: #{critic_forward.1} parent=0 // pred_fallthru
    _

</llo_original>
